<compile_context>
chip_gen: v7x
topology: tpu7x:2x2x1
jax: 0.10.0
libtpu: 0.0.40
codegen_flags: <defaults>
</compile_context>

<pallas_src>
import jax
import jax.numpy as jnp
from jax.experimental import pallas as pl
from jax.experimental.pallas import tpu as pltpu


IN_DIM = 3      # xyz coordinates
HIDDEN = 32
TM = 8192       # query points (lanes) per grid step


def mlp2d_kernel(x_ref, w1_ref, b1_ref, w2_ref, b2_ref, w3_ref, b3_ref, o_ref):
    """One lane-dense tile of TM query points through the 3-layer decoder.

    Layout:
      x_ref : (3, TM)        w1_ref: (H, 3)    w2_ref: (H, H)   w3_ref: (H, 1)
      b1/b2 : (H, 1)         b3    : (1, 1)    o_ref : (1, TM)
    """
    x = x_ref[...]                                                    # (3, TM) f32

    # ---- Layer 1 (3 -> H) on the VPU: three broadcast multiply-adds.
    # A K=3 matmul would waste >97% of the (128/256-wide) MXU array.
    h1 = (w1_ref[:, 0:1] * x[0:1, :]
          + w1_ref[:, 1:2] * x[1:2, :]
          + w1_ref[:, 2:3] * x[2:3, :]
          + b1_ref[...])                                              # (H, TM)
    h1 = jnp.maximum(h1, 0.0)

    # ---- Layer 2 (H -> H): the only matmul worth putting on the MXU.
    h2 = jnp.dot(w2_ref[...], h1, preferred_element_type=jnp.float32)  # (H, TM)
    h2 = jnp.maximum(h2 + b2_ref[...], 0.0)

    # ---- Layer 3 (H -> 1) on VPU + XLU: elementwise scale + sublane reduce
    # instead of an M=1 matmul (which would waste >99% of the MXU).
    out = jnp.sum(h2 * w3_ref[...], axis=0, keepdims=True) + b3_ref[...]  # (1, TM)

    o_ref[...] = out.astype(o_ref.dtype)                              # lane-dense store


def mlp2d_forward(xyz, params, do_grad=False):
    """Pallas equivalent of MLP2D.forward.  Returns (out, grad)."""
    w1, b1, w2, b2, w3, b3 = params
    n, d = xyz.shape
    assert d == IN_DIM

    # Grid / padding.  NOTE(v7x): if N is huge, prefer a TM that makes the
    # grid count a multiple of 2 so the two TensorCores are load-balanced.
    grid = pl.cdiv(n, TM)
    n_pad = grid * TM

    # Single transpose, then pad only the last (lane) dim.  Padded columns
    # are benign: there are no cross-lane ops and they are sliced off below.
    xyz_t = jnp.pad(xyz.T, ((0, 0), (0, n_pad - n)))                  # (3, n_pad)

    # Kernel-layout weights.
    w1t = w1.T                              # (H, 3)
    w2t = w2.T                              # (H, H)
    w3c = w3.reshape(HIDDEN, 1)             # (H, 1)  (used as a per-sublane scale)
    b1c = b1.reshape(HIDDEN, 1)
    b2c = b2.reshape(HIDDEN, 1)
    b3c = b3.reshape(1, 1)

    flops = 2 * n * (IN_DIM * HIDDEN + HIDDEN * HIDDEN + HIDDEN)
    weight_bytes = 4 * (IN_DIM * HIDDEN + HIDDEN + HIDDEN * HIDDEN + HIDDEN + HIDDEN + 1)
    bytes_accessed = 4 * n * (IN_DIM + 1) + weight_bytes

    out_row = pl.pallas_call(
        mlp2d_kernel,
        out_shape=jax.ShapeDtypeStruct((1, n_pad), xyz.dtype),
        grid_spec=pltpu.PrefetchScalarGridSpec(
            num_scalar_prefetch=0,
            grid=(grid,),
            in_specs=[
                pl.BlockSpec((IN_DIM, TM), lambda i: (0, i)),       # xyz tile (points on lanes)
                pl.BlockSpec((HIDDEN, IN_DIM), lambda i: (0, 0)),   # W1^T (resident)
                pl.BlockSpec((HIDDEN, 1), lambda i: (0, 0)),        # b1
                pl.BlockSpec((HIDDEN, HIDDEN), lambda i: (0, 0)),   # W2^T
                pl.BlockSpec((HIDDEN, 1), lambda i: (0, 0)),        # b2
                pl.BlockSpec((HIDDEN, 1), lambda i: (0, 0)),        # W3 (column)
                pl.BlockSpec((1, 1), lambda i: (0, 0)),             # b3
            ],
            out_specs=pl.BlockSpec((1, TM), lambda i: (0, i)),      # lane-dense output
        ),
        compiler_params=pltpu.CompilerParams(
            dimension_semantics=("parallel",),                      # megacore / v7x 2-TC sharding
        ),
        cost_estimate=pl.CostEstimate(
            flops=flops, transcendentals=0, bytes_accessed=bytes_accessed),
    )(xyz_t, w1t, b1c, w2t, b2c, w3c, b3c)

    # (1, n_pad) -> (n,), then match torch .squeeze() semantics (scalar if n==1).
    out = jnp.squeeze(out_row.reshape(-1)[:n])
    grad = None  # TODO(synk): do_grad=True (cal_gradient_torch) path not implemented.
    return out, grad


def init_decoder_params(key):
    """Deterministic synthetic decoder weights (PyTorch-Linear-like init)."""
    k1, k2, k3, k4, k5, k6 = jax.random.split(key, 6)

    def lin(kw, kb, fan_in, fan_out):
        bound = 1.0 / jnp.sqrt(fan_in)
        w = jax.random.uniform(kw, (fan_in, fan_out), jnp.float32, -bound, bound)
        b = jax.random.uniform(kb, (fan_out,), jnp.float32, -bound, bound)
        return w, b

    w1, b1 = lin(k1, k2, IN_DIM, HIDDEN)
    w2, b2 = lin(k3, k4, HIDDEN, HIDDEN)
    w3, b3 = lin(k5, k6, HIDDEN, 1)
    return (w1, b1, w2, b2, w3, b3)


def mlp2d_reference(xyz, params):
    """Pure-JAX reference of the same decoder (for correctness check)."""
    w1, b1, w2, b2, w3, b3 = params
    h1 = jnp.maximum(xyz @ w1 + b1, 0.0)
    h2 = jnp.maximum(h1 @ w2 + b2, 0.0)
    return jnp.squeeze(h2 @ w3 + b3, axis=-1)


if __name__ == "__main__":
    key = jax.random.PRNGKey(0)
    kx, kp = jax.random.split(key)

    N = 5000  # deliberately not a multiple of TM: exercises the padding path
    xyz = jax.random.normal(kx, (N, IN_DIM), dtype=jnp.float32)
    params = init_decoder_params(kp)

    out, grad = mlp2d_forward(xyz, params, do_grad=False)
    out = jax.block_until_ready(out)

    ref = mlp2d_reference(xyz, params)
    assert out.shape == (N,), out.shape
    assert grad is None
    assert jnp.allclose(out, ref, atol=1e-4, rtol=1e-4), "mismatch vs reference"

    print("KERNEL_OK")
</pallas_src>

<mosaic_0001>
module attributes {stable_mosaic.version = 11 : i64} {
  func.func @mlp2d_kernel(%arg0: i32, %arg1: memref<3x8192xf32, #tpu.memory_space<vmem>>, %arg2: memref<32x3xf32, #tpu.memory_space<vmem>>, %arg3: memref<32x1xf32, #tpu.memory_space<vmem>>, %arg4: memref<32x32xf32, #tpu.memory_space<vmem>>, %arg5: memref<32x1xf32, #tpu.memory_space<vmem>>, %arg6: memref<32x1xf32, #tpu.memory_space<vmem>>, %arg7: memref<1x1xf32, #tpu.memory_space<vmem>>, %arg8: memref<1x8192xf32, #tpu.memory_space<vmem>>) attributes {dimension_semantics = [#tpu.dimension_semantics<parallel>], iteration_bounds = array<i64: 1>, scalar_prefetch = 0 : i64, scratch_operands = 0 : i64, tpu.core_type = #tpu.core_type<tc>, window_params = [{transform_indices = @transform_0, window_bounds = array<i64: 3, 8192>}, {pipeline_mode = #tpu.pipeline_mode<synchronous>, transform_indices = @transform_1, window_bounds = array<i64: 32, 3>}, {pipeline_mode = #tpu.pipeline_mode<synchronous>, transform_indices = @transform_2, window_bounds = array<i64: 32, 1>}, {pipeline_mode = #tpu.pipeline_mode<synchronous>, transform_indices = @transform_3, window_bounds = array<i64: 32, 32>}, {pipeline_mode = #tpu.pipeline_mode<synchronous>, transform_indices = @transform_4, window_bounds = array<i64: 32, 1>}, {pipeline_mode = #tpu.pipeline_mode<synchronous>, transform_indices = @transform_5, window_bounds = array<i64: 32, 1>}, {pipeline_mode = #tpu.pipeline_mode<synchronous>, transform_indices = @transform_6, window_bounds = array<i64: 1, 1>}, {transform_indices = @transform_7, window_bounds = array<i64: 1, 8192>}]} {
    %c0 = arith.constant 0 : index
    %c0_0 = arith.constant 0 : index
    %0 = vector.load %arg1[%c0, %c0_0] : memref<3x8192xf32, #tpu.memory_space<vmem>>, vector<3x8192xf32>
    %c0_1 = arith.constant 0 : index
    %c0_2 = arith.constant 0 : index
    %1 = vector.load %arg2[%c0_1, %c0_2] : memref<32x3xf32, #tpu.memory_space<vmem>>, vector<32x1xf32>
    %2 = vector.extract_strided_slice %0 {offsets = [0, 0], sizes = [1, 8192], strides = [1, 1]} : vector<3x8192xf32> to vector<1x8192xf32>
    %3 = vector.broadcast %1 : vector<32x1xf32> to vector<32x8192xf32>
    %4 = vector.broadcast %2 : vector<1x8192xf32> to vector<32x8192xf32>
    %5 = arith.mulf %3, %4 : vector<32x8192xf32>
    %c0_3 = arith.constant 0 : index
    %c1 = arith.constant 1 : index
    %6 = vector.load %arg2[%c0_3, %c1] : memref<32x3xf32, #tpu.memory_space<vmem>>, vector<32x1xf32>
    %7 = vector.extract_strided_slice %0 {offsets = [1, 0], sizes = [1, 8192], strides = [1, 1]} : vector<3x8192xf32> to vector<1x8192xf32>
    %8 = vector.broadcast %6 : vector<32x1xf32> to vector<32x8192xf32>
    %9 = vector.broadcast %7 : vector<1x8192xf32> to vector<32x8192xf32>
    %10 = arith.mulf %8, %9 : vector<32x8192xf32>
    %11 = arith.addf %5, %10 : vector<32x8192xf32>
    %c0_4 = arith.constant 0 : index
    %c2 = arith.constant 2 : index
    %12 = vector.load %arg2[%c0_4, %c2] : memref<32x3xf32, #tpu.memory_space<vmem>>, vector<32x1xf32>
    %13 = vector.extract_strided_slice %0 {offsets = [2, 0], sizes = [1, 8192], strides = [1, 1]} : vector<3x8192xf32> to vector<1x8192xf32>
    %14 = vector.broadcast %12 : vector<32x1xf32> to vector<32x8192xf32>
    %15 = vector.broadcast %13 : vector<1x8192xf32> to vector<32x8192xf32>
    %16 = arith.mulf %14, %15 : vector<32x8192xf32>
    %17 = arith.addf %11, %16 : vector<32x8192xf32>
    %c0_5 = arith.constant 0 : index
    %c0_6 = arith.constant 0 : index
    %18 = vector.load %arg3[%c0_5, %c0_6] : memref<32x1xf32, #tpu.memory_space<vmem>>, vector<32x1xf32>
    %19 = vector.broadcast %18 : vector<32x1xf32> to vector<32x8192xf32>
    %20 = arith.addf %17, %19 : vector<32x8192xf32>
    %cst = arith.constant 0.000000e+00 : f32
    %21 = vector.broadcast %cst : f32 to vector<32x8192xf32>
    %22 = arith.maximumf %20, %21 : vector<32x8192xf32>
    %c0_7 = arith.constant 0 : index
    %c0_8 = arith.constant 0 : index
    %23 = vector.load %arg4[%c0_7, %c0_8] : memref<32x32xf32, #tpu.memory_space<vmem>>, vector<32x32xf32>
    %cst_9 = arith.constant dense<0.000000e+00> : vector<32x8192xf32>
    %24 = tpu.matmul %23, %22, %cst_9 {dimension_numbers = #tpu.dot_dimension_numbers<[1], [0], [0], [1], [0, 0, 1, 1], [], []>} : vector<32x32xf32>, vector<32x8192xf32>, vector<32x8192xf32> -> vector<32x8192xf32>
    %c0_10 = arith.constant 0 : index
    %c0_11 = arith.constant 0 : index
    %25 = vector.load %arg5[%c0_10, %c0_11] : memref<32x1xf32, #tpu.memory_space<vmem>>, vector<32x1xf32>
    %26 = vector.broadcast %25 : vector<32x1xf32> to vector<32x8192xf32>
    %27 = arith.addf %24, %26 : vector<32x8192xf32>
    %cst_12 = arith.constant 0.000000e+00 : f32
    %28 = vector.broadcast %cst_12 : f32 to vector<32x8192xf32>
    %29 = arith.maximumf %27, %28 : vector<32x8192xf32>
    %c0_13 = arith.constant 0 : index
    %c0_14 = arith.constant 0 : index
    %30 = vector.load %arg6[%c0_13, %c0_14] : memref<32x1xf32, #tpu.memory_space<vmem>>, vector<32x1xf32>
    %31 = vector.broadcast %30 : vector<32x1xf32> to vector<32x8192xf32>
    %32 = arith.mulf %29, %31 : vector<32x8192xf32>
    %cst_15 = arith.constant dense<0.000000e+00> : vector<8192xf32>
    %33 = vector.multi_reduction <add>, %32, %cst_15 [0] : vector<32x8192xf32> to vector<8192xf32>
    %34 = vector.shape_cast %33 : vector<8192xf32> to vector<1x8192xf32>
    %c0_16 = arith.constant 0 : index
    %c0_17 = arith.constant 0 : index
    %35 = vector.load %arg7[%c0_16, %c0_17] : memref<1x1xf32, #tpu.memory_space<vmem>>, vector<1x1xf32>
    %36 = vector.broadcast %35 : vector<1x1xf32> to vector<1x8192xf32>
    %37 = arith.addf %34, %36 : vector<1x8192xf32>
    %c0_18 = arith.constant 0 : index
    %c0_19 = arith.constant 0 : index
    %38 = vector.load %arg8[%c0_18, %c0_19] : memref<1x8192xf32, #tpu.memory_space<vmem>>, vector<1x8192xf32>
    tpu.vector_store %arg8[%c0_18, %c0_19], %37 {strides = array<i32>} : memref<1x8192xf32, #tpu.memory_space<vmem>>, vector<1x8192xf32>,
    return
  }
  func.func @transform_0(%arg0: i32) -> (i32, i32) {
    %c0_i32 = arith.constant 0 : i32
    %c0_i32_0 = arith.constant 0 : i32
    return %c0_i32, %arg0 : i32, i32
  }
  func.func @transform_1(%arg0: i32) -> (i32, i32) {
    %c0_i32 = arith.constant 0 : i32
    %c0_i32_0 = arith.constant 0 : i32
    %c0_i32_1 = arith.constant 0 : i32
    return %c0_i32, %c0_i32_0 : i32, i32
  }
  func.func @transform_2(%arg0: i32) -> (i32, i32) {
    %c0_i32 = arith.constant 0 : i32
    %c0_i32_0 = arith.constant 0 : i32
    %c0_i32_1 = arith.constant 0 : i32
    return %c0_i32, %c0_i32_0 : i32, i32
  }
  func.func @transform_3(%arg0: i32) -> (i32, i32) {
    %c0_i32 = arith.constant 0 : i32
    %c0_i32_0 = arith.constant 0 : i32
    %c0_i32_1 = arith.constant 0 : i32
    return %c0_i32, %c0_i32_0 : i32, i32
  }
  func.func @transform_4(%arg0: i32) -> (i32, i32) {
    %c0_i32 = arith.constant 0 : i32
    %c0_i32_0 = arith.constant 0 : i32
    %c0_i32_1 = arith.constant 0 : i32
    return %c0_i32, %c0_i32_0 : i32, i32
  }
  func.func @transform_5(%arg0: i32) -> (i32, i32) {
    %c0_i32 = arith.constant 0 : i32
    %c0_i32_0 = arith.constant 0 : i32
    %c0_i32_1 = arith.constant 0 : i32
    return %c0_i32, %c0_i32_0 : i32, i32
  }
  func.func @transform_6(%arg0: i32) -> (i32, i32) {
    %c0_i32 = arith.constant 0 : i32
    %c0_i32_0 = arith.constant 0 : i32
    %c0_i32_1 = arith.constant 0 : i32
    return %c0_i32, %c0_i32_0 : i32, i32
  }
  func.func @transform_7(%arg0: i32) -> (i32, i32) {
    %c0_i32 = arith.constant 0 : i32
    %c0_i32_0 = arith.constant 0 : i32
    return %c0_i32, %arg0 : i32, i32
  }
}

</mosaic_0001>

<llo_original>
// kernel: tpu_custom_call.1
$region0: #{tpu_custom_call.1}
  #allocation0 [shape = 'u32[]', space=smem, size = 0x4, offset = 0x4, fixed_abs, tag = 'smem constant byte address 0x4 - core index']
  #allocation1 [shape = 'u32[144,128]{1,0:T(1,128)}', space=vmem, size = 0x12000, scoped, tag = 'internal scratch']
  #allocation2 [shape = 'f32[1,1]{1,0:T(1,128)S(1)}', space=vmem, size = 0x200, scoped, tag = 'scoped memory for tpu_custom_call.1']
  %s0 = inlined_call_operand.hbm [shape: f32[3,8192], index: 0, kind: input, shape index: {}]
  %s1 = inlined_call_operand.vmem [shape: f32[32,3], index: 1, kind: input, shape index: {}]
  %s2 = inlined_call_operand.vmem [shape: f32[32,1], index: 2, kind: input, shape index: {}]
  %s3 = inlined_call_operand.vmem [shape: f32[32,32], index: 3, kind: input, shape index: {}]
  %s4 = inlined_call_operand.vmem [shape: f32[32,1], index: 4, kind: input, shape index: {}]
  %s5 = inlined_call_operand.vmem [shape: f32[32,1], index: 5, kind: input, shape index: {}]
  %s6 = inlined_call_operand.<no memory space> [shape: f32[1,1], index: 6, kind: input, shape index: {}]
  %s7 = inlined_call_operand.hbm [shape: f32[1,8192], index: 7, kind: output, shape index: {}]
  %s8 = sld [smem:[#allocation0]]
  $region42: #{tpu_custom_call.1} parent=0
    _
  %s10 = ssub.s32 1, %s8
  %s11 = scalar_select 0, %s10, %s8
  %v12 = vstv %s6
  %13 = vst [vmem:[#allocation2] sm:$0x1] %v12
  $region1: #{tpu_custom_call.1} parent=0
    #allocation3 [shape = 'u8[131072]{0}', space=vmem, size = 0x20000, scoped, tag = 'input window, operand 0, single buffered']
    #allocation4 [shape = 's32[1]{0}', space=sflag, size = 0x4, scoped, tag = 'scoped memory for tpu_custom_call.1']
    #allocation5 [shape = 's32[1]{0}', space=sflag, size = 0x4, scoped, tag = 'scoped memory for tpu_custom_call.1']
    #allocation6 [shape = 'u8[32768]{0}', space=vmem, size = 0x8000, scoped, tag = 'output window, operand 0, single buffered']
    %14 = vsyncpa [#allocation4], 0
    %15 = vsyncpa [#allocation5], 0
    // Predicated region
    $region2: #{tpu_custom_call.1} parent=1 // pred_check
      _
    $region3: #{tpu_custom_call.1} parent=1 // pred_check_branch
      %17 = sbr.rel (0) target = $region5
    $region4: #{tpu_custom_call.1} parent=1 // pred_region
      %s19 = ssub.s32 4096, 4096
      %20 = vsyncadd [#allocation4], %s19
      %s22 = sshll.u32 [#allocation3], 4
      %s23 = int_to_ptr.vmem [resolvable:$true] %s22
      %25 = dma.hbm_to_vmem [thread:$0]  %s0, 4096, %s23, [#allocation4]
    $region5: #{tpu_custom_call.1} parent=1 // pred_fallthru
      _
    // Predicated region
    $region6: #{tpu_custom_call.1} parent=1 // pred_check
      _
    $region7: #{tpu_custom_call.1} parent=1 // pred_check_branch
      %27 = sbr.rel (0) target = $region9
    $region8: #{tpu_custom_call.1} parent=1 // pred_region
      _
    $region9: #{tpu_custom_call.1} parent=1 // pred_fallthru
      _
    // Predicated region
    $region10: #{tpu_custom_call.1} parent=1 // pred_check
      _
    $region11: #{tpu_custom_call.1} parent=1 // pred_check_branch
      %29 = sbr.rel (0) target = $region13
    $region12: #{tpu_custom_call.1} parent=1 // pred_region
      _
    $region13: #{tpu_custom_call.1} parent=1 // pred_fallthru
      _
    // Predicated region
    $region14: #{tpu_custom_call.1} parent=1 // pred_check
      _
    $region15: #{tpu_custom_call.1} parent=1 // pred_check_branch
      %31 = sbr.rel (0) target = $region17
    $region16: #{tpu_custom_call.1} parent=1 // pred_region
      _
    $region17: #{tpu_custom_call.1} parent=1 // pred_fallthru
      _
    // Predicated region
    $region18: #{tpu_custom_call.1} parent=1 // pred_check
      _
    $region19: #{tpu_custom_call.1} parent=1 // pred_check_branch
      %33 = sbr.rel (0) target = $region21
    $region20: #{tpu_custom_call.1} parent=1 // pred_region
      _
    $region21: #{tpu_custom_call.1} parent=1 // pred_fallthru
      _
    // Predicated region
    $region22: #{tpu_custom_call.1} parent=1 // pred_check
      _
    $region23: #{tpu_custom_call.1} parent=1 // pred_check_branch
      %35 = sbr.rel (0) target = $region25
    $region24: #{tpu_custom_call.1} parent=1 // pred_region
      _
    $region25: #{tpu_custom_call.1} parent=1 // pred_fallthru
      _
    // Predicated region
    $region26: #{tpu_custom_call.1} parent=1 // pred_check
      _
    $region27: #{tpu_custom_call.1} parent=1 // pred_check_branch
      %37 = sbr.rel (0) target = $region29
    $region28: #{tpu_custom_call.1} parent=1 // pred_region
      _
    $region29: #{tpu_custom_call.1} parent=1 // pred_fallthru
      _
    // Predicated region
    $region30: #{tpu_custom_call.1} parent=1 // pred_check
      _
    $region31: #{tpu_custom_call.1} parent=1 // pred_check_branch
      %39 = sbr.rel (0) target = $region33
    $region32: #{tpu_custom_call.1} parent=1 // pred_region
      %40 = dma.done [#allocation4], 4096
    $region33: #{tpu_custom_call.1} parent=1 // pred_fallthru
      _
    %v41 = vld [vmem:[#allocation3] sm:$0x77]
    %v42 = vld [vmem:[#allocation3 + $0x8] sm:$0x77]
    %v43 = vld [vmem:[#allocation3 + $0x10] sm:$0x77]
    %v44 = vld [vmem:[#allocation3 + $0x18] sm:$0x77]
    %v45 = vld [vmem:[#allocation3 + $0x20] sm:$0x77]
    %v46 = vld [vmem:[#allocation3 + $0x28] sm:$0x77]
    %v47 = vld [vmem:[#allocation3 + $0x30] sm:$0x77]
    %v48 = vld [vmem:[#allocation3 + $0x38] sm:$0x77]
    %v49 = vld [vmem:[#allocation3 + $0x40] sm:$0x77]
    %v50 = vld [vmem:[#allocation3 + $0x48] sm:$0x77]
    %v51 = vld [vmem:[#allocation3 + $0x50] sm:$0x77]
    %v52 = vld [vmem:[#allocation3 + $0x58] sm:$0x77]
    %v53 = vld [vmem:[#allocation3 + $0x60] sm:$0x77]
    %v54 = vld [vmem:[#allocation3 + $0x68] sm:$0x77]
    %v55 = vld [vmem:[#allocation3 + $0x70] sm:$0x77]
    %v56 = vld [vmem:[#allocation3 + $0x78] sm:$0x77]
    %v57 = vld [vmem:[#allocation3 + $0x80] sm:$0x77]
    %v58 = vld [vmem:[#allocation3 + $0x88] sm:$0x77]
    %v59 = vld [vmem:[#allocation3 + $0x90] sm:$0x77]
    %v60 = vld [vmem:[#allocation3 + $0x98] sm:$0x77]
    %v61 = vld [vmem:[#allocation3 + $0xa0] sm:$0x77]
    %v62 = vld [vmem:[#allocation3 + $0xa8] sm:$0x77]
    %v63 = vld [vmem:[#allocation3 + $0xb0] sm:$0x77]
    %v64 = vld [vmem:[#allocation3 + $0xb8] sm:$0x77]
    %v65 = vld [vmem:[#allocation3 + $0xc0] sm:$0x77]
    %v66 = vld [vmem:[#allocation3 + $0xc8] sm:$0x77]
    %v67 = vld [vmem:[#allocation3 + $0xd0] sm:$0x77]
    %v68 = vld [vmem:[#allocation3 + $0xd8] sm:$0x77]
    %v69 = vld [vmem:[#allocation3 + $0xe0] sm:$0x77]
    %v70 = vld [vmem:[#allocation3 + $0xe8] sm:$0x77]
    %v71 = vld [vmem:[#allocation3 + $0xf0] sm:$0x77]
    %v72 = vld [vmem:[#allocation3 + $0xf8] sm:$0x77]
    %v73 = vld [vmem:[%s1] sm:$0xff]
    %v74 = vld [vmem:[%s1 + $0x8] sm:$0xff]
    %v75 = vld [vmem:[%s1 + $0x10] sm:$0xff]
    %v76 = vld [vmem:[%s1 + $0x18] sm:$0xff]
    %78 = vset.pattern.permute.xlu0 0
    %79 = vperm.xlu0 %78, %v73
    %v80 = vpop.permute.xlu0 %79
    %83 = vset.pattern.permute.xlu0 0
    %84 = vperm.xlu0 %83, %v74
    %v85 = vpop.permute.xlu0 %84
    %88 = vset.pattern.permute.xlu0 0
    %89 = vperm.xlu0 %88, %v75
    %v90 = vpop.permute.xlu0 %89
    %93 = vset.pattern.permute.xlu0 0
    %94 = vperm.xlu0 %93, %v76
    %v95 = vpop.permute.xlu0 %94
    %v129 = vlaneseq
    %v130 = vshrl.u32 %v129, 7
    %v131 = vsub.s32 0, %v130
    %v132 = vrot.slane %v41, %v131
    %v133 = vlaneseq
    %v134 = vshrl.u32 %v133, 7
    %v135 = vsub.s32 4, %v134
    %v136 = vrot.slane %v41, %v135
    %v137 = vlaneseq
    %v138 = vshrl.u32 %v137, 7
    %v139 = vsub.s32 0, %v138
    %v140 = vrot.slane %v42, %v139
    %v141 = vlaneseq
    %v142 = vshrl.u32 %v141, 7
    %v143 = vsub.s32 4, %v142
    %v144 = vrot.slane %v42, %v143
    %v145 = vlaneseq
    %v146 = vshrl.u32 %v145, 7
    %v147 = vsub.s32 0, %v146
    %v148 = vrot.slane %v43, %v147
    %v149 = vlaneseq
    %v150 = vshrl.u32 %v149, 7
    %v151 = vsub.s32 4, %v150
    %v152 = vrot.slane %v43, %v151
    %v153 = vlaneseq
    %v154 = vshrl.u32 %v153, 7
    %v155 = vsub.s32 0, %v154
    %v156 = vrot.slane %v44, %v155
    %v157 = vlaneseq
    %v158 = vshrl.u32 %v157, 7
    %v159 = vsub.s32 4, %v158
    %v160 = vrot.slane %v44, %v159
    %v161 = vlaneseq
    %v162 = vshrl.u32 %v161, 7
    %v163 = vsub.s32 0, %v162
    %v164 = vrot.slane %v45, %v163
    %v165 = vlaneseq
    %v166 = vshrl.u32 %v165, 7
    %v167 = vsub.s32 4, %v166
    %v168 = vrot.slane %v45, %v167
    %v169 = vlaneseq
    %v170 = vshrl.u32 %v169, 7
    %v171 = vsub.s32 0, %v170
    %v172 = vrot.slane %v46, %v171
    %v173 = vlaneseq
    %v174 = vshrl.u32 %v173, 7
    %v175 = vsub.s32 4, %v174
    %v176 = vrot.slane %v46, %v175
    %v177 = vlaneseq
    %v178 = vshrl.u32 %v177, 7
    %v179 = vsub.s32 0, %v178
    %v180 = vrot.slane %v47, %v179
    %v181 = vlaneseq
    %v182 = vshrl.u32 %v181, 7
    %v183 = vsub.s32 4, %v182
    %v184 = vrot.slane %v47, %v183
    %v185 = vlaneseq
    %v186 = vshrl.u32 %v185, 7
    %v187 = vsub.s32 0, %v186
    %v188 = vrot.slane %v48, %v187
    %v189 = vlaneseq
    %v190 = vshrl.u32 %v189, 7
    %v191 = vsub.s32 4, %v190
    %v192 = vrot.slane %v48, %v191
    %v193 = vlaneseq
    %v194 = vshrl.u32 %v193, 7
    %v195 = vsub.s32 0, %v194
    %v196 = vrot.slane %v49, %v195
    %v197 = vlaneseq
    %v198 = vshrl.u32 %v197, 7
    %v199 = vsub.s32 4, %v198
    %v200 = vrot.slane %v49, %v199
    %v201 = vlaneseq
    %v202 = vshrl.u32 %v201, 7
    %v203 = vsub.s32 0, %v202
    %v204 = vrot.slane %v50, %v203
    %v205 = vlaneseq
    %v206 = vshrl.u32 %v205, 7
    %v207 = vsub.s32 4, %v206
    %v208 = vrot.slane %v50, %v207
    %v209 = vlaneseq
    %v210 = vshrl.u32 %v209, 7
    %v211 = vsub.s32 0, %v210
    %v212 = vrot.slane %v51, %v211
    %v213 = vlaneseq
    %v214 = vshrl.u32 %v213, 7
    %v215 = vsub.s32 4, %v214
    %v216 = vrot.slane %v51, %v215
    %v217 = vlaneseq
    %v218 = vshrl.u32 %v217, 7
    %v219 = vsub.s32 0, %v218
    %v220 = vrot.slane %v52, %v219
    %v221 = vlaneseq
    %v222 = vshrl.u32 %v221, 7
    %v223 = vsub.s32 4, %v222
    %v224 = vrot.slane %v52, %v223
    %v225 = vlaneseq
    %v226 = vshrl.u32 %v225, 7
    %v227 = vsub.s32 0, %v226
    %v228 = vrot.slane %v53, %v227
    %v229 = vlaneseq
    %v230 = vshrl.u32 %v229, 7
    %v231 = vsub.s32 4, %v230
    %v232 = vrot.slane %v53, %v231
    %v233 = vlaneseq
    %v234 = vshrl.u32 %v233, 7
    %v235 = vsub.s32 0, %v234
    %v236 = vrot.slane %v54, %v235
    %v237 = vlaneseq
    %v238 = vshrl.u32 %v237, 7
    %v239 = vsub.s32 4, %v238
    %v240 = vrot.slane %v54, %v239
    %v241 = vlaneseq
    %v242 = vshrl.u32 %v241, 7
    %v243 = vsub.s32 0, %v242
    %v244 = vrot.slane %v55, %v243
    %v245 = vlaneseq
    %v246 = vshrl.u32 %v245, 7
    %v247 = vsub.s32 4, %v246
    %v248 = vrot.slane %v55, %v247
    %v249 = vlaneseq
    %v250 = vshrl.u32 %v249, 7
    %v251 = vsub.s32 0, %v250
    %v252 = vrot.slane %v56, %v251
    %v253 = vlaneseq
    %v254 = vshrl.u32 %v253, 7
    %v255 = vsub.s32 4, %v254
    %v256 = vrot.slane %v56, %v255
    %v257 = vlaneseq
    %v258 = vshrl.u32 %v257, 7
    %v259 = vsub.s32 0, %v258
    %v260 = vrot.slane %v57, %v259
    %v261 = vlaneseq
    %v262 = vshrl.u32 %v261, 7
    %v263 = vsub.s32 4, %v262
    %v264 = vrot.slane %v57, %v263
    %v265 = vlaneseq
    %v266 = vshrl.u32 %v265, 7
    %v267 = vsub.s32 0, %v266
    %v268 = vrot.slane %v58, %v267
    %v269 = vlaneseq
    %v270 = vshrl.u32 %v269, 7
    %v271 = vsub.s32 4, %v270
    %v272 = vrot.slane %v58, %v271
    %v273 = vlaneseq
    %v274 = vshrl.u32 %v273, 7
    %v275 = vsub.s32 0, %v274
    %v276 = vrot.slane %v59, %v275
    %v277 = vlaneseq
    %v278 = vshrl.u32 %v277, 7
    %v279 = vsub.s32 4, %v278
    %v280 = vrot.slane %v59, %v279
    %v281 = vlaneseq
    %v282 = vshrl.u32 %v281, 7
    %v283 = vsub.s32 0, %v282
    %v284 = vrot.slane %v60, %v283
    %v285 = vlaneseq
    %v286 = vshrl.u32 %v285, 7
    %v287 = vsub.s32 4, %v286
    %v288 = vrot.slane %v60, %v287
    %v289 = vlaneseq
    %v290 = vshrl.u32 %v289, 7
    %v291 = vsub.s32 0, %v290
    %v292 = vrot.slane %v61, %v291
    %v293 = vlaneseq
    %v294 = vshrl.u32 %v293, 7
    %v295 = vsub.s32 4, %v294
    %v296 = vrot.slane %v61, %v295
    %v297 = vlaneseq
    %v298 = vshrl.u32 %v297, 7
    %v299 = vsub.s32 0, %v298
    %v300 = vrot.slane %v62, %v299
    %v301 = vlaneseq
    %v302 = vshrl.u32 %v301, 7
    %v303 = vsub.s32 4, %v302
    %v304 = vrot.slane %v62, %v303
    %v305 = vlaneseq
    %v306 = vshrl.u32 %v305, 7
    %v307 = vsub.s32 0, %v306
    %v308 = vrot.slane %v63, %v307
    %v309 = vlaneseq
    %v310 = vshrl.u32 %v309, 7
    %v311 = vsub.s32 4, %v310
    %v312 = vrot.slane %v63, %v311
    %v313 = vlaneseq
    %v314 = vshrl.u32 %v313, 7
    %v315 = vsub.s32 0, %v314
    %v316 = vrot.slane %v64, %v315
    %v317 = vlaneseq
    %v318 = vshrl.u32 %v317, 7
    %v319 = vsub.s32 4, %v318
    %v320 = vrot.slane %v64, %v319
    %v321 = vlaneseq
    %v322 = vshrl.u32 %v321, 7
    %v323 = vsub.s32 0, %v322
    %v324 = vrot.slane %v65, %v323
    %v325 = vlaneseq
    %v326 = vshrl.u32 %v325, 7
    %v327 = vsub.s32 4, %v326
    %v328 = vrot.slane %v65, %v327
    %v329 = vlaneseq
    %v330 = vshrl.u32 %v329, 7
    %v331 = vsub.s32 0, %v330
    %v332 = vrot.slane %v66, %v331
    %v333 = vlaneseq
    %v334 = vshrl.u32 %v333, 7
    %v335 = vsub.s32 4, %v334
    %v336 = vrot.slane %v66, %v335
    %v337 = vlaneseq
    %v338 = vshrl.u32 %v337, 7
    %v339 = vsub.s32 0, %v338
    %v340 = vrot.slane %v67, %v339
    %v341 = vlaneseq
    %v342 = vshrl.u32 %v341, 7
    %v343 = vsub.s32 4, %v342
    %v344 = vrot.slane %v67, %v343
    %v345 = vlaneseq
    %v346 = vshrl.u32 %v345, 7
    %v347 = vsub.s32 0, %v346
    %v348 = vrot.slane %v68, %v347
    %v349 = vlaneseq
    %v350 = vshrl.u32 %v349, 7
    %v351 = vsub.s32 4, %v350
    %v352 = vrot.slane %v68, %v351
    %v353 = vlaneseq
    %v354 = vshrl.u32 %v353, 7
    %v355 = vsub.s32 0, %v354
    %v356 = vrot.slane %v69, %v355
    %v357 = vlaneseq
    %v358 = vshrl.u32 %v357, 7
    %v359 = vsub.s32 4, %v358
    %v360 = vrot.slane %v69, %v359
    %v361 = vlaneseq
    %v362 = vshrl.u32 %v361, 7
    %v363 = vsub.s32 0, %v362
    %v364 = vrot.slane %v70, %v363
    %v365 = vlaneseq
    %v366 = vshrl.u32 %v365, 7
    %v367 = vsub.s32 4, %v366
    %v368 = vrot.slane %v70, %v367
    %v369 = vlaneseq
    %v370 = vshrl.u32 %v369, 7
    %v371 = vsub.s32 0, %v370
    %v372 = vrot.slane %v71, %v371
    %v373 = vlaneseq
    %v374 = vshrl.u32 %v373, 7
    %v375 = vsub.s32 4, %v374
    %v376 = vrot.slane %v71, %v375
    %v377 = vlaneseq
    %v378 = vshrl.u32 %v377, 7
    %v379 = vsub.s32 0, %v378
    %v380 = vrot.slane %v72, %v379
    %v381 = vlaneseq
    %v382 = vshrl.u32 %v381, 7
    %v383 = vsub.s32 4, %v382
    %v384 = vrot.slane %v72, %v383
    %v449 = vlaneseq
    %v450 = vshrl.u32 %v449, 7
    %v451 = vsub.s32 0, %v450
    %v452 = vrot.slane %v132, %v451
    %v453 = vlaneseq
    %v454 = vshrl.u32 %v453, 7
    %v455 = vsub.s32 0, %v454
    %v456 = vrot.slane %v136, %v455
    %v457 = vlaneseq
    %v458 = vshrl.u32 %v457, 7
    %v459 = vsub.s32 0, %v458
    %v460 = vrot.slane %v140, %v459
    %v461 = vlaneseq
    %v462 = vshrl.u32 %v461, 7
    %v463 = vsub.s32 0, %v462
    %v464 = vrot.slane %v144, %v463
    %v465 = vlaneseq
    %v466 = vshrl.u32 %v465, 7
    %v467 = vsub.s32 0, %v466
    %v468 = vrot.slane %v148, %v467
    %v469 = vlaneseq
    %v470 = vshrl.u32 %v469, 7
    %v471 = vsub.s32 0, %v470
    %v472 = vrot.slane %v152, %v471
    %v473 = vlaneseq
    %v474 = vshrl.u32 %v473, 7
    %v475 = vsub.s32 0, %v474
    %v476 = vrot.slane %v156, %v475
    %v477 = vlaneseq
    %v478 = vshrl.u32 %v477, 7
    %v479 = vsub.s32 0, %v478
    %v480 = vrot.slane %v160, %v479
    %v481 = vlaneseq
    %v482 = vshrl.u32 %v481, 7
    %v483 = vsub.s32 0, %v482
    %v484 = vrot.slane %v164, %v483
    %v485 = vlaneseq
    %v486 = vshrl.u32 %v485, 7
    %v487 = vsub.s32 0, %v486
    %v488 = vrot.slane %v168, %v487
    %v489 = vlaneseq
    %v490 = vshrl.u32 %v489, 7
    %v491 = vsub.s32 0, %v490
    %v492 = vrot.slane %v172, %v491
    %v493 = vlaneseq
    %v494 = vshrl.u32 %v493, 7
    %v495 = vsub.s32 0, %v494
    %v496 = vrot.slane %v176, %v495
    %v497 = vlaneseq
    %v498 = vshrl.u32 %v497, 7
    %v499 = vsub.s32 0, %v498
    %v500 = vrot.slane %v180, %v499
    %v501 = vlaneseq
    %v502 = vshrl.u32 %v501, 7
    %v503 = vsub.s32 0, %v502
    %v504 = vrot.slane %v184, %v503
    %v505 = vlaneseq
    %v506 = vshrl.u32 %v505, 7
    %v507 = vsub.s32 0, %v506
    %v508 = vrot.slane %v188, %v507
    %v509 = vlaneseq
    %v510 = vshrl.u32 %v509, 7
    %v511 = vsub.s32 0, %v510
    %v512 = vrot.slane %v192, %v511
    %v513 = vlaneseq
    %v514 = vshrl.u32 %v513, 7
    %v515 = vsub.s32 0, %v514
    %v516 = vrot.slane %v196, %v515
    %v517 = vlaneseq
    %v518 = vshrl.u32 %v517, 7
    %v519 = vsub.s32 0, %v518
    %v520 = vrot.slane %v200, %v519
    %v521 = vlaneseq
    %v522 = vshrl.u32 %v521, 7
    %v523 = vsub.s32 0, %v522
    %v524 = vrot.slane %v204, %v523
    %v525 = vlaneseq
    %v526 = vshrl.u32 %v525, 7
    %v527 = vsub.s32 0, %v526
    %v528 = vrot.slane %v208, %v527
    %v529 = vlaneseq
    %v530 = vshrl.u32 %v529, 7
    %v531 = vsub.s32 0, %v530
    %v532 = vrot.slane %v212, %v531
    %v533 = vlaneseq
    %v534 = vshrl.u32 %v533, 7
    %v535 = vsub.s32 0, %v534
    %v536 = vrot.slane %v216, %v535
    %v537 = vlaneseq
    %v538 = vshrl.u32 %v537, 7
    %v539 = vsub.s32 0, %v538
    %v540 = vrot.slane %v220, %v539
    %v541 = vlaneseq
    %v542 = vshrl.u32 %v541, 7
    %v543 = vsub.s32 0, %v542
    %v544 = vrot.slane %v224, %v543
    %v545 = vlaneseq
    %v546 = vshrl.u32 %v545, 7
    %v547 = vsub.s32 0, %v546
    %v548 = vrot.slane %v228, %v547
    %v549 = vlaneseq
    %v550 = vshrl.u32 %v549, 7
    %v551 = vsub.s32 0, %v550
    %v552 = vrot.slane %v232, %v551
    %v553 = vlaneseq
    %v554 = vshrl.u32 %v553, 7
    %v555 = vsub.s32 0, %v554
    %v556 = vrot.slane %v236, %v555
    %v557 = vlaneseq
    %v558 = vshrl.u32 %v557, 7
    %v559 = vsub.s32 0, %v558
    %v560 = vrot.slane %v240, %v559
    %v561 = vlaneseq
    %v562 = vshrl.u32 %v561, 7
    %v563 = vsub.s32 0, %v562
    %v564 = vrot.slane %v244, %v563
    %v565 = vlaneseq
    %v566 = vshrl.u32 %v565, 7
    %v567 = vsub.s32 0, %v566
    %v568 = vrot.slane %v248, %v567
    %v569 = vlaneseq
    %v570 = vshrl.u32 %v569, 7
    %v571 = vsub.s32 0, %v570
    %v572 = vrot.slane %v252, %v571
    %v573 = vlaneseq
    %v574 = vshrl.u32 %v573, 7
    %v575 = vsub.s32 0, %v574
    %v576 = vrot.slane %v256, %v575
    %v577 = vlaneseq
    %v578 = vshrl.u32 %v577, 7
    %v579 = vsub.s32 0, %v578
    %v580 = vrot.slane %v260, %v579
    %v581 = vlaneseq
    %v582 = vshrl.u32 %v581, 7
    %v583 = vsub.s32 0, %v582
    %v584 = vrot.slane %v264, %v583
    %v585 = vlaneseq
    %v586 = vshrl.u32 %v585, 7
    %v587 = vsub.s32 0, %v586
    %v588 = vrot.slane %v268, %v587
    %v589 = vlaneseq
    %v590 = vshrl.u32 %v589, 7
    %v591 = vsub.s32 0, %v590
    %v592 = vrot.slane %v272, %v591
    %v593 = vlaneseq
    %v594 = vshrl.u32 %v593, 7
    %v595 = vsub.s32 0, %v594
    %v596 = vrot.slane %v276, %v595
    %v597 = vlaneseq
    %v598 = vshrl.u32 %v597, 7
    %v599 = vsub.s32 0, %v598
    %v600 = vrot.slane %v280, %v599
    %v601 = vlaneseq
    %v602 = vshrl.u32 %v601, 7
    %v603 = vsub.s32 0, %v602
    %v604 = vrot.slane %v284, %v603
    %v605 = vlaneseq
    %v606 = vshrl.u32 %v605, 7
    %v607 = vsub.s32 0, %v606
    %v608 = vrot.slane %v288, %v607
    %v609 = vlaneseq
    %v610 = vshrl.u32 %v609, 7
    %v611 = vsub.s32 0, %v610
    %v612 = vrot.slane %v292, %v611
    %v613 = vlaneseq
    %v614 = vshrl.u32 %v613, 7
    %v615 = vsub.s32 0, %v614
    %v616 = vrot.slane %v296, %v615
    %v617 = vlaneseq
    %v618 = vshrl.u32 %v617, 7
    %v619 = vsub.s32 0, %v618
    %v620 = vrot.slane %v300, %v619
    %v621 = vlaneseq
    %v622 = vshrl.u32 %v621, 7
    %v623 = vsub.s32 0, %v622
    %v624 = vrot.slane %v304, %v623
    %v625 = vlaneseq
    %v626 = vshrl.u32 %v625, 7
    %v627 = vsub.s32 0, %v626
    %v628 = vrot.slane %v308, %v627
    %v629 = vlaneseq
    %v630 = vshrl.u32 %v629, 7
    %v631 = vsub.s32 0, %v630
    %v632 = vrot.slane %v312, %v631
    %v633 = vlaneseq
    %v634 = vshrl.u32 %v633, 7
    %v635 = vsub.s32 0, %v634
    %v636 = vrot.slane %v316, %v635
    %v637 = vlaneseq
    %v638 = vshrl.u32 %v637, 7
    %v639 = vsub.s32 0, %v638
    %v640 = vrot.slane %v320, %v639
    %v641 = vlaneseq
    %v642 = vshrl.u32 %v641, 7
    %v643 = vsub.s32 0, %v642
    %v644 = vrot.slane %v324, %v643
    %v645 = vlaneseq
    %v646 = vshrl.u32 %v645, 7
    %v647 = vsub.s32 0, %v646
    %v648 = vrot.slane %v328, %v647
    %v649 = vlaneseq
    %v650 = vshrl.u32 %v649, 7
    %v651 = vsub.s32 0, %v650
    %v652 = vrot.slane %v332, %v651
    %v653 = vlaneseq
    %v654 = vshrl.u32 %v653, 7
    %v655 = vsub.s32 0, %v654
    %v656 = vrot.slane %v336, %v655
    %v657 = vlaneseq
    %v658 = vshrl.u32 %v657, 7
    %v659 = vsub.s32 0, %v658
    %v660 = vrot.slane %v340, %v659
    %v661 = vlaneseq
    %v662 = vshrl.u32 %v661, 7
    %v663 = vsub.s32 0, %v662
    %v664 = vrot.slane %v344, %v663
    %v665 = vlaneseq
    %v666 = vshrl.u32 %v665, 7
    %v667 = vsub.s32 0, %v666
    %v668 = vrot.slane %v348, %v667
    %v669 = vlaneseq
    %v670 = vshrl.u32 %v669, 7
    %v671 = vsub.s32 0, %v670
    %v672 = vrot.slane %v352, %v671
    %v673 = vlaneseq
    %v674 = vshrl.u32 %v673, 7
    %v675 = vsub.s32 0, %v674
    %v676 = vrot.slane %v356, %v675
    %v677 = vlaneseq
    %v678 = vshrl.u32 %v677, 7
    %v679 = vsub.s32 0, %v678
    %v680 = vrot.slane %v360, %v679
    %v681 = vlaneseq
    %v682 = vshrl.u32 %v681, 7
    %v683 = vsub.s32 0, %v682
    %v684 = vrot.slane %v364, %v683
    %v685 = vlaneseq
    %v686 = vshrl.u32 %v685, 7
    %v687 = vsub.s32 0, %v686
    %v688 = vrot.slane %v368, %v687
    %v689 = vlaneseq
    %v690 = vshrl.u32 %v689, 7
    %v691 = vsub.s32 0, %v690
    %v692 = vrot.slane %v372, %v691
    %v693 = vlaneseq
    %v694 = vshrl.u32 %v693, 7
    %v695 = vsub.s32 0, %v694
    %v696 = vrot.slane %v376, %v695
    %v697 = vlaneseq
    %v698 = vshrl.u32 %v697, 7
    %v699 = vsub.s32 0, %v698
    %v700 = vrot.slane %v380, %v699
    %v701 = vlaneseq
    %v702 = vshrl.u32 %v701, 7
    %v703 = vsub.s32 0, %v702
    %v704 = vrot.slane %v384, %v703
    %v705 = vmul.f32 %v80, %v452
    %v706 = vmul.f32 %v80, %v456
    %v707 = vmul.f32 %v80, %v460
    %v708 = vmul.f32 %v80, %v464
    %v709 = vmul.f32 %v80, %v468
    %v710 = vmul.f32 %v80, %v472
    %v711 = vmul.f32 %v80, %v476
    %v712 = vmul.f32 %v80, %v480
    %v713 = vmul.f32 %v80, %v484
    %v714 = vmul.f32 %v80, %v488
    %v715 = vmul.f32 %v80, %v492
    %v716 = vmul.f32 %v80, %v496
    %v717 = vmul.f32 %v80, %v500
    %v718 = vmul.f32 %v80, %v504
    %v719 = vmul.f32 %v80, %v508
    %v720 = vmul.f32 %v80, %v512
    %v721 = vmul.f32 %v80, %v516
    %v722 = vmul.f32 %v80, %v520
    %v723 = vmul.f32 %v80, %v524
    %v724 = vmul.f32 %v80, %v528
    %v725 = vmul.f32 %v80, %v532
    %v726 = vmul.f32 %v80, %v536
    %v727 = vmul.f32 %v80, %v540
    %v728 = vmul.f32 %v80, %v544
    %v729 = vmul.f32 %v80, %v548
    %v730 = vmul.f32 %v80, %v552
    %v731 = vmul.f32 %v80, %v556
    %v732 = vmul.f32 %v80, %v560
    %v733 = vmul.f32 %v80, %v564
    %v734 = vmul.f32 %v80, %v568
    %v735 = vmul.f32 %v80, %v572
    %v736 = vmul.f32 %v80, %v576
    %v737 = vmul.f32 %v80, %v580
    %v738 = vmul.f32 %v80, %v584
    %v739 = vmul.f32 %v80, %v588
    %v740 = vmul.f32 %v80, %v592
    %v741 = vmul.f32 %v80, %v596
    %v742 = vmul.f32 %v80, %v600
    %v743 = vmul.f32 %v80, %v604
    %v744 = vmul.f32 %v80, %v608
    %v745 = vmul.f32 %v80, %v612
    %v746 = vmul.f32 %v80, %v616
    %v747 = vmul.f32 %v80, %v620
    %v748 = vmul.f32 %v80, %v624
    %v749 = vmul.f32 %v80, %v628
    %v750 = vmul.f32 %v80, %v632
    %v751 = vmul.f32 %v80, %v636
    %v752 = vmul.f32 %v80, %v640
    %v753 = vmul.f32 %v80, %v644
    %v754 = vmul.f32 %v80, %v648
    %v755 = vmul.f32 %v80, %v652
    %v756 = vmul.f32 %v80, %v656
    %v757 = vmul.f32 %v80, %v660
    %v758 = vmul.f32 %v80, %v664
    %v759 = vmul.f32 %v80, %v668
    %v760 = vmul.f32 %v80, %v672
    %v761 = vmul.f32 %v80, %v676
    %v762 = vmul.f32 %v80, %v680
    %v763 = vmul.f32 %v80, %v684
    %v764 = vmul.f32 %v80, %v688
    %v765 = vmul.f32 %v80, %v692
    %v766 = vmul.f32 %v80, %v696
    %v767 = vmul.f32 %v80, %v700
    %v768 = vmul.f32 %v80, %v704
    %v769 = vmul.f32 %v85, %v452
    %v770 = vmul.f32 %v85, %v456
    %v771 = vmul.f32 %v85, %v460
    %v772 = vmul.f32 %v85, %v464
    %v773 = vmul.f32 %v85, %v468
    %v774 = vmul.f32 %v85, %v472
    %v775 = vmul.f32 %v85, %v476
    %v776 = vmul.f32 %v85, %v480
    %v777 = vmul.f32 %v85, %v484
    %v778 = vmul.f32 %v85, %v488
    %v779 = vmul.f32 %v85, %v492
    %v780 = vmul.f32 %v85, %v496
    %v781 = vmul.f32 %v85, %v500
    %v782 = vmul.f32 %v85, %v504
    %v783 = vmul.f32 %v85, %v508
    %v784 = vmul.f32 %v85, %v512
    %v785 = vmul.f32 %v85, %v516
    %v786 = vmul.f32 %v85, %v520
    %v787 = vmul.f32 %v85, %v524
    %v788 = vmul.f32 %v85, %v528
    %v789 = vmul.f32 %v85, %v532
    %v790 = vmul.f32 %v85, %v536
    %v791 = vmul.f32 %v85, %v540
    %v792 = vmul.f32 %v85, %v544
    %v793 = vmul.f32 %v85, %v548
    %v794 = vmul.f32 %v85, %v552
    %v795 = vmul.f32 %v85, %v556
    %v796 = vmul.f32 %v85, %v560
    %v797 = vmul.f32 %v85, %v564
    %v798 = vmul.f32 %v85, %v568
    %v799 = vmul.f32 %v85, %v572
    %v800 = vmul.f32 %v85, %v576
    %v801 = vmul.f32 %v85, %v580
    %v802 = vmul.f32 %v85, %v584
    %v803 = vmul.f32 %v85, %v588
    %v804 = vmul.f32 %v85, %v592
    %v805 = vmul.f32 %v85, %v596
    %v806 = vmul.f32 %v85, %v600
    %v807 = vmul.f32 %v85, %v604
    %v808 = vmul.f32 %v85, %v608
    %v809 = vmul.f32 %v85, %v612
    %v810 = vmul.f32 %v85, %v616
    %v811 = vmul.f32 %v85, %v620
    %v812 = vmul.f32 %v85, %v624
    %v813 = vmul.f32 %v85, %v628
    %v814 = vmul.f32 %v85, %v632
    %v815 = vmul.f32 %v85, %v636
    %v816 = vmul.f32 %v85, %v640
    %v817 = vmul.f32 %v85, %v644
    %v818 = vmul.f32 %v85, %v648
    %v819 = vmul.f32 %v85, %v652
    %v820 = vmul.f32 %v85, %v656
    %v821 = vmul.f32 %v85, %v660
    %v822 = vmul.f32 %v85, %v664
    %v823 = vmul.f32 %v85, %v668
    %v824 = vmul.f32 %v85, %v672
    %v825 = vmul.f32 %v85, %v676
    %v826 = vmul.f32 %v85, %v680
    %v827 = vmul.f32 %v85, %v684
    %v828 = vmul.f32 %v85, %v688
    %v829 = vmul.f32 %v85, %v692
    %v830 = vmul.f32 %v85, %v696
    %v831 = vmul.f32 %v85, %v700
    %v832 = vmul.f32 %v85, %v704
    %v833 = vmul.f32 %v90, %v452
    %v834 = vmul.f32 %v90, %v456
    %v835 = vmul.f32 %v90, %v460
    %v836 = vmul.f32 %v90, %v464
    %v837 = vmul.f32 %v90, %v468
    %v838 = vmul.f32 %v90, %v472
    %v839 = vmul.f32 %v90, %v476
    %v840 = vmul.f32 %v90, %v480
    %v841 = vmul.f32 %v90, %v484
    %v842 = vmul.f32 %v90, %v488
    %v843 = vmul.f32 %v90, %v492
    %v844 = vmul.f32 %v90, %v496
    %v845 = vmul.f32 %v90, %v500
    %v846 = vmul.f32 %v90, %v504
    %v847 = vmul.f32 %v90, %v508
    %v848 = vmul.f32 %v90, %v512
    %v849 = vmul.f32 %v90, %v516
    %v850 = vmul.f32 %v90, %v520
    %v851 = vmul.f32 %v90, %v524
    %v852 = vmul.f32 %v90, %v528
    %v853 = vmul.f32 %v90, %v532
    %v854 = vmul.f32 %v90, %v536
    %v855 = vmul.f32 %v90, %v540
    %v856 = vmul.f32 %v90, %v544
    %v857 = vmul.f32 %v90, %v548
    %v858 = vmul.f32 %v90, %v552
    %v859 = vmul.f32 %v90, %v556
    %v860 = vmul.f32 %v90, %v560
    %v861 = vmul.f32 %v90, %v564
    %v862 = vmul.f32 %v90, %v568
    %v863 = vmul.f32 %v90, %v572
    %v864 = vmul.f32 %v90, %v576
    %v865 = vmul.f32 %v90, %v580
    %v866 = vmul.f32 %v90, %v584
    %v867 = vmul.f32 %v90, %v588
    %v868 = vmul.f32 %v90, %v592
    %v869 = vmul.f32 %v90, %v596
    %v870 = vmul.f32 %v90, %v600
    %v871 = vmul.f32 %v90, %v604
    %v872 = vmul.f32 %v90, %v608
    %v873 = vmul.f32 %v90, %v612
    %v874 = vmul.f32 %v90, %v616
    %v875 = vmul.f32 %v90, %v620
    %v876 = vmul.f32 %v90, %v624
    %v877 = vmul.f32 %v90, %v628
    %v878 = vmul.f32 %v90, %v632
    %v879 = vmul.f32 %v90, %v636
    %v880 = vmul.f32 %v90, %v640
    %v881 = vmul.f32 %v90, %v644
    %v882 = vmul.f32 %v90, %v648
    %v883 = vmul.f32 %v90, %v652
    %v884 = vmul.f32 %v90, %v656
    %v885 = vmul.f32 %v90, %v660
    %v886 = vmul.f32 %v90, %v664
    %v887 = vmul.f32 %v90, %v668
    %v888 = vmul.f32 %v90, %v672
    %v889 = vmul.f32 %v90, %v676
    %v890 = vmul.f32 %v90, %v680
    %v891 = vmul.f32 %v90, %v684
    %v892 = vmul.f32 %v90, %v688
    %v893 = vmul.f32 %v90, %v692
    %v894 = vmul.f32 %v90, %v696
    %v895 = vmul.f32 %v90, %v700
    %v896 = vmul.f32 %v90, %v704
    %v897 = vmul.f32 %v95, %v452
    %v898 = vmul.f32 %v95, %v456
    %v899 = vmul.f32 %v95, %v460
    %v900 = vmul.f32 %v95, %v464
    %v901 = vmul.f32 %v95, %v468
    %v902 = vmul.f32 %v95, %v472
    %v903 = vmul.f32 %v95, %v476
    %v904 = vmul.f32 %v95, %v480
    %v905 = vmul.f32 %v95, %v484
    %v906 = vmul.f32 %v95, %v488
    %v907 = vmul.f32 %v95, %v492
    %v908 = vmul.f32 %v95, %v496
    %v909 = vmul.f32 %v95, %v500
    %v910 = vmul.f32 %v95, %v504
    %v911 = vmul.f32 %v95, %v508
    %v912 = vmul.f32 %v95, %v512
    %v913 = vmul.f32 %v95, %v516
    %v914 = vmul.f32 %v95, %v520
    %v915 = vmul.f32 %v95, %v524
    %v916 = vmul.f32 %v95, %v528
    %v917 = vmul.f32 %v95, %v532
    %v918 = vmul.f32 %v95, %v536
    %v919 = vmul.f32 %v95, %v540
    %v920 = vmul.f32 %v95, %v544
    %v921 = vmul.f32 %v95, %v548
    %v922 = vmul.f32 %v95, %v552
    %v923 = vmul.f32 %v95, %v556
    %v924 = vmul.f32 %v95, %v560
    %v925 = vmul.f32 %v95, %v564
    %v926 = vmul.f32 %v95, %v568
    %v927 = vmul.f32 %v95, %v572
    %v928 = vmul.f32 %v95, %v576
    %v929 = vmul.f32 %v95, %v580
    %v930 = vmul.f32 %v95, %v584
    %v931 = vmul.f32 %v95, %v588
    %v932 = vmul.f32 %v95, %v592
    %v933 = vmul.f32 %v95, %v596
    %v934 = vmul.f32 %v95, %v600
    %v935 = vmul.f32 %v95, %v604
    %v936 = vmul.f32 %v95, %v608
    %v937 = vmul.f32 %v95, %v612
    %v938 = vmul.f32 %v95, %v616
    %v939 = vmul.f32 %v95, %v620
    %v940 = vmul.f32 %v95, %v624
    %v941 = vmul.f32 %v95, %v628
    %v942 = vmul.f32 %v95, %v632
    %v943 = vmul.f32 %v95, %v636
    %v944 = vmul.f32 %v95, %v640
    %v945 = vmul.f32 %v95, %v644
    %v946 = vmul.f32 %v95, %v648
    %v947 = vmul.f32 %v95, %v652
    %v948 = vmul.f32 %v95, %v656
    %v949 = vmul.f32 %v95, %v660
    %v950 = vmul.f32 %v95, %v664
    %v951 = vmul.f32 %v95, %v668
    %v952 = vmul.f32 %v95, %v672
    %v953 = vmul.f32 %v95, %v676
    %v954 = vmul.f32 %v95, %v680
    %v955 = vmul.f32 %v95, %v684
    %v956 = vmul.f32 %v95, %v688
    %v957 = vmul.f32 %v95, %v692
    %v958 = vmul.f32 %v95, %v696
    %v959 = vmul.f32 %v95, %v700
    %v960 = vmul.f32 %v95, %v704
    %961 = vset.pattern.permute.xlu0 1
    %962 = vperm.xlu0 %961, %v73
    %v963 = vpop.permute.xlu0 %962
    %965 = vset.pattern.permute.xlu0 1
    %966 = vperm.xlu0 %965, %v74
    %v967 = vpop.permute.xlu0 %966
    %969 = vset.pattern.permute.xlu0 1
    %970 = vperm.xlu0 %969, %v75
    %v971 = vpop.permute.xlu0 %970
    %973 = vset.pattern.permute.xlu0 1
    %974 = vperm.xlu0 %973, %v76
    %v975 = vpop.permute.xlu0 %974
    %v977 = vlaneseq
    %v978 = vshrl.u32 %v977, 7
    %v979 = vsub.s32 1, %v978
    %v980 = vrot.slane %v41, %v979
    %v981 = vlaneseq
    %v982 = vshrl.u32 %v981, 7
    %v983 = vsub.s32 5, %v982
    %v984 = vrot.slane %v41, %v983
    %v985 = vlaneseq
    %v986 = vshrl.u32 %v985, 7
    %v987 = vsub.s32 1, %v986
    %v988 = vrot.slane %v42, %v987
    %v989 = vlaneseq
    %v990 = vshrl.u32 %v989, 7
    %v991 = vsub.s32 5, %v990
    %v992 = vrot.slane %v42, %v991
    %v993 = vlaneseq
    %v994 = vshrl.u32 %v993, 7
    %v995 = vsub.s32 1, %v994
    %v996 = vrot.slane %v43, %v995
    %v997 = vlaneseq
    %v998 = vshrl.u32 %v997, 7
    %v999 = vsub.s32 5, %v998
    %v1000 = vrot.slane %v43, %v999
    %v1001 = vlaneseq
    %v1002 = vshrl.u32 %v1001, 7
    %v1003 = vsub.s32 1, %v1002
    %v1004 = vrot.slane %v44, %v1003
    %v1005 = vlaneseq
    %v1006 = vshrl.u32 %v1005, 7
    %v1007 = vsub.s32 5, %v1006
    %v1008 = vrot.slane %v44, %v1007
    %v1009 = vlaneseq
    %v1010 = vshrl.u32 %v1009, 7
    %v1011 = vsub.s32 1, %v1010
    %v1012 = vrot.slane %v45, %v1011
    %v1013 = vlaneseq
    %v1014 = vshrl.u32 %v1013, 7
    %v1015 = vsub.s32 5, %v1014
    %v1016 = vrot.slane %v45, %v1015
    %v1017 = vlaneseq
    %v1018 = vshrl.u32 %v1017, 7
    %v1019 = vsub.s32 1, %v1018
    %v1020 = vrot.slane %v46, %v1019
    %v1021 = vlaneseq
    %v1022 = vshrl.u32 %v1021, 7
    %v1023 = vsub.s32 5, %v1022
    %v1024 = vrot.slane %v46, %v1023
    %v1025 = vlaneseq
    %v1026 = vshrl.u32 %v1025, 7
    %v1027 = vsub.s32 1, %v1026
    %v1028 = vrot.slane %v47, %v1027
    %v1029 = vlaneseq
    %v1030 = vshrl.u32 %v1029, 7
    %v1031 = vsub.s32 5, %v1030
    %v1032 = vrot.slane %v47, %v1031
    %v1033 = vlaneseq
    %v1034 = vshrl.u32 %v1033, 7
    %v1035 = vsub.s32 1, %v1034
    %v1036 = vrot.slane %v48, %v1035
    %v1037 = vlaneseq
    %v1038 = vshrl.u32 %v1037, 7
    %v1039 = vsub.s32 5, %v1038
    %v1040 = vrot.slane %v48, %v1039
    %v1041 = vlaneseq
    %v1042 = vshrl.u32 %v1041, 7
    %v1043 = vsub.s32 1, %v1042
    %v1044 = vrot.slane %v49, %v1043
    %v1045 = vlaneseq
    %v1046 = vshrl.u32 %v1045, 7
    %v1047 = vsub.s32 5, %v1046
    %v1048 = vrot.slane %v49, %v1047
    %v1049 = vlaneseq
    %v1050 = vshrl.u32 %v1049, 7
    %v1051 = vsub.s32 1, %v1050
    %v1052 = vrot.slane %v50, %v1051
    %v1053 = vlaneseq
    %v1054 = vshrl.u32 %v1053, 7
    %v1055 = vsub.s32 5, %v1054
    %v1056 = vrot.slane %v50, %v1055
    %v1057 = vlaneseq
    %v1058 = vshrl.u32 %v1057, 7
    %v1059 = vsub.s32 1, %v1058
    %v1060 = vrot.slane %v51, %v1059
    %v1061 = vlaneseq
    %v1062 = vshrl.u32 %v1061, 7
    %v1063 = vsub.s32 5, %v1062
    %v1064 = vrot.slane %v51, %v1063
    %v1065 = vlaneseq
    %v1066 = vshrl.u32 %v1065, 7
    %v1067 = vsub.s32 1, %v1066
    %v1068 = vrot.slane %v52, %v1067
    %v1069 = vlaneseq
    %v1070 = vshrl.u32 %v1069, 7
    %v1071 = vsub.s32 5, %v1070
    %v1072 = vrot.slane %v52, %v1071
    %v1073 = vlaneseq
    %v1074 = vshrl.u32 %v1073, 7
    %v1075 = vsub.s32 1, %v1074
    %v1076 = vrot.slane %v53, %v1075
    %v1077 = vlaneseq
    %v1078 = vshrl.u32 %v1077, 7
    %v1079 = vsub.s32 5, %v1078
    %v1080 = vrot.slane %v53, %v1079
    %v1081 = vlaneseq
    %v1082 = vshrl.u32 %v1081, 7
    %v1083 = vsub.s32 1, %v1082
    %v1084 = vrot.slane %v54, %v1083
    %v1085 = vlaneseq
    %v1086 = vshrl.u32 %v1085, 7
    %v1087 = vsub.s32 5, %v1086
    %v1088 = vrot.slane %v54, %v1087
    %v1089 = vlaneseq
    %v1090 = vshrl.u32 %v1089, 7
    %v1091 = vsub.s32 1, %v1090
    %v1092 = vrot.slane %v55, %v1091
    %v1093 = vlaneseq
    %v1094 = vshrl.u32 %v1093, 7
    %v1095 = vsub.s32 5, %v1094
    %v1096 = vrot.slane %v55, %v1095
    %v1097 = vlaneseq
    %v1098 = vshrl.u32 %v1097, 7
    %v1099 = vsub.s32 1, %v1098
    %v1100 = vrot.slane %v56, %v1099
    %v1101 = vlaneseq
    %v1102 = vshrl.u32 %v1101, 7
    %v1103 = vsub.s32 5, %v1102
    %v1104 = vrot.slane %v56, %v1103
    %v1105 = vlaneseq
    %v1106 = vshrl.u32 %v1105, 7
    %v1107 = vsub.s32 1, %v1106
    %v1108 = vrot.slane %v57, %v1107
    %v1109 = vlaneseq
    %v1110 = vshrl.u32 %v1109, 7
    %v1111 = vsub.s32 5, %v1110
    %v1112 = vrot.slane %v57, %v1111
    %v1113 = vlaneseq
    %v1114 = vshrl.u32 %v1113, 7
    %v1115 = vsub.s32 1, %v1114
    %v1116 = vrot.slane %v58, %v1115
    %v1117 = vlaneseq
    %v1118 = vshrl.u32 %v1117, 7
    %v1119 = vsub.s32 5, %v1118
    %v1120 = vrot.slane %v58, %v1119
    %v1121 = vlaneseq
    %v1122 = vshrl.u32 %v1121, 7
    %v1123 = vsub.s32 1, %v1122
    %v1124 = vrot.slane %v59, %v1123
    %v1125 = vlaneseq
    %v1126 = vshrl.u32 %v1125, 7
    %v1127 = vsub.s32 5, %v1126
    %v1128 = vrot.slane %v59, %v1127
    %v1129 = vlaneseq
    %v1130 = vshrl.u32 %v1129, 7
    %v1131 = vsub.s32 1, %v1130
    %v1132 = vrot.slane %v60, %v1131
    %v1133 = vlaneseq
    %v1134 = vshrl.u32 %v1133, 7
    %v1135 = vsub.s32 5, %v1134
    %v1136 = vrot.slane %v60, %v1135
    %v1137 = vlaneseq
    %v1138 = vshrl.u32 %v1137, 7
    %v1139 = vsub.s32 1, %v1138
    %v1140 = vrot.slane %v61, %v1139
    %v1141 = vlaneseq
    %v1142 = vshrl.u32 %v1141, 7
    %v1143 = vsub.s32 5, %v1142
    %v1144 = vrot.slane %v61, %v1143
    %v1145 = vlaneseq
    %v1146 = vshrl.u32 %v1145, 7
    %v1147 = vsub.s32 1, %v1146
    %v1148 = vrot.slane %v62, %v1147
    %v1149 = vlaneseq
    %v1150 = vshrl.u32 %v1149, 7
    %v1151 = vsub.s32 5, %v1150
    %v1152 = vrot.slane %v62, %v1151
    %v1153 = vlaneseq
    %v1154 = vshrl.u32 %v1153, 7
    %v1155 = vsub.s32 1, %v1154
    %v1156 = vrot.slane %v63, %v1155
    %v1157 = vlaneseq
    %v1158 = vshrl.u32 %v1157, 7
    %v1159 = vsub.s32 5, %v1158
    %v1160 = vrot.slane %v63, %v1159
    %v1161 = vlaneseq
    %v1162 = vshrl.u32 %v1161, 7
    %v1163 = vsub.s32 1, %v1162
    %v1164 = vrot.slane %v64, %v1163
    %v1165 = vlaneseq
    %v1166 = vshrl.u32 %v1165, 7
    %v1167 = vsub.s32 5, %v1166
    %v1168 = vrot.slane %v64, %v1167
    %v1169 = vlaneseq
    %v1170 = vshrl.u32 %v1169, 7
    %v1171 = vsub.s32 1, %v1170
    %v1172 = vrot.slane %v65, %v1171
    %v1173 = vlaneseq
    %v1174 = vshrl.u32 %v1173, 7
    %v1175 = vsub.s32 5, %v1174
    %v1176 = vrot.slane %v65, %v1175
    %v1177 = vlaneseq
    %v1178 = vshrl.u32 %v1177, 7
    %v1179 = vsub.s32 1, %v1178
    %v1180 = vrot.slane %v66, %v1179
    %v1181 = vlaneseq
    %v1182 = vshrl.u32 %v1181, 7
    %v1183 = vsub.s32 5, %v1182
    %v1184 = vrot.slane %v66, %v1183
    %v1185 = vlaneseq
    %v1186 = vshrl.u32 %v1185, 7
    %v1187 = vsub.s32 1, %v1186
    %v1188 = vrot.slane %v67, %v1187
    %v1189 = vlaneseq
    %v1190 = vshrl.u32 %v1189, 7
    %v1191 = vsub.s32 5, %v1190
    %v1192 = vrot.slane %v67, %v1191
    %v1193 = vlaneseq
    %v1194 = vshrl.u32 %v1193, 7
    %v1195 = vsub.s32 1, %v1194
    %v1196 = vrot.slane %v68, %v1195
    %v1197 = vlaneseq
    %v1198 = vshrl.u32 %v1197, 7
    %v1199 = vsub.s32 5, %v1198
    %v1200 = vrot.slane %v68, %v1199
    %v1201 = vlaneseq
    %v1202 = vshrl.u32 %v1201, 7
    %v1203 = vsub.s32 1, %v1202
    %v1204 = vrot.slane %v69, %v1203
    %v1205 = vlaneseq
    %v1206 = vshrl.u32 %v1205, 7
    %v1207 = vsub.s32 5, %v1206
    %v1208 = vrot.slane %v69, %v1207
    %v1209 = vlaneseq
    %v1210 = vshrl.u32 %v1209, 7
    %v1211 = vsub.s32 1, %v1210
    %v1212 = vrot.slane %v70, %v1211
    %v1213 = vlaneseq
    %v1214 = vshrl.u32 %v1213, 7
    %v1215 = vsub.s32 5, %v1214
    %v1216 = vrot.slane %v70, %v1215
    %v1217 = vlaneseq
    %v1218 = vshrl.u32 %v1217, 7
    %v1219 = vsub.s32 1, %v1218
    %v1220 = vrot.slane %v71, %v1219
    %v1221 = vlaneseq
    %v1222 = vshrl.u32 %v1221, 7
    %v1223 = vsub.s32 5, %v1222
    %v1224 = vrot.slane %v71, %v1223
    %v1225 = vlaneseq
    %v1226 = vshrl.u32 %v1225, 7
    %v1227 = vsub.s32 1, %v1226
    %v1228 = vrot.slane %v72, %v1227
    %v1229 = vlaneseq
    %v1230 = vshrl.u32 %v1229, 7
    %v1231 = vsub.s32 5, %v1230
    %v1232 = vrot.slane %v72, %v1231
    %v1297 = vlaneseq
    %v1298 = vshrl.u32 %v1297, 7
    %v1299 = vsub.s32 1, %v1298
    %v1300 = vrot.slane %v980, %v1299
    %v1301 = vlaneseq
    %v1302 = vshrl.u32 %v1301, 7
    %v1303 = vsub.s32 1, %v1302
    %v1304 = vrot.slane %v984, %v1303
    %v1305 = vlaneseq
    %v1306 = vshrl.u32 %v1305, 7
    %v1307 = vsub.s32 1, %v1306
    %v1308 = vrot.slane %v988, %v1307
    %v1309 = vlaneseq
    %v1310 = vshrl.u32 %v1309, 7
    %v1311 = vsub.s32 1, %v1310
    %v1312 = vrot.slane %v992, %v1311
    %v1313 = vlaneseq
    %v1314 = vshrl.u32 %v1313, 7
    %v1315 = vsub.s32 1, %v1314
    %v1316 = vrot.slane %v996, %v1315
    %v1317 = vlaneseq
    %v1318 = vshrl.u32 %v1317, 7
    %v1319 = vsub.s32 1, %v1318
    %v1320 = vrot.slane %v1000, %v1319
    %v1321 = vlaneseq
    %v1322 = vshrl.u32 %v1321, 7
    %v1323 = vsub.s32 1, %v1322
    %v1324 = vrot.slane %v1004, %v1323
    %v1325 = vlaneseq
    %v1326 = vshrl.u32 %v1325, 7
    %v1327 = vsub.s32 1, %v1326
    %v1328 = vrot.slane %v1008, %v1327
    %v1329 = vlaneseq
    %v1330 = vshrl.u32 %v1329, 7
    %v1331 = vsub.s32 1, %v1330
    %v1332 = vrot.slane %v1012, %v1331
    %v1333 = vlaneseq
    %v1334 = vshrl.u32 %v1333, 7
    %v1335 = vsub.s32 1, %v1334
    %v1336 = vrot.slane %v1016, %v1335
    %v1337 = vlaneseq
    %v1338 = vshrl.u32 %v1337, 7
    %v1339 = vsub.s32 1, %v1338
    %v1340 = vrot.slane %v1020, %v1339
    %v1341 = vlaneseq
    %v1342 = vshrl.u32 %v1341, 7
    %v1343 = vsub.s32 1, %v1342
    %v1344 = vrot.slane %v1024, %v1343
    %v1345 = vlaneseq
    %v1346 = vshrl.u32 %v1345, 7
    %v1347 = vsub.s32 1, %v1346
    %v1348 = vrot.slane %v1028, %v1347
    %v1349 = vlaneseq
    %v1350 = vshrl.u32 %v1349, 7
    %v1351 = vsub.s32 1, %v1350
    %v1352 = vrot.slane %v1032, %v1351
    %v1353 = vlaneseq
    %v1354 = vshrl.u32 %v1353, 7
    %v1355 = vsub.s32 1, %v1354
    %v1356 = vrot.slane %v1036, %v1355
    %v1357 = vlaneseq
    %v1358 = vshrl.u32 %v1357, 7
    %v1359 = vsub.s32 1, %v1358
    %v1360 = vrot.slane %v1040, %v1359
    %v1361 = vlaneseq
    %v1362 = vshrl.u32 %v1361, 7
    %v1363 = vsub.s32 1, %v1362
    %v1364 = vrot.slane %v1044, %v1363
    %v1365 = vlaneseq
    %v1366 = vshrl.u32 %v1365, 7
    %v1367 = vsub.s32 1, %v1366
    %v1368 = vrot.slane %v1048, %v1367
    %v1369 = vlaneseq
    %v1370 = vshrl.u32 %v1369, 7
    %v1371 = vsub.s32 1, %v1370
    %v1372 = vrot.slane %v1052, %v1371
    %v1373 = vlaneseq
    %v1374 = vshrl.u32 %v1373, 7
    %v1375 = vsub.s32 1, %v1374
    %v1376 = vrot.slane %v1056, %v1375
    %v1377 = vlaneseq
    %v1378 = vshrl.u32 %v1377, 7
    %v1379 = vsub.s32 1, %v1378
    %v1380 = vrot.slane %v1060, %v1379
    %v1381 = vlaneseq
    %v1382 = vshrl.u32 %v1381, 7
    %v1383 = vsub.s32 1, %v1382
    %v1384 = vrot.slane %v1064, %v1383
    %v1385 = vlaneseq
    %v1386 = vshrl.u32 %v1385, 7
    %v1387 = vsub.s32 1, %v1386
    %v1388 = vrot.slane %v1068, %v1387
    %v1389 = vlaneseq
    %v1390 = vshrl.u32 %v1389, 7
    %v1391 = vsub.s32 1, %v1390
    %v1392 = vrot.slane %v1072, %v1391
    %v1393 = vlaneseq
    %v1394 = vshrl.u32 %v1393, 7
    %v1395 = vsub.s32 1, %v1394
    %v1396 = vrot.slane %v1076, %v1395
    %v1397 = vlaneseq
    %v1398 = vshrl.u32 %v1397, 7
    %v1399 = vsub.s32 1, %v1398
    %v1400 = vrot.slane %v1080, %v1399
    %v1401 = vlaneseq
    %v1402 = vshrl.u32 %v1401, 7
    %v1403 = vsub.s32 1, %v1402
    %v1404 = vrot.slane %v1084, %v1403
    %v1405 = vlaneseq
    %v1406 = vshrl.u32 %v1405, 7
    %v1407 = vsub.s32 1, %v1406
    %v1408 = vrot.slane %v1088, %v1407
    %v1409 = vlaneseq
    %v1410 = vshrl.u32 %v1409, 7
    %v1411 = vsub.s32 1, %v1410
    %v1412 = vrot.slane %v1092, %v1411
    %v1413 = vlaneseq
    %v1414 = vshrl.u32 %v1413, 7
    %v1415 = vsub.s32 1, %v1414
    %v1416 = vrot.slane %v1096, %v1415
    %v1417 = vlaneseq
    %v1418 = vshrl.u32 %v1417, 7
    %v1419 = vsub.s32 1, %v1418
    %v1420 = vrot.slane %v1100, %v1419
    %v1421 = vlaneseq
    %v1422 = vshrl.u32 %v1421, 7
    %v1423 = vsub.s32 1, %v1422
    %v1424 = vrot.slane %v1104, %v1423
    %v1425 = vlaneseq
    %v1426 = vshrl.u32 %v1425, 7
    %v1427 = vsub.s32 1, %v1426
    %v1428 = vrot.slane %v1108, %v1427
    %v1429 = vlaneseq
    %v1430 = vshrl.u32 %v1429, 7
    %v1431 = vsub.s32 1, %v1430
    %v1432 = vrot.slane %v1112, %v1431
    %v1433 = vlaneseq
    %v1434 = vshrl.u32 %v1433, 7
    %v1435 = vsub.s32 1, %v1434
    %v1436 = vrot.slane %v1116, %v1435
    %v1437 = vlaneseq
    %v1438 = vshrl.u32 %v1437, 7
    %v1439 = vsub.s32 1, %v1438
    %v1440 = vrot.slane %v1120, %v1439
    %v1441 = vlaneseq
    %v1442 = vshrl.u32 %v1441, 7
    %v1443 = vsub.s32 1, %v1442
    %v1444 = vrot.slane %v1124, %v1443
    %v1445 = vlaneseq
    %v1446 = vshrl.u32 %v1445, 7
    %v1447 = vsub.s32 1, %v1446
    %v1448 = vrot.slane %v1128, %v1447
    %v1449 = vlaneseq
    %v1450 = vshrl.u32 %v1449, 7
    %v1451 = vsub.s32 1, %v1450
    %v1452 = vrot.slane %v1132, %v1451
    %v1453 = vlaneseq
    %v1454 = vshrl.u32 %v1453, 7
    %v1455 = vsub.s32 1, %v1454
    %v1456 = vrot.slane %v1136, %v1455
    %v1457 = vlaneseq
    %v1458 = vshrl.u32 %v1457, 7
    %v1459 = vsub.s32 1, %v1458
    %v1460 = vrot.slane %v1140, %v1459
    %v1461 = vlaneseq
    %v1462 = vshrl.u32 %v1461, 7
    %v1463 = vsub.s32 1, %v1462
    %v1464 = vrot.slane %v1144, %v1463
    %v1465 = vlaneseq
    %v1466 = vshrl.u32 %v1465, 7
    %v1467 = vsub.s32 1, %v1466
    %v1468 = vrot.slane %v1148, %v1467
    %v1469 = vlaneseq
    %v1470 = vshrl.u32 %v1469, 7
    %v1471 = vsub.s32 1, %v1470
    %v1472 = vrot.slane %v1152, %v1471
    %v1473 = vlaneseq
    %v1474 = vshrl.u32 %v1473, 7
    %v1475 = vsub.s32 1, %v1474
    %v1476 = vrot.slane %v1156, %v1475
    %v1477 = vlaneseq
    %v1478 = vshrl.u32 %v1477, 7
    %v1479 = vsub.s32 1, %v1478
    %v1480 = vrot.slane %v1160, %v1479
    %v1481 = vlaneseq
    %v1482 = vshrl.u32 %v1481, 7
    %v1483 = vsub.s32 1, %v1482
    %v1484 = vrot.slane %v1164, %v1483
    %v1485 = vlaneseq
    %v1486 = vshrl.u32 %v1485, 7
    %v1487 = vsub.s32 1, %v1486
    %v1488 = vrot.slane %v1168, %v1487
    %v1489 = vlaneseq
    %v1490 = vshrl.u32 %v1489, 7
    %v1491 = vsub.s32 1, %v1490
    %v1492 = vrot.slane %v1172, %v1491
    %v1493 = vlaneseq
    %v1494 = vshrl.u32 %v1493, 7
    %v1495 = vsub.s32 1, %v1494
    %v1496 = vrot.slane %v1176, %v1495
    %v1497 = vlaneseq
    %v1498 = vshrl.u32 %v1497, 7
    %v1499 = vsub.s32 1, %v1498
    %v1500 = vrot.slane %v1180, %v1499
    %v1501 = vlaneseq
    %v1502 = vshrl.u32 %v1501, 7
    %v1503 = vsub.s32 1, %v1502
    %v1504 = vrot.slane %v1184, %v1503
    %v1505 = vlaneseq
    %v1506 = vshrl.u32 %v1505, 7
    %v1507 = vsub.s32 1, %v1506
    %v1508 = vrot.slane %v1188, %v1507
    %v1509 = vlaneseq
    %v1510 = vshrl.u32 %v1509, 7
    %v1511 = vsub.s32 1, %v1510
    %v1512 = vrot.slane %v1192, %v1511
    %v1513 = vlaneseq
    %v1514 = vshrl.u32 %v1513, 7
    %v1515 = vsub.s32 1, %v1514
    %v1516 = vrot.slane %v1196, %v1515
    %v1517 = vlaneseq
    %v1518 = vshrl.u32 %v1517, 7
    %v1519 = vsub.s32 1, %v1518
    %v1520 = vrot.slane %v1200, %v1519
    %v1521 = vlaneseq
    %v1522 = vshrl.u32 %v1521, 7
    %v1523 = vsub.s32 1, %v1522
    %v1524 = vrot.slane %v1204, %v1523
    %v1525 = vlaneseq
    %v1526 = vshrl.u32 %v1525, 7
    %v1527 = vsub.s32 1, %v1526
    %v1528 = vrot.slane %v1208, %v1527
    %v1529 = vlaneseq
    %v1530 = vshrl.u32 %v1529, 7
    %v1531 = vsub.s32 1, %v1530
    %v1532 = vrot.slane %v1212, %v1531
    %v1533 = vlaneseq
    %v1534 = vshrl.u32 %v1533, 7
    %v1535 = vsub.s32 1, %v1534
    %v1536 = vrot.slane %v1216, %v1535
    %v1537 = vlaneseq
    %v1538 = vshrl.u32 %v1537, 7
    %v1539 = vsub.s32 1, %v1538
    %v1540 = vrot.slane %v1220, %v1539
    %v1541 = vlaneseq
    %v1542 = vshrl.u32 %v1541, 7
    %v1543 = vsub.s32 1, %v1542
    %v1544 = vrot.slane %v1224, %v1543
    %v1545 = vlaneseq
    %v1546 = vshrl.u32 %v1545, 7
    %v1547 = vsub.s32 1, %v1546
    %v1548 = vrot.slane %v1228, %v1547
    %v1549 = vlaneseq
    %v1550 = vshrl.u32 %v1549, 7
    %v1551 = vsub.s32 1, %v1550
    %v1552 = vrot.slane %v1232, %v1551
    %v1553 = vmul.f32 %v963, %v1300
    %v1554 = vmul.f32 %v963, %v1304
    %v1555 = vmul.f32 %v963, %v1308
    %v1556 = vmul.f32 %v963, %v1312
    %v1557 = vmul.f32 %v963, %v1316
    %v1558 = vmul.f32 %v963, %v1320
    %v1559 = vmul.f32 %v963, %v1324
    %v1560 = vmul.f32 %v963, %v1328
    %v1561 = vmul.f32 %v963, %v1332
    %v1562 = vmul.f32 %v963, %v1336
    %v1563 = vmul.f32 %v963, %v1340
    %v1564 = vmul.f32 %v963, %v1344
    %v1565 = vmul.f32 %v963, %v1348
    %v1566 = vmul.f32 %v963, %v1352
    %v1567 = vmul.f32 %v963, %v1356
    %v1568 = vmul.f32 %v963, %v1360
    %v1569 = vmul.f32 %v963, %v1364
    %v1570 = vmul.f32 %v963, %v1368
    %v1571 = vmul.f32 %v963, %v1372
    %v1572 = vmul.f32 %v963, %v1376
    %v1573 = vmul.f32 %v963, %v1380
    %v1574 = vmul.f32 %v963, %v1384
    %v1575 = vmul.f32 %v963, %v1388
    %v1576 = vmul.f32 %v963, %v1392
    %v1577 = vmul.f32 %v963, %v1396
    %v1578 = vmul.f32 %v963, %v1400
    %v1579 = vmul.f32 %v963, %v1404
    %v1580 = vmul.f32 %v963, %v1408
    %v1581 = vmul.f32 %v963, %v1412
    %v1582 = vmul.f32 %v963, %v1416
    %v1583 = vmul.f32 %v963, %v1420
    %v1584 = vmul.f32 %v963, %v1424
    %v1585 = vmul.f32 %v963, %v1428
    %v1586 = vmul.f32 %v963, %v1432
    %v1587 = vmul.f32 %v963, %v1436
    %v1588 = vmul.f32 %v963, %v1440
    %v1589 = vmul.f32 %v963, %v1444
    %v1590 = vmul.f32 %v963, %v1448
    %v1591 = vmul.f32 %v963, %v1452
    %v1592 = vmul.f32 %v963, %v1456
    %v1593 = vmul.f32 %v963, %v1460
    %v1594 = vmul.f32 %v963, %v1464
    %v1595 = vmul.f32 %v963, %v1468
    %v1596 = vmul.f32 %v963, %v1472
    %v1597 = vmul.f32 %v963, %v1476
    %v1598 = vmul.f32 %v963, %v1480
    %v1599 = vmul.f32 %v963, %v1484
    %v1600 = vmul.f32 %v963, %v1488
    %v1601 = vmul.f32 %v963, %v1492
    %v1602 = vmul.f32 %v963, %v1496
    %v1603 = vmul.f32 %v963, %v1500
    %v1604 = vmul.f32 %v963, %v1504
    %v1605 = vmul.f32 %v963, %v1508
    %v1606 = vmul.f32 %v963, %v1512
    %v1607 = vmul.f32 %v963, %v1516
    %v1608 = vmul.f32 %v963, %v1520
    %v1609 = vmul.f32 %v963, %v1524
    %v1610 = vmul.f32 %v963, %v1528
    %v1611 = vmul.f32 %v963, %v1532
    %v1612 = vmul.f32 %v963, %v1536
    %v1613 = vmul.f32 %v963, %v1540
    %v1614 = vmul.f32 %v963, %v1544
    %v1615 = vmul.f32 %v963, %v1548
    %v1616 = vmul.f32 %v963, %v1552
    %v1617 = vmul.f32 %v967, %v1300
    %v1618 = vmul.f32 %v967, %v1304
    %v1619 = vmul.f32 %v967, %v1308
    %v1620 = vmul.f32 %v967, %v1312
    %v1621 = vmul.f32 %v967, %v1316
    %v1622 = vmul.f32 %v967, %v1320
    %v1623 = vmul.f32 %v967, %v1324
    %v1624 = vmul.f32 %v967, %v1328
    %v1625 = vmul.f32 %v967, %v1332
    %v1626 = vmul.f32 %v967, %v1336
    %v1627 = vmul.f32 %v967, %v1340
    %v1628 = vmul.f32 %v967, %v1344
    %v1629 = vmul.f32 %v967, %v1348
    %v1630 = vmul.f32 %v967, %v1352
    %v1631 = vmul.f32 %v967, %v1356
    %v1632 = vmul.f32 %v967, %v1360
    %v1633 = vmul.f32 %v967, %v1364
    %v1634 = vmul.f32 %v967, %v1368
    %v1635 = vmul.f32 %v967, %v1372
    %v1636 = vmul.f32 %v967, %v1376
    %v1637 = vmul.f32 %v967, %v1380
    %v1638 = vmul.f32 %v967, %v1384
    %v1639 = vmul.f32 %v967, %v1388
    %v1640 = vmul.f32 %v967, %v1392
    %v1641 = vmul.f32 %v967, %v1396
    %v1642 = vmul.f32 %v967, %v1400
    %v1643 = vmul.f32 %v967, %v1404
    %v1644 = vmul.f32 %v967, %v1408
    %v1645 = vmul.f32 %v967, %v1412
    %v1646 = vmul.f32 %v967, %v1416
    %v1647 = vmul.f32 %v967, %v1420
    %v1648 = vmul.f32 %v967, %v1424
    %v1649 = vmul.f32 %v967, %v1428
    %v1650 = vmul.f32 %v967, %v1432
    %v1651 = vmul.f32 %v967, %v1436
    %v1652 = vmul.f32 %v967, %v1440
    %v1653 = vmul.f32 %v967, %v1444
    %v1654 = vmul.f32 %v967, %v1448
    %v1655 = vmul.f32 %v967, %v1452
    %v1656 = vmul.f32 %v967, %v1456
    %v1657 = vmul.f32 %v967, %v1460
    %v1658 = vmul.f32 %v967, %v1464
    %v1659 = vmul.f32 %v967, %v1468
    %v1660 = vmul.f32 %v967, %v1472
    %v1661 = vmul.f32 %v967, %v1476
    %v1662 = vmul.f32 %v967, %v1480
    %v1663 = vmul.f32 %v967, %v1484
    %v1664 = vmul.f32 %v967, %v1488
    %v1665 = vmul.f32 %v967, %v1492
    %v1666 = vmul.f32 %v967, %v1496
    %v1667 = vmul.f32 %v967, %v1500
    %v1668 = vmul.f32 %v967, %v1504
    %v1669 = vmul.f32 %v967, %v1508
    %v1670 = vmul.f32 %v967, %v1512
    %v1671 = vmul.f32 %v967, %v1516
    %v1672 = vmul.f32 %v967, %v1520
    %v1673 = vmul.f32 %v967, %v1524
    %v1674 = vmul.f32 %v967, %v1528
    %v1675 = vmul.f32 %v967, %v1532
    %v1676 = vmul.f32 %v967, %v1536
    %v1677 = vmul.f32 %v967, %v1540
    %v1678 = vmul.f32 %v967, %v1544
    %v1679 = vmul.f32 %v967, %v1548
    %v1680 = vmul.f32 %v967, %v1552
    %v1681 = vmul.f32 %v971, %v1300
    %v1682 = vmul.f32 %v971, %v1304
    %v1683 = vmul.f32 %v971, %v1308
    %v1684 = vmul.f32 %v971, %v1312
    %v1685 = vmul.f32 %v971, %v1316
    %v1686 = vmul.f32 %v971, %v1320
    %v1687 = vmul.f32 %v971, %v1324
    %v1688 = vmul.f32 %v971, %v1328
    %v1689 = vmul.f32 %v971, %v1332
    %v1690 = vmul.f32 %v971, %v1336
    %v1691 = vmul.f32 %v971, %v1340
    %v1692 = vmul.f32 %v971, %v1344
    %v1693 = vmul.f32 %v971, %v1348
    %v1694 = vmul.f32 %v971, %v1352
    %v1695 = vmul.f32 %v971, %v1356
    %v1696 = vmul.f32 %v971, %v1360
    %v1697 = vmul.f32 %v971, %v1364
    %v1698 = vmul.f32 %v971, %v1368
    %v1699 = vmul.f32 %v971, %v1372
    %v1700 = vmul.f32 %v971, %v1376
    %v1701 = vmul.f32 %v971, %v1380
    %v1702 = vmul.f32 %v971, %v1384
    %v1703 = vmul.f32 %v971, %v1388
    %v1704 = vmul.f32 %v971, %v1392
    %v1705 = vmul.f32 %v971, %v1396
    %v1706 = vmul.f32 %v971, %v1400
    %v1707 = vmul.f32 %v971, %v1404
    %v1708 = vmul.f32 %v971, %v1408
    %v1709 = vmul.f32 %v971, %v1412
    %v1710 = vmul.f32 %v971, %v1416
    %v1711 = vmul.f32 %v971, %v1420
    %v1712 = vmul.f32 %v971, %v1424
    %v1713 = vmul.f32 %v971, %v1428
    %v1714 = vmul.f32 %v971, %v1432
    %v1715 = vmul.f32 %v971, %v1436
    %v1716 = vmul.f32 %v971, %v1440
    %v1717 = vmul.f32 %v971, %v1444
    %v1718 = vmul.f32 %v971, %v1448
    %v1719 = vmul.f32 %v971, %v1452
    %v1720 = vmul.f32 %v971, %v1456
    %v1721 = vmul.f32 %v971, %v1460
    %v1722 = vmul.f32 %v971, %v1464
    %v1723 = vmul.f32 %v971, %v1468
    %v1724 = vmul.f32 %v971, %v1472
    %v1725 = vmul.f32 %v971, %v1476
    %v1726 = vmul.f32 %v971, %v1480
    %v1727 = vmul.f32 %v971, %v1484
    %v1728 = vmul.f32 %v971, %v1488
    %v1729 = vmul.f32 %v971, %v1492
    %v1730 = vmul.f32 %v971, %v1496
    %v1731 = vmul.f32 %v971, %v1500
    %v1732 = vmul.f32 %v971, %v1504
    %v1733 = vmul.f32 %v971, %v1508
    %v1734 = vmul.f32 %v971, %v1512
    %v1735 = vmul.f32 %v971, %v1516
    %v1736 = vmul.f32 %v971, %v1520
    %v1737 = vmul.f32 %v971, %v1524
    %v1738 = vmul.f32 %v971, %v1528
    %v1739 = vmul.f32 %v971, %v1532
    %v1740 = vmul.f32 %v971, %v1536
    %v1741 = vmul.f32 %v971, %v1540
    %v1742 = vmul.f32 %v971, %v1544
    %v1743 = vmul.f32 %v971, %v1548
    %v1744 = vmul.f32 %v971, %v1552
    %v1745 = vmul.f32 %v975, %v1300
    %v1746 = vmul.f32 %v975, %v1304
    %v1747 = vmul.f32 %v975, %v1308
    %v1748 = vmul.f32 %v975, %v1312
    %v1749 = vmul.f32 %v975, %v1316
    %v1750 = vmul.f32 %v975, %v1320
    %v1751 = vmul.f32 %v975, %v1324
    %v1752 = vmul.f32 %v975, %v1328
    %v1753 = vmul.f32 %v975, %v1332
    %v1754 = vmul.f32 %v975, %v1336
    %v1755 = vmul.f32 %v975, %v1340
    %v1756 = vmul.f32 %v975, %v1344
    %v1757 = vmul.f32 %v975, %v1348
    %v1758 = vmul.f32 %v975, %v1352
    %v1759 = vmul.f32 %v975, %v1356
    %v1760 = vmul.f32 %v975, %v1360
    %v1761 = vmul.f32 %v975, %v1364
    %v1762 = vmul.f32 %v975, %v1368
    %v1763 = vmul.f32 %v975, %v1372
    %v1764 = vmul.f32 %v975, %v1376
    %v1765 = vmul.f32 %v975, %v1380
    %v1766 = vmul.f32 %v975, %v1384
    %v1767 = vmul.f32 %v975, %v1388
    %v1768 = vmul.f32 %v975, %v1392
    %v1769 = vmul.f32 %v975, %v1396
    %v1770 = vmul.f32 %v975, %v1400
    %v1771 = vmul.f32 %v975, %v1404
    %v1772 = vmul.f32 %v975, %v1408
    %v1773 = vmul.f32 %v975, %v1412
    %v1774 = vmul.f32 %v975, %v1416
    %v1775 = vmul.f32 %v975, %v1420
    %v1776 = vmul.f32 %v975, %v1424
    %v1777 = vmul.f32 %v975, %v1428
    %v1778 = vmul.f32 %v975, %v1432
    %v1779 = vmul.f32 %v975, %v1436
    %v1780 = vmul.f32 %v975, %v1440
    %v1781 = vmul.f32 %v975, %v1444
    %v1782 = vmul.f32 %v975, %v1448
    %v1783 = vmul.f32 %v975, %v1452
    %v1784 = vmul.f32 %v975, %v1456
    %v1785 = vmul.f32 %v975, %v1460
    %v1786 = vmul.f32 %v975, %v1464
    %v1787 = vmul.f32 %v975, %v1468
    %v1788 = vmul.f32 %v975, %v1472
    %v1789 = vmul.f32 %v975, %v1476
    %v1790 = vmul.f32 %v975, %v1480
    %v1791 = vmul.f32 %v975, %v1484
    %v1792 = vmul.f32 %v975, %v1488
    %v1793 = vmul.f32 %v975, %v1492
    %v1794 = vmul.f32 %v975, %v1496
    %v1795 = vmul.f32 %v975, %v1500
    %v1796 = vmul.f32 %v975, %v1504
    %v1797 = vmul.f32 %v975, %v1508
    %v1798 = vmul.f32 %v975, %v1512
    %v1799 = vmul.f32 %v975, %v1516
    %v1800 = vmul.f32 %v975, %v1520
    %v1801 = vmul.f32 %v975, %v1524
    %v1802 = vmul.f32 %v975, %v1528
    %v1803 = vmul.f32 %v975, %v1532
    %v1804 = vmul.f32 %v975, %v1536
    %v1805 = vmul.f32 %v975, %v1540
    %v1806 = vmul.f32 %v975, %v1544
    %v1807 = vmul.f32 %v975, %v1548
    %v1808 = vmul.f32 %v975, %v1552
    %v1809 = vadd.f32 %v705, %v1553
    %v1810 = vadd.f32 %v706, %v1554
    %v1811 = vadd.f32 %v707, %v1555
    %v1812 = vadd.f32 %v708, %v1556
    %v1813 = vadd.f32 %v709, %v1557
    %v1814 = vadd.f32 %v710, %v1558
    %v1815 = vadd.f32 %v711, %v1559
    %v1816 = vadd.f32 %v712, %v1560
    %v1817 = vadd.f32 %v713, %v1561
    %v1818 = vadd.f32 %v714, %v1562
    %v1819 = vadd.f32 %v715, %v1563
    %v1820 = vadd.f32 %v716, %v1564
    %v1821 = vadd.f32 %v717, %v1565
    %v1822 = vadd.f32 %v718, %v1566
    %v1823 = vadd.f32 %v719, %v1567
    %v1824 = vadd.f32 %v720, %v1568
    %v1825 = vadd.f32 %v721, %v1569
    %v1826 = vadd.f32 %v722, %v1570
    %v1827 = vadd.f32 %v723, %v1571
    %v1828 = vadd.f32 %v724, %v1572
    %v1829 = vadd.f32 %v725, %v1573
    %v1830 = vadd.f32 %v726, %v1574
    %v1831 = vadd.f32 %v727, %v1575
    %v1832 = vadd.f32 %v728, %v1576
    %v1833 = vadd.f32 %v729, %v1577
    %v1834 = vadd.f32 %v730, %v1578
    %v1835 = vadd.f32 %v731, %v1579
    %v1836 = vadd.f32 %v732, %v1580
    %v1837 = vadd.f32 %v733, %v1581
    %v1838 = vadd.f32 %v734, %v1582
    %v1839 = vadd.f32 %v735, %v1583
    %v1840 = vadd.f32 %v736, %v1584
    %v1841 = vadd.f32 %v737, %v1585
    %v1842 = vadd.f32 %v738, %v1586
    %v1843 = vadd.f32 %v739, %v1587
    %v1844 = vadd.f32 %v740, %v1588
    %v1845 = vadd.f32 %v741, %v1589
    %v1846 = vadd.f32 %v742, %v1590
    %v1847 = vadd.f32 %v743, %v1591
    %v1848 = vadd.f32 %v744, %v1592
    %v1849 = vadd.f32 %v745, %v1593
    %v1850 = vadd.f32 %v746, %v1594
    %v1851 = vadd.f32 %v747, %v1595
    %v1852 = vadd.f32 %v748, %v1596
    %v1853 = vadd.f32 %v749, %v1597
    %v1854 = vadd.f32 %v750, %v1598
    %v1855 = vadd.f32 %v751, %v1599
    %v1856 = vadd.f32 %v752, %v1600
    %v1857 = vadd.f32 %v753, %v1601
    %v1858 = vadd.f32 %v754, %v1602
    %v1859 = vadd.f32 %v755, %v1603
    %v1860 = vadd.f32 %v756, %v1604
    %v1861 = vadd.f32 %v757, %v1605
    %v1862 = vadd.f32 %v758, %v1606
    %v1863 = vadd.f32 %v759, %v1607
    %v1864 = vadd.f32 %v760, %v1608
    %v1865 = vadd.f32 %v761, %v1609
    %v1866 = vadd.f32 %v762, %v1610
    %v1867 = vadd.f32 %v763, %v1611
    %v1868 = vadd.f32 %v764, %v1612
    %v1869 = vadd.f32 %v765, %v1613
    %v1870 = vadd.f32 %v766, %v1614
    %v1871 = vadd.f32 %v767, %v1615
    %v1872 = vadd.f32 %v768, %v1616
    %v1873 = vadd.f32 %v769, %v1617
    %v1874 = vadd.f32 %v770, %v1618
    %v1875 = vadd.f32 %v771, %v1619
    %v1876 = vadd.f32 %v772, %v1620
    %v1877 = vadd.f32 %v773, %v1621
    %v1878 = vadd.f32 %v774, %v1622
    %v1879 = vadd.f32 %v775, %v1623
    %v1880 = vadd.f32 %v776, %v1624
    %v1881 = vadd.f32 %v777, %v1625
    %v1882 = vadd.f32 %v778, %v1626
    %v1883 = vadd.f32 %v779, %v1627
    %v1884 = vadd.f32 %v780, %v1628
    %v1885 = vadd.f32 %v781, %v1629
    %v1886 = vadd.f32 %v782, %v1630
    %v1887 = vadd.f32 %v783, %v1631
    %v1888 = vadd.f32 %v784, %v1632
    %v1889 = vadd.f32 %v785, %v1633
    %v1890 = vadd.f32 %v786, %v1634
    %v1891 = vadd.f32 %v787, %v1635
    %v1892 = vadd.f32 %v788, %v1636
    %v1893 = vadd.f32 %v789, %v1637
    %v1894 = vadd.f32 %v790, %v1638
    %v1895 = vadd.f32 %v791, %v1639
    %v1896 = vadd.f32 %v792, %v1640
    %v1897 = vadd.f32 %v793, %v1641
    %v1898 = vadd.f32 %v794, %v1642
    %v1899 = vadd.f32 %v795, %v1643
    %v1900 = vadd.f32 %v796, %v1644
    %v1901 = vadd.f32 %v797, %v1645
    %v1902 = vadd.f32 %v798, %v1646
    %v1903 = vadd.f32 %v799, %v1647
    %v1904 = vadd.f32 %v800, %v1648
    %v1905 = vadd.f32 %v801, %v1649
    %v1906 = vadd.f32 %v802, %v1650
    %v1907 = vadd.f32 %v803, %v1651
    %v1908 = vadd.f32 %v804, %v1652
    %v1909 = vadd.f32 %v805, %v1653
    %v1910 = vadd.f32 %v806, %v1654
    %v1911 = vadd.f32 %v807, %v1655
    %v1912 = vadd.f32 %v808, %v1656
    %v1913 = vadd.f32 %v809, %v1657
    %v1914 = vadd.f32 %v810, %v1658
    %v1915 = vadd.f32 %v811, %v1659
    %v1916 = vadd.f32 %v812, %v1660
    %v1917 = vadd.f32 %v813, %v1661
    %v1918 = vadd.f32 %v814, %v1662
    %v1919 = vadd.f32 %v815, %v1663
    %v1920 = vadd.f32 %v816, %v1664
    %v1921 = vadd.f32 %v817, %v1665
    %v1922 = vadd.f32 %v818, %v1666
    %v1923 = vadd.f32 %v819, %v1667
    %v1924 = vadd.f32 %v820, %v1668
    %v1925 = vadd.f32 %v821, %v1669
    %v1926 = vadd.f32 %v822, %v1670
    %v1927 = vadd.f32 %v823, %v1671
    %v1928 = vadd.f32 %v824, %v1672
    %v1929 = vadd.f32 %v825, %v1673
    %v1930 = vadd.f32 %v826, %v1674
    %v1931 = vadd.f32 %v827, %v1675
    %v1932 = vadd.f32 %v828, %v1676
    %v1933 = vadd.f32 %v829, %v1677
    %v1934 = vadd.f32 %v830, %v1678
    %v1935 = vadd.f32 %v831, %v1679
    %v1936 = vadd.f32 %v832, %v1680
    %v1937 = vadd.f32 %v833, %v1681
    %v1938 = vadd.f32 %v834, %v1682
    %v1939 = vadd.f32 %v835, %v1683
    %v1940 = vadd.f32 %v836, %v1684
    %v1941 = vadd.f32 %v837, %v1685
    %v1942 = vadd.f32 %v838, %v1686
    %v1943 = vadd.f32 %v839, %v1687
    %v1944 = vadd.f32 %v840, %v1688
    %v1945 = vadd.f32 %v841, %v1689
    %v1946 = vadd.f32 %v842, %v1690
    %v1947 = vadd.f32 %v843, %v1691
    %v1948 = vadd.f32 %v844, %v1692
    %v1949 = vadd.f32 %v845, %v1693
    %v1950 = vadd.f32 %v846, %v1694
    %v1951 = vadd.f32 %v847, %v1695
    %v1952 = vadd.f32 %v848, %v1696
    %v1953 = vadd.f32 %v849, %v1697
    %v1954 = vadd.f32 %v850, %v1698
    %v1955 = vadd.f32 %v851, %v1699
    %v1956 = vadd.f32 %v852, %v1700
    %v1957 = vadd.f32 %v853, %v1701
    %v1958 = vadd.f32 %v854, %v1702
    %v1959 = vadd.f32 %v855, %v1703
    %v1960 = vadd.f32 %v856, %v1704
    %v1961 = vadd.f32 %v857, %v1705
    %v1962 = vadd.f32 %v858, %v1706
    %v1963 = vadd.f32 %v859, %v1707
    %v1964 = vadd.f32 %v860, %v1708
    %v1965 = vadd.f32 %v861, %v1709
    %v1966 = vadd.f32 %v862, %v1710
    %v1967 = vadd.f32 %v863, %v1711
    %v1968 = vadd.f32 %v864, %v1712
    %v1969 = vadd.f32 %v865, %v1713
    %v1970 = vadd.f32 %v866, %v1714
    %v1971 = vadd.f32 %v867, %v1715
    %v1972 = vadd.f32 %v868, %v1716
    %v1973 = vadd.f32 %v869, %v1717
    %v1974 = vadd.f32 %v870, %v1718
    %v1975 = vadd.f32 %v871, %v1719
    %v1976 = vadd.f32 %v872, %v1720
    %v1977 = vadd.f32 %v873, %v1721
    %v1978 = vadd.f32 %v874, %v1722
    %v1979 = vadd.f32 %v875, %v1723
    %v1980 = vadd.f32 %v876, %v1724
    %v1981 = vadd.f32 %v877, %v1725
    %v1982 = vadd.f32 %v878, %v1726
    %v1983 = vadd.f32 %v879, %v1727
    %v1984 = vadd.f32 %v880, %v1728
    %v1985 = vadd.f32 %v881, %v1729
    %v1986 = vadd.f32 %v882, %v1730
    %v1987 = vadd.f32 %v883, %v1731
    %v1988 = vadd.f32 %v884, %v1732
    %v1989 = vadd.f32 %v885, %v1733
    %v1990 = vadd.f32 %v886, %v1734
    %v1991 = vadd.f32 %v887, %v1735
    %v1992 = vadd.f32 %v888, %v1736
    %v1993 = vadd.f32 %v889, %v1737
    %v1994 = vadd.f32 %v890, %v1738
    %v1995 = vadd.f32 %v891, %v1739
    %v1996 = vadd.f32 %v892, %v1740
    %v1997 = vadd.f32 %v893, %v1741
    %v1998 = vadd.f32 %v894, %v1742
    %v1999 = vadd.f32 %v895, %v1743
    %v2000 = vadd.f32 %v896, %v1744
    %v2001 = vadd.f32 %v897, %v1745
    %v2002 = vadd.f32 %v898, %v1746
    %v2003 = vadd.f32 %v899, %v1747
    %v2004 = vadd.f32 %v900, %v1748
    %v2005 = vadd.f32 %v901, %v1749
    %v2006 = vadd.f32 %v902, %v1750
    %v2007 = vadd.f32 %v903, %v1751
    %v2008 = vadd.f32 %v904, %v1752
    %v2009 = vadd.f32 %v905, %v1753
    %v2010 = vadd.f32 %v906, %v1754
    %v2011 = vadd.f32 %v907, %v1755
    %v2012 = vadd.f32 %v908, %v1756
    %v2013 = vadd.f32 %v909, %v1757
    %v2014 = vadd.f32 %v910, %v1758
    %v2015 = vadd.f32 %v911, %v1759
    %v2016 = vadd.f32 %v912, %v1760
    %v2017 = vadd.f32 %v913, %v1761
    %v2018 = vadd.f32 %v914, %v1762
    %v2019 = vadd.f32 %v915, %v1763
    %v2020 = vadd.f32 %v916, %v1764
    %v2021 = vadd.f32 %v917, %v1765
    %v2022 = vadd.f32 %v918, %v1766
    %v2023 = vadd.f32 %v919, %v1767
    %v2024 = vadd.f32 %v920, %v1768
    %v2025 = vadd.f32 %v921, %v1769
    %v2026 = vadd.f32 %v922, %v1770
    %v2027 = vadd.f32 %v923, %v1771
    %v2028 = vadd.f32 %v924, %v1772
    %v2029 = vadd.f32 %v925, %v1773
    %v2030 = vadd.f32 %v926, %v1774
    %v2031 = vadd.f32 %v927, %v1775
    %v2032 = vadd.f32 %v928, %v1776
    %v2033 = vadd.f32 %v929, %v1777
    %v2034 = vadd.f32 %v930, %v1778
    %v2035 = vadd.f32 %v931, %v1779
    %v2036 = vadd.f32 %v932, %v1780
    %v2037 = vadd.f32 %v933, %v1781
    %v2038 = vadd.f32 %v934, %v1782
    %v2039 = vadd.f32 %v935, %v1783
    %v2040 = vadd.f32 %v936, %v1784
    %v2041 = vadd.f32 %v937, %v1785
    %v2042 = vadd.f32 %v938, %v1786
    %v2043 = vadd.f32 %v939, %v1787
    %v2044 = vadd.f32 %v940, %v1788
    %v2045 = vadd.f32 %v941, %v1789
    %v2046 = vadd.f32 %v942, %v1790
    %v2047 = vadd.f32 %v943, %v1791
    %v2048 = vadd.f32 %v944, %v1792
    %v2049 = vadd.f32 %v945, %v1793
    %v2050 = vadd.f32 %v946, %v1794
    %v2051 = vadd.f32 %v947, %v1795
    %v2052 = vadd.f32 %v948, %v1796
    %v2053 = vadd.f32 %v949, %v1797
    %v2054 = vadd.f32 %v950, %v1798
    %v2055 = vadd.f32 %v951, %v1799
    %v2056 = vadd.f32 %v952, %v1800
    %v2057 = vadd.f32 %v953, %v1801
    %v2058 = vadd.f32 %v954, %v1802
    %v2059 = vadd.f32 %v955, %v1803
    %v2060 = vadd.f32 %v956, %v1804
    %v2061 = vadd.f32 %v957, %v1805
    %v2062 = vadd.f32 %v958, %v1806
    %v2063 = vadd.f32 %v959, %v1807
    %v2064 = vadd.f32 %v960, %v1808
    %2065 = vset.pattern.permute.xlu0 2
    %2066 = vperm.xlu0 %2065, %v73
    %v2067 = vpop.permute.xlu0 %2066
    %2069 = vset.pattern.permute.xlu0 2
    %2070 = vperm.xlu0 %2069, %v74
    %v2071 = vpop.permute.xlu0 %2070
    %2073 = vset.pattern.permute.xlu0 2
    %2074 = vperm.xlu0 %2073, %v75
    %v2075 = vpop.permute.xlu0 %2074
    %2077 = vset.pattern.permute.xlu0 2
    %2078 = vperm.xlu0 %2077, %v76
    %v2079 = vpop.permute.xlu0 %2078
    %v2081 = vlaneseq
    %v2082 = vshrl.u32 %v2081, 7
    %v2083 = vsub.s32 2, %v2082
    %v2084 = vrot.slane %v41, %v2083
    %v2085 = vlaneseq
    %v2086 = vshrl.u32 %v2085, 7
    %v2087 = vsub.s32 6, %v2086
    %v2088 = vrot.slane %v41, %v2087
    %v2089 = vlaneseq
    %v2090 = vshrl.u32 %v2089, 7
    %v2091 = vsub.s32 2, %v2090
    %v2092 = vrot.slane %v42, %v2091
    %v2093 = vlaneseq
    %v2094 = vshrl.u32 %v2093, 7
    %v2095 = vsub.s32 6, %v2094
    %v2096 = vrot.slane %v42, %v2095
    %v2097 = vlaneseq
    %v2098 = vshrl.u32 %v2097, 7
    %v2099 = vsub.s32 2, %v2098
    %v2100 = vrot.slane %v43, %v2099
    %v2101 = vlaneseq
    %v2102 = vshrl.u32 %v2101, 7
    %v2103 = vsub.s32 6, %v2102
    %v2104 = vrot.slane %v43, %v2103
    %v2105 = vlaneseq
    %v2106 = vshrl.u32 %v2105, 7
    %v2107 = vsub.s32 2, %v2106
    %v2108 = vrot.slane %v44, %v2107
    %v2109 = vlaneseq
    %v2110 = vshrl.u32 %v2109, 7
    %v2111 = vsub.s32 6, %v2110
    %v2112 = vrot.slane %v44, %v2111
    %v2113 = vlaneseq
    %v2114 = vshrl.u32 %v2113, 7
    %v2115 = vsub.s32 2, %v2114
    %v2116 = vrot.slane %v45, %v2115
    %v2117 = vlaneseq
    %v2118 = vshrl.u32 %v2117, 7
    %v2119 = vsub.s32 6, %v2118
    %v2120 = vrot.slane %v45, %v2119
    %v2121 = vlaneseq
    %v2122 = vshrl.u32 %v2121, 7
    %v2123 = vsub.s32 2, %v2122
    %v2124 = vrot.slane %v46, %v2123
    %v2125 = vlaneseq
    %v2126 = vshrl.u32 %v2125, 7
    %v2127 = vsub.s32 6, %v2126
    %v2128 = vrot.slane %v46, %v2127
    %v2129 = vlaneseq
    %v2130 = vshrl.u32 %v2129, 7
    %v2131 = vsub.s32 2, %v2130
    %v2132 = vrot.slane %v47, %v2131
    %v2133 = vlaneseq
    %v2134 = vshrl.u32 %v2133, 7
    %v2135 = vsub.s32 6, %v2134
    %v2136 = vrot.slane %v47, %v2135
    %v2137 = vlaneseq
    %v2138 = vshrl.u32 %v2137, 7
    %v2139 = vsub.s32 2, %v2138
    %v2140 = vrot.slane %v48, %v2139
    %v2141 = vlaneseq
    %v2142 = vshrl.u32 %v2141, 7
    %v2143 = vsub.s32 6, %v2142
    %v2144 = vrot.slane %v48, %v2143
    %v2145 = vlaneseq
    %v2146 = vshrl.u32 %v2145, 7
    %v2147 = vsub.s32 2, %v2146
    %v2148 = vrot.slane %v49, %v2147
    %v2149 = vlaneseq
    %v2150 = vshrl.u32 %v2149, 7
    %v2151 = vsub.s32 6, %v2150
    %v2152 = vrot.slane %v49, %v2151
    %v2153 = vlaneseq
    %v2154 = vshrl.u32 %v2153, 7
    %v2155 = vsub.s32 2, %v2154
    %v2156 = vrot.slane %v50, %v2155
    %v2157 = vlaneseq
    %v2158 = vshrl.u32 %v2157, 7
    %v2159 = vsub.s32 6, %v2158
    %v2160 = vrot.slane %v50, %v2159
    %v2161 = vlaneseq
    %v2162 = vshrl.u32 %v2161, 7
    %v2163 = vsub.s32 2, %v2162
    %v2164 = vrot.slane %v51, %v2163
    %v2165 = vlaneseq
    %v2166 = vshrl.u32 %v2165, 7
    %v2167 = vsub.s32 6, %v2166
    %v2168 = vrot.slane %v51, %v2167
    %v2169 = vlaneseq
    %v2170 = vshrl.u32 %v2169, 7
    %v2171 = vsub.s32 2, %v2170
    %v2172 = vrot.slane %v52, %v2171
    %v2173 = vlaneseq
    %v2174 = vshrl.u32 %v2173, 7
    %v2175 = vsub.s32 6, %v2174
    %v2176 = vrot.slane %v52, %v2175
    %v2177 = vlaneseq
    %v2178 = vshrl.u32 %v2177, 7
    %v2179 = vsub.s32 2, %v2178
    %v2180 = vrot.slane %v53, %v2179
    %v2181 = vlaneseq
    %v2182 = vshrl.u32 %v2181, 7
    %v2183 = vsub.s32 6, %v2182
    %v2184 = vrot.slane %v53, %v2183
    %v2185 = vlaneseq
    %v2186 = vshrl.u32 %v2185, 7
    %v2187 = vsub.s32 2, %v2186
    %v2188 = vrot.slane %v54, %v2187
    %v2189 = vlaneseq
    %v2190 = vshrl.u32 %v2189, 7
    %v2191 = vsub.s32 6, %v2190
    %v2192 = vrot.slane %v54, %v2191
    %v2193 = vlaneseq
    %v2194 = vshrl.u32 %v2193, 7
    %v2195 = vsub.s32 2, %v2194
    %v2196 = vrot.slane %v55, %v2195
    %v2197 = vlaneseq
    %v2198 = vshrl.u32 %v2197, 7
    %v2199 = vsub.s32 6, %v2198
    %v2200 = vrot.slane %v55, %v2199
    %v2201 = vlaneseq
    %v2202 = vshrl.u32 %v2201, 7
    %v2203 = vsub.s32 2, %v2202
    %v2204 = vrot.slane %v56, %v2203
    %v2205 = vlaneseq
    %v2206 = vshrl.u32 %v2205, 7
    %v2207 = vsub.s32 6, %v2206
    %v2208 = vrot.slane %v56, %v2207
    %v2209 = vlaneseq
    %v2210 = vshrl.u32 %v2209, 7
    %v2211 = vsub.s32 2, %v2210
    %v2212 = vrot.slane %v57, %v2211
    %v2213 = vlaneseq
    %v2214 = vshrl.u32 %v2213, 7
    %v2215 = vsub.s32 6, %v2214
    %v2216 = vrot.slane %v57, %v2215
    %v2217 = vlaneseq
    %v2218 = vshrl.u32 %v2217, 7
    %v2219 = vsub.s32 2, %v2218
    %v2220 = vrot.slane %v58, %v2219
    %v2221 = vlaneseq
    %v2222 = vshrl.u32 %v2221, 7
    %v2223 = vsub.s32 6, %v2222
    %v2224 = vrot.slane %v58, %v2223
    %v2225 = vlaneseq
    %v2226 = vshrl.u32 %v2225, 7
    %v2227 = vsub.s32 2, %v2226
    %v2228 = vrot.slane %v59, %v2227
    %v2229 = vlaneseq
    %v2230 = vshrl.u32 %v2229, 7
    %v2231 = vsub.s32 6, %v2230
    %v2232 = vrot.slane %v59, %v2231
    %v2233 = vlaneseq
    %v2234 = vshrl.u32 %v2233, 7
    %v2235 = vsub.s32 2, %v2234
    %v2236 = vrot.slane %v60, %v2235
    %v2237 = vlaneseq
    %v2238 = vshrl.u32 %v2237, 7
    %v2239 = vsub.s32 6, %v2238
    %v2240 = vrot.slane %v60, %v2239
    %v2241 = vlaneseq
    %v2242 = vshrl.u32 %v2241, 7
    %v2243 = vsub.s32 2, %v2242
    %v2244 = vrot.slane %v61, %v2243
    %v2245 = vlaneseq
    %v2246 = vshrl.u32 %v2245, 7
    %v2247 = vsub.s32 6, %v2246
    %v2248 = vrot.slane %v61, %v2247
    %v2249 = vlaneseq
    %v2250 = vshrl.u32 %v2249, 7
    %v2251 = vsub.s32 2, %v2250
    %v2252 = vrot.slane %v62, %v2251
    %v2253 = vlaneseq
    %v2254 = vshrl.u32 %v2253, 7
    %v2255 = vsub.s32 6, %v2254
    %v2256 = vrot.slane %v62, %v2255
    %v2257 = vlaneseq
    %v2258 = vshrl.u32 %v2257, 7
    %v2259 = vsub.s32 2, %v2258
    %v2260 = vrot.slane %v63, %v2259
    %v2261 = vlaneseq
    %v2262 = vshrl.u32 %v2261, 7
    %v2263 = vsub.s32 6, %v2262
    %v2264 = vrot.slane %v63, %v2263
    %v2265 = vlaneseq
    %v2266 = vshrl.u32 %v2265, 7
    %v2267 = vsub.s32 2, %v2266
    %v2268 = vrot.slane %v64, %v2267
    %v2269 = vlaneseq
    %v2270 = vshrl.u32 %v2269, 7
    %v2271 = vsub.s32 6, %v2270
    %v2272 = vrot.slane %v64, %v2271
    %v2273 = vlaneseq
    %v2274 = vshrl.u32 %v2273, 7
    %v2275 = vsub.s32 2, %v2274
    %v2276 = vrot.slane %v65, %v2275
    %v2277 = vlaneseq
    %v2278 = vshrl.u32 %v2277, 7
    %v2279 = vsub.s32 6, %v2278
    %v2280 = vrot.slane %v65, %v2279
    %v2281 = vlaneseq
    %v2282 = vshrl.u32 %v2281, 7
    %v2283 = vsub.s32 2, %v2282
    %v2284 = vrot.slane %v66, %v2283
    %v2285 = vlaneseq
    %v2286 = vshrl.u32 %v2285, 7
    %v2287 = vsub.s32 6, %v2286
    %v2288 = vrot.slane %v66, %v2287
    %v2289 = vlaneseq
    %v2290 = vshrl.u32 %v2289, 7
    %v2291 = vsub.s32 2, %v2290
    %v2292 = vrot.slane %v67, %v2291
    %v2293 = vlaneseq
    %v2294 = vshrl.u32 %v2293, 7
    %v2295 = vsub.s32 6, %v2294
    %v2296 = vrot.slane %v67, %v2295
    %v2297 = vlaneseq
    %v2298 = vshrl.u32 %v2297, 7
    %v2299 = vsub.s32 2, %v2298
    %v2300 = vrot.slane %v68, %v2299
    %v2301 = vlaneseq
    %v2302 = vshrl.u32 %v2301, 7
    %v2303 = vsub.s32 6, %v2302
    %v2304 = vrot.slane %v68, %v2303
    %v2305 = vlaneseq
    %v2306 = vshrl.u32 %v2305, 7
    %v2307 = vsub.s32 2, %v2306
    %v2308 = vrot.slane %v69, %v2307
    %v2309 = vlaneseq
    %v2310 = vshrl.u32 %v2309, 7
    %v2311 = vsub.s32 6, %v2310
    %v2312 = vrot.slane %v69, %v2311
    %v2313 = vlaneseq
    %v2314 = vshrl.u32 %v2313, 7
    %v2315 = vsub.s32 2, %v2314
    %v2316 = vrot.slane %v70, %v2315
    %v2317 = vlaneseq
    %v2318 = vshrl.u32 %v2317, 7
    %v2319 = vsub.s32 6, %v2318
    %v2320 = vrot.slane %v70, %v2319
    %v2321 = vlaneseq
    %v2322 = vshrl.u32 %v2321, 7
    %v2323 = vsub.s32 2, %v2322
    %v2324 = vrot.slane %v71, %v2323
    %v2325 = vlaneseq
    %v2326 = vshrl.u32 %v2325, 7
    %v2327 = vsub.s32 6, %v2326
    %v2328 = vrot.slane %v71, %v2327
    %v2329 = vlaneseq
    %v2330 = vshrl.u32 %v2329, 7
    %v2331 = vsub.s32 2, %v2330
    %v2332 = vrot.slane %v72, %v2331
    %v2333 = vlaneseq
    %v2334 = vshrl.u32 %v2333, 7
    %v2335 = vsub.s32 6, %v2334
    %v2336 = vrot.slane %v72, %v2335
    %v2401 = vlaneseq
    %v2402 = vshrl.u32 %v2401, 7
    %v2403 = vsub.s32 2, %v2402
    %v2404 = vrot.slane %v2084, %v2403
    %v2405 = vlaneseq
    %v2406 = vshrl.u32 %v2405, 7
    %v2407 = vsub.s32 2, %v2406
    %v2408 = vrot.slane %v2088, %v2407
    %v2409 = vlaneseq
    %v2410 = vshrl.u32 %v2409, 7
    %v2411 = vsub.s32 2, %v2410
    %v2412 = vrot.slane %v2092, %v2411
    %v2413 = vlaneseq
    %v2414 = vshrl.u32 %v2413, 7
    %v2415 = vsub.s32 2, %v2414
    %v2416 = vrot.slane %v2096, %v2415
    %v2417 = vlaneseq
    %v2418 = vshrl.u32 %v2417, 7
    %v2419 = vsub.s32 2, %v2418
    %v2420 = vrot.slane %v2100, %v2419
    %v2421 = vlaneseq
    %v2422 = vshrl.u32 %v2421, 7
    %v2423 = vsub.s32 2, %v2422
    %v2424 = vrot.slane %v2104, %v2423
    %v2425 = vlaneseq
    %v2426 = vshrl.u32 %v2425, 7
    %v2427 = vsub.s32 2, %v2426
    %v2428 = vrot.slane %v2108, %v2427
    %v2429 = vlaneseq
    %v2430 = vshrl.u32 %v2429, 7
    %v2431 = vsub.s32 2, %v2430
    %v2432 = vrot.slane %v2112, %v2431
    %v2433 = vlaneseq
    %v2434 = vshrl.u32 %v2433, 7
    %v2435 = vsub.s32 2, %v2434
    %v2436 = vrot.slane %v2116, %v2435
    %v2437 = vlaneseq
    %v2438 = vshrl.u32 %v2437, 7
    %v2439 = vsub.s32 2, %v2438
    %v2440 = vrot.slane %v2120, %v2439
    %v2441 = vlaneseq
    %v2442 = vshrl.u32 %v2441, 7
    %v2443 = vsub.s32 2, %v2442
    %v2444 = vrot.slane %v2124, %v2443
    %v2445 = vlaneseq
    %v2446 = vshrl.u32 %v2445, 7
    %v2447 = vsub.s32 2, %v2446
    %v2448 = vrot.slane %v2128, %v2447
    %v2449 = vlaneseq
    %v2450 = vshrl.u32 %v2449, 7
    %v2451 = vsub.s32 2, %v2450
    %v2452 = vrot.slane %v2132, %v2451
    %v2453 = vlaneseq
    %v2454 = vshrl.u32 %v2453, 7
    %v2455 = vsub.s32 2, %v2454
    %v2456 = vrot.slane %v2136, %v2455
    %v2457 = vlaneseq
    %v2458 = vshrl.u32 %v2457, 7
    %v2459 = vsub.s32 2, %v2458
    %v2460 = vrot.slane %v2140, %v2459
    %v2461 = vlaneseq
    %v2462 = vshrl.u32 %v2461, 7
    %v2463 = vsub.s32 2, %v2462
    %v2464 = vrot.slane %v2144, %v2463
    %v2465 = vlaneseq
    %v2466 = vshrl.u32 %v2465, 7
    %v2467 = vsub.s32 2, %v2466
    %v2468 = vrot.slane %v2148, %v2467
    %v2469 = vlaneseq
    %v2470 = vshrl.u32 %v2469, 7
    %v2471 = vsub.s32 2, %v2470
    %v2472 = vrot.slane %v2152, %v2471
    %v2473 = vlaneseq
    %v2474 = vshrl.u32 %v2473, 7
    %v2475 = vsub.s32 2, %v2474
    %v2476 = vrot.slane %v2156, %v2475
    %v2477 = vlaneseq
    %v2478 = vshrl.u32 %v2477, 7
    %v2479 = vsub.s32 2, %v2478
    %v2480 = vrot.slane %v2160, %v2479
    %v2481 = vlaneseq
    %v2482 = vshrl.u32 %v2481, 7
    %v2483 = vsub.s32 2, %v2482
    %v2484 = vrot.slane %v2164, %v2483
    %v2485 = vlaneseq
    %v2486 = vshrl.u32 %v2485, 7
    %v2487 = vsub.s32 2, %v2486
    %v2488 = vrot.slane %v2168, %v2487
    %v2489 = vlaneseq
    %v2490 = vshrl.u32 %v2489, 7
    %v2491 = vsub.s32 2, %v2490
    %v2492 = vrot.slane %v2172, %v2491
    %v2493 = vlaneseq
    %v2494 = vshrl.u32 %v2493, 7
    %v2495 = vsub.s32 2, %v2494
    %v2496 = vrot.slane %v2176, %v2495
    %v2497 = vlaneseq
    %v2498 = vshrl.u32 %v2497, 7
    %v2499 = vsub.s32 2, %v2498
    %v2500 = vrot.slane %v2180, %v2499
    %v2501 = vlaneseq
    %v2502 = vshrl.u32 %v2501, 7
    %v2503 = vsub.s32 2, %v2502
    %v2504 = vrot.slane %v2184, %v2503
    %v2505 = vlaneseq
    %v2506 = vshrl.u32 %v2505, 7
    %v2507 = vsub.s32 2, %v2506
    %v2508 = vrot.slane %v2188, %v2507
    %v2509 = vlaneseq
    %v2510 = vshrl.u32 %v2509, 7
    %v2511 = vsub.s32 2, %v2510
    %v2512 = vrot.slane %v2192, %v2511
    %v2513 = vlaneseq
    %v2514 = vshrl.u32 %v2513, 7
    %v2515 = vsub.s32 2, %v2514
    %v2516 = vrot.slane %v2196, %v2515
    %v2517 = vlaneseq
    %v2518 = vshrl.u32 %v2517, 7
    %v2519 = vsub.s32 2, %v2518
    %v2520 = vrot.slane %v2200, %v2519
    %v2521 = vlaneseq
    %v2522 = vshrl.u32 %v2521, 7
    %v2523 = vsub.s32 2, %v2522
    %v2524 = vrot.slane %v2204, %v2523
    %v2525 = vlaneseq
    %v2526 = vshrl.u32 %v2525, 7
    %v2527 = vsub.s32 2, %v2526
    %v2528 = vrot.slane %v2208, %v2527
    %v2529 = vlaneseq
    %v2530 = vshrl.u32 %v2529, 7
    %v2531 = vsub.s32 2, %v2530
    %v2532 = vrot.slane %v2212, %v2531
    %v2533 = vlaneseq
    %v2534 = vshrl.u32 %v2533, 7
    %v2535 = vsub.s32 2, %v2534
    %v2536 = vrot.slane %v2216, %v2535
    %v2537 = vlaneseq
    %v2538 = vshrl.u32 %v2537, 7
    %v2539 = vsub.s32 2, %v2538
    %v2540 = vrot.slane %v2220, %v2539
    %v2541 = vlaneseq
    %v2542 = vshrl.u32 %v2541, 7
    %v2543 = vsub.s32 2, %v2542
    %v2544 = vrot.slane %v2224, %v2543
    %v2545 = vlaneseq
    %v2546 = vshrl.u32 %v2545, 7
    %v2547 = vsub.s32 2, %v2546
    %v2548 = vrot.slane %v2228, %v2547
    %v2549 = vlaneseq
    %v2550 = vshrl.u32 %v2549, 7
    %v2551 = vsub.s32 2, %v2550
    %v2552 = vrot.slane %v2232, %v2551
    %v2553 = vlaneseq
    %v2554 = vshrl.u32 %v2553, 7
    %v2555 = vsub.s32 2, %v2554
    %v2556 = vrot.slane %v2236, %v2555
    %v2557 = vlaneseq
    %v2558 = vshrl.u32 %v2557, 7
    %v2559 = vsub.s32 2, %v2558
    %v2560 = vrot.slane %v2240, %v2559
    %v2561 = vlaneseq
    %v2562 = vshrl.u32 %v2561, 7
    %v2563 = vsub.s32 2, %v2562
    %v2564 = vrot.slane %v2244, %v2563
    %v2565 = vlaneseq
    %v2566 = vshrl.u32 %v2565, 7
    %v2567 = vsub.s32 2, %v2566
    %v2568 = vrot.slane %v2248, %v2567
    %v2569 = vlaneseq
    %v2570 = vshrl.u32 %v2569, 7
    %v2571 = vsub.s32 2, %v2570
    %v2572 = vrot.slane %v2252, %v2571
    %v2573 = vlaneseq
    %v2574 = vshrl.u32 %v2573, 7
    %v2575 = vsub.s32 2, %v2574
    %v2576 = vrot.slane %v2256, %v2575
    %v2577 = vlaneseq
    %v2578 = vshrl.u32 %v2577, 7
    %v2579 = vsub.s32 2, %v2578
    %v2580 = vrot.slane %v2260, %v2579
    %v2581 = vlaneseq
    %v2582 = vshrl.u32 %v2581, 7
    %v2583 = vsub.s32 2, %v2582
    %v2584 = vrot.slane %v2264, %v2583
    %v2585 = vlaneseq
    %v2586 = vshrl.u32 %v2585, 7
    %v2587 = vsub.s32 2, %v2586
    %v2588 = vrot.slane %v2268, %v2587
    %v2589 = vlaneseq
    %v2590 = vshrl.u32 %v2589, 7
    %v2591 = vsub.s32 2, %v2590
    %v2592 = vrot.slane %v2272, %v2591
    %v2593 = vlaneseq
    %v2594 = vshrl.u32 %v2593, 7
    %v2595 = vsub.s32 2, %v2594
    %v2596 = vrot.slane %v2276, %v2595
    %v2597 = vlaneseq
    %v2598 = vshrl.u32 %v2597, 7
    %v2599 = vsub.s32 2, %v2598
    %v2600 = vrot.slane %v2280, %v2599
    %v2601 = vlaneseq
    %v2602 = vshrl.u32 %v2601, 7
    %v2603 = vsub.s32 2, %v2602
    %v2604 = vrot.slane %v2284, %v2603
    %v2605 = vlaneseq
    %v2606 = vshrl.u32 %v2605, 7
    %v2607 = vsub.s32 2, %v2606
    %v2608 = vrot.slane %v2288, %v2607
    %v2609 = vlaneseq
    %v2610 = vshrl.u32 %v2609, 7
    %v2611 = vsub.s32 2, %v2610
    %v2612 = vrot.slane %v2292, %v2611
    %v2613 = vlaneseq
    %v2614 = vshrl.u32 %v2613, 7
    %v2615 = vsub.s32 2, %v2614
    %v2616 = vrot.slane %v2296, %v2615
    %v2617 = vlaneseq
    %v2618 = vshrl.u32 %v2617, 7
    %v2619 = vsub.s32 2, %v2618
    %v2620 = vrot.slane %v2300, %v2619
    %v2621 = vlaneseq
    %v2622 = vshrl.u32 %v2621, 7
    %v2623 = vsub.s32 2, %v2622
    %v2624 = vrot.slane %v2304, %v2623
    %v2625 = vlaneseq
    %v2626 = vshrl.u32 %v2625, 7
    %v2627 = vsub.s32 2, %v2626
    %v2628 = vrot.slane %v2308, %v2627
    %v2629 = vlaneseq
    %v2630 = vshrl.u32 %v2629, 7
    %v2631 = vsub.s32 2, %v2630
    %v2632 = vrot.slane %v2312, %v2631
    %v2633 = vlaneseq
    %v2634 = vshrl.u32 %v2633, 7
    %v2635 = vsub.s32 2, %v2634
    %v2636 = vrot.slane %v2316, %v2635
    %v2637 = vlaneseq
    %v2638 = vshrl.u32 %v2637, 7
    %v2639 = vsub.s32 2, %v2638
    %v2640 = vrot.slane %v2320, %v2639
    %v2641 = vlaneseq
    %v2642 = vshrl.u32 %v2641, 7
    %v2643 = vsub.s32 2, %v2642
    %v2644 = vrot.slane %v2324, %v2643
    %v2645 = vlaneseq
    %v2646 = vshrl.u32 %v2645, 7
    %v2647 = vsub.s32 2, %v2646
    %v2648 = vrot.slane %v2328, %v2647
    %v2649 = vlaneseq
    %v2650 = vshrl.u32 %v2649, 7
    %v2651 = vsub.s32 2, %v2650
    %v2652 = vrot.slane %v2332, %v2651
    %v2653 = vlaneseq
    %v2654 = vshrl.u32 %v2653, 7
    %v2655 = vsub.s32 2, %v2654
    %v2656 = vrot.slane %v2336, %v2655
    %v2657 = vmul.f32 %v2067, %v2404
    %v2658 = vmul.f32 %v2067, %v2408
    %v2659 = vmul.f32 %v2067, %v2412
    %v2660 = vmul.f32 %v2067, %v2416
    %v2661 = vmul.f32 %v2067, %v2420
    %v2662 = vmul.f32 %v2067, %v2424
    %v2663 = vmul.f32 %v2067, %v2428
    %v2664 = vmul.f32 %v2067, %v2432
    %v2665 = vmul.f32 %v2067, %v2436
    %v2666 = vmul.f32 %v2067, %v2440
    %v2667 = vmul.f32 %v2067, %v2444
    %v2668 = vmul.f32 %v2067, %v2448
    %v2669 = vmul.f32 %v2067, %v2452
    %v2670 = vmul.f32 %v2067, %v2456
    %v2671 = vmul.f32 %v2067, %v2460
    %v2672 = vmul.f32 %v2067, %v2464
    %v2673 = vmul.f32 %v2067, %v2468
    %v2674 = vmul.f32 %v2067, %v2472
    %v2675 = vmul.f32 %v2067, %v2476
    %v2676 = vmul.f32 %v2067, %v2480
    %v2677 = vmul.f32 %v2067, %v2484
    %v2678 = vmul.f32 %v2067, %v2488
    %v2679 = vmul.f32 %v2067, %v2492
    %v2680 = vmul.f32 %v2067, %v2496
    %v2681 = vmul.f32 %v2067, %v2500
    %v2682 = vmul.f32 %v2067, %v2504
    %v2683 = vmul.f32 %v2067, %v2508
    %v2684 = vmul.f32 %v2067, %v2512
    %v2685 = vmul.f32 %v2067, %v2516
    %v2686 = vmul.f32 %v2067, %v2520
    %v2687 = vmul.f32 %v2067, %v2524
    %v2688 = vmul.f32 %v2067, %v2528
    %v2689 = vmul.f32 %v2067, %v2532
    %v2690 = vmul.f32 %v2067, %v2536
    %v2691 = vmul.f32 %v2067, %v2540
    %v2692 = vmul.f32 %v2067, %v2544
    %v2693 = vmul.f32 %v2067, %v2548
    %v2694 = vmul.f32 %v2067, %v2552
    %v2695 = vmul.f32 %v2067, %v2556
    %v2696 = vmul.f32 %v2067, %v2560
    %v2697 = vmul.f32 %v2067, %v2564
    %v2698 = vmul.f32 %v2067, %v2568
    %v2699 = vmul.f32 %v2067, %v2572
    %v2700 = vmul.f32 %v2067, %v2576
    %v2701 = vmul.f32 %v2067, %v2580
    %v2702 = vmul.f32 %v2067, %v2584
    %v2703 = vmul.f32 %v2067, %v2588
    %v2704 = vmul.f32 %v2067, %v2592
    %v2705 = vmul.f32 %v2067, %v2596
    %v2706 = vmul.f32 %v2067, %v2600
    %v2707 = vmul.f32 %v2067, %v2604
    %v2708 = vmul.f32 %v2067, %v2608
    %v2709 = vmul.f32 %v2067, %v2612
    %v2710 = vmul.f32 %v2067, %v2616
    %v2711 = vmul.f32 %v2067, %v2620
    %v2712 = vmul.f32 %v2067, %v2624
    %v2713 = vmul.f32 %v2067, %v2628
    %v2714 = vmul.f32 %v2067, %v2632
    %v2715 = vmul.f32 %v2067, %v2636
    %v2716 = vmul.f32 %v2067, %v2640
    %v2717 = vmul.f32 %v2067, %v2644
    %v2718 = vmul.f32 %v2067, %v2648
    %v2719 = vmul.f32 %v2067, %v2652
    %v2720 = vmul.f32 %v2067, %v2656
    %v2721 = vmul.f32 %v2071, %v2404
    %v2722 = vmul.f32 %v2071, %v2408
    %v2723 = vmul.f32 %v2071, %v2412
    %v2724 = vmul.f32 %v2071, %v2416
    %v2725 = vmul.f32 %v2071, %v2420
    %v2726 = vmul.f32 %v2071, %v2424
    %v2727 = vmul.f32 %v2071, %v2428
    %v2728 = vmul.f32 %v2071, %v2432
    %v2729 = vmul.f32 %v2071, %v2436
    %v2730 = vmul.f32 %v2071, %v2440
    %v2731 = vmul.f32 %v2071, %v2444
    %v2732 = vmul.f32 %v2071, %v2448
    %v2733 = vmul.f32 %v2071, %v2452
    %v2734 = vmul.f32 %v2071, %v2456
    %v2735 = vmul.f32 %v2071, %v2460
    %v2736 = vmul.f32 %v2071, %v2464
    %v2737 = vmul.f32 %v2071, %v2468
    %v2738 = vmul.f32 %v2071, %v2472
    %v2739 = vmul.f32 %v2071, %v2476
    %v2740 = vmul.f32 %v2071, %v2480
    %v2741 = vmul.f32 %v2071, %v2484
    %v2742 = vmul.f32 %v2071, %v2488
    %v2743 = vmul.f32 %v2071, %v2492
    %v2744 = vmul.f32 %v2071, %v2496
    %v2745 = vmul.f32 %v2071, %v2500
    %v2746 = vmul.f32 %v2071, %v2504
    %v2747 = vmul.f32 %v2071, %v2508
    %v2748 = vmul.f32 %v2071, %v2512
    %v2749 = vmul.f32 %v2071, %v2516
    %v2750 = vmul.f32 %v2071, %v2520
    %v2751 = vmul.f32 %v2071, %v2524
    %v2752 = vmul.f32 %v2071, %v2528
    %v2753 = vmul.f32 %v2071, %v2532
    %v2754 = vmul.f32 %v2071, %v2536
    %v2755 = vmul.f32 %v2071, %v2540
    %v2756 = vmul.f32 %v2071, %v2544
    %v2757 = vmul.f32 %v2071, %v2548
    %v2758 = vmul.f32 %v2071, %v2552
    %v2759 = vmul.f32 %v2071, %v2556
    %v2760 = vmul.f32 %v2071, %v2560
    %v2761 = vmul.f32 %v2071, %v2564
    %v2762 = vmul.f32 %v2071, %v2568
    %v2763 = vmul.f32 %v2071, %v2572
    %v2764 = vmul.f32 %v2071, %v2576
    %v2765 = vmul.f32 %v2071, %v2580
    %v2766 = vmul.f32 %v2071, %v2584
    %v2767 = vmul.f32 %v2071, %v2588
    %v2768 = vmul.f32 %v2071, %v2592
    %v2769 = vmul.f32 %v2071, %v2596
    %v2770 = vmul.f32 %v2071, %v2600
    %v2771 = vmul.f32 %v2071, %v2604
    %v2772 = vmul.f32 %v2071, %v2608
    %v2773 = vmul.f32 %v2071, %v2612
    %v2774 = vmul.f32 %v2071, %v2616
    %v2775 = vmul.f32 %v2071, %v2620
    %v2776 = vmul.f32 %v2071, %v2624
    %v2777 = vmul.f32 %v2071, %v2628
    %v2778 = vmul.f32 %v2071, %v2632
    %v2779 = vmul.f32 %v2071, %v2636
    %v2780 = vmul.f32 %v2071, %v2640
    %v2781 = vmul.f32 %v2071, %v2644
    %v2782 = vmul.f32 %v2071, %v2648
    %v2783 = vmul.f32 %v2071, %v2652
    %v2784 = vmul.f32 %v2071, %v2656
    %v2785 = vmul.f32 %v2075, %v2404
    %v2786 = vmul.f32 %v2075, %v2408
    %v2787 = vmul.f32 %v2075, %v2412
    %v2788 = vmul.f32 %v2075, %v2416
    %v2789 = vmul.f32 %v2075, %v2420
    %v2790 = vmul.f32 %v2075, %v2424
    %v2791 = vmul.f32 %v2075, %v2428
    %v2792 = vmul.f32 %v2075, %v2432
    %v2793 = vmul.f32 %v2075, %v2436
    %v2794 = vmul.f32 %v2075, %v2440
    %v2795 = vmul.f32 %v2075, %v2444
    %v2796 = vmul.f32 %v2075, %v2448
    %v2797 = vmul.f32 %v2075, %v2452
    %v2798 = vmul.f32 %v2075, %v2456
    %v2799 = vmul.f32 %v2075, %v2460
    %v2800 = vmul.f32 %v2075, %v2464
    %v2801 = vmul.f32 %v2075, %v2468
    %v2802 = vmul.f32 %v2075, %v2472
    %v2803 = vmul.f32 %v2075, %v2476
    %v2804 = vmul.f32 %v2075, %v2480
    %v2805 = vmul.f32 %v2075, %v2484
    %v2806 = vmul.f32 %v2075, %v2488
    %v2807 = vmul.f32 %v2075, %v2492
    %v2808 = vmul.f32 %v2075, %v2496
    %v2809 = vmul.f32 %v2075, %v2500
    %v2810 = vmul.f32 %v2075, %v2504
    %v2811 = vmul.f32 %v2075, %v2508
    %v2812 = vmul.f32 %v2075, %v2512
    %v2813 = vmul.f32 %v2075, %v2516
    %v2814 = vmul.f32 %v2075, %v2520
    %v2815 = vmul.f32 %v2075, %v2524
    %v2816 = vmul.f32 %v2075, %v2528
    %v2817 = vmul.f32 %v2075, %v2532
    %v2818 = vmul.f32 %v2075, %v2536
    %v2819 = vmul.f32 %v2075, %v2540
    %v2820 = vmul.f32 %v2075, %v2544
    %v2821 = vmul.f32 %v2075, %v2548
    %v2822 = vmul.f32 %v2075, %v2552
    %v2823 = vmul.f32 %v2075, %v2556
    %v2824 = vmul.f32 %v2075, %v2560
    %v2825 = vmul.f32 %v2075, %v2564
    %v2826 = vmul.f32 %v2075, %v2568
    %v2827 = vmul.f32 %v2075, %v2572
    %v2828 = vmul.f32 %v2075, %v2576
    %v2829 = vmul.f32 %v2075, %v2580
    %v2830 = vmul.f32 %v2075, %v2584
    %v2831 = vmul.f32 %v2075, %v2588
    %v2832 = vmul.f32 %v2075, %v2592
    %v2833 = vmul.f32 %v2075, %v2596
    %v2834 = vmul.f32 %v2075, %v2600
    %v2835 = vmul.f32 %v2075, %v2604
    %v2836 = vmul.f32 %v2075, %v2608
    %v2837 = vmul.f32 %v2075, %v2612
    %v2838 = vmul.f32 %v2075, %v2616
    %v2839 = vmul.f32 %v2075, %v2620
    %v2840 = vmul.f32 %v2075, %v2624
    %v2841 = vmul.f32 %v2075, %v2628
    %v2842 = vmul.f32 %v2075, %v2632
    %v2843 = vmul.f32 %v2075, %v2636
    %v2844 = vmul.f32 %v2075, %v2640
    %v2845 = vmul.f32 %v2075, %v2644
    %v2846 = vmul.f32 %v2075, %v2648
    %v2847 = vmul.f32 %v2075, %v2652
    %v2848 = vmul.f32 %v2075, %v2656
    %v2849 = vmul.f32 %v2079, %v2404
    %v2850 = vmul.f32 %v2079, %v2408
    %v2851 = vmul.f32 %v2079, %v2412
    %v2852 = vmul.f32 %v2079, %v2416
    %v2853 = vmul.f32 %v2079, %v2420
    %v2854 = vmul.f32 %v2079, %v2424
    %v2855 = vmul.f32 %v2079, %v2428
    %v2856 = vmul.f32 %v2079, %v2432
    %v2857 = vmul.f32 %v2079, %v2436
    %v2858 = vmul.f32 %v2079, %v2440
    %v2859 = vmul.f32 %v2079, %v2444
    %v2860 = vmul.f32 %v2079, %v2448
    %v2861 = vmul.f32 %v2079, %v2452
    %v2862 = vmul.f32 %v2079, %v2456
    %v2863 = vmul.f32 %v2079, %v2460
    %v2864 = vmul.f32 %v2079, %v2464
    %v2865 = vmul.f32 %v2079, %v2468
    %v2866 = vmul.f32 %v2079, %v2472
    %v2867 = vmul.f32 %v2079, %v2476
    %v2868 = vmul.f32 %v2079, %v2480
    %v2869 = vmul.f32 %v2079, %v2484
    %v2870 = vmul.f32 %v2079, %v2488
    %v2871 = vmul.f32 %v2079, %v2492
    %v2872 = vmul.f32 %v2079, %v2496
    %v2873 = vmul.f32 %v2079, %v2500
    %v2874 = vmul.f32 %v2079, %v2504
    %v2875 = vmul.f32 %v2079, %v2508
    %v2876 = vmul.f32 %v2079, %v2512
    %v2877 = vmul.f32 %v2079, %v2516
    %v2878 = vmul.f32 %v2079, %v2520
    %v2879 = vmul.f32 %v2079, %v2524
    %v2880 = vmul.f32 %v2079, %v2528
    %v2881 = vmul.f32 %v2079, %v2532
    %v2882 = vmul.f32 %v2079, %v2536
    %v2883 = vmul.f32 %v2079, %v2540
    %v2884 = vmul.f32 %v2079, %v2544
    %v2885 = vmul.f32 %v2079, %v2548
    %v2886 = vmul.f32 %v2079, %v2552
    %v2887 = vmul.f32 %v2079, %v2556
    %v2888 = vmul.f32 %v2079, %v2560
    %v2889 = vmul.f32 %v2079, %v2564
    %v2890 = vmul.f32 %v2079, %v2568
    %v2891 = vmul.f32 %v2079, %v2572
    %v2892 = vmul.f32 %v2079, %v2576
    %v2893 = vmul.f32 %v2079, %v2580
    %v2894 = vmul.f32 %v2079, %v2584
    %v2895 = vmul.f32 %v2079, %v2588
    %v2896 = vmul.f32 %v2079, %v2592
    %v2897 = vmul.f32 %v2079, %v2596
    %v2898 = vmul.f32 %v2079, %v2600
    %v2899 = vmul.f32 %v2079, %v2604
    %v2900 = vmul.f32 %v2079, %v2608
    %v2901 = vmul.f32 %v2079, %v2612
    %v2902 = vmul.f32 %v2079, %v2616
    %v2903 = vmul.f32 %v2079, %v2620
    %v2904 = vmul.f32 %v2079, %v2624
    %v2905 = vmul.f32 %v2079, %v2628
    %v2906 = vmul.f32 %v2079, %v2632
    %v2907 = vmul.f32 %v2079, %v2636
    %v2908 = vmul.f32 %v2079, %v2640
    %v2909 = vmul.f32 %v2079, %v2644
    %v2910 = vmul.f32 %v2079, %v2648
    %v2911 = vmul.f32 %v2079, %v2652
    %v2912 = vmul.f32 %v2079, %v2656
    %v2913 = vadd.f32 %v1809, %v2657
    %v2914 = vadd.f32 %v1810, %v2658
    %v2915 = vadd.f32 %v1811, %v2659
    %v2916 = vadd.f32 %v1812, %v2660
    %v2917 = vadd.f32 %v1813, %v2661
    %v2918 = vadd.f32 %v1814, %v2662
    %v2919 = vadd.f32 %v1815, %v2663
    %v2920 = vadd.f32 %v1816, %v2664
    %v2921 = vadd.f32 %v1817, %v2665
    %v2922 = vadd.f32 %v1818, %v2666
    %v2923 = vadd.f32 %v1819, %v2667
    %v2924 = vadd.f32 %v1820, %v2668
    %v2925 = vadd.f32 %v1821, %v2669
    %v2926 = vadd.f32 %v1822, %v2670
    %v2927 = vadd.f32 %v1823, %v2671
    %v2928 = vadd.f32 %v1824, %v2672
    %v2929 = vadd.f32 %v1825, %v2673
    %v2930 = vadd.f32 %v1826, %v2674
    %v2931 = vadd.f32 %v1827, %v2675
    %v2932 = vadd.f32 %v1828, %v2676
    %v2933 = vadd.f32 %v1829, %v2677
    %v2934 = vadd.f32 %v1830, %v2678
    %v2935 = vadd.f32 %v1831, %v2679
    %v2936 = vadd.f32 %v1832, %v2680
    %v2937 = vadd.f32 %v1833, %v2681
    %v2938 = vadd.f32 %v1834, %v2682
    %v2939 = vadd.f32 %v1835, %v2683
    %v2940 = vadd.f32 %v1836, %v2684
    %v2941 = vadd.f32 %v1837, %v2685
    %v2942 = vadd.f32 %v1838, %v2686
    %v2943 = vadd.f32 %v1839, %v2687
    %v2944 = vadd.f32 %v1840, %v2688
    %v2945 = vadd.f32 %v1841, %v2689
    %v2946 = vadd.f32 %v1842, %v2690
    %v2947 = vadd.f32 %v1843, %v2691
    %v2948 = vadd.f32 %v1844, %v2692
    %v2949 = vadd.f32 %v1845, %v2693
    %v2950 = vadd.f32 %v1846, %v2694
    %v2951 = vadd.f32 %v1847, %v2695
    %v2952 = vadd.f32 %v1848, %v2696
    %v2953 = vadd.f32 %v1849, %v2697
    %v2954 = vadd.f32 %v1850, %v2698
    %v2955 = vadd.f32 %v1851, %v2699
    %v2956 = vadd.f32 %v1852, %v2700
    %v2957 = vadd.f32 %v1853, %v2701
    %v2958 = vadd.f32 %v1854, %v2702
    %v2959 = vadd.f32 %v1855, %v2703
    %v2960 = vadd.f32 %v1856, %v2704
    %v2961 = vadd.f32 %v1857, %v2705
    %v2962 = vadd.f32 %v1858, %v2706
    %v2963 = vadd.f32 %v1859, %v2707
    %v2964 = vadd.f32 %v1860, %v2708
    %v2965 = vadd.f32 %v1861, %v2709
    %v2966 = vadd.f32 %v1862, %v2710
    %v2967 = vadd.f32 %v1863, %v2711
    %v2968 = vadd.f32 %v1864, %v2712
    %v2969 = vadd.f32 %v1865, %v2713
    %v2970 = vadd.f32 %v1866, %v2714
    %v2971 = vadd.f32 %v1867, %v2715
    %v2972 = vadd.f32 %v1868, %v2716
    %v2973 = vadd.f32 %v1869, %v2717
    %v2974 = vadd.f32 %v1870, %v2718
    %v2975 = vadd.f32 %v1871, %v2719
    %v2976 = vadd.f32 %v1872, %v2720
    %v2977 = vadd.f32 %v1873, %v2721
    %v2978 = vadd.f32 %v1874, %v2722
    %v2979 = vadd.f32 %v1875, %v2723
    %v2980 = vadd.f32 %v1876, %v2724
    %v2981 = vadd.f32 %v1877, %v2725
    %v2982 = vadd.f32 %v1878, %v2726
    %v2983 = vadd.f32 %v1879, %v2727
    %v2984 = vadd.f32 %v1880, %v2728
    %v2985 = vadd.f32 %v1881, %v2729
    %v2986 = vadd.f32 %v1882, %v2730
    %v2987 = vadd.f32 %v1883, %v2731
    %v2988 = vadd.f32 %v1884, %v2732
    %v2989 = vadd.f32 %v1885, %v2733
    %v2990 = vadd.f32 %v1886, %v2734
    %v2991 = vadd.f32 %v1887, %v2735
    %v2992 = vadd.f32 %v1888, %v2736
    %v2993 = vadd.f32 %v1889, %v2737
    %v2994 = vadd.f32 %v1890, %v2738
    %v2995 = vadd.f32 %v1891, %v2739
    %v2996 = vadd.f32 %v1892, %v2740
    %v2997 = vadd.f32 %v1893, %v2741
    %v2998 = vadd.f32 %v1894, %v2742
    %v2999 = vadd.f32 %v1895, %v2743
    %v3000 = vadd.f32 %v1896, %v2744
    %v3001 = vadd.f32 %v1897, %v2745
    %v3002 = vadd.f32 %v1898, %v2746
    %v3003 = vadd.f32 %v1899, %v2747
    %v3004 = vadd.f32 %v1900, %v2748
    %v3005 = vadd.f32 %v1901, %v2749
    %v3006 = vadd.f32 %v1902, %v2750
    %v3007 = vadd.f32 %v1903, %v2751
    %v3008 = vadd.f32 %v1904, %v2752
    %v3009 = vadd.f32 %v1905, %v2753
    %v3010 = vadd.f32 %v1906, %v2754
    %v3011 = vadd.f32 %v1907, %v2755
    %v3012 = vadd.f32 %v1908, %v2756
    %v3013 = vadd.f32 %v1909, %v2757
    %v3014 = vadd.f32 %v1910, %v2758
    %v3015 = vadd.f32 %v1911, %v2759
    %v3016 = vadd.f32 %v1912, %v2760
    %v3017 = vadd.f32 %v1913, %v2761
    %v3018 = vadd.f32 %v1914, %v2762
    %v3019 = vadd.f32 %v1915, %v2763
    %v3020 = vadd.f32 %v1916, %v2764
    %v3021 = vadd.f32 %v1917, %v2765
    %v3022 = vadd.f32 %v1918, %v2766
    %v3023 = vadd.f32 %v1919, %v2767
    %v3024 = vadd.f32 %v1920, %v2768
    %v3025 = vadd.f32 %v1921, %v2769
    %v3026 = vadd.f32 %v1922, %v2770
    %v3027 = vadd.f32 %v1923, %v2771
    %v3028 = vadd.f32 %v1924, %v2772
    %v3029 = vadd.f32 %v1925, %v2773
    %v3030 = vadd.f32 %v1926, %v2774
    %v3031 = vadd.f32 %v1927, %v2775
    %v3032 = vadd.f32 %v1928, %v2776
    %v3033 = vadd.f32 %v1929, %v2777
    %v3034 = vadd.f32 %v1930, %v2778
    %v3035 = vadd.f32 %v1931, %v2779
    %v3036 = vadd.f32 %v1932, %v2780
    %v3037 = vadd.f32 %v1933, %v2781
    %v3038 = vadd.f32 %v1934, %v2782
    %v3039 = vadd.f32 %v1935, %v2783
    %v3040 = vadd.f32 %v1936, %v2784
    %v3041 = vadd.f32 %v1937, %v2785
    %v3042 = vadd.f32 %v1938, %v2786
    %v3043 = vadd.f32 %v1939, %v2787
    %v3044 = vadd.f32 %v1940, %v2788
    %v3045 = vadd.f32 %v1941, %v2789
    %v3046 = vadd.f32 %v1942, %v2790
    %v3047 = vadd.f32 %v1943, %v2791
    %v3048 = vadd.f32 %v1944, %v2792
    %v3049 = vadd.f32 %v1945, %v2793
    %v3050 = vadd.f32 %v1946, %v2794
    %v3051 = vadd.f32 %v1947, %v2795
    %v3052 = vadd.f32 %v1948, %v2796
    %v3053 = vadd.f32 %v1949, %v2797
    %v3054 = vadd.f32 %v1950, %v2798
    %v3055 = vadd.f32 %v1951, %v2799
    %v3056 = vadd.f32 %v1952, %v2800
    %v3057 = vadd.f32 %v1953, %v2801
    %v3058 = vadd.f32 %v1954, %v2802
    %v3059 = vadd.f32 %v1955, %v2803
    %v3060 = vadd.f32 %v1956, %v2804
    %v3061 = vadd.f32 %v1957, %v2805
    %v3062 = vadd.f32 %v1958, %v2806
    %v3063 = vadd.f32 %v1959, %v2807
    %v3064 = vadd.f32 %v1960, %v2808
    %v3065 = vadd.f32 %v1961, %v2809
    %v3066 = vadd.f32 %v1962, %v2810
    %v3067 = vadd.f32 %v1963, %v2811
    %v3068 = vadd.f32 %v1964, %v2812
    %v3069 = vadd.f32 %v1965, %v2813
    %v3070 = vadd.f32 %v1966, %v2814
    %v3071 = vadd.f32 %v1967, %v2815
    %v3072 = vadd.f32 %v1968, %v2816
    %v3073 = vadd.f32 %v1969, %v2817
    %v3074 = vadd.f32 %v1970, %v2818
    %v3075 = vadd.f32 %v1971, %v2819
    %v3076 = vadd.f32 %v1972, %v2820
    %v3077 = vadd.f32 %v1973, %v2821
    %v3078 = vadd.f32 %v1974, %v2822
    %v3079 = vadd.f32 %v1975, %v2823
    %v3080 = vadd.f32 %v1976, %v2824
    %v3081 = vadd.f32 %v1977, %v2825
    %v3082 = vadd.f32 %v1978, %v2826
    %v3083 = vadd.f32 %v1979, %v2827
    %v3084 = vadd.f32 %v1980, %v2828
    %v3085 = vadd.f32 %v1981, %v2829
    %v3086 = vadd.f32 %v1982, %v2830
    %v3087 = vadd.f32 %v1983, %v2831
    %v3088 = vadd.f32 %v1984, %v2832
    %v3089 = vadd.f32 %v1985, %v2833
    %v3090 = vadd.f32 %v1986, %v2834
    %v3091 = vadd.f32 %v1987, %v2835
    %v3092 = vadd.f32 %v1988, %v2836
    %v3093 = vadd.f32 %v1989, %v2837
    %v3094 = vadd.f32 %v1990, %v2838
    %v3095 = vadd.f32 %v1991, %v2839
    %v3096 = vadd.f32 %v1992, %v2840
    %v3097 = vadd.f32 %v1993, %v2841
    %v3098 = vadd.f32 %v1994, %v2842
    %v3099 = vadd.f32 %v1995, %v2843
    %v3100 = vadd.f32 %v1996, %v2844
    %v3101 = vadd.f32 %v1997, %v2845
    %v3102 = vadd.f32 %v1998, %v2846
    %v3103 = vadd.f32 %v1999, %v2847
    %v3104 = vadd.f32 %v2000, %v2848
    %v3105 = vadd.f32 %v2001, %v2849
    %v3106 = vadd.f32 %v2002, %v2850
    %v3107 = vadd.f32 %v2003, %v2851
    %v3108 = vadd.f32 %v2004, %v2852
    %v3109 = vadd.f32 %v2005, %v2853
    %v3110 = vadd.f32 %v2006, %v2854
    %v3111 = vadd.f32 %v2007, %v2855
    %v3112 = vadd.f32 %v2008, %v2856
    %v3113 = vadd.f32 %v2009, %v2857
    %v3114 = vadd.f32 %v2010, %v2858
    %v3115 = vadd.f32 %v2011, %v2859
    %v3116 = vadd.f32 %v2012, %v2860
    %v3117 = vadd.f32 %v2013, %v2861
    %v3118 = vadd.f32 %v2014, %v2862
    %v3119 = vadd.f32 %v2015, %v2863
    %v3120 = vadd.f32 %v2016, %v2864
    %v3121 = vadd.f32 %v2017, %v2865
    %v3122 = vadd.f32 %v2018, %v2866
    %v3123 = vadd.f32 %v2019, %v2867
    %v3124 = vadd.f32 %v2020, %v2868
    %v3125 = vadd.f32 %v2021, %v2869
    %v3126 = vadd.f32 %v2022, %v2870
    %v3127 = vadd.f32 %v2023, %v2871
    %v3128 = vadd.f32 %v2024, %v2872
    %v3129 = vadd.f32 %v2025, %v2873
    %v3130 = vadd.f32 %v2026, %v2874
    %v3131 = vadd.f32 %v2027, %v2875
    %v3132 = vadd.f32 %v2028, %v2876
    %v3133 = vadd.f32 %v2029, %v2877
    %v3134 = vadd.f32 %v2030, %v2878
    %v3135 = vadd.f32 %v2031, %v2879
    %v3136 = vadd.f32 %v2032, %v2880
    %v3137 = vadd.f32 %v2033, %v2881
    %v3138 = vadd.f32 %v2034, %v2882
    %v3139 = vadd.f32 %v2035, %v2883
    %v3140 = vadd.f32 %v2036, %v2884
    %v3141 = vadd.f32 %v2037, %v2885
    %v3142 = vadd.f32 %v2038, %v2886
    %v3143 = vadd.f32 %v2039, %v2887
    %v3144 = vadd.f32 %v2040, %v2888
    %v3145 = vadd.f32 %v2041, %v2889
    %v3146 = vadd.f32 %v2042, %v2890
    %v3147 = vadd.f32 %v2043, %v2891
    %v3148 = vadd.f32 %v2044, %v2892
    %v3149 = vadd.f32 %v2045, %v2893
    %v3150 = vadd.f32 %v2046, %v2894
    %v3151 = vadd.f32 %v2047, %v2895
    %v3152 = vadd.f32 %v2048, %v2896
    %v3153 = vadd.f32 %v2049, %v2897
    %v3154 = vadd.f32 %v2050, %v2898
    %v3155 = vadd.f32 %v2051, %v2899
    %v3156 = vadd.f32 %v2052, %v2900
    %v3157 = vadd.f32 %v2053, %v2901
    %v3158 = vadd.f32 %v2054, %v2902
    %v3159 = vadd.f32 %v2055, %v2903
    %v3160 = vadd.f32 %v2056, %v2904
    %v3161 = vadd.f32 %v2057, %v2905
    %v3162 = vadd.f32 %v2058, %v2906
    %v3163 = vadd.f32 %v2059, %v2907
    %v3164 = vadd.f32 %v2060, %v2908
    %v3165 = vadd.f32 %v2061, %v2909
    %v3166 = vadd.f32 %v2062, %v2910
    %v3167 = vadd.f32 %v2063, %v2911
    %v3168 = vadd.f32 %v2064, %v2912
    %v3169 = vld [vmem:[%s2] sm:$0xff]
    %v3170 = vld [vmem:[%s2 + $0x8] sm:$0xff]
    %v3171 = vld [vmem:[%s2 + $0x10] sm:$0xff]
    %v3172 = vld [vmem:[%s2 + $0x18] sm:$0xff]
    %3174 = vset.pattern.permute.xlu0 0
    %3175 = vperm.xlu0 %3174, %v3169
    %v3176 = vpop.permute.xlu0 %3175
    %3179 = vset.pattern.permute.xlu0 0
    %3180 = vperm.xlu0 %3179, %v3170
    %v3181 = vpop.permute.xlu0 %3180
    %3184 = vset.pattern.permute.xlu0 0
    %3185 = vperm.xlu0 %3184, %v3171
    %v3186 = vpop.permute.xlu0 %3185
    %3189 = vset.pattern.permute.xlu0 0
    %3190 = vperm.xlu0 %3189, %v3172
    %v3191 = vpop.permute.xlu0 %3190
    %v3193 = vadd.f32 %v2913, %v3176
    %v3194 = vadd.f32 %v2914, %v3176
    %v3195 = vadd.f32 %v2915, %v3176
    %v3196 = vadd.f32 %v2916, %v3176
    %v3197 = vadd.f32 %v2917, %v3176
    %v3198 = vadd.f32 %v2918, %v3176
    %v3199 = vadd.f32 %v2919, %v3176
    %v3200 = vadd.f32 %v2920, %v3176
    %v3201 = vadd.f32 %v2921, %v3176
    %v3202 = vadd.f32 %v2922, %v3176
    %v3203 = vadd.f32 %v2923, %v3176
    %v3204 = vadd.f32 %v2924, %v3176
    %v3205 = vadd.f32 %v2925, %v3176
    %v3206 = vadd.f32 %v2926, %v3176
    %v3207 = vadd.f32 %v2927, %v3176
    %v3208 = vadd.f32 %v2928, %v3176
    %v3209 = vadd.f32 %v2929, %v3176
    %v3210 = vadd.f32 %v2930, %v3176
    %v3211 = vadd.f32 %v2931, %v3176
    %v3212 = vadd.f32 %v2932, %v3176
    %v3213 = vadd.f32 %v2933, %v3176
    %v3214 = vadd.f32 %v2934, %v3176
    %v3215 = vadd.f32 %v2935, %v3176
    %v3216 = vadd.f32 %v2936, %v3176
    %v3217 = vadd.f32 %v2937, %v3176
    %v3218 = vadd.f32 %v2938, %v3176
    %v3219 = vadd.f32 %v2939, %v3176
    %v3220 = vadd.f32 %v2940, %v3176
    %v3221 = vadd.f32 %v2941, %v3176
    %v3222 = vadd.f32 %v2942, %v3176
    %v3223 = vadd.f32 %v2943, %v3176
    %v3224 = vadd.f32 %v2944, %v3176
    %v3225 = vadd.f32 %v2945, %v3176
    %v3226 = vadd.f32 %v2946, %v3176
    %v3227 = vadd.f32 %v2947, %v3176
    %v3228 = vadd.f32 %v2948, %v3176
    %v3229 = vadd.f32 %v2949, %v3176
    %v3230 = vadd.f32 %v2950, %v3176
    %v3231 = vadd.f32 %v2951, %v3176
    %v3232 = vadd.f32 %v2952, %v3176
    %v3233 = vadd.f32 %v2953, %v3176
    %v3234 = vadd.f32 %v2954, %v3176
    %v3235 = vadd.f32 %v2955, %v3176
    %v3236 = vadd.f32 %v2956, %v3176
    %v3237 = vadd.f32 %v2957, %v3176
    %v3238 = vadd.f32 %v2958, %v3176
    %v3239 = vadd.f32 %v2959, %v3176
    %v3240 = vadd.f32 %v2960, %v3176
    %v3241 = vadd.f32 %v2961, %v3176
    %v3242 = vadd.f32 %v2962, %v3176
    %v3243 = vadd.f32 %v2963, %v3176
    %v3244 = vadd.f32 %v2964, %v3176
    %v3245 = vadd.f32 %v2965, %v3176
    %v3246 = vadd.f32 %v2966, %v3176
    %v3247 = vadd.f32 %v2967, %v3176
    %v3248 = vadd.f32 %v2968, %v3176
    %v3249 = vadd.f32 %v2969, %v3176
    %v3250 = vadd.f32 %v2970, %v3176
    %v3251 = vadd.f32 %v2971, %v3176
    %v3252 = vadd.f32 %v2972, %v3176
    %v3253 = vadd.f32 %v2973, %v3176
    %v3254 = vadd.f32 %v2974, %v3176
    %v3255 = vadd.f32 %v2975, %v3176
    %v3256 = vadd.f32 %v2976, %v3176
    %v3257 = vadd.f32 %v2977, %v3181
    %v3258 = vadd.f32 %v2978, %v3181
    %v3259 = vadd.f32 %v2979, %v3181
    %v3260 = vadd.f32 %v2980, %v3181
    %v3261 = vadd.f32 %v2981, %v3181
    %v3262 = vadd.f32 %v2982, %v3181
    %v3263 = vadd.f32 %v2983, %v3181
    %v3264 = vadd.f32 %v2984, %v3181
    %v3265 = vadd.f32 %v2985, %v3181
    %v3266 = vadd.f32 %v2986, %v3181
    %v3267 = vadd.f32 %v2987, %v3181
    %v3268 = vadd.f32 %v2988, %v3181
    %v3269 = vadd.f32 %v2989, %v3181
    %v3270 = vadd.f32 %v2990, %v3181
    %v3271 = vadd.f32 %v2991, %v3181
    %v3272 = vadd.f32 %v2992, %v3181
    %v3273 = vadd.f32 %v2993, %v3181
    %v3274 = vadd.f32 %v2994, %v3181
    %v3275 = vadd.f32 %v2995, %v3181
    %v3276 = vadd.f32 %v2996, %v3181
    %v3277 = vadd.f32 %v2997, %v3181
    %v3278 = vadd.f32 %v2998, %v3181
    %v3279 = vadd.f32 %v2999, %v3181
    %v3280 = vadd.f32 %v3000, %v3181
    %v3281 = vadd.f32 %v3001, %v3181
    %v3282 = vadd.f32 %v3002, %v3181
    %v3283 = vadd.f32 %v3003, %v3181
    %v3284 = vadd.f32 %v3004, %v3181
    %v3285 = vadd.f32 %v3005, %v3181
    %v3286 = vadd.f32 %v3006, %v3181
    %v3287 = vadd.f32 %v3007, %v3181
    %v3288 = vadd.f32 %v3008, %v3181
    %v3289 = vadd.f32 %v3009, %v3181
    %v3290 = vadd.f32 %v3010, %v3181
    %v3291 = vadd.f32 %v3011, %v3181
    %v3292 = vadd.f32 %v3012, %v3181
    %v3293 = vadd.f32 %v3013, %v3181
    %v3294 = vadd.f32 %v3014, %v3181
    %v3295 = vadd.f32 %v3015, %v3181
    %v3296 = vadd.f32 %v3016, %v3181
    %v3297 = vadd.f32 %v3017, %v3181
    %v3298 = vadd.f32 %v3018, %v3181
    %v3299 = vadd.f32 %v3019, %v3181
    %v3300 = vadd.f32 %v3020, %v3181
    %v3301 = vadd.f32 %v3021, %v3181
    %v3302 = vadd.f32 %v3022, %v3181
    %v3303 = vadd.f32 %v3023, %v3181
    %v3304 = vadd.f32 %v3024, %v3181
    %v3305 = vadd.f32 %v3025, %v3181
    %v3306 = vadd.f32 %v3026, %v3181
    %v3307 = vadd.f32 %v3027, %v3181
    %v3308 = vadd.f32 %v3028, %v3181
    %v3309 = vadd.f32 %v3029, %v3181
    %v3310 = vadd.f32 %v3030, %v3181
    %v3311 = vadd.f32 %v3031, %v3181
    %v3312 = vadd.f32 %v3032, %v3181
    %v3313 = vadd.f32 %v3033, %v3181
    %v3314 = vadd.f32 %v3034, %v3181
    %v3315 = vadd.f32 %v3035, %v3181
    %v3316 = vadd.f32 %v3036, %v3181
    %v3317 = vadd.f32 %v3037, %v3181
    %v3318 = vadd.f32 %v3038, %v3181
    %v3319 = vadd.f32 %v3039, %v3181
    %v3320 = vadd.f32 %v3040, %v3181
    %v3321 = vadd.f32 %v3041, %v3186
    %v3322 = vadd.f32 %v3042, %v3186
    %v3323 = vadd.f32 %v3043, %v3186
    %v3324 = vadd.f32 %v3044, %v3186
    %v3325 = vadd.f32 %v3045, %v3186
    %v3326 = vadd.f32 %v3046, %v3186
    %v3327 = vadd.f32 %v3047, %v3186
    %v3328 = vadd.f32 %v3048, %v3186
    %v3329 = vadd.f32 %v3049, %v3186
    %v3330 = vadd.f32 %v3050, %v3186
    %v3331 = vadd.f32 %v3051, %v3186
    %v3332 = vadd.f32 %v3052, %v3186
    %v3333 = vadd.f32 %v3053, %v3186
    %v3334 = vadd.f32 %v3054, %v3186
    %v3335 = vadd.f32 %v3055, %v3186
    %v3336 = vadd.f32 %v3056, %v3186
    %v3337 = vadd.f32 %v3057, %v3186
    %v3338 = vadd.f32 %v3058, %v3186
    %v3339 = vadd.f32 %v3059, %v3186
    %v3340 = vadd.f32 %v3060, %v3186
    %v3341 = vadd.f32 %v3061, %v3186
    %v3342 = vadd.f32 %v3062, %v3186
    %v3343 = vadd.f32 %v3063, %v3186
    %v3344 = vadd.f32 %v3064, %v3186
    %v3345 = vadd.f32 %v3065, %v3186
    %v3346 = vadd.f32 %v3066, %v3186
    %v3347 = vadd.f32 %v3067, %v3186
    %v3348 = vadd.f32 %v3068, %v3186
    %v3349 = vadd.f32 %v3069, %v3186
    %v3350 = vadd.f32 %v3070, %v3186
    %v3351 = vadd.f32 %v3071, %v3186
    %v3352 = vadd.f32 %v3072, %v3186
    %v3353 = vadd.f32 %v3073, %v3186
    %v3354 = vadd.f32 %v3074, %v3186
    %v3355 = vadd.f32 %v3075, %v3186
    %v3356 = vadd.f32 %v3076, %v3186
    %v3357 = vadd.f32 %v3077, %v3186
    %v3358 = vadd.f32 %v3078, %v3186
    %v3359 = vadd.f32 %v3079, %v3186
    %v3360 = vadd.f32 %v3080, %v3186
    %v3361 = vadd.f32 %v3081, %v3186
    %v3362 = vadd.f32 %v3082, %v3186
    %v3363 = vadd.f32 %v3083, %v3186
    %v3364 = vadd.f32 %v3084, %v3186
    %v3365 = vadd.f32 %v3085, %v3186
    %v3366 = vadd.f32 %v3086, %v3186
    %v3367 = vadd.f32 %v3087, %v3186
    %v3368 = vadd.f32 %v3088, %v3186
    %v3369 = vadd.f32 %v3089, %v3186
    %v3370 = vadd.f32 %v3090, %v3186
    %v3371 = vadd.f32 %v3091, %v3186
    %v3372 = vadd.f32 %v3092, %v3186
    %v3373 = vadd.f32 %v3093, %v3186
    %v3374 = vadd.f32 %v3094, %v3186
    %v3375 = vadd.f32 %v3095, %v3186
    %v3376 = vadd.f32 %v3096, %v3186
    %v3377 = vadd.f32 %v3097, %v3186
    %v3378 = vadd.f32 %v3098, %v3186
    %v3379 = vadd.f32 %v3099, %v3186
    %v3380 = vadd.f32 %v3100, %v3186
    %v3381 = vadd.f32 %v3101, %v3186
    %v3382 = vadd.f32 %v3102, %v3186
    %v3383 = vadd.f32 %v3103, %v3186
    %v3384 = vadd.f32 %v3104, %v3186
    %v3385 = vadd.f32 %v3105, %v3191
    %v3386 = vadd.f32 %v3106, %v3191
    %v3387 = vadd.f32 %v3107, %v3191
    %v3388 = vadd.f32 %v3108, %v3191
    %v3389 = vadd.f32 %v3109, %v3191
    %v3390 = vadd.f32 %v3110, %v3191
    %v3391 = vadd.f32 %v3111, %v3191
    %v3392 = vadd.f32 %v3112, %v3191
    %v3393 = vadd.f32 %v3113, %v3191
    %v3394 = vadd.f32 %v3114, %v3191
    %v3395 = vadd.f32 %v3115, %v3191
    %v3396 = vadd.f32 %v3116, %v3191
    %v3397 = vadd.f32 %v3117, %v3191
    %v3398 = vadd.f32 %v3118, %v3191
    %v3399 = vadd.f32 %v3119, %v3191
    %v3400 = vadd.f32 %v3120, %v3191
    %v3401 = vadd.f32 %v3121, %v3191
    %v3402 = vadd.f32 %v3122, %v3191
    %v3403 = vadd.f32 %v3123, %v3191
    %v3404 = vadd.f32 %v3124, %v3191
    %v3405 = vadd.f32 %v3125, %v3191
    %v3406 = vadd.f32 %v3126, %v3191
    %v3407 = vadd.f32 %v3127, %v3191
    %v3408 = vadd.f32 %v3128, %v3191
    %v3409 = vadd.f32 %v3129, %v3191
    %v3410 = vadd.f32 %v3130, %v3191
    %v3411 = vadd.f32 %v3131, %v3191
    %v3412 = vadd.f32 %v3132, %v3191
    %v3413 = vadd.f32 %v3133, %v3191
    %v3414 = vadd.f32 %v3134, %v3191
    %v3415 = vadd.f32 %v3135, %v3191
    %v3416 = vadd.f32 %v3136, %v3191
    %v3417 = vadd.f32 %v3137, %v3191
    %v3418 = vadd.f32 %v3138, %v3191
    %v3419 = vadd.f32 %v3139, %v3191
    %v3420 = vadd.f32 %v3140, %v3191
    %v3421 = vadd.f32 %v3141, %v3191
    %v3422 = vadd.f32 %v3142, %v3191
    %v3423 = vadd.f32 %v3143, %v3191
    %v3424 = vadd.f32 %v3144, %v3191
    %v3425 = vadd.f32 %v3145, %v3191
    %v3426 = vadd.f32 %v3146, %v3191
    %v3427 = vadd.f32 %v3147, %v3191
    %v3428 = vadd.f32 %v3148, %v3191
    %v3429 = vadd.f32 %v3149, %v3191
    %v3430 = vadd.f32 %v3150, %v3191
    %v3431 = vadd.f32 %v3151, %v3191
    %v3432 = vadd.f32 %v3152, %v3191
    %v3433 = vadd.f32 %v3153, %v3191
    %v3434 = vadd.f32 %v3154, %v3191
    %v3435 = vadd.f32 %v3155, %v3191
    %v3436 = vadd.f32 %v3156, %v3191
    %v3437 = vadd.f32 %v3157, %v3191
    %v3438 = vadd.f32 %v3158, %v3191
    %v3439 = vadd.f32 %v3159, %v3191
    %v3440 = vadd.f32 %v3160, %v3191
    %v3441 = vadd.f32 %v3161, %v3191
    %v3442 = vadd.f32 %v3162, %v3191
    %v3443 = vadd.f32 %v3163, %v3191
    %v3444 = vadd.f32 %v3164, %v3191
    %v3445 = vadd.f32 %v3165, %v3191
    %v3446 = vadd.f32 %v3166, %v3191
    %v3447 = vadd.f32 %v3167, %v3191
    %v3448 = vadd.f32 %v3168, %v3191
    %v3449 = vmax.f32 %v3193, 0.0
    %v3450 = vmax.f32 %v3194, 0.0
    %v3451 = vmax.f32 %v3195, 0.0
    %v3452 = vmax.f32 %v3196, 0.0
    %v3453 = vmax.f32 %v3197, 0.0
    %v3454 = vmax.f32 %v3198, 0.0
    %v3455 = vmax.f32 %v3199, 0.0
    %v3456 = vmax.f32 %v3200, 0.0
    %v3457 = vmax.f32 %v3201, 0.0
    %v3458 = vmax.f32 %v3202, 0.0
    %v3459 = vmax.f32 %v3203, 0.0
    %v3460 = vmax.f32 %v3204, 0.0
    %v3461 = vmax.f32 %v3205, 0.0
    %v3462 = vmax.f32 %v3206, 0.0
    %v3463 = vmax.f32 %v3207, 0.0
    %v3464 = vmax.f32 %v3208, 0.0
    %v3465 = vmax.f32 %v3209, 0.0
    %v3466 = vmax.f32 %v3210, 0.0
    %v3467 = vmax.f32 %v3211, 0.0
    %v3468 = vmax.f32 %v3212, 0.0
    %v3469 = vmax.f32 %v3213, 0.0
    %v3470 = vmax.f32 %v3214, 0.0
    %v3471 = vmax.f32 %v3215, 0.0
    %v3472 = vmax.f32 %v3216, 0.0
    %v3473 = vmax.f32 %v3217, 0.0
    %v3474 = vmax.f32 %v3218, 0.0
    %v3475 = vmax.f32 %v3219, 0.0
    %v3476 = vmax.f32 %v3220, 0.0
    %v3477 = vmax.f32 %v3221, 0.0
    %v3478 = vmax.f32 %v3222, 0.0
    %v3479 = vmax.f32 %v3223, 0.0
    %v3480 = vmax.f32 %v3224, 0.0
    %v3481 = vmax.f32 %v3225, 0.0
    %v3482 = vmax.f32 %v3226, 0.0
    %v3483 = vmax.f32 %v3227, 0.0
    %v3484 = vmax.f32 %v3228, 0.0
    %v3485 = vmax.f32 %v3229, 0.0
    %v3486 = vmax.f32 %v3230, 0.0
    %v3487 = vmax.f32 %v3231, 0.0
    %v3488 = vmax.f32 %v3232, 0.0
    %v3489 = vmax.f32 %v3233, 0.0
    %v3490 = vmax.f32 %v3234, 0.0
    %v3491 = vmax.f32 %v3235, 0.0
    %v3492 = vmax.f32 %v3236, 0.0
    %v3493 = vmax.f32 %v3237, 0.0
    %v3494 = vmax.f32 %v3238, 0.0
    %v3495 = vmax.f32 %v3239, 0.0
    %v3496 = vmax.f32 %v3240, 0.0
    %v3497 = vmax.f32 %v3241, 0.0
    %v3498 = vmax.f32 %v3242, 0.0
    %v3499 = vmax.f32 %v3243, 0.0
    %v3500 = vmax.f32 %v3244, 0.0
    %v3501 = vmax.f32 %v3245, 0.0
    %v3502 = vmax.f32 %v3246, 0.0
    %v3503 = vmax.f32 %v3247, 0.0
    %v3504 = vmax.f32 %v3248, 0.0
    %v3505 = vmax.f32 %v3249, 0.0
    %v3506 = vmax.f32 %v3250, 0.0
    %v3507 = vmax.f32 %v3251, 0.0
    %v3508 = vmax.f32 %v3252, 0.0
    %v3509 = vmax.f32 %v3253, 0.0
    %v3510 = vmax.f32 %v3254, 0.0
    %v3511 = vmax.f32 %v3255, 0.0
    %v3512 = vmax.f32 %v3256, 0.0
    %v3513 = vmax.f32 %v3257, 0.0
    %v3514 = vmax.f32 %v3258, 0.0
    %v3515 = vmax.f32 %v3259, 0.0
    %v3516 = vmax.f32 %v3260, 0.0
    %v3517 = vmax.f32 %v3261, 0.0
    %v3518 = vmax.f32 %v3262, 0.0
    %v3519 = vmax.f32 %v3263, 0.0
    %v3520 = vmax.f32 %v3264, 0.0
    %v3521 = vmax.f32 %v3265, 0.0
    %v3522 = vmax.f32 %v3266, 0.0
    %v3523 = vmax.f32 %v3267, 0.0
    %v3524 = vmax.f32 %v3268, 0.0
    %v3525 = vmax.f32 %v3269, 0.0
    %v3526 = vmax.f32 %v3270, 0.0
    %v3527 = vmax.f32 %v3271, 0.0
    %v3528 = vmax.f32 %v3272, 0.0
    %v3529 = vmax.f32 %v3273, 0.0
    %v3530 = vmax.f32 %v3274, 0.0
    %v3531 = vmax.f32 %v3275, 0.0
    %v3532 = vmax.f32 %v3276, 0.0
    %v3533 = vmax.f32 %v3277, 0.0
    %v3534 = vmax.f32 %v3278, 0.0
    %v3535 = vmax.f32 %v3279, 0.0
    %v3536 = vmax.f32 %v3280, 0.0
    %v3537 = vmax.f32 %v3281, 0.0
    %v3538 = vmax.f32 %v3282, 0.0
    %v3539 = vmax.f32 %v3283, 0.0
    %v3540 = vmax.f32 %v3284, 0.0
    %v3541 = vmax.f32 %v3285, 0.0
    %v3542 = vmax.f32 %v3286, 0.0
    %v3543 = vmax.f32 %v3287, 0.0
    %v3544 = vmax.f32 %v3288, 0.0
    %v3545 = vmax.f32 %v3289, 0.0
    %v3546 = vmax.f32 %v3290, 0.0
    %v3547 = vmax.f32 %v3291, 0.0
    %v3548 = vmax.f32 %v3292, 0.0
    %v3549 = vmax.f32 %v3293, 0.0
    %v3550 = vmax.f32 %v3294, 0.0
    %v3551 = vmax.f32 %v3295, 0.0
    %v3552 = vmax.f32 %v3296, 0.0
    %v3553 = vmax.f32 %v3297, 0.0
    %v3554 = vmax.f32 %v3298, 0.0
    %v3555 = vmax.f32 %v3299, 0.0
    %v3556 = vmax.f32 %v3300, 0.0
    %v3557 = vmax.f32 %v3301, 0.0
    %v3558 = vmax.f32 %v3302, 0.0
    %v3559 = vmax.f32 %v3303, 0.0
    %v3560 = vmax.f32 %v3304, 0.0
    %v3561 = vmax.f32 %v3305, 0.0
    %v3562 = vmax.f32 %v3306, 0.0
    %v3563 = vmax.f32 %v3307, 0.0
    %v3564 = vmax.f32 %v3308, 0.0
    %v3565 = vmax.f32 %v3309, 0.0
    %v3566 = vmax.f32 %v3310, 0.0
    %v3567 = vmax.f32 %v3311, 0.0
    %v3568 = vmax.f32 %v3312, 0.0
    %v3569 = vmax.f32 %v3313, 0.0
    %v3570 = vmax.f32 %v3314, 0.0
    %v3571 = vmax.f32 %v3315, 0.0
    %v3572 = vmax.f32 %v3316, 0.0
    %v3573 = vmax.f32 %v3317, 0.0
    %v3574 = vmax.f32 %v3318, 0.0
    %v3575 = vmax.f32 %v3319, 0.0
    %v3576 = vmax.f32 %v3320, 0.0
    %v3577 = vmax.f32 %v3321, 0.0
    %v3578 = vmax.f32 %v3322, 0.0
    %v3579 = vmax.f32 %v3323, 0.0
    %v3580 = vmax.f32 %v3324, 0.0
    %v3581 = vmax.f32 %v3325, 0.0
    %v3582 = vmax.f32 %v3326, 0.0
    %v3583 = vmax.f32 %v3327, 0.0
    %v3584 = vmax.f32 %v3328, 0.0
    %v3585 = vmax.f32 %v3329, 0.0
    %v3586 = vmax.f32 %v3330, 0.0
    %v3587 = vmax.f32 %v3331, 0.0
    %v3588 = vmax.f32 %v3332, 0.0
    %v3589 = vmax.f32 %v3333, 0.0
    %v3590 = vmax.f32 %v3334, 0.0
    %v3591 = vmax.f32 %v3335, 0.0
    %v3592 = vmax.f32 %v3336, 0.0
    %v3593 = vmax.f32 %v3337, 0.0
    %v3594 = vmax.f32 %v3338, 0.0
    %v3595 = vmax.f32 %v3339, 0.0
    %v3596 = vmax.f32 %v3340, 0.0
    %v3597 = vmax.f32 %v3341, 0.0
    %v3598 = vmax.f32 %v3342, 0.0
    %v3599 = vmax.f32 %v3343, 0.0
    %v3600 = vmax.f32 %v3344, 0.0
    %v3601 = vmax.f32 %v3345, 0.0
    %v3602 = vmax.f32 %v3346, 0.0
    %v3603 = vmax.f32 %v3347, 0.0
    %v3604 = vmax.f32 %v3348, 0.0
    %v3605 = vmax.f32 %v3349, 0.0
    %v3606 = vmax.f32 %v3350, 0.0
    %v3607 = vmax.f32 %v3351, 0.0
    %v3608 = vmax.f32 %v3352, 0.0
    %v3609 = vmax.f32 %v3353, 0.0
    %v3610 = vmax.f32 %v3354, 0.0
    %v3611 = vmax.f32 %v3355, 0.0
    %v3612 = vmax.f32 %v3356, 0.0
    %v3613 = vmax.f32 %v3357, 0.0
    %v3614 = vmax.f32 %v3358, 0.0
    %v3615 = vmax.f32 %v3359, 0.0
    %v3616 = vmax.f32 %v3360, 0.0
    %v3617 = vmax.f32 %v3361, 0.0
    %v3618 = vmax.f32 %v3362, 0.0
    %v3619 = vmax.f32 %v3363, 0.0
    %v3620 = vmax.f32 %v3364, 0.0
    %v3621 = vmax.f32 %v3365, 0.0
    %v3622 = vmax.f32 %v3366, 0.0
    %v3623 = vmax.f32 %v3367, 0.0
    %v3624 = vmax.f32 %v3368, 0.0
    %v3625 = vmax.f32 %v3369, 0.0
    %v3626 = vmax.f32 %v3370, 0.0
    %v3627 = vmax.f32 %v3371, 0.0
    %v3628 = vmax.f32 %v3372, 0.0
    %v3629 = vmax.f32 %v3373, 0.0
    %v3630 = vmax.f32 %v3374, 0.0
    %v3631 = vmax.f32 %v3375, 0.0
    %v3632 = vmax.f32 %v3376, 0.0
    %v3633 = vmax.f32 %v3377, 0.0
    %v3634 = vmax.f32 %v3378, 0.0
    %v3635 = vmax.f32 %v3379, 0.0
    %v3636 = vmax.f32 %v3380, 0.0
    %v3637 = vmax.f32 %v3381, 0.0
    %v3638 = vmax.f32 %v3382, 0.0
    %v3639 = vmax.f32 %v3383, 0.0
    %v3640 = vmax.f32 %v3384, 0.0
    %v3641 = vmax.f32 %v3385, 0.0
    %v3642 = vmax.f32 %v3386, 0.0
    %v3643 = vmax.f32 %v3387, 0.0
    %v3644 = vmax.f32 %v3388, 0.0
    %v3645 = vmax.f32 %v3389, 0.0
    %v3646 = vmax.f32 %v3390, 0.0
    %v3647 = vmax.f32 %v3391, 0.0
    %v3648 = vmax.f32 %v3392, 0.0
    %v3649 = vmax.f32 %v3393, 0.0
    %v3650 = vmax.f32 %v3394, 0.0
    %v3651 = vmax.f32 %v3395, 0.0
    %v3652 = vmax.f32 %v3396, 0.0
    %v3653 = vmax.f32 %v3397, 0.0
    %v3654 = vmax.f32 %v3398, 0.0
    %v3655 = vmax.f32 %v3399, 0.0
    %v3656 = vmax.f32 %v3400, 0.0
    %v3657 = vmax.f32 %v3401, 0.0
    %v3658 = vmax.f32 %v3402, 0.0
    %v3659 = vmax.f32 %v3403, 0.0
    %v3660 = vmax.f32 %v3404, 0.0
    %v3661 = vmax.f32 %v3405, 0.0
    %v3662 = vmax.f32 %v3406, 0.0
    %v3663 = vmax.f32 %v3407, 0.0
    %v3664 = vmax.f32 %v3408, 0.0
    %v3665 = vmax.f32 %v3409, 0.0
    %v3666 = vmax.f32 %v3410, 0.0
    %v3667 = vmax.f32 %v3411, 0.0
    %v3668 = vmax.f32 %v3412, 0.0
    %v3669 = vmax.f32 %v3413, 0.0
    %v3670 = vmax.f32 %v3414, 0.0
    %v3671 = vmax.f32 %v3415, 0.0
    %v3672 = vmax.f32 %v3416, 0.0
    %v3673 = vmax.f32 %v3417, 0.0
    %v3674 = vmax.f32 %v3418, 0.0
    %v3675 = vmax.f32 %v3419, 0.0
    %v3676 = vmax.f32 %v3420, 0.0
    %v3677 = vmax.f32 %v3421, 0.0
    %v3678 = vmax.f32 %v3422, 0.0
    %v3679 = vmax.f32 %v3423, 0.0
    %v3680 = vmax.f32 %v3424, 0.0
    %v3681 = vmax.f32 %v3425, 0.0
    %v3682 = vmax.f32 %v3426, 0.0
    %v3683 = vmax.f32 %v3427, 0.0
    %v3684 = vmax.f32 %v3428, 0.0
    %v3685 = vmax.f32 %v3429, 0.0
    %v3686 = vmax.f32 %v3430, 0.0
    %v3687 = vmax.f32 %v3431, 0.0
    %v3688 = vmax.f32 %v3432, 0.0
    %v3689 = vmax.f32 %v3433, 0.0
    %v3690 = vmax.f32 %v3434, 0.0
    %v3691 = vmax.f32 %v3435, 0.0
    %v3692 = vmax.f32 %v3436, 0.0
    %v3693 = vmax.f32 %v3437, 0.0
    %v3694 = vmax.f32 %v3438, 0.0
    %v3695 = vmax.f32 %v3439, 0.0
    %v3696 = vmax.f32 %v3440, 0.0
    %v3697 = vmax.f32 %v3441, 0.0
    %v3698 = vmax.f32 %v3442, 0.0
    %v3699 = vmax.f32 %v3443, 0.0
    %v3700 = vmax.f32 %v3444, 0.0
    %v3701 = vmax.f32 %v3445, 0.0
    %v3702 = vmax.f32 %v3446, 0.0
    %v3703 = vmax.f32 %v3447, 0.0
    %v3704 = vmax.f32 %v3448, 0.0
    %v3705 = vld [vmem:[%s3] sm:$0xff]
    %v3706 = vld [vmem:[%s3 + $0x8] sm:$0xff]
    %v3707 = vld [vmem:[%s3 + $0x10] sm:$0xff]
    %v3708 = vld [vmem:[%s3 + $0x18] sm:$0xff]
    %v3709 = vld [vmem:[%s4] sm:$0xff]
    %v3710 = vld [vmem:[%s4 + $0x8] sm:$0xff]
    %v3711 = vld [vmem:[%s4 + $0x10] sm:$0xff]
    %v3712 = vld [vmem:[%s4 + $0x18] sm:$0xff]
    %3714 = vset.pattern.permute.xlu0 0
    %3715 = vperm.xlu0 %3714, %v3709
    %v3716 = vpop.permute.xlu0 %3715
    %3719 = vset.pattern.permute.xlu0 0
    %3720 = vperm.xlu0 %3719, %v3710
    %v3721 = vpop.permute.xlu0 %3720
    %3724 = vset.pattern.permute.xlu0 0
    %3725 = vperm.xlu0 %3724, %v3711
    %v3726 = vpop.permute.xlu0 %3725
    %3729 = vset.pattern.permute.xlu0 0
    %3730 = vperm.xlu0 %3729, %v3712
    %v3731 = vpop.permute.xlu0 %3730
    %vm3733 = vcmask 261120
    %v3735 = vsel %vm3733, %v3705, 0
    %v3738 = vsel %vm3733, %v3706, 0
    %v3741 = vsel %vm3733, %v3707, 0
    %v3744 = vsel %vm3733, %v3708, 0
    %3746 = vmatprep.subr.mxu0 %v3450
    %3747 = vmatpush1.msra.mxu0 %v3449
    %3748 = vmatprep.subr.mxu0 %v3514
    %3749 = vmatpush1.msra.mxu0 %v3513
    %3750 = vmatprep.subr.mxu0 %v3578
    %3751 = vmatpush1.msra.mxu0 %v3577
    %3752 = vmatprep.subr.mxu0 %v3642
    %3753 = vmatpush1.msra.mxu0 %v3641
    %3754 = vmatprep.subr.mxu0 0.0
    %3755 = vmatpush1.msra.mxu0 0.0
    %3756 = vmatprep.subr.mxu0 0.0
    %3757 = vmatpush1.msra.mxu0 0.0
    %3758 = vmatprep.subr.mxu0 0.0
    %3759 = vmatpush1.msra.mxu0 0.0
    %3760 = vmatprep.subr.mxu0 0.0
    %3761 = vmatpush1.msra.mxu0 0.0
    %3762 = vmatprep.subr.mxu0 0.0
    %3763 = vmatpush1.msra.mxu0 0.0
    %3764 = vmatprep.subr.mxu0 0.0
    %3765 = vmatpush1.msra.mxu0 0.0
    %3766 = vmatprep.subr.mxu0 0.0
    %3767 = vmatpush1.msra.mxu0 0.0
    %3768 = vmatprep.subr.mxu0 0.0
    %3769 = vmatpush1.msra.mxu0 0.0
    %3770 = vmatprep.subr.mxu0 0.0
    %3771 = vmatpush1.msra.mxu0 0.0
    %3772 = vmatprep.subr.mxu0 0.0
    %3773 = vmatpush1.msra.mxu0 0.0
    %3774 = vmatprep.subr.mxu0 0.0
    %3775 = vmatpush1.msra.mxu0 0.0
    %3776 = vmatprep.subr.mxu0 0.0
    %3777 = vmatpush1.msra.mxu0 0.0
    %3778 = vmatprep.subr.mxu0 0.0
    %3779 = vmatpush1.msra.mxu0 0.0
    %3780 = vmatprep.subr.mxu0 0.0
    %3781 = vmatpush1.msra.mxu0 0.0
    %3782 = vmatprep.subr.mxu0 0.0
    %3783 = vmatpush1.msra.mxu0 0.0
    %3784 = vmatprep.subr.mxu0 0.0
    %3785 = vmatpush1.msra.mxu0 0.0
    %3786 = vmatprep.subr.mxu0 0.0
    %3787 = vmatpush1.msra.mxu0 0.0
    %3788 = vmatprep.subr.mxu0 0.0
    %3789 = vmatpush1.msra.mxu0 0.0
    %3790 = vmatprep.subr.mxu0 0.0
    %3791 = vmatpush1.msra.mxu0 0.0
    %3792 = vmatprep.subr.mxu0 0.0
    %3793 = vmatpush1.msra.mxu0 0.0
    %3794 = vmatprep.subr.mxu0 0.0
    %3795 = vmatpush1.msra.mxu0 0.0
    %3796 = vmatprep.subr.mxu0 0.0
    %3797 = vmatpush1.msra.mxu0 0.0
    %3798 = vmatprep.subr.mxu0 0.0
    %3799 = vmatpush1.msra.mxu0 0.0
    %3800 = vmatprep.subr.mxu0 0.0
    %3801 = vmatpush1.msra.mxu0 0.0
    %3802 = vmatprep.subr.mxu0 0.0
    %3803 = vmatpush1.msra.mxu0 0.0
    %3804 = vmatprep.subr.mxu0 0.0
    %3805 = vmatpush1.msra.mxu0 0.0
    %3806 = vmatprep.subr.mxu0 0.0
    %3807 = vmatpush1.msra.mxu0 0.0
    %3808 = vmatprep.subr.mxu0 0.0
    %3809 = vmatpush1.msra.mxu0 0.0
    %3810 = vmatprep.mubr.f32.mxu0 0.0
    %3811 = vmatmul.mubr.f32.gmra.mrb[0].mxu0 %v3735
    %v3812 = vpop.f32.mrb[0].mxu0
    %v3813 = vadd.f32 %v3716, %v3812
    %v3814 = vpop.f32.mrb[0].mxu0
    %v3815 = vadd.f32 %v3716, %v3814
    %3816 = vmatprep.mubr.f32.mxu0 0.0
    %3817 = vmatmul.mubr.f32.gmra.mrb[0].mxu0 %v3738
    %v3818 = vpop.f32.mrb[0].mxu0
    %v3819 = vadd.f32 %v3721, %v3818
    %v3820 = vpop.f32.mrb[0].mxu0
    %v3821 = vadd.f32 %v3721, %v3820
    %3822 = vmatprep.mubr.f32.mxu0 0.0
    %3823 = vmatmul.mubr.f32.gmra.mrb[0].mxu0 %v3741
    %v3824 = vpop.f32.mrb[0].mxu0
    %v3825 = vadd.f32 %v3726, %v3824
    %v3826 = vpop.f32.mrb[0].mxu0
    %v3827 = vadd.f32 %v3726, %v3826
    %3828 = vmatprep.mubr.f32.mxu0 0.0
    %3829 = vmatmul.mubr.f32.gmra.mrb[0].mxu0 %v3744
    %v3830 = vpop.f32.mrb[0].mxu0
    %v3831 = vadd.f32 %v3731, %v3830
    %v3832 = vpop.f32.mrb[0].mxu0
    %v3833 = vadd.f32 %v3731, %v3832
    %3834 = vdwg.mxu0
    %3835 = vmatprep.subr.mxu0 %v3452
    %3836 = vmatpush1.msra.mxu0 %v3451
    %3837 = vmatprep.subr.mxu0 %v3516
    %3838 = vmatpush1.msra.mxu0 %v3515
    %3839 = vmatprep.subr.mxu0 %v3580
    %3840 = vmatpush1.msra.mxu0 %v3579
    %3841 = vmatprep.subr.mxu0 %v3644
    %3842 = vmatpush1.msra.mxu0 %v3643
    %3843 = vmatprep.subr.mxu0 0.0
    %3844 = vmatpush1.msra.mxu0 0.0
    %3845 = vmatprep.subr.mxu0 0.0
    %3846 = vmatpush1.msra.mxu0 0.0
    %3847 = vmatprep.subr.mxu0 0.0
    %3848 = vmatpush1.msra.mxu0 0.0
    %3849 = vmatprep.subr.mxu0 0.0
    %3850 = vmatpush1.msra.mxu0 0.0
    %3851 = vmatprep.subr.mxu0 0.0
    %3852 = vmatpush1.msra.mxu0 0.0
    %3853 = vmatprep.subr.mxu0 0.0
    %3854 = vmatpush1.msra.mxu0 0.0
    %3855 = vmatprep.subr.mxu0 0.0
    %3856 = vmatpush1.msra.mxu0 0.0
    %3857 = vmatprep.subr.mxu0 0.0
    %3858 = vmatpush1.msra.mxu0 0.0
    %3859 = vmatprep.subr.mxu0 0.0
    %3860 = vmatpush1.msra.mxu0 0.0
    %3861 = vmatprep.subr.mxu0 0.0
    %3862 = vmatpush1.msra.mxu0 0.0
    %3863 = vmatprep.subr.mxu0 0.0
    %3864 = vmatpush1.msra.mxu0 0.0
    %3865 = vmatprep.subr.mxu0 0.0
    %3866 = vmatpush1.msra.mxu0 0.0
    %3867 = vmatprep.subr.mxu0 0.0
    %3868 = vmatpush1.msra.mxu0 0.0
    %3869 = vmatprep.subr.mxu0 0.0
    %3870 = vmatpush1.msra.mxu0 0.0
    %3871 = vmatprep.subr.mxu0 0.0
    %3872 = vmatpush1.msra.mxu0 0.0
    %3873 = vmatprep.subr.mxu0 0.0
    %3874 = vmatpush1.msra.mxu0 0.0
    %3875 = vmatprep.subr.mxu0 0.0
    %3876 = vmatpush1.msra.mxu0 0.0
    %3877 = vmatprep.subr.mxu0 0.0
    %3878 = vmatpush1.msra.mxu0 0.0
    %3879 = vmatprep.subr.mxu0 0.0
    %3880 = vmatpush1.msra.mxu0 0.0
    %3881 = vmatprep.subr.mxu0 0.0
    %3882 = vmatpush1.msra.mxu0 0.0
    %3883 = vmatprep.subr.mxu0 0.0
    %3884 = vmatpush1.msra.mxu0 0.0
    %3885 = vmatprep.subr.mxu0 0.0
    %3886 = vmatpush1.msra.mxu0 0.0
    %3887 = vmatprep.subr.mxu0 0.0
    %3888 = vmatpush1.msra.mxu0 0.0
    %3889 = vmatprep.subr.mxu0 0.0
    %3890 = vmatpush1.msra.mxu0 0.0
    %3891 = vmatprep.subr.mxu0 0.0
    %3892 = vmatpush1.msra.mxu0 0.0
    %3893 = vmatprep.subr.mxu0 0.0
    %3894 = vmatpush1.msra.mxu0 0.0
    %3895 = vmatprep.subr.mxu0 0.0
    %3896 = vmatpush1.msra.mxu0 0.0
    %3897 = vmatprep.subr.mxu0 0.0
    %3898 = vmatpush1.msra.mxu0 0.0
    %3899 = vmatprep.mubr.f32.mxu0 0.0
    %3900 = vmatmul.mubr.f32.gmra.mrb[0].mxu0 %v3735
    %v3901 = vpop.f32.mrb[0].mxu0
    %v3902 = vadd.f32 %v3716, %v3901
    %v3903 = vpop.f32.mrb[0].mxu0
    %v3904 = vadd.f32 %v3716, %v3903
    %3905 = vmatprep.mubr.f32.mxu0 0.0
    %3906 = vmatmul.mubr.f32.gmra.mrb[0].mxu0 %v3738
    %v3907 = vpop.f32.mrb[0].mxu0
    %v3908 = vadd.f32 %v3721, %v3907
    %v3909 = vpop.f32.mrb[0].mxu0
    %v3910 = vadd.f32 %v3721, %v3909
    %3911 = vmatprep.mubr.f32.mxu0 0.0
    %3912 = vmatmul.mubr.f32.gmra.mrb[0].mxu0 %v3741
    %v3913 = vpop.f32.mrb[0].mxu0
    %v3914 = vadd.f32 %v3726, %v3913
    %v3915 = vpop.f32.mrb[0].mxu0
    %v3916 = vadd.f32 %v3726, %v3915
    %3917 = vmatprep.mubr.f32.mxu0 0.0
    %3918 = vmatmul.mubr.f32.gmra.mrb[0].mxu0 %v3744
    %v3919 = vpop.f32.mrb[0].mxu0
    %v3920 = vadd.f32 %v3731, %v3919
    %v3921 = vpop.f32.mrb[0].mxu0
    %v3922 = vadd.f32 %v3731, %v3921
    %3923 = vdwg.mxu0
    %3924 = vmatprep.subr.mxu0 %v3454
    %3925 = vmatpush1.msra.mxu0 %v3453
    %3926 = vmatprep.subr.mxu0 %v3518
    %3927 = vmatpush1.msra.mxu0 %v3517
    %3928 = vmatprep.subr.mxu0 %v3582
    %3929 = vmatpush1.msra.mxu0 %v3581
    %3930 = vmatprep.subr.mxu0 %v3646
    %3931 = vmatpush1.msra.mxu0 %v3645
    %3932 = vmatprep.subr.mxu0 0.0
    %3933 = vmatpush1.msra.mxu0 0.0
    %3934 = vmatprep.subr.mxu0 0.0
    %3935 = vmatpush1.msra.mxu0 0.0
    %3936 = vmatprep.subr.mxu0 0.0
    %3937 = vmatpush1.msra.mxu0 0.0
    %3938 = vmatprep.subr.mxu0 0.0
    %3939 = vmatpush1.msra.mxu0 0.0
    %3940 = vmatprep.subr.mxu0 0.0
    %3941 = vmatpush1.msra.mxu0 0.0
    %3942 = vmatprep.subr.mxu0 0.0
    %3943 = vmatpush1.msra.mxu0 0.0
    %3944 = vmatprep.subr.mxu0 0.0
    %3945 = vmatpush1.msra.mxu0 0.0
    %3946 = vmatprep.subr.mxu0 0.0
    %3947 = vmatpush1.msra.mxu0 0.0
    %3948 = vmatprep.subr.mxu0 0.0
    %3949 = vmatpush1.msra.mxu0 0.0
    %3950 = vmatprep.subr.mxu0 0.0
    %3951 = vmatpush1.msra.mxu0 0.0
    %3952 = vmatprep.subr.mxu0 0.0
    %3953 = vmatpush1.msra.mxu0 0.0
    %3954 = vmatprep.subr.mxu0 0.0
    %3955 = vmatpush1.msra.mxu0 0.0
    %3956 = vmatprep.subr.mxu0 0.0
    %3957 = vmatpush1.msra.mxu0 0.0
    %3958 = vmatprep.subr.mxu0 0.0
    %3959 = vmatpush1.msra.mxu0 0.0
    %3960 = vmatprep.subr.mxu0 0.0
    %3961 = vmatpush1.msra.mxu0 0.0
    %3962 = vmatprep.subr.mxu0 0.0
    %3963 = vmatpush1.msra.mxu0 0.0
    %3964 = vmatprep.subr.mxu0 0.0
    %3965 = vmatpush1.msra.mxu0 0.0
    %3966 = vmatprep.subr.mxu0 0.0
    %3967 = vmatpush1.msra.mxu0 0.0
    %3968 = vmatprep.subr.mxu0 0.0
    %3969 = vmatpush1.msra.mxu0 0.0
    %3970 = vmatprep.subr.mxu0 0.0
    %3971 = vmatpush1.msra.mxu0 0.0
    %3972 = vmatprep.subr.mxu0 0.0
    %3973 = vmatpush1.msra.mxu0 0.0
    %3974 = vmatprep.subr.mxu0 0.0
    %3975 = vmatpush1.msra.mxu0 0.0
    %3976 = vmatprep.subr.mxu0 0.0
    %3977 = vmatpush1.msra.mxu0 0.0
    %3978 = vmatprep.subr.mxu0 0.0
    %3979 = vmatpush1.msra.mxu0 0.0
    %3980 = vmatprep.subr.mxu0 0.0
    %3981 = vmatpush1.msra.mxu0 0.0
    %3982 = vmatprep.subr.mxu0 0.0
    %3983 = vmatpush1.msra.mxu0 0.0
    %3984 = vmatprep.subr.mxu0 0.0
    %3985 = vmatpush1.msra.mxu0 0.0
    %3986 = vmatprep.subr.mxu0 0.0
    %3987 = vmatpush1.msra.mxu0 0.0
    %3988 = vmatprep.mubr.f32.mxu0 0.0
    %3989 = vmatmul.mubr.f32.gmra.mrb[0].mxu0 %v3735
    %v3990 = vpop.f32.mrb[0].mxu0
    %v3991 = vadd.f32 %v3716, %v3990
    %v3992 = vpop.f32.mrb[0].mxu0
    %v3993 = vadd.f32 %v3716, %v3992
    %3994 = vmatprep.mubr.f32.mxu0 0.0
    %3995 = vmatmul.mubr.f32.gmra.mrb[0].mxu0 %v3738
    %v3996 = vpop.f32.mrb[0].mxu0
    %v3997 = vadd.f32 %v3721, %v3996
    %v3998 = vpop.f32.mrb[0].mxu0
    %v3999 = vadd.f32 %v3721, %v3998
    %4000 = vmatprep.mubr.f32.mxu0 0.0
    %4001 = vmatmul.mubr.f32.gmra.mrb[0].mxu0 %v3741
    %v4002 = vpop.f32.mrb[0].mxu0
    %v4003 = vadd.f32 %v3726, %v4002
    %v4004 = vpop.f32.mrb[0].mxu0
    %v4005 = vadd.f32 %v3726, %v4004
    %4006 = vmatprep.mubr.f32.mxu0 0.0
    %4007 = vmatmul.mubr.f32.gmra.mrb[0].mxu0 %v3744
    %v4008 = vpop.f32.mrb[0].mxu0
    %v4009 = vadd.f32 %v3731, %v4008
    %v4010 = vpop.f32.mrb[0].mxu0
    %v4011 = vadd.f32 %v3731, %v4010
    %4012 = vdwg.mxu0
    %4013 = vmatprep.subr.mxu0 %v3456
    %4014 = vmatpush1.msra.mxu0 %v3455
    %4015 = vmatprep.subr.mxu0 %v3520
    %4016 = vmatpush1.msra.mxu0 %v3519
    %4017 = vmatprep.subr.mxu0 %v3584
    %4018 = vmatpush1.msra.mxu0 %v3583
    %4019 = vmatprep.subr.mxu0 %v3648
    %4020 = vmatpush1.msra.mxu0 %v3647
    %4021 = vmatprep.subr.mxu0 0.0
    %4022 = vmatpush1.msra.mxu0 0.0
    %4023 = vmatprep.subr.mxu0 0.0
    %4024 = vmatpush1.msra.mxu0 0.0
    %4025 = vmatprep.subr.mxu0 0.0
    %4026 = vmatpush1.msra.mxu0 0.0
    %4027 = vmatprep.subr.mxu0 0.0
    %4028 = vmatpush1.msra.mxu0 0.0
    %4029 = vmatprep.subr.mxu0 0.0
    %4030 = vmatpush1.msra.mxu0 0.0
    %4031 = vmatprep.subr.mxu0 0.0
    %4032 = vmatpush1.msra.mxu0 0.0
    %4033 = vmatprep.subr.mxu0 0.0
    %4034 = vmatpush1.msra.mxu0 0.0
    %4035 = vmatprep.subr.mxu0 0.0
    %4036 = vmatpush1.msra.mxu0 0.0
    %4037 = vmatprep.subr.mxu0 0.0
    %4038 = vmatpush1.msra.mxu0 0.0
    %4039 = vmatprep.subr.mxu0 0.0
    %4040 = vmatpush1.msra.mxu0 0.0
    %4041 = vmatprep.subr.mxu0 0.0
    %4042 = vmatpush1.msra.mxu0 0.0
    %4043 = vmatprep.subr.mxu0 0.0
    %4044 = vmatpush1.msra.mxu0 0.0
    %4045 = vmatprep.subr.mxu0 0.0
    %4046 = vmatpush1.msra.mxu0 0.0
    %4047 = vmatprep.subr.mxu0 0.0
    %4048 = vmatpush1.msra.mxu0 0.0
    %4049 = vmatprep.subr.mxu0 0.0
    %4050 = vmatpush1.msra.mxu0 0.0
    %4051 = vmatprep.subr.mxu0 0.0
    %4052 = vmatpush1.msra.mxu0 0.0
    %4053 = vmatprep.subr.mxu0 0.0
    %4054 = vmatpush1.msra.mxu0 0.0
    %4055 = vmatprep.subr.mxu0 0.0
    %4056 = vmatpush1.msra.mxu0 0.0
    %4057 = vmatprep.subr.mxu0 0.0
    %4058 = vmatpush1.msra.mxu0 0.0
    %4059 = vmatprep.subr.mxu0 0.0
    %4060 = vmatpush1.msra.mxu0 0.0
    %4061 = vmatprep.subr.mxu0 0.0
    %4062 = vmatpush1.msra.mxu0 0.0
    %4063 = vmatprep.subr.mxu0 0.0
    %4064 = vmatpush1.msra.mxu0 0.0
    %4065 = vmatprep.subr.mxu0 0.0
    %4066 = vmatpush1.msra.mxu0 0.0
    %4067 = vmatprep.subr.mxu0 0.0
    %4068 = vmatpush1.msra.mxu0 0.0
    %4069 = vmatprep.subr.mxu0 0.0
    %4070 = vmatpush1.msra.mxu0 0.0
    %4071 = vmatprep.subr.mxu0 0.0
    %4072 = vmatpush1.msra.mxu0 0.0
    %4073 = vmatprep.subr.mxu0 0.0
    %4074 = vmatpush1.msra.mxu0 0.0
    %4075 = vmatprep.subr.mxu0 0.0
    %4076 = vmatpush1.msra.mxu0 0.0
    %4077 = vmatprep.mubr.f32.mxu0 0.0
    %4078 = vmatmul.mubr.f32.gmra.mrb[0].mxu0 %v3735
    %v4079 = vpop.f32.mrb[0].mxu0
    %v4080 = vadd.f32 %v3716, %v4079
    %v4081 = vpop.f32.mrb[0].mxu0
    %v4082 = vadd.f32 %v3716, %v4081
    %4083 = vmatprep.mubr.f32.mxu0 0.0
    %4084 = vmatmul.mubr.f32.gmra.mrb[0].mxu0 %v3738
    %v4085 = vpop.f32.mrb[0].mxu0
    %v4086 = vadd.f32 %v3721, %v4085
    %v4087 = vpop.f32.mrb[0].mxu0
    %v4088 = vadd.f32 %v3721, %v4087
    %4089 = vmatprep.mubr.f32.mxu0 0.0
    %4090 = vmatmul.mubr.f32.gmra.mrb[0].mxu0 %v3741
    %v4091 = vpop.f32.mrb[0].mxu0
    %v4092 = vadd.f32 %v3726, %v4091
    %v4093 = vpop.f32.mrb[0].mxu0
    %v4094 = vadd.f32 %v3726, %v4093
    %4095 = vmatprep.mubr.f32.mxu0 0.0
    %4096 = vmatmul.mubr.f32.gmra.mrb[0].mxu0 %v3744
    %v4097 = vpop.f32.mrb[0].mxu0
    %v4098 = vadd.f32 %v3731, %v4097
    %v4099 = vpop.f32.mrb[0].mxu0
    %v4100 = vadd.f32 %v3731, %v4099
    %4101 = vdwg.mxu0
    %4102 = vmatprep.subr.mxu0 %v3458
    %4103 = vmatpush1.msra.mxu0 %v3457
    %4104 = vmatprep.subr.mxu0 %v3522
    %4105 = vmatpush1.msra.mxu0 %v3521
    %4106 = vmatprep.subr.mxu0 %v3586
    %4107 = vmatpush1.msra.mxu0 %v3585
    %4108 = vmatprep.subr.mxu0 %v3650
    %4109 = vmatpush1.msra.mxu0 %v3649
    %4110 = vmatprep.subr.mxu0 0.0
    %4111 = vmatpush1.msra.mxu0 0.0
    %4112 = vmatprep.subr.mxu0 0.0
    %4113 = vmatpush1.msra.mxu0 0.0
    %4114 = vmatprep.subr.mxu0 0.0
    %4115 = vmatpush1.msra.mxu0 0.0
    %4116 = vmatprep.subr.mxu0 0.0
    %4117 = vmatpush1.msra.mxu0 0.0
    %4118 = vmatprep.subr.mxu0 0.0
    %4119 = vmatpush1.msra.mxu0 0.0
    %4120 = vmatprep.subr.mxu0 0.0
    %4121 = vmatpush1.msra.mxu0 0.0
    %4122 = vmatprep.subr.mxu0 0.0
    %4123 = vmatpush1.msra.mxu0 0.0
    %4124 = vmatprep.subr.mxu0 0.0
    %4125 = vmatpush1.msra.mxu0 0.0
    %4126 = vmatprep.subr.mxu0 0.0
    %4127 = vmatpush1.msra.mxu0 0.0
    %4128 = vmatprep.subr.mxu0 0.0
    %4129 = vmatpush1.msra.mxu0 0.0
    %4130 = vmatprep.subr.mxu0 0.0
    %4131 = vmatpush1.msra.mxu0 0.0
    %4132 = vmatprep.subr.mxu0 0.0
    %4133 = vmatpush1.msra.mxu0 0.0
    %4134 = vmatprep.subr.mxu0 0.0
    %4135 = vmatpush1.msra.mxu0 0.0
    %4136 = vmatprep.subr.mxu0 0.0
    %4137 = vmatpush1.msra.mxu0 0.0
    %4138 = vmatprep.subr.mxu0 0.0
    %4139 = vmatpush1.msra.mxu0 0.0
    %4140 = vmatprep.subr.mxu0 0.0
    %4141 = vmatpush1.msra.mxu0 0.0
    %4142 = vmatprep.subr.mxu0 0.0
    %4143 = vmatpush1.msra.mxu0 0.0
    %4144 = vmatprep.subr.mxu0 0.0
    %4145 = vmatpush1.msra.mxu0 0.0
    %4146 = vmatprep.subr.mxu0 0.0
    %4147 = vmatpush1.msra.mxu0 0.0
    %4148 = vmatprep.subr.mxu0 0.0
    %4149 = vmatpush1.msra.mxu0 0.0
    %4150 = vmatprep.subr.mxu0 0.0
    %4151 = vmatpush1.msra.mxu0 0.0
    %4152 = vmatprep.subr.mxu0 0.0
    %4153 = vmatpush1.msra.mxu0 0.0
    %4154 = vmatprep.subr.mxu0 0.0
    %4155 = vmatpush1.msra.mxu0 0.0
    %4156 = vmatprep.subr.mxu0 0.0
    %4157 = vmatpush1.msra.mxu0 0.0
    %4158 = vmatprep.subr.mxu0 0.0
    %4159 = vmatpush1.msra.mxu0 0.0
    %4160 = vmatprep.subr.mxu0 0.0
    %4161 = vmatpush1.msra.mxu0 0.0
    %4162 = vmatprep.subr.mxu0 0.0
    %4163 = vmatpush1.msra.mxu0 0.0
    %4164 = vmatprep.subr.mxu0 0.0
    %4165 = vmatpush1.msra.mxu0 0.0
    %4166 = vmatprep.mubr.f32.mxu0 0.0
    %4167 = vmatmul.mubr.f32.gmra.mrb[0].mxu0 %v3735
    %v4168 = vpop.f32.mrb[0].mxu0
    %v4169 = vadd.f32 %v3716, %v4168
    %v4170 = vpop.f32.mrb[0].mxu0
    %v4171 = vadd.f32 %v3716, %v4170
    %4172 = vmatprep.mubr.f32.mxu0 0.0
    %4173 = vmatmul.mubr.f32.gmra.mrb[0].mxu0 %v3738
    %v4174 = vpop.f32.mrb[0].mxu0
    %v4175 = vadd.f32 %v3721, %v4174
    %v4176 = vpop.f32.mrb[0].mxu0
    %v4177 = vadd.f32 %v3721, %v4176
    %4178 = vmatprep.mubr.f32.mxu0 0.0
    %4179 = vmatmul.mubr.f32.gmra.mrb[0].mxu0 %v3741
    %v4180 = vpop.f32.mrb[0].mxu0
    %v4181 = vadd.f32 %v3726, %v4180
    %v4182 = vpop.f32.mrb[0].mxu0
    %v4183 = vadd.f32 %v3726, %v4182
    %4184 = vmatprep.mubr.f32.mxu0 0.0
    %4185 = vmatmul.mubr.f32.gmra.mrb[0].mxu0 %v3744
    %v4186 = vpop.f32.mrb[0].mxu0
    %v4187 = vadd.f32 %v3731, %v4186
    %v4188 = vpop.f32.mrb[0].mxu0
    %v4189 = vadd.f32 %v3731, %v4188
    %4190 = vdwg.mxu0
    %4191 = vmatprep.subr.mxu0 %v3460
    %4192 = vmatpush1.msra.mxu0 %v3459
    %4193 = vmatprep.subr.mxu0 %v3524
    %4194 = vmatpush1.msra.mxu0 %v3523
    %4195 = vmatprep.subr.mxu0 %v3588
    %4196 = vmatpush1.msra.mxu0 %v3587
    %4197 = vmatprep.subr.mxu0 %v3652
    %4198 = vmatpush1.msra.mxu0 %v3651
    %4199 = vmatprep.subr.mxu0 0.0
    %4200 = vmatpush1.msra.mxu0 0.0
    %4201 = vmatprep.subr.mxu0 0.0
    %4202 = vmatpush1.msra.mxu0 0.0
    %4203 = vmatprep.subr.mxu0 0.0
    %4204 = vmatpush1.msra.mxu0 0.0
    %4205 = vmatprep.subr.mxu0 0.0
    %4206 = vmatpush1.msra.mxu0 0.0
    %4207 = vmatprep.subr.mxu0 0.0
    %4208 = vmatpush1.msra.mxu0 0.0
    %4209 = vmatprep.subr.mxu0 0.0
    %4210 = vmatpush1.msra.mxu0 0.0
    %4211 = vmatprep.subr.mxu0 0.0
    %4212 = vmatpush1.msra.mxu0 0.0
    %4213 = vmatprep.subr.mxu0 0.0
    %4214 = vmatpush1.msra.mxu0 0.0
    %4215 = vmatprep.subr.mxu0 0.0
    %4216 = vmatpush1.msra.mxu0 0.0
    %4217 = vmatprep.subr.mxu0 0.0
    %4218 = vmatpush1.msra.mxu0 0.0
    %4219 = vmatprep.subr.mxu0 0.0
    %4220 = vmatpush1.msra.mxu0 0.0
    %4221 = vmatprep.subr.mxu0 0.0
    %4222 = vmatpush1.msra.mxu0 0.0
    %4223 = vmatprep.subr.mxu0 0.0
    %4224 = vmatpush1.msra.mxu0 0.0
    %4225 = vmatprep.subr.mxu0 0.0
    %4226 = vmatpush1.msra.mxu0 0.0
    %4227 = vmatprep.subr.mxu0 0.0
    %4228 = vmatpush1.msra.mxu0 0.0
    %4229 = vmatprep.subr.mxu0 0.0
    %4230 = vmatpush1.msra.mxu0 0.0
    %4231 = vmatprep.subr.mxu0 0.0
    %4232 = vmatpush1.msra.mxu0 0.0
    %4233 = vmatprep.subr.mxu0 0.0
    %4234 = vmatpush1.msra.mxu0 0.0
    %4235 = vmatprep.subr.mxu0 0.0
    %4236 = vmatpush1.msra.mxu0 0.0
    %4237 = vmatprep.subr.mxu0 0.0
    %4238 = vmatpush1.msra.mxu0 0.0
    %4239 = vmatprep.subr.mxu0 0.0
    %4240 = vmatpush1.msra.mxu0 0.0
    %4241 = vmatprep.subr.mxu0 0.0
    %4242 = vmatpush1.msra.mxu0 0.0
    %4243 = vmatprep.subr.mxu0 0.0
    %4244 = vmatpush1.msra.mxu0 0.0
    %4245 = vmatprep.subr.mxu0 0.0
    %4246 = vmatpush1.msra.mxu0 0.0
    %4247 = vmatprep.subr.mxu0 0.0
    %4248 = vmatpush1.msra.mxu0 0.0
    %4249 = vmatprep.subr.mxu0 0.0
    %4250 = vmatpush1.msra.mxu0 0.0
    %4251 = vmatprep.subr.mxu0 0.0
    %4252 = vmatpush1.msra.mxu0 0.0
    %4253 = vmatprep.subr.mxu0 0.0
    %4254 = vmatpush1.msra.mxu0 0.0
    %4255 = vmatprep.mubr.f32.mxu0 0.0
    %4256 = vmatmul.mubr.f32.gmra.mrb[0].mxu0 %v3735
    %v4257 = vpop.f32.mrb[0].mxu0
    %v4258 = vadd.f32 %v3716, %v4257
    %v4259 = vpop.f32.mrb[0].mxu0
    %v4260 = vadd.f32 %v3716, %v4259
    %4261 = vmatprep.mubr.f32.mxu0 0.0
    %4262 = vmatmul.mubr.f32.gmra.mrb[0].mxu0 %v3738
    %v4263 = vpop.f32.mrb[0].mxu0
    %v4264 = vadd.f32 %v3721, %v4263
    %v4265 = vpop.f32.mrb[0].mxu0
    %v4266 = vadd.f32 %v3721, %v4265
    %4267 = vmatprep.mubr.f32.mxu0 0.0
    %4268 = vmatmul.mubr.f32.gmra.mrb[0].mxu0 %v3741
    %v4269 = vpop.f32.mrb[0].mxu0
    %v4270 = vadd.f32 %v3726, %v4269
    %v4271 = vpop.f32.mrb[0].mxu0
    %v4272 = vadd.f32 %v3726, %v4271
    %4273 = vmatprep.mubr.f32.mxu0 0.0
    %4274 = vmatmul.mubr.f32.gmra.mrb[0].mxu0 %v3744
    %v4275 = vpop.f32.mrb[0].mxu0
    %v4276 = vadd.f32 %v3731, %v4275
    %v4277 = vpop.f32.mrb[0].mxu0
    %v4278 = vadd.f32 %v3731, %v4277
    %4279 = vdwg.mxu0
    %4280 = vmatprep.subr.mxu0 %v3462
    %4281 = vmatpush1.msra.mxu0 %v3461
    %4282 = vmatprep.subr.mxu0 %v3526
    %4283 = vmatpush1.msra.mxu0 %v3525
    %4284 = vmatprep.subr.mxu0 %v3590
    %4285 = vmatpush1.msra.mxu0 %v3589
    %4286 = vmatprep.subr.mxu0 %v3654
    %4287 = vmatpush1.msra.mxu0 %v3653
    %4288 = vmatprep.subr.mxu0 0.0
    %4289 = vmatpush1.msra.mxu0 0.0
    %4290 = vmatprep.subr.mxu0 0.0
    %4291 = vmatpush1.msra.mxu0 0.0
    %4292 = vmatprep.subr.mxu0 0.0
    %4293 = vmatpush1.msra.mxu0 0.0
    %4294 = vmatprep.subr.mxu0 0.0
    %4295 = vmatpush1.msra.mxu0 0.0
    %4296 = vmatprep.subr.mxu0 0.0
    %4297 = vmatpush1.msra.mxu0 0.0
    %4298 = vmatprep.subr.mxu0 0.0
    %4299 = vmatpush1.msra.mxu0 0.0
    %4300 = vmatprep.subr.mxu0 0.0
    %4301 = vmatpush1.msra.mxu0 0.0
    %4302 = vmatprep.subr.mxu0 0.0
    %4303 = vmatpush1.msra.mxu0 0.0
    %4304 = vmatprep.subr.mxu0 0.0
    %4305 = vmatpush1.msra.mxu0 0.0
    %4306 = vmatprep.subr.mxu0 0.0
    %4307 = vmatpush1.msra.mxu0 0.0
    %4308 = vmatprep.subr.mxu0 0.0
    %4309 = vmatpush1.msra.mxu0 0.0
    %4310 = vmatprep.subr.mxu0 0.0
    %4311 = vmatpush1.msra.mxu0 0.0
    %4312 = vmatprep.subr.mxu0 0.0
    %4313 = vmatpush1.msra.mxu0 0.0
    %4314 = vmatprep.subr.mxu0 0.0
    %4315 = vmatpush1.msra.mxu0 0.0
    %4316 = vmatprep.subr.mxu0 0.0
    %4317 = vmatpush1.msra.mxu0 0.0
    %4318 = vmatprep.subr.mxu0 0.0
    %4319 = vmatpush1.msra.mxu0 0.0
    %4320 = vmatprep.subr.mxu0 0.0
    %4321 = vmatpush1.msra.mxu0 0.0
    %4322 = vmatprep.subr.mxu0 0.0
    %4323 = vmatpush1.msra.mxu0 0.0
    %4324 = vmatprep.subr.mxu0 0.0
    %4325 = vmatpush1.msra.mxu0 0.0
    %4326 = vmatprep.subr.mxu0 0.0
    %4327 = vmatpush1.msra.mxu0 0.0
    %4328 = vmatprep.subr.mxu0 0.0
    %4329 = vmatpush1.msra.mxu0 0.0
    %4330 = vmatprep.subr.mxu0 0.0
    %4331 = vmatpush1.msra.mxu0 0.0
    %4332 = vmatprep.subr.mxu0 0.0
    %4333 = vmatpush1.msra.mxu0 0.0
    %4334 = vmatprep.subr.mxu0 0.0
    %4335 = vmatpush1.msra.mxu0 0.0
    %4336 = vmatprep.subr.mxu0 0.0
    %4337 = vmatpush1.msra.mxu0 0.0
    %4338 = vmatprep.subr.mxu0 0.0
    %4339 = vmatpush1.msra.mxu0 0.0
    %4340 = vmatprep.subr.mxu0 0.0
    %4341 = vmatpush1.msra.mxu0 0.0
    %4342 = vmatprep.subr.mxu0 0.0
    %4343 = vmatpush1.msra.mxu0 0.0
    %4344 = vmatprep.mubr.f32.mxu0 0.0
    %4345 = vmatmul.mubr.f32.gmra.mrb[0].mxu0 %v3735
    %v4346 = vpop.f32.mrb[0].mxu0
    %v4347 = vadd.f32 %v3716, %v4346
    %v4348 = vpop.f32.mrb[0].mxu0
    %v4349 = vadd.f32 %v3716, %v4348
    %4350 = vmatprep.mubr.f32.mxu0 0.0
    %4351 = vmatmul.mubr.f32.gmra.mrb[0].mxu0 %v3738
    %v4352 = vpop.f32.mrb[0].mxu0
    %v4353 = vadd.f32 %v3721, %v4352
    %v4354 = vpop.f32.mrb[0].mxu0
    %v4355 = vadd.f32 %v3721, %v4354
    %4356 = vmatprep.mubr.f32.mxu0 0.0
    %4357 = vmatmul.mubr.f32.gmra.mrb[0].mxu0 %v3741
    %v4358 = vpop.f32.mrb[0].mxu0
    %v4359 = vadd.f32 %v3726, %v4358
    %v4360 = vpop.f32.mrb[0].mxu0
    %v4361 = vadd.f32 %v3726, %v4360
    %4362 = vmatprep.mubr.f32.mxu0 0.0
    %4363 = vmatmul.mubr.f32.gmra.mrb[0].mxu0 %v3744
    %v4364 = vpop.f32.mrb[0].mxu0
    %v4365 = vadd.f32 %v3731, %v4364
    %v4366 = vpop.f32.mrb[0].mxu0
    %v4367 = vadd.f32 %v3731, %v4366
    %4368 = vdwg.mxu0
    %4369 = vmatprep.subr.mxu0 %v3464
    %4370 = vmatpush1.msra.mxu0 %v3463
    %4371 = vmatprep.subr.mxu0 %v3528
    %4372 = vmatpush1.msra.mxu0 %v3527
    %4373 = vmatprep.subr.mxu0 %v3592
    %4374 = vmatpush1.msra.mxu0 %v3591
    %4375 = vmatprep.subr.mxu0 %v3656
    %4376 = vmatpush1.msra.mxu0 %v3655
    %4377 = vmatprep.subr.mxu0 0.0
    %4378 = vmatpush1.msra.mxu0 0.0
    %4379 = vmatprep.subr.mxu0 0.0
    %4380 = vmatpush1.msra.mxu0 0.0
    %4381 = vmatprep.subr.mxu0 0.0
    %4382 = vmatpush1.msra.mxu0 0.0
    %4383 = vmatprep.subr.mxu0 0.0
    %4384 = vmatpush1.msra.mxu0 0.0
    %4385 = vmatprep.subr.mxu0 0.0
    %4386 = vmatpush1.msra.mxu0 0.0
    %4387 = vmatprep.subr.mxu0 0.0
    %4388 = vmatpush1.msra.mxu0 0.0
    %4389 = vmatprep.subr.mxu0 0.0
    %4390 = vmatpush1.msra.mxu0 0.0
    %4391 = vmatprep.subr.mxu0 0.0
    %4392 = vmatpush1.msra.mxu0 0.0
    %4393 = vmatprep.subr.mxu0 0.0
    %4394 = vmatpush1.msra.mxu0 0.0
    %4395 = vmatprep.subr.mxu0 0.0
    %4396 = vmatpush1.msra.mxu0 0.0
    %4397 = vmatprep.subr.mxu0 0.0
    %4398 = vmatpush1.msra.mxu0 0.0
    %4399 = vmatprep.subr.mxu0 0.0
    %4400 = vmatpush1.msra.mxu0 0.0
    %4401 = vmatprep.subr.mxu0 0.0
    %4402 = vmatpush1.msra.mxu0 0.0
    %4403 = vmatprep.subr.mxu0 0.0
    %4404 = vmatpush1.msra.mxu0 0.0
    %4405 = vmatprep.subr.mxu0 0.0
    %4406 = vmatpush1.msra.mxu0 0.0
    %4407 = vmatprep.subr.mxu0 0.0
    %4408 = vmatpush1.msra.mxu0 0.0
    %4409 = vmatprep.subr.mxu0 0.0
    %4410 = vmatpush1.msra.mxu0 0.0
    %4411 = vmatprep.subr.mxu0 0.0
    %4412 = vmatpush1.msra.mxu0 0.0
    %4413 = vmatprep.subr.mxu0 0.0
    %4414 = vmatpush1.msra.mxu0 0.0
    %4415 = vmatprep.subr.mxu0 0.0
    %4416 = vmatpush1.msra.mxu0 0.0
    %4417 = vmatprep.subr.mxu0 0.0
    %4418 = vmatpush1.msra.mxu0 0.0
    %4419 = vmatprep.subr.mxu0 0.0
    %4420 = vmatpush1.msra.mxu0 0.0
    %4421 = vmatprep.subr.mxu0 0.0
    %4422 = vmatpush1.msra.mxu0 0.0
    %4423 = vmatprep.subr.mxu0 0.0
    %4424 = vmatpush1.msra.mxu0 0.0
    %4425 = vmatprep.subr.mxu0 0.0
    %4426 = vmatpush1.msra.mxu0 0.0
    %4427 = vmatprep.subr.mxu0 0.0
    %4428 = vmatpush1.msra.mxu0 0.0
    %4429 = vmatprep.subr.mxu0 0.0
    %4430 = vmatpush1.msra.mxu0 0.0
    %4431 = vmatprep.subr.mxu0 0.0
    %4432 = vmatpush1.msra.mxu0 0.0
    %4433 = vmatprep.mubr.f32.mxu0 0.0
    %4434 = vmatmul.mubr.f32.gmra.mrb[0].mxu0 %v3735
    %v4435 = vpop.f32.mrb[0].mxu0
    %v4436 = vadd.f32 %v3716, %v4435
    %v4437 = vpop.f32.mrb[0].mxu0
    %v4438 = vadd.f32 %v3716, %v4437
    %4439 = vmatprep.mubr.f32.mxu0 0.0
    %4440 = vmatmul.mubr.f32.gmra.mrb[0].mxu0 %v3738
    %v4441 = vpop.f32.mrb[0].mxu0
    %v4442 = vadd.f32 %v3721, %v4441
    %v4443 = vpop.f32.mrb[0].mxu0
    %v4444 = vadd.f32 %v3721, %v4443
    %4445 = vmatprep.mubr.f32.mxu0 0.0
    %4446 = vmatmul.mubr.f32.gmra.mrb[0].mxu0 %v3741
    %v4447 = vpop.f32.mrb[0].mxu0
    %v4448 = vadd.f32 %v3726, %v4447
    %v4449 = vpop.f32.mrb[0].mxu0
    %v4450 = vadd.f32 %v3726, %v4449
    %4451 = vmatprep.mubr.f32.mxu0 0.0
    %4452 = vmatmul.mubr.f32.gmra.mrb[0].mxu0 %v3744
    %v4453 = vpop.f32.mrb[0].mxu0
    %v4454 = vadd.f32 %v3731, %v4453
    %v4455 = vpop.f32.mrb[0].mxu0
    %v4456 = vadd.f32 %v3731, %v4455
    %4457 = vdwg.mxu0
    %4458 = vmatprep.subr.mxu0 %v3466
    %4459 = vmatpush1.msra.mxu0 %v3465
    %4460 = vmatprep.subr.mxu0 %v3530
    %4461 = vmatpush1.msra.mxu0 %v3529
    %4462 = vmatprep.subr.mxu0 %v3594
    %4463 = vmatpush1.msra.mxu0 %v3593
    %4464 = vmatprep.subr.mxu0 %v3658
    %4465 = vmatpush1.msra.mxu0 %v3657
    %4466 = vmatprep.subr.mxu0 0.0
    %4467 = vmatpush1.msra.mxu0 0.0
    %4468 = vmatprep.subr.mxu0 0.0
    %4469 = vmatpush1.msra.mxu0 0.0
    %4470 = vmatprep.subr.mxu0 0.0
    %4471 = vmatpush1.msra.mxu0 0.0
    %4472 = vmatprep.subr.mxu0 0.0
    %4473 = vmatpush1.msra.mxu0 0.0
    %4474 = vmatprep.subr.mxu0 0.0
    %4475 = vmatpush1.msra.mxu0 0.0
    %4476 = vmatprep.subr.mxu0 0.0
    %4477 = vmatpush1.msra.mxu0 0.0
    %4478 = vmatprep.subr.mxu0 0.0
    %4479 = vmatpush1.msra.mxu0 0.0
    %4480 = vmatprep.subr.mxu0 0.0
    %4481 = vmatpush1.msra.mxu0 0.0
    %4482 = vmatprep.subr.mxu0 0.0
    %4483 = vmatpush1.msra.mxu0 0.0
    %4484 = vmatprep.subr.mxu0 0.0
    %4485 = vmatpush1.msra.mxu0 0.0
    %4486 = vmatprep.subr.mxu0 0.0
    %4487 = vmatpush1.msra.mxu0 0.0
    %4488 = vmatprep.subr.mxu0 0.0
    %4489 = vmatpush1.msra.mxu0 0.0
    %4490 = vmatprep.subr.mxu0 0.0
    %4491 = vmatpush1.msra.mxu0 0.0
    %4492 = vmatprep.subr.mxu0 0.0
    %4493 = vmatpush1.msra.mxu0 0.0
    %4494 = vmatprep.subr.mxu0 0.0
    %4495 = vmatpush1.msra.mxu0 0.0
    %4496 = vmatprep.subr.mxu0 0.0
    %4497 = vmatpush1.msra.mxu0 0.0
    %4498 = vmatprep.subr.mxu0 0.0
    %4499 = vmatpush1.msra.mxu0 0.0
    %4500 = vmatprep.subr.mxu0 0.0
    %4501 = vmatpush1.msra.mxu0 0.0
    %4502 = vmatprep.subr.mxu0 0.0
    %4503 = vmatpush1.msra.mxu0 0.0
    %4504 = vmatprep.subr.mxu0 0.0
    %4505 = vmatpush1.msra.mxu0 0.0
    %4506 = vmatprep.subr.mxu0 0.0
    %4507 = vmatpush1.msra.mxu0 0.0
    %4508 = vmatprep.subr.mxu0 0.0
    %4509 = vmatpush1.msra.mxu0 0.0
    %4510 = vmatprep.subr.mxu0 0.0
    %4511 = vmatpush1.msra.mxu0 0.0
    %4512 = vmatprep.subr.mxu0 0.0
    %4513 = vmatpush1.msra.mxu0 0.0
    %4514 = vmatprep.subr.mxu0 0.0
    %4515 = vmatpush1.msra.mxu0 0.0
    %4516 = vmatprep.subr.mxu0 0.0
    %4517 = vmatpush1.msra.mxu0 0.0
    %4518 = vmatprep.subr.mxu0 0.0
    %4519 = vmatpush1.msra.mxu0 0.0
    %4520 = vmatprep.subr.mxu0 0.0
    %4521 = vmatpush1.msra.mxu0 0.0
    %4522 = vmatprep.mubr.f32.mxu0 0.0
    %4523 = vmatmul.mubr.f32.gmra.mrb[0].mxu0 %v3735
    %v4524 = vpop.f32.mrb[0].mxu0
    %v4525 = vadd.f32 %v3716, %v4524
    %v4526 = vpop.f32.mrb[0].mxu0
    %v4527 = vadd.f32 %v3716, %v4526
    %4528 = vmatprep.mubr.f32.mxu0 0.0
    %4529 = vmatmul.mubr.f32.gmra.mrb[0].mxu0 %v3738
    %v4530 = vpop.f32.mrb[0].mxu0
    %v4531 = vadd.f32 %v3721, %v4530
    %v4532 = vpop.f32.mrb[0].mxu0
    %v4533 = vadd.f32 %v3721, %v4532
    %4534 = vmatprep.mubr.f32.mxu0 0.0
    %4535 = vmatmul.mubr.f32.gmra.mrb[0].mxu0 %v3741
    %v4536 = vpop.f32.mrb[0].mxu0
    %v4537 = vadd.f32 %v3726, %v4536
    %v4538 = vpop.f32.mrb[0].mxu0
    %v4539 = vadd.f32 %v3726, %v4538
    %4540 = vmatprep.mubr.f32.mxu0 0.0
    %4541 = vmatmul.mubr.f32.gmra.mrb[0].mxu0 %v3744
    %v4542 = vpop.f32.mrb[0].mxu0
    %v4543 = vadd.f32 %v3731, %v4542
    %v4544 = vpop.f32.mrb[0].mxu0
    %v4545 = vadd.f32 %v3731, %v4544
    %4546 = vdwg.mxu0
    %4547 = vmatprep.subr.mxu0 %v3468
    %4548 = vmatpush1.msra.mxu0 %v3467
    %4549 = vmatprep.subr.mxu0 %v3532
    %4550 = vmatpush1.msra.mxu0 %v3531
    %4551 = vmatprep.subr.mxu0 %v3596
    %4552 = vmatpush1.msra.mxu0 %v3595
    %4553 = vmatprep.subr.mxu0 %v3660
    %4554 = vmatpush1.msra.mxu0 %v3659
    %4555 = vmatprep.subr.mxu0 0.0
    %4556 = vmatpush1.msra.mxu0 0.0
    %4557 = vmatprep.subr.mxu0 0.0
    %4558 = vmatpush1.msra.mxu0 0.0
    %4559 = vmatprep.subr.mxu0 0.0
    %4560 = vmatpush1.msra.mxu0 0.0
    %4561 = vmatprep.subr.mxu0 0.0
    %4562 = vmatpush1.msra.mxu0 0.0
    %4563 = vmatprep.subr.mxu0 0.0
    %4564 = vmatpush1.msra.mxu0 0.0
    %4565 = vmatprep.subr.mxu0 0.0
    %4566 = vmatpush1.msra.mxu0 0.0
    %4567 = vmatprep.subr.mxu0 0.0
    %4568 = vmatpush1.msra.mxu0 0.0
    %4569 = vmatprep.subr.mxu0 0.0
    %4570 = vmatpush1.msra.mxu0 0.0
    %4571 = vmatprep.subr.mxu0 0.0
    %4572 = vmatpush1.msra.mxu0 0.0
    %4573 = vmatprep.subr.mxu0 0.0
    %4574 = vmatpush1.msra.mxu0 0.0
    %4575 = vmatprep.subr.mxu0 0.0
    %4576 = vmatpush1.msra.mxu0 0.0
    %4577 = vmatprep.subr.mxu0 0.0
    %4578 = vmatpush1.msra.mxu0 0.0
    %4579 = vmatprep.subr.mxu0 0.0
    %4580 = vmatpush1.msra.mxu0 0.0
    %4581 = vmatprep.subr.mxu0 0.0
    %4582 = vmatpush1.msra.mxu0 0.0
    %4583 = vmatprep.subr.mxu0 0.0
    %4584 = vmatpush1.msra.mxu0 0.0
    %4585 = vmatprep.subr.mxu0 0.0
    %4586 = vmatpush1.msra.mxu0 0.0
    %4587 = vmatprep.subr.mxu0 0.0
    %4588 = vmatpush1.msra.mxu0 0.0
    %4589 = vmatprep.subr.mxu0 0.0
    %4590 = vmatpush1.msra.mxu0 0.0
    %4591 = vmatprep.subr.mxu0 0.0
    %4592 = vmatpush1.msra.mxu0 0.0
    %4593 = vmatprep.subr.mxu0 0.0
    %4594 = vmatpush1.msra.mxu0 0.0
    %4595 = vmatprep.subr.mxu0 0.0
    %4596 = vmatpush1.msra.mxu0 0.0
    %4597 = vmatprep.subr.mxu0 0.0
    %4598 = vmatpush1.msra.mxu0 0.0
    %4599 = vmatprep.subr.mxu0 0.0
    %4600 = vmatpush1.msra.mxu0 0.0
    %4601 = vmatprep.subr.mxu0 0.0
    %4602 = vmatpush1.msra.mxu0 0.0
    %4603 = vmatprep.subr.mxu0 0.0
    %4604 = vmatpush1.msra.mxu0 0.0
    %4605 = vmatprep.subr.mxu0 0.0
    %4606 = vmatpush1.msra.mxu0 0.0
    %4607 = vmatprep.subr.mxu0 0.0
    %4608 = vmatpush1.msra.mxu0 0.0
    %4609 = vmatprep.subr.mxu0 0.0
    %4610 = vmatpush1.msra.mxu0 0.0
    %4611 = vmatprep.mubr.f32.mxu0 0.0
    %4612 = vmatmul.mubr.f32.gmra.mrb[0].mxu0 %v3735
    %v4613 = vpop.f32.mrb[0].mxu0
    %v4614 = vadd.f32 %v3716, %v4613
    %v4615 = vpop.f32.mrb[0].mxu0
    %v4616 = vadd.f32 %v3716, %v4615
    %4617 = vmatprep.mubr.f32.mxu0 0.0
    %4618 = vmatmul.mubr.f32.gmra.mrb[0].mxu0 %v3738
    %v4619 = vpop.f32.mrb[0].mxu0
    %v4620 = vadd.f32 %v3721, %v4619
    %v4621 = vpop.f32.mrb[0].mxu0
    %v4622 = vadd.f32 %v3721, %v4621
    %4623 = vmatprep.mubr.f32.mxu0 0.0
    %4624 = vmatmul.mubr.f32.gmra.mrb[0].mxu0 %v3741
    %v4625 = vpop.f32.mrb[0].mxu0
    %v4626 = vadd.f32 %v3726, %v4625
    %v4627 = vpop.f32.mrb[0].mxu0
    %v4628 = vadd.f32 %v3726, %v4627
    %4629 = vmatprep.mubr.f32.mxu0 0.0
    %4630 = vmatmul.mubr.f32.gmra.mrb[0].mxu0 %v3744
    %v4631 = vpop.f32.mrb[0].mxu0
    %v4632 = vadd.f32 %v3731, %v4631
    %v4633 = vpop.f32.mrb[0].mxu0
    %v4634 = vadd.f32 %v3731, %v4633
    %4635 = vdwg.mxu0
    %4636 = vmatprep.subr.mxu0 %v3470
    %4637 = vmatpush1.msra.mxu0 %v3469
    %4638 = vmatprep.subr.mxu0 %v3534
    %4639 = vmatpush1.msra.mxu0 %v3533
    %4640 = vmatprep.subr.mxu0 %v3598
    %4641 = vmatpush1.msra.mxu0 %v3597
    %4642 = vmatprep.subr.mxu0 %v3662
    %4643 = vmatpush1.msra.mxu0 %v3661
    %4644 = vmatprep.subr.mxu0 0.0
    %4645 = vmatpush1.msra.mxu0 0.0
    %4646 = vmatprep.subr.mxu0 0.0
    %4647 = vmatpush1.msra.mxu0 0.0
    %4648 = vmatprep.subr.mxu0 0.0
    %4649 = vmatpush1.msra.mxu0 0.0
    %4650 = vmatprep.subr.mxu0 0.0
    %4651 = vmatpush1.msra.mxu0 0.0
    %4652 = vmatprep.subr.mxu0 0.0
    %4653 = vmatpush1.msra.mxu0 0.0
    %4654 = vmatprep.subr.mxu0 0.0
    %4655 = vmatpush1.msra.mxu0 0.0
    %4656 = vmatprep.subr.mxu0 0.0
    %4657 = vmatpush1.msra.mxu0 0.0
    %4658 = vmatprep.subr.mxu0 0.0
    %4659 = vmatpush1.msra.mxu0 0.0
    %4660 = vmatprep.subr.mxu0 0.0
    %4661 = vmatpush1.msra.mxu0 0.0
    %4662 = vmatprep.subr.mxu0 0.0
    %4663 = vmatpush1.msra.mxu0 0.0
    %4664 = vmatprep.subr.mxu0 0.0
    %4665 = vmatpush1.msra.mxu0 0.0
    %4666 = vmatprep.subr.mxu0 0.0
    %4667 = vmatpush1.msra.mxu0 0.0
    %4668 = vmatprep.subr.mxu0 0.0
    %4669 = vmatpush1.msra.mxu0 0.0
    %4670 = vmatprep.subr.mxu0 0.0
    %4671 = vmatpush1.msra.mxu0 0.0
    %4672 = vmatprep.subr.mxu0 0.0
    %4673 = vmatpush1.msra.mxu0 0.0
    %4674 = vmatprep.subr.mxu0 0.0
    %4675 = vmatpush1.msra.mxu0 0.0
    %4676 = vmatprep.subr.mxu0 0.0
    %4677 = vmatpush1.msra.mxu0 0.0
    %4678 = vmatprep.subr.mxu0 0.0
    %4679 = vmatpush1.msra.mxu0 0.0
    %4680 = vmatprep.subr.mxu0 0.0
    %4681 = vmatpush1.msra.mxu0 0.0
    %4682 = vmatprep.subr.mxu0 0.0
    %4683 = vmatpush1.msra.mxu0 0.0
    %4684 = vmatprep.subr.mxu0 0.0
    %4685 = vmatpush1.msra.mxu0 0.0
    %4686 = vmatprep.subr.mxu0 0.0
    %4687 = vmatpush1.msra.mxu0 0.0
    %4688 = vmatprep.subr.mxu0 0.0
    %4689 = vmatpush1.msra.mxu0 0.0
    %4690 = vmatprep.subr.mxu0 0.0
    %4691 = vmatpush1.msra.mxu0 0.0
    %4692 = vmatprep.subr.mxu0 0.0
    %4693 = vmatpush1.msra.mxu0 0.0
    %4694 = vmatprep.subr.mxu0 0.0
    %4695 = vmatpush1.msra.mxu0 0.0
    %4696 = vmatprep.subr.mxu0 0.0
    %4697 = vmatpush1.msra.mxu0 0.0
    %4698 = vmatprep.subr.mxu0 0.0
    %4699 = vmatpush1.msra.mxu0 0.0
    %4700 = vmatprep.mubr.f32.mxu0 0.0
    %4701 = vmatmul.mubr.f32.gmra.mrb[0].mxu0 %v3735
    %v4702 = vpop.f32.mrb[0].mxu0
    %v4703 = vadd.f32 %v3716, %v4702
    %v4704 = vpop.f32.mrb[0].mxu0
    %v4705 = vadd.f32 %v3716, %v4704
    %4706 = vmatprep.mubr.f32.mxu0 0.0
    %4707 = vmatmul.mubr.f32.gmra.mrb[0].mxu0 %v3738
    %v4708 = vpop.f32.mrb[0].mxu0
    %v4709 = vadd.f32 %v3721, %v4708
    %v4710 = vpop.f32.mrb[0].mxu0
    %v4711 = vadd.f32 %v3721, %v4710
    %4712 = vmatprep.mubr.f32.mxu0 0.0
    %4713 = vmatmul.mubr.f32.gmra.mrb[0].mxu0 %v3741
    %v4714 = vpop.f32.mrb[0].mxu0
    %v4715 = vadd.f32 %v3726, %v4714
    %v4716 = vpop.f32.mrb[0].mxu0
    %v4717 = vadd.f32 %v3726, %v4716
    %4718 = vmatprep.mubr.f32.mxu0 0.0
    %4719 = vmatmul.mubr.f32.gmra.mrb[0].mxu0 %v3744
    %v4720 = vpop.f32.mrb[0].mxu0
    %v4721 = vadd.f32 %v3731, %v4720
    %v4722 = vpop.f32.mrb[0].mxu0
    %v4723 = vadd.f32 %v3731, %v4722
    %4724 = vdwg.mxu0
    %4725 = vmatprep.subr.mxu0 %v3472
    %4726 = vmatpush1.msra.mxu0 %v3471
    %4727 = vmatprep.subr.mxu0 %v3536
    %4728 = vmatpush1.msra.mxu0 %v3535
    %4729 = vmatprep.subr.mxu0 %v3600
    %4730 = vmatpush1.msra.mxu0 %v3599
    %4731 = vmatprep.subr.mxu0 %v3664
    %4732 = vmatpush1.msra.mxu0 %v3663
    %4733 = vmatprep.subr.mxu0 0.0
    %4734 = vmatpush1.msra.mxu0 0.0
    %4735 = vmatprep.subr.mxu0 0.0
    %4736 = vmatpush1.msra.mxu0 0.0
    %4737 = vmatprep.subr.mxu0 0.0
    %4738 = vmatpush1.msra.mxu0 0.0
    %4739 = vmatprep.subr.mxu0 0.0
    %4740 = vmatpush1.msra.mxu0 0.0
    %4741 = vmatprep.subr.mxu0 0.0
    %4742 = vmatpush1.msra.mxu0 0.0
    %4743 = vmatprep.subr.mxu0 0.0
    %4744 = vmatpush1.msra.mxu0 0.0
    %4745 = vmatprep.subr.mxu0 0.0
    %4746 = vmatpush1.msra.mxu0 0.0
    %4747 = vmatprep.subr.mxu0 0.0
    %4748 = vmatpush1.msra.mxu0 0.0
    %4749 = vmatprep.subr.mxu0 0.0
    %4750 = vmatpush1.msra.mxu0 0.0
    %4751 = vmatprep.subr.mxu0 0.0
    %4752 = vmatpush1.msra.mxu0 0.0
    %4753 = vmatprep.subr.mxu0 0.0
    %4754 = vmatpush1.msra.mxu0 0.0
    %4755 = vmatprep.subr.mxu0 0.0
    %4756 = vmatpush1.msra.mxu0 0.0
    %4757 = vmatprep.subr.mxu0 0.0
    %4758 = vmatpush1.msra.mxu0 0.0
    %4759 = vmatprep.subr.mxu0 0.0
    %4760 = vmatpush1.msra.mxu0 0.0
    %4761 = vmatprep.subr.mxu0 0.0
    %4762 = vmatpush1.msra.mxu0 0.0
    %4763 = vmatprep.subr.mxu0 0.0
    %4764 = vmatpush1.msra.mxu0 0.0
    %4765 = vmatprep.subr.mxu0 0.0
    %4766 = vmatpush1.msra.mxu0 0.0
    %4767 = vmatprep.subr.mxu0 0.0
    %4768 = vmatpush1.msra.mxu0 0.0
    %4769 = vmatprep.subr.mxu0 0.0
    %4770 = vmatpush1.msra.mxu0 0.0
    %4771 = vmatprep.subr.mxu0 0.0
    %4772 = vmatpush1.msra.mxu0 0.0
    %4773 = vmatprep.subr.mxu0 0.0
    %4774 = vmatpush1.msra.mxu0 0.0
    %4775 = vmatprep.subr.mxu0 0.0
    %4776 = vmatpush1.msra.mxu0 0.0
    %4777 = vmatprep.subr.mxu0 0.0
    %4778 = vmatpush1.msra.mxu0 0.0
    %4779 = vmatprep.subr.mxu0 0.0
    %4780 = vmatpush1.msra.mxu0 0.0
    %4781 = vmatprep.subr.mxu0 0.0
    %4782 = vmatpush1.msra.mxu0 0.0
    %4783 = vmatprep.subr.mxu0 0.0
    %4784 = vmatpush1.msra.mxu0 0.0
    %4785 = vmatprep.subr.mxu0 0.0
    %4786 = vmatpush1.msra.mxu0 0.0
    %4787 = vmatprep.subr.mxu0 0.0
    %4788 = vmatpush1.msra.mxu0 0.0
    %4789 = vmatprep.mubr.f32.mxu0 0.0
    %4790 = vmatmul.mubr.f32.gmra.mrb[0].mxu0 %v3735
    %v4791 = vpop.f32.mrb[0].mxu0
    %v4792 = vadd.f32 %v3716, %v4791
    %v4793 = vpop.f32.mrb[0].mxu0
    %v4794 = vadd.f32 %v3716, %v4793
    %4795 = vmatprep.mubr.f32.mxu0 0.0
    %4796 = vmatmul.mubr.f32.gmra.mrb[0].mxu0 %v3738
    %v4797 = vpop.f32.mrb[0].mxu0
    %v4798 = vadd.f32 %v3721, %v4797
    %v4799 = vpop.f32.mrb[0].mxu0
    %v4800 = vadd.f32 %v3721, %v4799
    %4801 = vmatprep.mubr.f32.mxu0 0.0
    %4802 = vmatmul.mubr.f32.gmra.mrb[0].mxu0 %v3741
    %v4803 = vpop.f32.mrb[0].mxu0
    %v4804 = vadd.f32 %v3726, %v4803
    %v4805 = vpop.f32.mrb[0].mxu0
    %v4806 = vadd.f32 %v3726, %v4805
    %4807 = vmatprep.mubr.f32.mxu0 0.0
    %4808 = vmatmul.mubr.f32.gmra.mrb[0].mxu0 %v3744
    %v4809 = vpop.f32.mrb[0].mxu0
    %v4810 = vadd.f32 %v3731, %v4809
    %v4811 = vpop.f32.mrb[0].mxu0
    %v4812 = vadd.f32 %v3731, %v4811
    %4813 = vdwg.mxu0
    %4814 = vmatprep.subr.mxu0 %v3474
    %4815 = vmatpush1.msra.mxu0 %v3473
    %4816 = vmatprep.subr.mxu0 %v3538
    %4817 = vmatpush1.msra.mxu0 %v3537
    %4818 = vmatprep.subr.mxu0 %v3602
    %4819 = vmatpush1.msra.mxu0 %v3601
    %4820 = vmatprep.subr.mxu0 %v3666
    %4821 = vmatpush1.msra.mxu0 %v3665
    %4822 = vmatprep.subr.mxu0 0.0
    %4823 = vmatpush1.msra.mxu0 0.0
    %4824 = vmatprep.subr.mxu0 0.0
    %4825 = vmatpush1.msra.mxu0 0.0
    %4826 = vmatprep.subr.mxu0 0.0
    %4827 = vmatpush1.msra.mxu0 0.0
    %4828 = vmatprep.subr.mxu0 0.0
    %4829 = vmatpush1.msra.mxu0 0.0
    %4830 = vmatprep.subr.mxu0 0.0
    %4831 = vmatpush1.msra.mxu0 0.0
    %4832 = vmatprep.subr.mxu0 0.0
    %4833 = vmatpush1.msra.mxu0 0.0
    %4834 = vmatprep.subr.mxu0 0.0
    %4835 = vmatpush1.msra.mxu0 0.0
    %4836 = vmatprep.subr.mxu0 0.0
    %4837 = vmatpush1.msra.mxu0 0.0
    %4838 = vmatprep.subr.mxu0 0.0
    %4839 = vmatpush1.msra.mxu0 0.0
    %4840 = vmatprep.subr.mxu0 0.0
    %4841 = vmatpush1.msra.mxu0 0.0
    %4842 = vmatprep.subr.mxu0 0.0
    %4843 = vmatpush1.msra.mxu0 0.0
    %4844 = vmatprep.subr.mxu0 0.0
    %4845 = vmatpush1.msra.mxu0 0.0
    %4846 = vmatprep.subr.mxu0 0.0
    %4847 = vmatpush1.msra.mxu0 0.0
    %4848 = vmatprep.subr.mxu0 0.0
    %4849 = vmatpush1.msra.mxu0 0.0
    %4850 = vmatprep.subr.mxu0 0.0
    %4851 = vmatpush1.msra.mxu0 0.0
    %4852 = vmatprep.subr.mxu0 0.0
    %4853 = vmatpush1.msra.mxu0 0.0
    %4854 = vmatprep.subr.mxu0 0.0
    %4855 = vmatpush1.msra.mxu0 0.0
    %4856 = vmatprep.subr.mxu0 0.0
    %4857 = vmatpush1.msra.mxu0 0.0
    %4858 = vmatprep.subr.mxu0 0.0
    %4859 = vmatpush1.msra.mxu0 0.0
    %4860 = vmatprep.subr.mxu0 0.0
    %4861 = vmatpush1.msra.mxu0 0.0
    %4862 = vmatprep.subr.mxu0 0.0
    %4863 = vmatpush1.msra.mxu0 0.0
    %4864 = vmatprep.subr.mxu0 0.0
    %4865 = vmatpush1.msra.mxu0 0.0
    %4866 = vmatprep.subr.mxu0 0.0
    %4867 = vmatpush1.msra.mxu0 0.0
    %4868 = vmatprep.subr.mxu0 0.0
    %4869 = vmatpush1.msra.mxu0 0.0
    %4870 = vmatprep.subr.mxu0 0.0
    %4871 = vmatpush1.msra.mxu0 0.0
    %4872 = vmatprep.subr.mxu0 0.0
    %4873 = vmatpush1.msra.mxu0 0.0
    %4874 = vmatprep.subr.mxu0 0.0
    %4875 = vmatpush1.msra.mxu0 0.0
    %4876 = vmatprep.subr.mxu0 0.0
    %4877 = vmatpush1.msra.mxu0 0.0
    %4878 = vmatprep.mubr.f32.mxu0 0.0
    %4879 = vmatmul.mubr.f32.gmra.mrb[0].mxu0 %v3735
    %v4880 = vpop.f32.mrb[0].mxu0
    %v4881 = vadd.f32 %v3716, %v4880
    %v4882 = vpop.f32.mrb[0].mxu0
    %v4883 = vadd.f32 %v3716, %v4882
    %4884 = vmatprep.mubr.f32.mxu0 0.0
    %4885 = vmatmul.mubr.f32.gmra.mrb[0].mxu0 %v3738
    %v4886 = vpop.f32.mrb[0].mxu0
    %v4887 = vadd.f32 %v3721, %v4886
    %v4888 = vpop.f32.mrb[0].mxu0
    %v4889 = vadd.f32 %v3721, %v4888
    %4890 = vmatprep.mubr.f32.mxu0 0.0
    %4891 = vmatmul.mubr.f32.gmra.mrb[0].mxu0 %v3741
    %v4892 = vpop.f32.mrb[0].mxu0
    %v4893 = vadd.f32 %v3726, %v4892
    %v4894 = vpop.f32.mrb[0].mxu0
    %v4895 = vadd.f32 %v3726, %v4894
    %4896 = vmatprep.mubr.f32.mxu0 0.0
    %4897 = vmatmul.mubr.f32.gmra.mrb[0].mxu0 %v3744
    %v4898 = vpop.f32.mrb[0].mxu0
    %v4899 = vadd.f32 %v3731, %v4898
    %v4900 = vpop.f32.mrb[0].mxu0
    %v4901 = vadd.f32 %v3731, %v4900
    %4902 = vdwg.mxu0
    %4903 = vmatprep.subr.mxu0 %v3476
    %4904 = vmatpush1.msra.mxu0 %v3475
    %4905 = vmatprep.subr.mxu0 %v3540
    %4906 = vmatpush1.msra.mxu0 %v3539
    %4907 = vmatprep.subr.mxu0 %v3604
    %4908 = vmatpush1.msra.mxu0 %v3603
    %4909 = vmatprep.subr.mxu0 %v3668
    %4910 = vmatpush1.msra.mxu0 %v3667
    %4911 = vmatprep.subr.mxu0 0.0
    %4912 = vmatpush1.msra.mxu0 0.0
    %4913 = vmatprep.subr.mxu0 0.0
    %4914 = vmatpush1.msra.mxu0 0.0
    %4915 = vmatprep.subr.mxu0 0.0
    %4916 = vmatpush1.msra.mxu0 0.0
    %4917 = vmatprep.subr.mxu0 0.0
    %4918 = vmatpush1.msra.mxu0 0.0
    %4919 = vmatprep.subr.mxu0 0.0
    %4920 = vmatpush1.msra.mxu0 0.0
    %4921 = vmatprep.subr.mxu0 0.0
    %4922 = vmatpush1.msra.mxu0 0.0
    %4923 = vmatprep.subr.mxu0 0.0
    %4924 = vmatpush1.msra.mxu0 0.0
    %4925 = vmatprep.subr.mxu0 0.0
    %4926 = vmatpush1.msra.mxu0 0.0
    %4927 = vmatprep.subr.mxu0 0.0
    %4928 = vmatpush1.msra.mxu0 0.0
    %4929 = vmatprep.subr.mxu0 0.0
    %4930 = vmatpush1.msra.mxu0 0.0
    %4931 = vmatprep.subr.mxu0 0.0
    %4932 = vmatpush1.msra.mxu0 0.0
    %4933 = vmatprep.subr.mxu0 0.0
    %4934 = vmatpush1.msra.mxu0 0.0
    %4935 = vmatprep.subr.mxu0 0.0
    %4936 = vmatpush1.msra.mxu0 0.0
    %4937 = vmatprep.subr.mxu0 0.0
    %4938 = vmatpush1.msra.mxu0 0.0
    %4939 = vmatprep.subr.mxu0 0.0
    %4940 = vmatpush1.msra.mxu0 0.0
    %4941 = vmatprep.subr.mxu0 0.0
    %4942 = vmatpush1.msra.mxu0 0.0
    %4943 = vmatprep.subr.mxu0 0.0
    %4944 = vmatpush1.msra.mxu0 0.0
    %4945 = vmatprep.subr.mxu0 0.0
    %4946 = vmatpush1.msra.mxu0 0.0
    %4947 = vmatprep.subr.mxu0 0.0
    %4948 = vmatpush1.msra.mxu0 0.0
    %4949 = vmatprep.subr.mxu0 0.0
    %4950 = vmatpush1.msra.mxu0 0.0
    %4951 = vmatprep.subr.mxu0 0.0
    %4952 = vmatpush1.msra.mxu0 0.0
    %4953 = vmatprep.subr.mxu0 0.0
    %4954 = vmatpush1.msra.mxu0 0.0
    %4955 = vmatprep.subr.mxu0 0.0
    %4956 = vmatpush1.msra.mxu0 0.0
    %4957 = vmatprep.subr.mxu0 0.0
    %4958 = vmatpush1.msra.mxu0 0.0
    %4959 = vmatprep.subr.mxu0 0.0
    %4960 = vmatpush1.msra.mxu0 0.0
    %4961 = vmatprep.subr.mxu0 0.0
    %4962 = vmatpush1.msra.mxu0 0.0
    %4963 = vmatprep.subr.mxu0 0.0
    %4964 = vmatpush1.msra.mxu0 0.0
    %4965 = vmatprep.subr.mxu0 0.0
    %4966 = vmatpush1.msra.mxu0 0.0
    %4967 = vmatprep.mubr.f32.mxu0 0.0
    %4968 = vmatmul.mubr.f32.gmra.mrb[0].mxu0 %v3735
    %v4969 = vpop.f32.mrb[0].mxu0
    %v4970 = vadd.f32 %v3716, %v4969
    %v4971 = vpop.f32.mrb[0].mxu0
    %v4972 = vadd.f32 %v3716, %v4971
    %4973 = vmatprep.mubr.f32.mxu0 0.0
    %4974 = vmatmul.mubr.f32.gmra.mrb[0].mxu0 %v3738
    %v4975 = vpop.f32.mrb[0].mxu0
    %v4976 = vadd.f32 %v3721, %v4975
    %v4977 = vpop.f32.mrb[0].mxu0
    %v4978 = vadd.f32 %v3721, %v4977
    %4979 = vmatprep.mubr.f32.mxu0 0.0
    %4980 = vmatmul.mubr.f32.gmra.mrb[0].mxu0 %v3741
    %v4981 = vpop.f32.mrb[0].mxu0
    %v4982 = vadd.f32 %v3726, %v4981
    %v4983 = vpop.f32.mrb[0].mxu0
    %v4984 = vadd.f32 %v3726, %v4983
    %4985 = vmatprep.mubr.f32.mxu0 0.0
    %4986 = vmatmul.mubr.f32.gmra.mrb[0].mxu0 %v3744
    %v4987 = vpop.f32.mrb[0].mxu0
    %v4988 = vadd.f32 %v3731, %v4987
    %v4989 = vpop.f32.mrb[0].mxu0
    %v4990 = vadd.f32 %v3731, %v4989
    %4991 = vdwg.mxu0
    %4992 = vmatprep.subr.mxu0 %v3478
    %4993 = vmatpush1.msra.mxu0 %v3477
    %4994 = vmatprep.subr.mxu0 %v3542
    %4995 = vmatpush1.msra.mxu0 %v3541
    %4996 = vmatprep.subr.mxu0 %v3606
    %4997 = vmatpush1.msra.mxu0 %v3605
    %4998 = vmatprep.subr.mxu0 %v3670
    %4999 = vmatpush1.msra.mxu0 %v3669
    %5000 = vmatprep.subr.mxu0 0.0
    %5001 = vmatpush1.msra.mxu0 0.0
    %5002 = vmatprep.subr.mxu0 0.0
    %5003 = vmatpush1.msra.mxu0 0.0
    %5004 = vmatprep.subr.mxu0 0.0
    %5005 = vmatpush1.msra.mxu0 0.0
    %5006 = vmatprep.subr.mxu0 0.0
    %5007 = vmatpush1.msra.mxu0 0.0
    %5008 = vmatprep.subr.mxu0 0.0
    %5009 = vmatpush1.msra.mxu0 0.0
    %5010 = vmatprep.subr.mxu0 0.0
    %5011 = vmatpush1.msra.mxu0 0.0
    %5012 = vmatprep.subr.mxu0 0.0
    %5013 = vmatpush1.msra.mxu0 0.0
    %5014 = vmatprep.subr.mxu0 0.0
    %5015 = vmatpush1.msra.mxu0 0.0
    %5016 = vmatprep.subr.mxu0 0.0
    %5017 = vmatpush1.msra.mxu0 0.0
    %5018 = vmatprep.subr.mxu0 0.0
    %5019 = vmatpush1.msra.mxu0 0.0
    %5020 = vmatprep.subr.mxu0 0.0
    %5021 = vmatpush1.msra.mxu0 0.0
    %5022 = vmatprep.subr.mxu0 0.0
    %5023 = vmatpush1.msra.mxu0 0.0
    %5024 = vmatprep.subr.mxu0 0.0
    %5025 = vmatpush1.msra.mxu0 0.0
    %5026 = vmatprep.subr.mxu0 0.0
    %5027 = vmatpush1.msra.mxu0 0.0
    %5028 = vmatprep.subr.mxu0 0.0
    %5029 = vmatpush1.msra.mxu0 0.0
    %5030 = vmatprep.subr.mxu0 0.0
    %5031 = vmatpush1.msra.mxu0 0.0
    %5032 = vmatprep.subr.mxu0 0.0
    %5033 = vmatpush1.msra.mxu0 0.0
    %5034 = vmatprep.subr.mxu0 0.0
    %5035 = vmatpush1.msra.mxu0 0.0
    %5036 = vmatprep.subr.mxu0 0.0
    %5037 = vmatpush1.msra.mxu0 0.0
    %5038 = vmatprep.subr.mxu0 0.0
    %5039 = vmatpush1.msra.mxu0 0.0
    %5040 = vmatprep.subr.mxu0 0.0
    %5041 = vmatpush1.msra.mxu0 0.0
    %5042 = vmatprep.subr.mxu0 0.0
    %5043 = vmatpush1.msra.mxu0 0.0
    %5044 = vmatprep.subr.mxu0 0.0
    %5045 = vmatpush1.msra.mxu0 0.0
    %5046 = vmatprep.subr.mxu0 0.0
    %5047 = vmatpush1.msra.mxu0 0.0
    %5048 = vmatprep.subr.mxu0 0.0
    %5049 = vmatpush1.msra.mxu0 0.0
    %5050 = vmatprep.subr.mxu0 0.0
    %5051 = vmatpush1.msra.mxu0 0.0
    %5052 = vmatprep.subr.mxu0 0.0
    %5053 = vmatpush1.msra.mxu0 0.0
    %5054 = vmatprep.subr.mxu0 0.0
    %5055 = vmatpush1.msra.mxu0 0.0
    %5056 = vmatprep.mubr.f32.mxu0 0.0
    %5057 = vmatmul.mubr.f32.gmra.mrb[0].mxu0 %v3735
    %v5058 = vpop.f32.mrb[0].mxu0
    %v5059 = vadd.f32 %v3716, %v5058
    %v5060 = vpop.f32.mrb[0].mxu0
    %v5061 = vadd.f32 %v3716, %v5060
    %5062 = vmatprep.mubr.f32.mxu0 0.0
    %5063 = vmatmul.mubr.f32.gmra.mrb[0].mxu0 %v3738
    %v5064 = vpop.f32.mrb[0].mxu0
    %v5065 = vadd.f32 %v3721, %v5064
    %v5066 = vpop.f32.mrb[0].mxu0
    %v5067 = vadd.f32 %v3721, %v5066
    %5068 = vmatprep.mubr.f32.mxu0 0.0
    %5069 = vmatmul.mubr.f32.gmra.mrb[0].mxu0 %v3741
    %v5070 = vpop.f32.mrb[0].mxu0
    %v5071 = vadd.f32 %v3726, %v5070
    %v5072 = vpop.f32.mrb[0].mxu0
    %v5073 = vadd.f32 %v3726, %v5072
    %5074 = vmatprep.mubr.f32.mxu0 0.0
    %5075 = vmatmul.mubr.f32.gmra.mrb[0].mxu0 %v3744
    %v5076 = vpop.f32.mrb[0].mxu0
    %v5077 = vadd.f32 %v3731, %v5076
    %v5078 = vpop.f32.mrb[0].mxu0
    %v5079 = vadd.f32 %v3731, %v5078
    %5080 = vdwg.mxu0
    %5081 = vmatprep.subr.mxu0 %v3480
    %5082 = vmatpush1.msra.mxu0 %v3479
    %5083 = vmatprep.subr.mxu0 %v3544
    %5084 = vmatpush1.msra.mxu0 %v3543
    %5085 = vmatprep.subr.mxu0 %v3608
    %5086 = vmatpush1.msra.mxu0 %v3607
    %5087 = vmatprep.subr.mxu0 %v3672
    %5088 = vmatpush1.msra.mxu0 %v3671
    %5089 = vmatprep.subr.mxu0 0.0
    %5090 = vmatpush1.msra.mxu0 0.0
    %5091 = vmatprep.subr.mxu0 0.0
    %5092 = vmatpush1.msra.mxu0 0.0
    %5093 = vmatprep.subr.mxu0 0.0
    %5094 = vmatpush1.msra.mxu0 0.0
    %5095 = vmatprep.subr.mxu0 0.0
    %5096 = vmatpush1.msra.mxu0 0.0
    %5097 = vmatprep.subr.mxu0 0.0
    %5098 = vmatpush1.msra.mxu0 0.0
    %5099 = vmatprep.subr.mxu0 0.0
    %5100 = vmatpush1.msra.mxu0 0.0
    %5101 = vmatprep.subr.mxu0 0.0
    %5102 = vmatpush1.msra.mxu0 0.0
    %5103 = vmatprep.subr.mxu0 0.0
    %5104 = vmatpush1.msra.mxu0 0.0
    %5105 = vmatprep.subr.mxu0 0.0
    %5106 = vmatpush1.msra.mxu0 0.0
    %5107 = vmatprep.subr.mxu0 0.0
    %5108 = vmatpush1.msra.mxu0 0.0
    %5109 = vmatprep.subr.mxu0 0.0
    %5110 = vmatpush1.msra.mxu0 0.0
    %5111 = vmatprep.subr.mxu0 0.0
    %5112 = vmatpush1.msra.mxu0 0.0
    %5113 = vmatprep.subr.mxu0 0.0
    %5114 = vmatpush1.msra.mxu0 0.0
    %5115 = vmatprep.subr.mxu0 0.0
    %5116 = vmatpush1.msra.mxu0 0.0
    %5117 = vmatprep.subr.mxu0 0.0
    %5118 = vmatpush1.msra.mxu0 0.0
    %5119 = vmatprep.subr.mxu0 0.0
    %5120 = vmatpush1.msra.mxu0 0.0
    %5121 = vmatprep.subr.mxu0 0.0
    %5122 = vmatpush1.msra.mxu0 0.0
    %5123 = vmatprep.subr.mxu0 0.0
    %5124 = vmatpush1.msra.mxu0 0.0
    %5125 = vmatprep.subr.mxu0 0.0
    %5126 = vmatpush1.msra.mxu0 0.0
    %5127 = vmatprep.subr.mxu0 0.0
    %5128 = vmatpush1.msra.mxu0 0.0
    %5129 = vmatprep.subr.mxu0 0.0
    %5130 = vmatpush1.msra.mxu0 0.0
    %5131 = vmatprep.subr.mxu0 0.0
    %5132 = vmatpush1.msra.mxu0 0.0
    %5133 = vmatprep.subr.mxu0 0.0
    %5134 = vmatpush1.msra.mxu0 0.0
    %5135 = vmatprep.subr.mxu0 0.0
    %5136 = vmatpush1.msra.mxu0 0.0
    %5137 = vmatprep.subr.mxu0 0.0
    %5138 = vmatpush1.msra.mxu0 0.0
    %5139 = vmatprep.subr.mxu0 0.0
    %5140 = vmatpush1.msra.mxu0 0.0
    %5141 = vmatprep.subr.mxu0 0.0
    %5142 = vmatpush1.msra.mxu0 0.0
    %5143 = vmatprep.subr.mxu0 0.0
    %5144 = vmatpush1.msra.mxu0 0.0
    %5145 = vmatprep.mubr.f32.mxu0 0.0
    %5146 = vmatmul.mubr.f32.gmra.mrb[0].mxu0 %v3735
    %v5147 = vpop.f32.mrb[0].mxu0
    %v5148 = vadd.f32 %v3716, %v5147
    %v5149 = vpop.f32.mrb[0].mxu0
    %v5150 = vadd.f32 %v3716, %v5149
    %5151 = vmatprep.mubr.f32.mxu0 0.0
    %5152 = vmatmul.mubr.f32.gmra.mrb[0].mxu0 %v3738
    %v5153 = vpop.f32.mrb[0].mxu0
    %v5154 = vadd.f32 %v3721, %v5153
    %v5155 = vpop.f32.mrb[0].mxu0
    %v5156 = vadd.f32 %v3721, %v5155
    %5157 = vmatprep.mubr.f32.mxu0 0.0
    %5158 = vmatmul.mubr.f32.gmra.mrb[0].mxu0 %v3741
    %v5159 = vpop.f32.mrb[0].mxu0
    %v5160 = vadd.f32 %v3726, %v5159
    %v5161 = vpop.f32.mrb[0].mxu0
    %v5162 = vadd.f32 %v3726, %v5161
    %5163 = vmatprep.mubr.f32.mxu0 0.0
    %5164 = vmatmul.mubr.f32.gmra.mrb[0].mxu0 %v3744
    %v5165 = vpop.f32.mrb[0].mxu0
    %v5166 = vadd.f32 %v3731, %v5165
    %v5167 = vpop.f32.mrb[0].mxu0
    %v5168 = vadd.f32 %v3731, %v5167
    %5169 = vdwg.mxu0
    %5170 = vmatprep.subr.mxu0 %v3482
    %5171 = vmatpush1.msra.mxu0 %v3481
    %5172 = vmatprep.subr.mxu0 %v3546
    %5173 = vmatpush1.msra.mxu0 %v3545
    %5174 = vmatprep.subr.mxu0 %v3610
    %5175 = vmatpush1.msra.mxu0 %v3609
    %5176 = vmatprep.subr.mxu0 %v3674
    %5177 = vmatpush1.msra.mxu0 %v3673
    %5178 = vmatprep.subr.mxu0 0.0
    %5179 = vmatpush1.msra.mxu0 0.0
    %5180 = vmatprep.subr.mxu0 0.0
    %5181 = vmatpush1.msra.mxu0 0.0
    %5182 = vmatprep.subr.mxu0 0.0
    %5183 = vmatpush1.msra.mxu0 0.0
    %5184 = vmatprep.subr.mxu0 0.0
    %5185 = vmatpush1.msra.mxu0 0.0
    %5186 = vmatprep.subr.mxu0 0.0
    %5187 = vmatpush1.msra.mxu0 0.0
    %5188 = vmatprep.subr.mxu0 0.0
    %5189 = vmatpush1.msra.mxu0 0.0
    %5190 = vmatprep.subr.mxu0 0.0
    %5191 = vmatpush1.msra.mxu0 0.0
    %5192 = vmatprep.subr.mxu0 0.0
    %5193 = vmatpush1.msra.mxu0 0.0
    %5194 = vmatprep.subr.mxu0 0.0
    %5195 = vmatpush1.msra.mxu0 0.0
    %5196 = vmatprep.subr.mxu0 0.0
    %5197 = vmatpush1.msra.mxu0 0.0
    %5198 = vmatprep.subr.mxu0 0.0
    %5199 = vmatpush1.msra.mxu0 0.0
    %5200 = vmatprep.subr.mxu0 0.0
    %5201 = vmatpush1.msra.mxu0 0.0
    %5202 = vmatprep.subr.mxu0 0.0
    %5203 = vmatpush1.msra.mxu0 0.0
    %5204 = vmatprep.subr.mxu0 0.0
    %5205 = vmatpush1.msra.mxu0 0.0
    %5206 = vmatprep.subr.mxu0 0.0
    %5207 = vmatpush1.msra.mxu0 0.0
    %5208 = vmatprep.subr.mxu0 0.0
    %5209 = vmatpush1.msra.mxu0 0.0
    %5210 = vmatprep.subr.mxu0 0.0
    %5211 = vmatpush1.msra.mxu0 0.0
    %5212 = vmatprep.subr.mxu0 0.0
    %5213 = vmatpush1.msra.mxu0 0.0
    %5214 = vmatprep.subr.mxu0 0.0
    %5215 = vmatpush1.msra.mxu0 0.0
    %5216 = vmatprep.subr.mxu0 0.0
    %5217 = vmatpush1.msra.mxu0 0.0
    %5218 = vmatprep.subr.mxu0 0.0
    %5219 = vmatpush1.msra.mxu0 0.0
    %5220 = vmatprep.subr.mxu0 0.0
    %5221 = vmatpush1.msra.mxu0 0.0
    %5222 = vmatprep.subr.mxu0 0.0
    %5223 = vmatpush1.msra.mxu0 0.0
    %5224 = vmatprep.subr.mxu0 0.0
    %5225 = vmatpush1.msra.mxu0 0.0
    %5226 = vmatprep.subr.mxu0 0.0
    %5227 = vmatpush1.msra.mxu0 0.0
    %5228 = vmatprep.subr.mxu0 0.0
    %5229 = vmatpush1.msra.mxu0 0.0
    %5230 = vmatprep.subr.mxu0 0.0
    %5231 = vmatpush1.msra.mxu0 0.0
    %5232 = vmatprep.subr.mxu0 0.0
    %5233 = vmatpush1.msra.mxu0 0.0
    %5234 = vmatprep.mubr.f32.mxu0 0.0
    %5235 = vmatmul.mubr.f32.gmra.mrb[0].mxu0 %v3735
    %v5236 = vpop.f32.mrb[0].mxu0
    %v5237 = vadd.f32 %v3716, %v5236
    %v5238 = vpop.f32.mrb[0].mxu0
    %v5239 = vadd.f32 %v3716, %v5238
    %5240 = vmatprep.mubr.f32.mxu0 0.0
    %5241 = vmatmul.mubr.f32.gmra.mrb[0].mxu0 %v3738
    %v5242 = vpop.f32.mrb[0].mxu0
    %v5243 = vadd.f32 %v3721, %v5242
    %v5244 = vpop.f32.mrb[0].mxu0
    %v5245 = vadd.f32 %v3721, %v5244
    %5246 = vmatprep.mubr.f32.mxu0 0.0
    %5247 = vmatmul.mubr.f32.gmra.mrb[0].mxu0 %v3741
    %v5248 = vpop.f32.mrb[0].mxu0
    %v5249 = vadd.f32 %v3726, %v5248
    %v5250 = vpop.f32.mrb[0].mxu0
    %v5251 = vadd.f32 %v3726, %v5250
    %5252 = vmatprep.mubr.f32.mxu0 0.0
    %5253 = vmatmul.mubr.f32.gmra.mrb[0].mxu0 %v3744
    %v5254 = vpop.f32.mrb[0].mxu0
    %v5255 = vadd.f32 %v3731, %v5254
    %v5256 = vpop.f32.mrb[0].mxu0
    %v5257 = vadd.f32 %v3731, %v5256
    %5258 = vdwg.mxu0
    %5259 = vmatprep.subr.mxu0 %v3484
    %5260 = vmatpush1.msra.mxu0 %v3483
    %5261 = vmatprep.subr.mxu0 %v3548
    %5262 = vmatpush1.msra.mxu0 %v3547
    %5263 = vmatprep.subr.mxu0 %v3612
    %5264 = vmatpush1.msra.mxu0 %v3611
    %5265 = vmatprep.subr.mxu0 %v3676
    %5266 = vmatpush1.msra.mxu0 %v3675
    %5267 = vmatprep.subr.mxu0 0.0
    %5268 = vmatpush1.msra.mxu0 0.0
    %5269 = vmatprep.subr.mxu0 0.0
    %5270 = vmatpush1.msra.mxu0 0.0
    %5271 = vmatprep.subr.mxu0 0.0
    %5272 = vmatpush1.msra.mxu0 0.0
    %5273 = vmatprep.subr.mxu0 0.0
    %5274 = vmatpush1.msra.mxu0 0.0
    %5275 = vmatprep.subr.mxu0 0.0
    %5276 = vmatpush1.msra.mxu0 0.0
    %5277 = vmatprep.subr.mxu0 0.0
    %5278 = vmatpush1.msra.mxu0 0.0
    %5279 = vmatprep.subr.mxu0 0.0
    %5280 = vmatpush1.msra.mxu0 0.0
    %5281 = vmatprep.subr.mxu0 0.0
    %5282 = vmatpush1.msra.mxu0 0.0
    %5283 = vmatprep.subr.mxu0 0.0
    %5284 = vmatpush1.msra.mxu0 0.0
    %5285 = vmatprep.subr.mxu0 0.0
    %5286 = vmatpush1.msra.mxu0 0.0
    %5287 = vmatprep.subr.mxu0 0.0
    %5288 = vmatpush1.msra.mxu0 0.0
    %5289 = vmatprep.subr.mxu0 0.0
    %5290 = vmatpush1.msra.mxu0 0.0
    %5291 = vmatprep.subr.mxu0 0.0
    %5292 = vmatpush1.msra.mxu0 0.0
    %5293 = vmatprep.subr.mxu0 0.0
    %5294 = vmatpush1.msra.mxu0 0.0
    %5295 = vmatprep.subr.mxu0 0.0
    %5296 = vmatpush1.msra.mxu0 0.0
    %5297 = vmatprep.subr.mxu0 0.0
    %5298 = vmatpush1.msra.mxu0 0.0
    %5299 = vmatprep.subr.mxu0 0.0
    %5300 = vmatpush1.msra.mxu0 0.0
    %5301 = vmatprep.subr.mxu0 0.0
    %5302 = vmatpush1.msra.mxu0 0.0
    %5303 = vmatprep.subr.mxu0 0.0
    %5304 = vmatpush1.msra.mxu0 0.0
    %5305 = vmatprep.subr.mxu0 0.0
    %5306 = vmatpush1.msra.mxu0 0.0
    %5307 = vmatprep.subr.mxu0 0.0
    %5308 = vmatpush1.msra.mxu0 0.0
    %5309 = vmatprep.subr.mxu0 0.0
    %5310 = vmatpush1.msra.mxu0 0.0
    %5311 = vmatprep.subr.mxu0 0.0
    %5312 = vmatpush1.msra.mxu0 0.0
    %5313 = vmatprep.subr.mxu0 0.0
    %5314 = vmatpush1.msra.mxu0 0.0
    %5315 = vmatprep.subr.mxu0 0.0
    %5316 = vmatpush1.msra.mxu0 0.0
    %5317 = vmatprep.subr.mxu0 0.0
    %5318 = vmatpush1.msra.mxu0 0.0
    %5319 = vmatprep.subr.mxu0 0.0
    %5320 = vmatpush1.msra.mxu0 0.0
    %5321 = vmatprep.subr.mxu0 0.0
    %5322 = vmatpush1.msra.mxu0 0.0
    %5323 = vmatprep.mubr.f32.mxu0 0.0
    %5324 = vmatmul.mubr.f32.gmra.mrb[0].mxu0 %v3735
    %v5325 = vpop.f32.mrb[0].mxu0
    %v5326 = vadd.f32 %v3716, %v5325
    %v5327 = vpop.f32.mrb[0].mxu0
    %v5328 = vadd.f32 %v3716, %v5327
    %5329 = vmatprep.mubr.f32.mxu0 0.0
    %5330 = vmatmul.mubr.f32.gmra.mrb[0].mxu0 %v3738
    %v5331 = vpop.f32.mrb[0].mxu0
    %v5332 = vadd.f32 %v3721, %v5331
    %v5333 = vpop.f32.mrb[0].mxu0
    %v5334 = vadd.f32 %v3721, %v5333
    %5335 = vmatprep.mubr.f32.mxu0 0.0
    %5336 = vmatmul.mubr.f32.gmra.mrb[0].mxu0 %v3741
    %v5337 = vpop.f32.mrb[0].mxu0
    %v5338 = vadd.f32 %v3726, %v5337
    %v5339 = vpop.f32.mrb[0].mxu0
    %v5340 = vadd.f32 %v3726, %v5339
    %5341 = vmatprep.mubr.f32.mxu0 0.0
    %5342 = vmatmul.mubr.f32.gmra.mrb[0].mxu0 %v3744
    %v5343 = vpop.f32.mrb[0].mxu0
    %v5344 = vadd.f32 %v3731, %v5343
    %v5345 = vpop.f32.mrb[0].mxu0
    %v5346 = vadd.f32 %v3731, %v5345
    %5347 = vdwg.mxu0
    %5348 = vmatprep.subr.mxu0 %v3486
    %5349 = vmatpush1.msra.mxu0 %v3485
    %5350 = vmatprep.subr.mxu0 %v3550
    %5351 = vmatpush1.msra.mxu0 %v3549
    %5352 = vmatprep.subr.mxu0 %v3614
    %5353 = vmatpush1.msra.mxu0 %v3613
    %5354 = vmatprep.subr.mxu0 %v3678
    %5355 = vmatpush1.msra.mxu0 %v3677
    %5356 = vmatprep.subr.mxu0 0.0
    %5357 = vmatpush1.msra.mxu0 0.0
    %5358 = vmatprep.subr.mxu0 0.0
    %5359 = vmatpush1.msra.mxu0 0.0
    %5360 = vmatprep.subr.mxu0 0.0
    %5361 = vmatpush1.msra.mxu0 0.0
    %5362 = vmatprep.subr.mxu0 0.0
    %5363 = vmatpush1.msra.mxu0 0.0
    %5364 = vmatprep.subr.mxu0 0.0
    %5365 = vmatpush1.msra.mxu0 0.0
    %5366 = vmatprep.subr.mxu0 0.0
    %5367 = vmatpush1.msra.mxu0 0.0
    %5368 = vmatprep.subr.mxu0 0.0
    %5369 = vmatpush1.msra.mxu0 0.0
    %5370 = vmatprep.subr.mxu0 0.0
    %5371 = vmatpush1.msra.mxu0 0.0
    %5372 = vmatprep.subr.mxu0 0.0
    %5373 = vmatpush1.msra.mxu0 0.0
    %5374 = vmatprep.subr.mxu0 0.0
    %5375 = vmatpush1.msra.mxu0 0.0
    %5376 = vmatprep.subr.mxu0 0.0
    %5377 = vmatpush1.msra.mxu0 0.0
    %5378 = vmatprep.subr.mxu0 0.0
    %5379 = vmatpush1.msra.mxu0 0.0
    %5380 = vmatprep.subr.mxu0 0.0
    %5381 = vmatpush1.msra.mxu0 0.0
    %5382 = vmatprep.subr.mxu0 0.0
    %5383 = vmatpush1.msra.mxu0 0.0
    %5384 = vmatprep.subr.mxu0 0.0
    %5385 = vmatpush1.msra.mxu0 0.0
    %5386 = vmatprep.subr.mxu0 0.0
    %5387 = vmatpush1.msra.mxu0 0.0
    %5388 = vmatprep.subr.mxu0 0.0
    %5389 = vmatpush1.msra.mxu0 0.0
    %5390 = vmatprep.subr.mxu0 0.0
    %5391 = vmatpush1.msra.mxu0 0.0
    %5392 = vmatprep.subr.mxu0 0.0
    %5393 = vmatpush1.msra.mxu0 0.0
    %5394 = vmatprep.subr.mxu0 0.0
    %5395 = vmatpush1.msra.mxu0 0.0
    %5396 = vmatprep.subr.mxu0 0.0
    %5397 = vmatpush1.msra.mxu0 0.0
    %5398 = vmatprep.subr.mxu0 0.0
    %5399 = vmatpush1.msra.mxu0 0.0
    %5400 = vmatprep.subr.mxu0 0.0
    %5401 = vmatpush1.msra.mxu0 0.0
    %5402 = vmatprep.subr.mxu0 0.0
    %5403 = vmatpush1.msra.mxu0 0.0
    %5404 = vmatprep.subr.mxu0 0.0
    %5405 = vmatpush1.msra.mxu0 0.0
    %5406 = vmatprep.subr.mxu0 0.0
    %5407 = vmatpush1.msra.mxu0 0.0
    %5408 = vmatprep.subr.mxu0 0.0
    %5409 = vmatpush1.msra.mxu0 0.0
    %5410 = vmatprep.subr.mxu0 0.0
    %5411 = vmatpush1.msra.mxu0 0.0
    %5412 = vmatprep.mubr.f32.mxu0 0.0
    %5413 = vmatmul.mubr.f32.gmra.mrb[0].mxu0 %v3735
    %v5414 = vpop.f32.mrb[0].mxu0
    %v5415 = vadd.f32 %v3716, %v5414
    %v5416 = vpop.f32.mrb[0].mxu0
    %v5417 = vadd.f32 %v3716, %v5416
    %5418 = vmatprep.mubr.f32.mxu0 0.0
    %5419 = vmatmul.mubr.f32.gmra.mrb[0].mxu0 %v3738
    %v5420 = vpop.f32.mrb[0].mxu0
    %v5421 = vadd.f32 %v3721, %v5420
    %v5422 = vpop.f32.mrb[0].mxu0
    %v5423 = vadd.f32 %v3721, %v5422
    %5424 = vmatprep.mubr.f32.mxu0 0.0
    %5425 = vmatmul.mubr.f32.gmra.mrb[0].mxu0 %v3741
    %v5426 = vpop.f32.mrb[0].mxu0
    %v5427 = vadd.f32 %v3726, %v5426
    %v5428 = vpop.f32.mrb[0].mxu0
    %v5429 = vadd.f32 %v3726, %v5428
    %5430 = vmatprep.mubr.f32.mxu0 0.0
    %5431 = vmatmul.mubr.f32.gmra.mrb[0].mxu0 %v3744
    %v5432 = vpop.f32.mrb[0].mxu0
    %v5433 = vadd.f32 %v3731, %v5432
    %v5434 = vpop.f32.mrb[0].mxu0
    %v5435 = vadd.f32 %v3731, %v5434
    %5436 = vdwg.mxu0
    %5437 = vmatprep.subr.mxu0 %v3488
    %5438 = vmatpush1.msra.mxu0 %v3487
    %5439 = vmatprep.subr.mxu0 %v3552
    %5440 = vmatpush1.msra.mxu0 %v3551
    %5441 = vmatprep.subr.mxu0 %v3616
    %5442 = vmatpush1.msra.mxu0 %v3615
    %5443 = vmatprep.subr.mxu0 %v3680
    %5444 = vmatpush1.msra.mxu0 %v3679
    %5445 = vmatprep.subr.mxu0 0.0
    %5446 = vmatpush1.msra.mxu0 0.0
    %5447 = vmatprep.subr.mxu0 0.0
    %5448 = vmatpush1.msra.mxu0 0.0
    %5449 = vmatprep.subr.mxu0 0.0
    %5450 = vmatpush1.msra.mxu0 0.0
    %5451 = vmatprep.subr.mxu0 0.0
    %5452 = vmatpush1.msra.mxu0 0.0
    %5453 = vmatprep.subr.mxu0 0.0
    %5454 = vmatpush1.msra.mxu0 0.0
    %5455 = vmatprep.subr.mxu0 0.0
    %5456 = vmatpush1.msra.mxu0 0.0
    %5457 = vmatprep.subr.mxu0 0.0
    %5458 = vmatpush1.msra.mxu0 0.0
    %5459 = vmatprep.subr.mxu0 0.0
    %5460 = vmatpush1.msra.mxu0 0.0
    %5461 = vmatprep.subr.mxu0 0.0
    %5462 = vmatpush1.msra.mxu0 0.0
    %5463 = vmatprep.subr.mxu0 0.0
    %5464 = vmatpush1.msra.mxu0 0.0
    %5465 = vmatprep.subr.mxu0 0.0
    %5466 = vmatpush1.msra.mxu0 0.0
    %5467 = vmatprep.subr.mxu0 0.0
    %5468 = vmatpush1.msra.mxu0 0.0
    %5469 = vmatprep.subr.mxu0 0.0
    %5470 = vmatpush1.msra.mxu0 0.0
    %5471 = vmatprep.subr.mxu0 0.0
    %5472 = vmatpush1.msra.mxu0 0.0
    %5473 = vmatprep.subr.mxu0 0.0
    %5474 = vmatpush1.msra.mxu0 0.0
    %5475 = vmatprep.subr.mxu0 0.0
    %5476 = vmatpush1.msra.mxu0 0.0
    %5477 = vmatprep.subr.mxu0 0.0
    %5478 = vmatpush1.msra.mxu0 0.0
    %5479 = vmatprep.subr.mxu0 0.0
    %5480 = vmatpush1.msra.mxu0 0.0
    %5481 = vmatprep.subr.mxu0 0.0
    %5482 = vmatpush1.msra.mxu0 0.0
    %5483 = vmatprep.subr.mxu0 0.0
    %5484 = vmatpush1.msra.mxu0 0.0
    %5485 = vmatprep.subr.mxu0 0.0
    %5486 = vmatpush1.msra.mxu0 0.0
    %5487 = vmatprep.subr.mxu0 0.0
    %5488 = vmatpush1.msra.mxu0 0.0
    %5489 = vmatprep.subr.mxu0 0.0
    %5490 = vmatpush1.msra.mxu0 0.0
    %5491 = vmatprep.subr.mxu0 0.0
    %5492 = vmatpush1.msra.mxu0 0.0
    %5493 = vmatprep.subr.mxu0 0.0
    %5494 = vmatpush1.msra.mxu0 0.0
    %5495 = vmatprep.subr.mxu0 0.0
    %5496 = vmatpush1.msra.mxu0 0.0
    %5497 = vmatprep.subr.mxu0 0.0
    %5498 = vmatpush1.msra.mxu0 0.0
    %5499 = vmatprep.subr.mxu0 0.0
    %5500 = vmatpush1.msra.mxu0 0.0
    %5501 = vmatprep.mubr.f32.mxu0 0.0
    %5502 = vmatmul.mubr.f32.gmra.mrb[0].mxu0 %v3735
    %v5503 = vpop.f32.mrb[0].mxu0
    %v5504 = vadd.f32 %v3716, %v5503
    %v5505 = vpop.f32.mrb[0].mxu0
    %v5506 = vadd.f32 %v3716, %v5505
    %5507 = vmatprep.mubr.f32.mxu0 0.0
    %5508 = vmatmul.mubr.f32.gmra.mrb[0].mxu0 %v3738
    %v5509 = vpop.f32.mrb[0].mxu0
    %v5510 = vadd.f32 %v3721, %v5509
    %v5511 = vpop.f32.mrb[0].mxu0
    %v5512 = vadd.f32 %v3721, %v5511
    %5513 = vmatprep.mubr.f32.mxu0 0.0
    %5514 = vmatmul.mubr.f32.gmra.mrb[0].mxu0 %v3741
    %v5515 = vpop.f32.mrb[0].mxu0
    %v5516 = vadd.f32 %v3726, %v5515
    %v5517 = vpop.f32.mrb[0].mxu0
    %v5518 = vadd.f32 %v3726, %v5517
    %5519 = vmatprep.mubr.f32.mxu0 0.0
    %5520 = vmatmul.mubr.f32.gmra.mrb[0].mxu0 %v3744
    %v5521 = vpop.f32.mrb[0].mxu0
    %v5522 = vadd.f32 %v3731, %v5521
    %v5523 = vpop.f32.mrb[0].mxu0
    %v5524 = vadd.f32 %v3731, %v5523
    %5525 = vdwg.mxu0
    %5526 = vmatprep.subr.mxu0 %v3490
    %5527 = vmatpush1.msra.mxu0 %v3489
    %5528 = vmatprep.subr.mxu0 %v3554
    %5529 = vmatpush1.msra.mxu0 %v3553
    %5530 = vmatprep.subr.mxu0 %v3618
    %5531 = vmatpush1.msra.mxu0 %v3617
    %5532 = vmatprep.subr.mxu0 %v3682
    %5533 = vmatpush1.msra.mxu0 %v3681
    %5534 = vmatprep.subr.mxu0 0.0
    %5535 = vmatpush1.msra.mxu0 0.0
    %5536 = vmatprep.subr.mxu0 0.0
    %5537 = vmatpush1.msra.mxu0 0.0
    %5538 = vmatprep.subr.mxu0 0.0
    %5539 = vmatpush1.msra.mxu0 0.0
    %5540 = vmatprep.subr.mxu0 0.0
    %5541 = vmatpush1.msra.mxu0 0.0
    %5542 = vmatprep.subr.mxu0 0.0
    %5543 = vmatpush1.msra.mxu0 0.0
    %5544 = vmatprep.subr.mxu0 0.0
    %5545 = vmatpush1.msra.mxu0 0.0
    %5546 = vmatprep.subr.mxu0 0.0
    %5547 = vmatpush1.msra.mxu0 0.0
    %5548 = vmatprep.subr.mxu0 0.0
    %5549 = vmatpush1.msra.mxu0 0.0
    %5550 = vmatprep.subr.mxu0 0.0
    %5551 = vmatpush1.msra.mxu0 0.0
    %5552 = vmatprep.subr.mxu0 0.0
    %5553 = vmatpush1.msra.mxu0 0.0
    %5554 = vmatprep.subr.mxu0 0.0
    %5555 = vmatpush1.msra.mxu0 0.0
    %5556 = vmatprep.subr.mxu0 0.0
    %5557 = vmatpush1.msra.mxu0 0.0
    %5558 = vmatprep.subr.mxu0 0.0
    %5559 = vmatpush1.msra.mxu0 0.0
    %5560 = vmatprep.subr.mxu0 0.0
    %5561 = vmatpush1.msra.mxu0 0.0
    %5562 = vmatprep.subr.mxu0 0.0
    %5563 = vmatpush1.msra.mxu0 0.0
    %5564 = vmatprep.subr.mxu0 0.0
    %5565 = vmatpush1.msra.mxu0 0.0
    %5566 = vmatprep.subr.mxu0 0.0
    %5567 = vmatpush1.msra.mxu0 0.0
    %5568 = vmatprep.subr.mxu0 0.0
    %5569 = vmatpush1.msra.mxu0 0.0
    %5570 = vmatprep.subr.mxu0 0.0
    %5571 = vmatpush1.msra.mxu0 0.0
    %5572 = vmatprep.subr.mxu0 0.0
    %5573 = vmatpush1.msra.mxu0 0.0
    %5574 = vmatprep.subr.mxu0 0.0
    %5575 = vmatpush1.msra.mxu0 0.0
    %5576 = vmatprep.subr.mxu0 0.0
    %5577 = vmatpush1.msra.mxu0 0.0
    %5578 = vmatprep.subr.mxu0 0.0
    %5579 = vmatpush1.msra.mxu0 0.0
    %5580 = vmatprep.subr.mxu0 0.0
    %5581 = vmatpush1.msra.mxu0 0.0
    %5582 = vmatprep.subr.mxu0 0.0
    %5583 = vmatpush1.msra.mxu0 0.0
    %5584 = vmatprep.subr.mxu0 0.0
    %5585 = vmatpush1.msra.mxu0 0.0
    %5586 = vmatprep.subr.mxu0 0.0
    %5587 = vmatpush1.msra.mxu0 0.0
    %5588 = vmatprep.subr.mxu0 0.0
    %5589 = vmatpush1.msra.mxu0 0.0
    %5590 = vmatprep.mubr.f32.mxu0 0.0
    %5591 = vmatmul.mubr.f32.gmra.mrb[0].mxu0 %v3735
    %v5592 = vpop.f32.mrb[0].mxu0
    %v5593 = vadd.f32 %v3716, %v5592
    %v5594 = vpop.f32.mrb[0].mxu0
    %v5595 = vadd.f32 %v3716, %v5594
    %5596 = vmatprep.mubr.f32.mxu0 0.0
    %5597 = vmatmul.mubr.f32.gmra.mrb[0].mxu0 %v3738
    %v5598 = vpop.f32.mrb[0].mxu0
    %v5599 = vadd.f32 %v3721, %v5598
    %v5600 = vpop.f32.mrb[0].mxu0
    %v5601 = vadd.f32 %v3721, %v5600
    %5602 = vmatprep.mubr.f32.mxu0 0.0
    %5603 = vmatmul.mubr.f32.gmra.mrb[0].mxu0 %v3741
    %v5604 = vpop.f32.mrb[0].mxu0
    %v5605 = vadd.f32 %v3726, %v5604
    %v5606 = vpop.f32.mrb[0].mxu0
    %v5607 = vadd.f32 %v3726, %v5606
    %5608 = vmatprep.mubr.f32.mxu0 0.0
    %5609 = vmatmul.mubr.f32.gmra.mrb[0].mxu0 %v3744
    %v5610 = vpop.f32.mrb[0].mxu0
    %v5611 = vadd.f32 %v3731, %v5610
    %v5612 = vpop.f32.mrb[0].mxu0
    %v5613 = vadd.f32 %v3731, %v5612
    %5614 = vdwg.mxu0
    %5615 = vmatprep.subr.mxu0 %v3492
    %5616 = vmatpush1.msra.mxu0 %v3491
    %5617 = vmatprep.subr.mxu0 %v3556
    %5618 = vmatpush1.msra.mxu0 %v3555
    %5619 = vmatprep.subr.mxu0 %v3620
    %5620 = vmatpush1.msra.mxu0 %v3619
    %5621 = vmatprep.subr.mxu0 %v3684
    %5622 = vmatpush1.msra.mxu0 %v3683
    %5623 = vmatprep.subr.mxu0 0.0
    %5624 = vmatpush1.msra.mxu0 0.0
    %5625 = vmatprep.subr.mxu0 0.0
    %5626 = vmatpush1.msra.mxu0 0.0
    %5627 = vmatprep.subr.mxu0 0.0
    %5628 = vmatpush1.msra.mxu0 0.0
    %5629 = vmatprep.subr.mxu0 0.0
    %5630 = vmatpush1.msra.mxu0 0.0
    %5631 = vmatprep.subr.mxu0 0.0
    %5632 = vmatpush1.msra.mxu0 0.0
    %5633 = vmatprep.subr.mxu0 0.0
    %5634 = vmatpush1.msra.mxu0 0.0
    %5635 = vmatprep.subr.mxu0 0.0
    %5636 = vmatpush1.msra.mxu0 0.0
    %5637 = vmatprep.subr.mxu0 0.0
    %5638 = vmatpush1.msra.mxu0 0.0
    %5639 = vmatprep.subr.mxu0 0.0
    %5640 = vmatpush1.msra.mxu0 0.0
    %5641 = vmatprep.subr.mxu0 0.0
    %5642 = vmatpush1.msra.mxu0 0.0
    %5643 = vmatprep.subr.mxu0 0.0
    %5644 = vmatpush1.msra.mxu0 0.0
    %5645 = vmatprep.subr.mxu0 0.0
    %5646 = vmatpush1.msra.mxu0 0.0
    %5647 = vmatprep.subr.mxu0 0.0
    %5648 = vmatpush1.msra.mxu0 0.0
    %5649 = vmatprep.subr.mxu0 0.0
    %5650 = vmatpush1.msra.mxu0 0.0
    %5651 = vmatprep.subr.mxu0 0.0
    %5652 = vmatpush1.msra.mxu0 0.0
    %5653 = vmatprep.subr.mxu0 0.0
    %5654 = vmatpush1.msra.mxu0 0.0
    %5655 = vmatprep.subr.mxu0 0.0
    %5656 = vmatpush1.msra.mxu0 0.0
    %5657 = vmatprep.subr.mxu0 0.0
    %5658 = vmatpush1.msra.mxu0 0.0
    %5659 = vmatprep.subr.mxu0 0.0
    %5660 = vmatpush1.msra.mxu0 0.0
    %5661 = vmatprep.subr.mxu0 0.0
    %5662 = vmatpush1.msra.mxu0 0.0
    %5663 = vmatprep.subr.mxu0 0.0
    %5664 = vmatpush1.msra.mxu0 0.0
    %5665 = vmatprep.subr.mxu0 0.0
    %5666 = vmatpush1.msra.mxu0 0.0
    %5667 = vmatprep.subr.mxu0 0.0
    %5668 = vmatpush1.msra.mxu0 0.0
    %5669 = vmatprep.subr.mxu0 0.0
    %5670 = vmatpush1.msra.mxu0 0.0
    %5671 = vmatprep.subr.mxu0 0.0
    %5672 = vmatpush1.msra.mxu0 0.0
    %5673 = vmatprep.subr.mxu0 0.0
    %5674 = vmatpush1.msra.mxu0 0.0
    %5675 = vmatprep.subr.mxu0 0.0
    %5676 = vmatpush1.msra.mxu0 0.0
    %5677 = vmatprep.subr.mxu0 0.0
    %5678 = vmatpush1.msra.mxu0 0.0
    %5679 = vmatprep.mubr.f32.mxu0 0.0
    %5680 = vmatmul.mubr.f32.gmra.mrb[0].mxu0 %v3735
    %v5681 = vpop.f32.mrb[0].mxu0
    %v5682 = vadd.f32 %v3716, %v5681
    %v5683 = vpop.f32.mrb[0].mxu0
    %v5684 = vadd.f32 %v3716, %v5683
    %5685 = vmatprep.mubr.f32.mxu0 0.0
    %5686 = vmatmul.mubr.f32.gmra.mrb[0].mxu0 %v3738
    %v5687 = vpop.f32.mrb[0].mxu0
    %v5688 = vadd.f32 %v3721, %v5687
    %v5689 = vpop.f32.mrb[0].mxu0
    %v5690 = vadd.f32 %v3721, %v5689
    %5691 = vmatprep.mubr.f32.mxu0 0.0
    %5692 = vmatmul.mubr.f32.gmra.mrb[0].mxu0 %v3741
    %v5693 = vpop.f32.mrb[0].mxu0
    %v5694 = vadd.f32 %v3726, %v5693
    %v5695 = vpop.f32.mrb[0].mxu0
    %v5696 = vadd.f32 %v3726, %v5695
    %5697 = vmatprep.mubr.f32.mxu0 0.0
    %5698 = vmatmul.mubr.f32.gmra.mrb[0].mxu0 %v3744
    %v5699 = vpop.f32.mrb[0].mxu0
    %v5700 = vadd.f32 %v3731, %v5699
    %v5701 = vpop.f32.mrb[0].mxu0
    %v5702 = vadd.f32 %v3731, %v5701
    %5703 = vdwg.mxu0
    %5704 = vmatprep.subr.mxu0 %v3494
    %5705 = vmatpush1.msra.mxu0 %v3493
    %5706 = vmatprep.subr.mxu0 %v3558
    %5707 = vmatpush1.msra.mxu0 %v3557
    %5708 = vmatprep.subr.mxu0 %v3622
    %5709 = vmatpush1.msra.mxu0 %v3621
    %5710 = vmatprep.subr.mxu0 %v3686
    %5711 = vmatpush1.msra.mxu0 %v3685
    %5712 = vmatprep.subr.mxu0 0.0
    %5713 = vmatpush1.msra.mxu0 0.0
    %5714 = vmatprep.subr.mxu0 0.0
    %5715 = vmatpush1.msra.mxu0 0.0
    %5716 = vmatprep.subr.mxu0 0.0
    %5717 = vmatpush1.msra.mxu0 0.0
    %5718 = vmatprep.subr.mxu0 0.0
    %5719 = vmatpush1.msra.mxu0 0.0
    %5720 = vmatprep.subr.mxu0 0.0
    %5721 = vmatpush1.msra.mxu0 0.0
    %5722 = vmatprep.subr.mxu0 0.0
    %5723 = vmatpush1.msra.mxu0 0.0
    %5724 = vmatprep.subr.mxu0 0.0
    %5725 = vmatpush1.msra.mxu0 0.0
    %5726 = vmatprep.subr.mxu0 0.0
    %5727 = vmatpush1.msra.mxu0 0.0
    %5728 = vmatprep.subr.mxu0 0.0
    %5729 = vmatpush1.msra.mxu0 0.0
    %5730 = vmatprep.subr.mxu0 0.0
    %5731 = vmatpush1.msra.mxu0 0.0
    %5732 = vmatprep.subr.mxu0 0.0
    %5733 = vmatpush1.msra.mxu0 0.0
    %5734 = vmatprep.subr.mxu0 0.0
    %5735 = vmatpush1.msra.mxu0 0.0
    %5736 = vmatprep.subr.mxu0 0.0
    %5737 = vmatpush1.msra.mxu0 0.0
    %5738 = vmatprep.subr.mxu0 0.0
    %5739 = vmatpush1.msra.mxu0 0.0
    %5740 = vmatprep.subr.mxu0 0.0
    %5741 = vmatpush1.msra.mxu0 0.0
    %5742 = vmatprep.subr.mxu0 0.0
    %5743 = vmatpush1.msra.mxu0 0.0
    %5744 = vmatprep.subr.mxu0 0.0
    %5745 = vmatpush1.msra.mxu0 0.0
    %5746 = vmatprep.subr.mxu0 0.0
    %5747 = vmatpush1.msra.mxu0 0.0
    %5748 = vmatprep.subr.mxu0 0.0
    %5749 = vmatpush1.msra.mxu0 0.0
    %5750 = vmatprep.subr.mxu0 0.0
    %5751 = vmatpush1.msra.mxu0 0.0
    %5752 = vmatprep.subr.mxu0 0.0
    %5753 = vmatpush1.msra.mxu0 0.0
    %5754 = vmatprep.subr.mxu0 0.0
    %5755 = vmatpush1.msra.mxu0 0.0
    %5756 = vmatprep.subr.mxu0 0.0
    %5757 = vmatpush1.msra.mxu0 0.0
    %5758 = vmatprep.subr.mxu0 0.0
    %5759 = vmatpush1.msra.mxu0 0.0
    %5760 = vmatprep.subr.mxu0 0.0
    %5761 = vmatpush1.msra.mxu0 0.0
    %5762 = vmatprep.subr.mxu0 0.0
    %5763 = vmatpush1.msra.mxu0 0.0
    %5764 = vmatprep.subr.mxu0 0.0
    %5765 = vmatpush1.msra.mxu0 0.0
    %5766 = vmatprep.subr.mxu0 0.0
    %5767 = vmatpush1.msra.mxu0 0.0
    %5768 = vmatprep.mubr.f32.mxu0 0.0
    %5769 = vmatmul.mubr.f32.gmra.mrb[0].mxu0 %v3735
    %v5770 = vpop.f32.mrb[0].mxu0
    %v5771 = vadd.f32 %v3716, %v5770
    %v5772 = vpop.f32.mrb[0].mxu0
    %v5773 = vadd.f32 %v3716, %v5772
    %5774 = vmatprep.mubr.f32.mxu0 0.0
    %5775 = vmatmul.mubr.f32.gmra.mrb[0].mxu0 %v3738
    %v5776 = vpop.f32.mrb[0].mxu0
    %v5777 = vadd.f32 %v3721, %v5776
    %v5778 = vpop.f32.mrb[0].mxu0
    %v5779 = vadd.f32 %v3721, %v5778
    %5780 = vmatprep.mubr.f32.mxu0 0.0
    %5781 = vmatmul.mubr.f32.gmra.mrb[0].mxu0 %v3741
    %v5782 = vpop.f32.mrb[0].mxu0
    %v5783 = vadd.f32 %v3726, %v5782
    %v5784 = vpop.f32.mrb[0].mxu0
    %v5785 = vadd.f32 %v3726, %v5784
    %5786 = vmatprep.mubr.f32.mxu0 0.0
    %5787 = vmatmul.mubr.f32.gmra.mrb[0].mxu0 %v3744
    %v5788 = vpop.f32.mrb[0].mxu0
    %v5789 = vadd.f32 %v3731, %v5788
    %v5790 = vpop.f32.mrb[0].mxu0
    %v5791 = vadd.f32 %v3731, %v5790
    %5792 = vdwg.mxu0
    %5793 = vmatprep.subr.mxu0 %v3496
    %5794 = vmatpush1.msra.mxu0 %v3495
    %5795 = vmatprep.subr.mxu0 %v3560
    %5796 = vmatpush1.msra.mxu0 %v3559
    %5797 = vmatprep.subr.mxu0 %v3624
    %5798 = vmatpush1.msra.mxu0 %v3623
    %5799 = vmatprep.subr.mxu0 %v3688
    %5800 = vmatpush1.msra.mxu0 %v3687
    %5801 = vmatprep.subr.mxu0 0.0
    %5802 = vmatpush1.msra.mxu0 0.0
    %5803 = vmatprep.subr.mxu0 0.0
    %5804 = vmatpush1.msra.mxu0 0.0
    %5805 = vmatprep.subr.mxu0 0.0
    %5806 = vmatpush1.msra.mxu0 0.0
    %5807 = vmatprep.subr.mxu0 0.0
    %5808 = vmatpush1.msra.mxu0 0.0
    %5809 = vmatprep.subr.mxu0 0.0
    %5810 = vmatpush1.msra.mxu0 0.0
    %5811 = vmatprep.subr.mxu0 0.0
    %5812 = vmatpush1.msra.mxu0 0.0
    %5813 = vmatprep.subr.mxu0 0.0
    %5814 = vmatpush1.msra.mxu0 0.0
    %5815 = vmatprep.subr.mxu0 0.0
    %5816 = vmatpush1.msra.mxu0 0.0
    %5817 = vmatprep.subr.mxu0 0.0
    %5818 = vmatpush1.msra.mxu0 0.0
    %5819 = vmatprep.subr.mxu0 0.0
    %5820 = vmatpush1.msra.mxu0 0.0
    %5821 = vmatprep.subr.mxu0 0.0
    %5822 = vmatpush1.msra.mxu0 0.0
    %5823 = vmatprep.subr.mxu0 0.0
    %5824 = vmatpush1.msra.mxu0 0.0
    %5825 = vmatprep.subr.mxu0 0.0
    %5826 = vmatpush1.msra.mxu0 0.0
    %5827 = vmatprep.subr.mxu0 0.0
    %5828 = vmatpush1.msra.mxu0 0.0
    %5829 = vmatprep.subr.mxu0 0.0
    %5830 = vmatpush1.msra.mxu0 0.0
    %5831 = vmatprep.subr.mxu0 0.0
    %5832 = vmatpush1.msra.mxu0 0.0
    %5833 = vmatprep.subr.mxu0 0.0
    %5834 = vmatpush1.msra.mxu0 0.0
    %5835 = vmatprep.subr.mxu0 0.0
    %5836 = vmatpush1.msra.mxu0 0.0
    %5837 = vmatprep.subr.mxu0 0.0
    %5838 = vmatpush1.msra.mxu0 0.0
    %5839 = vmatprep.subr.mxu0 0.0
    %5840 = vmatpush1.msra.mxu0 0.0
    %5841 = vmatprep.subr.mxu0 0.0
    %5842 = vmatpush1.msra.mxu0 0.0
    %5843 = vmatprep.subr.mxu0 0.0
    %5844 = vmatpush1.msra.mxu0 0.0
    %5845 = vmatprep.subr.mxu0 0.0
    %5846 = vmatpush1.msra.mxu0 0.0
    %5847 = vmatprep.subr.mxu0 0.0
    %5848 = vmatpush1.msra.mxu0 0.0
    %5849 = vmatprep.subr.mxu0 0.0
    %5850 = vmatpush1.msra.mxu0 0.0
    %5851 = vmatprep.subr.mxu0 0.0
    %5852 = vmatpush1.msra.mxu0 0.0
    %5853 = vmatprep.subr.mxu0 0.0
    %5854 = vmatpush1.msra.mxu0 0.0
    %5855 = vmatprep.subr.mxu0 0.0
    %5856 = vmatpush1.msra.mxu0 0.0
    %5857 = vmatprep.mubr.f32.mxu0 0.0
    %5858 = vmatmul.mubr.f32.gmra.mrb[0].mxu0 %v3735
    %v5859 = vpop.f32.mrb[0].mxu0
    %v5860 = vadd.f32 %v3716, %v5859
    %v5861 = vpop.f32.mrb[0].mxu0
    %v5862 = vadd.f32 %v3716, %v5861
    %5863 = vmatprep.mubr.f32.mxu0 0.0
    %5864 = vmatmul.mubr.f32.gmra.mrb[0].mxu0 %v3738
    %v5865 = vpop.f32.mrb[0].mxu0
    %v5866 = vadd.f32 %v3721, %v5865
    %v5867 = vpop.f32.mrb[0].mxu0
    %v5868 = vadd.f32 %v3721, %v5867
    %5869 = vmatprep.mubr.f32.mxu0 0.0
    %5870 = vmatmul.mubr.f32.gmra.mrb[0].mxu0 %v3741
    %v5871 = vpop.f32.mrb[0].mxu0
    %v5872 = vadd.f32 %v3726, %v5871
    %v5873 = vpop.f32.mrb[0].mxu0
    %v5874 = vadd.f32 %v3726, %v5873
    %5875 = vmatprep.mubr.f32.mxu0 0.0
    %5876 = vmatmul.mubr.f32.gmra.mrb[0].mxu0 %v3744
    %v5877 = vpop.f32.mrb[0].mxu0
    %v5878 = vadd.f32 %v3731, %v5877
    %v5879 = vpop.f32.mrb[0].mxu0
    %v5880 = vadd.f32 %v3731, %v5879
    %5881 = vdwg.mxu0
    %5882 = vmatprep.subr.mxu0 %v3498
    %5883 = vmatpush1.msra.mxu0 %v3497
    %5884 = vmatprep.subr.mxu0 %v3562
    %5885 = vmatpush1.msra.mxu0 %v3561
    %5886 = vmatprep.subr.mxu0 %v3626
    %5887 = vmatpush1.msra.mxu0 %v3625
    %5888 = vmatprep.subr.mxu0 %v3690
    %5889 = vmatpush1.msra.mxu0 %v3689
    %5890 = vmatprep.subr.mxu0 0.0
    %5891 = vmatpush1.msra.mxu0 0.0
    %5892 = vmatprep.subr.mxu0 0.0
    %5893 = vmatpush1.msra.mxu0 0.0
    %5894 = vmatprep.subr.mxu0 0.0
    %5895 = vmatpush1.msra.mxu0 0.0
    %5896 = vmatprep.subr.mxu0 0.0
    %5897 = vmatpush1.msra.mxu0 0.0
    %5898 = vmatprep.subr.mxu0 0.0
    %5899 = vmatpush1.msra.mxu0 0.0
    %5900 = vmatprep.subr.mxu0 0.0
    %5901 = vmatpush1.msra.mxu0 0.0
    %5902 = vmatprep.subr.mxu0 0.0
    %5903 = vmatpush1.msra.mxu0 0.0
    %5904 = vmatprep.subr.mxu0 0.0
    %5905 = vmatpush1.msra.mxu0 0.0
    %5906 = vmatprep.subr.mxu0 0.0
    %5907 = vmatpush1.msra.mxu0 0.0
    %5908 = vmatprep.subr.mxu0 0.0
    %5909 = vmatpush1.msra.mxu0 0.0
    %5910 = vmatprep.subr.mxu0 0.0
    %5911 = vmatpush1.msra.mxu0 0.0
    %5912 = vmatprep.subr.mxu0 0.0
    %5913 = vmatpush1.msra.mxu0 0.0
    %5914 = vmatprep.subr.mxu0 0.0
    %5915 = vmatpush1.msra.mxu0 0.0
    %5916 = vmatprep.subr.mxu0 0.0
    %5917 = vmatpush1.msra.mxu0 0.0
    %5918 = vmatprep.subr.mxu0 0.0
    %5919 = vmatpush1.msra.mxu0 0.0
    %5920 = vmatprep.subr.mxu0 0.0
    %5921 = vmatpush1.msra.mxu0 0.0
    %5922 = vmatprep.subr.mxu0 0.0
    %5923 = vmatpush1.msra.mxu0 0.0
    %5924 = vmatprep.subr.mxu0 0.0
    %5925 = vmatpush1.msra.mxu0 0.0
    %5926 = vmatprep.subr.mxu0 0.0
    %5927 = vmatpush1.msra.mxu0 0.0
    %5928 = vmatprep.subr.mxu0 0.0
    %5929 = vmatpush1.msra.mxu0 0.0
    %5930 = vmatprep.subr.mxu0 0.0
    %5931 = vmatpush1.msra.mxu0 0.0
    %5932 = vmatprep.subr.mxu0 0.0
    %5933 = vmatpush1.msra.mxu0 0.0
    %5934 = vmatprep.subr.mxu0 0.0
    %5935 = vmatpush1.msra.mxu0 0.0
    %5936 = vmatprep.subr.mxu0 0.0
    %5937 = vmatpush1.msra.mxu0 0.0
    %5938 = vmatprep.subr.mxu0 0.0
    %5939 = vmatpush1.msra.mxu0 0.0
    %5940 = vmatprep.subr.mxu0 0.0
    %5941 = vmatpush1.msra.mxu0 0.0
    %5942 = vmatprep.subr.mxu0 0.0
    %5943 = vmatpush1.msra.mxu0 0.0
    %5944 = vmatprep.subr.mxu0 0.0
    %5945 = vmatpush1.msra.mxu0 0.0
    %5946 = vmatprep.mubr.f32.mxu0 0.0
    %5947 = vmatmul.mubr.f32.gmra.mrb[0].mxu0 %v3735
    %v5948 = vpop.f32.mrb[0].mxu0
    %v5949 = vadd.f32 %v3716, %v5948
    %v5950 = vpop.f32.mrb[0].mxu0
    %v5951 = vadd.f32 %v3716, %v5950
    %5952 = vmatprep.mubr.f32.mxu0 0.0
    %5953 = vmatmul.mubr.f32.gmra.mrb[0].mxu0 %v3738
    %v5954 = vpop.f32.mrb[0].mxu0
    %v5955 = vadd.f32 %v3721, %v5954
    %v5956 = vpop.f32.mrb[0].mxu0
    %v5957 = vadd.f32 %v3721, %v5956
    %5958 = vmatprep.mubr.f32.mxu0 0.0
    %5959 = vmatmul.mubr.f32.gmra.mrb[0].mxu0 %v3741
    %v5960 = vpop.f32.mrb[0].mxu0
    %v5961 = vadd.f32 %v3726, %v5960
    %v5962 = vpop.f32.mrb[0].mxu0
    %v5963 = vadd.f32 %v3726, %v5962
    %5964 = vmatprep.mubr.f32.mxu0 0.0
    %5965 = vmatmul.mubr.f32.gmra.mrb[0].mxu0 %v3744
    %v5966 = vpop.f32.mrb[0].mxu0
    %v5967 = vadd.f32 %v3731, %v5966
    %v5968 = vpop.f32.mrb[0].mxu0
    %v5969 = vadd.f32 %v3731, %v5968
    %5970 = vdwg.mxu0
    %5971 = vmatprep.subr.mxu0 %v3500
    %5972 = vmatpush1.msra.mxu0 %v3499
    %5973 = vmatprep.subr.mxu0 %v3564
    %5974 = vmatpush1.msra.mxu0 %v3563
    %5975 = vmatprep.subr.mxu0 %v3628
    %5976 = vmatpush1.msra.mxu0 %v3627
    %5977 = vmatprep.subr.mxu0 %v3692
    %5978 = vmatpush1.msra.mxu0 %v3691
    %5979 = vmatprep.subr.mxu0 0.0
    %5980 = vmatpush1.msra.mxu0 0.0
    %5981 = vmatprep.subr.mxu0 0.0
    %5982 = vmatpush1.msra.mxu0 0.0
    %5983 = vmatprep.subr.mxu0 0.0
    %5984 = vmatpush1.msra.mxu0 0.0
    %5985 = vmatprep.subr.mxu0 0.0
    %5986 = vmatpush1.msra.mxu0 0.0
    %5987 = vmatprep.subr.mxu0 0.0
    %5988 = vmatpush1.msra.mxu0 0.0
    %5989 = vmatprep.subr.mxu0 0.0
    %5990 = vmatpush1.msra.mxu0 0.0
    %5991 = vmatprep.subr.mxu0 0.0
    %5992 = vmatpush1.msra.mxu0 0.0
    %5993 = vmatprep.subr.mxu0 0.0
    %5994 = vmatpush1.msra.mxu0 0.0
    %5995 = vmatprep.subr.mxu0 0.0
    %5996 = vmatpush1.msra.mxu0 0.0
    %5997 = vmatprep.subr.mxu0 0.0
    %5998 = vmatpush1.msra.mxu0 0.0
    %5999 = vmatprep.subr.mxu0 0.0
    %6000 = vmatpush1.msra.mxu0 0.0
    %6001 = vmatprep.subr.mxu0 0.0
    %6002 = vmatpush1.msra.mxu0 0.0
    %6003 = vmatprep.subr.mxu0 0.0
    %6004 = vmatpush1.msra.mxu0 0.0
    %6005 = vmatprep.subr.mxu0 0.0
    %6006 = vmatpush1.msra.mxu0 0.0
    %6007 = vmatprep.subr.mxu0 0.0
    %6008 = vmatpush1.msra.mxu0 0.0
    %6009 = vmatprep.subr.mxu0 0.0
    %6010 = vmatpush1.msra.mxu0 0.0
    %6011 = vmatprep.subr.mxu0 0.0
    %6012 = vmatpush1.msra.mxu0 0.0
    %6013 = vmatprep.subr.mxu0 0.0
    %6014 = vmatpush1.msra.mxu0 0.0
    %6015 = vmatprep.subr.mxu0 0.0
    %6016 = vmatpush1.msra.mxu0 0.0
    %6017 = vmatprep.subr.mxu0 0.0
    %6018 = vmatpush1.msra.mxu0 0.0
    %6019 = vmatprep.subr.mxu0 0.0
    %6020 = vmatpush1.msra.mxu0 0.0
    %6021 = vmatprep.subr.mxu0 0.0
    %6022 = vmatpush1.msra.mxu0 0.0
    %6023 = vmatprep.subr.mxu0 0.0
    %6024 = vmatpush1.msra.mxu0 0.0
    %6025 = vmatprep.subr.mxu0 0.0
    %6026 = vmatpush1.msra.mxu0 0.0
    %6027 = vmatprep.subr.mxu0 0.0
    %6028 = vmatpush1.msra.mxu0 0.0
    %6029 = vmatprep.subr.mxu0 0.0
    %6030 = vmatpush1.msra.mxu0 0.0
    %6031 = vmatprep.subr.mxu0 0.0
    %6032 = vmatpush1.msra.mxu0 0.0
    %6033 = vmatprep.subr.mxu0 0.0
    %6034 = vmatpush1.msra.mxu0 0.0
    %6035 = vmatprep.mubr.f32.mxu0 0.0
    %6036 = vmatmul.mubr.f32.gmra.mrb[0].mxu0 %v3735
    %v6037 = vpop.f32.mrb[0].mxu0
    %v6038 = vadd.f32 %v3716, %v6037
    %v6039 = vpop.f32.mrb[0].mxu0
    %v6040 = vadd.f32 %v3716, %v6039
    %6041 = vmatprep.mubr.f32.mxu0 0.0
    %6042 = vmatmul.mubr.f32.gmra.mrb[0].mxu0 %v3738
    %v6043 = vpop.f32.mrb[0].mxu0
    %v6044 = vadd.f32 %v3721, %v6043
    %v6045 = vpop.f32.mrb[0].mxu0
    %v6046 = vadd.f32 %v3721, %v6045
    %6047 = vmatprep.mubr.f32.mxu0 0.0
    %6048 = vmatmul.mubr.f32.gmra.mrb[0].mxu0 %v3741
    %v6049 = vpop.f32.mrb[0].mxu0
    %v6050 = vadd.f32 %v3726, %v6049
    %v6051 = vpop.f32.mrb[0].mxu0
    %v6052 = vadd.f32 %v3726, %v6051
    %6053 = vmatprep.mubr.f32.mxu0 0.0
    %6054 = vmatmul.mubr.f32.gmra.mrb[0].mxu0 %v3744
    %v6055 = vpop.f32.mrb[0].mxu0
    %v6056 = vadd.f32 %v3731, %v6055
    %v6057 = vpop.f32.mrb[0].mxu0
    %v6058 = vadd.f32 %v3731, %v6057
    %6059 = vdwg.mxu0
    %6060 = vmatprep.subr.mxu0 %v3502
    %6061 = vmatpush1.msra.mxu0 %v3501
    %6062 = vmatprep.subr.mxu0 %v3566
    %6063 = vmatpush1.msra.mxu0 %v3565
    %6064 = vmatprep.subr.mxu0 %v3630
    %6065 = vmatpush1.msra.mxu0 %v3629
    %6066 = vmatprep.subr.mxu0 %v3694
    %6067 = vmatpush1.msra.mxu0 %v3693
    %6068 = vmatprep.subr.mxu0 0.0
    %6069 = vmatpush1.msra.mxu0 0.0
    %6070 = vmatprep.subr.mxu0 0.0
    %6071 = vmatpush1.msra.mxu0 0.0
    %6072 = vmatprep.subr.mxu0 0.0
    %6073 = vmatpush1.msra.mxu0 0.0
    %6074 = vmatprep.subr.mxu0 0.0
    %6075 = vmatpush1.msra.mxu0 0.0
    %6076 = vmatprep.subr.mxu0 0.0
    %6077 = vmatpush1.msra.mxu0 0.0
    %6078 = vmatprep.subr.mxu0 0.0
    %6079 = vmatpush1.msra.mxu0 0.0
    %6080 = vmatprep.subr.mxu0 0.0
    %6081 = vmatpush1.msra.mxu0 0.0
    %6082 = vmatprep.subr.mxu0 0.0
    %6083 = vmatpush1.msra.mxu0 0.0
    %6084 = vmatprep.subr.mxu0 0.0
    %6085 = vmatpush1.msra.mxu0 0.0
    %6086 = vmatprep.subr.mxu0 0.0
    %6087 = vmatpush1.msra.mxu0 0.0
    %6088 = vmatprep.subr.mxu0 0.0
    %6089 = vmatpush1.msra.mxu0 0.0
    %6090 = vmatprep.subr.mxu0 0.0
    %6091 = vmatpush1.msra.mxu0 0.0
    %6092 = vmatprep.subr.mxu0 0.0
    %6093 = vmatpush1.msra.mxu0 0.0
    %6094 = vmatprep.subr.mxu0 0.0
    %6095 = vmatpush1.msra.mxu0 0.0
    %6096 = vmatprep.subr.mxu0 0.0
    %6097 = vmatpush1.msra.mxu0 0.0
    %6098 = vmatprep.subr.mxu0 0.0
    %6099 = vmatpush1.msra.mxu0 0.0
    %6100 = vmatprep.subr.mxu0 0.0
    %6101 = vmatpush1.msra.mxu0 0.0
    %6102 = vmatprep.subr.mxu0 0.0
    %6103 = vmatpush1.msra.mxu0 0.0
    %6104 = vmatprep.subr.mxu0 0.0
    %6105 = vmatpush1.msra.mxu0 0.0
    %6106 = vmatprep.subr.mxu0 0.0
    %6107 = vmatpush1.msra.mxu0 0.0
    %6108 = vmatprep.subr.mxu0 0.0
    %6109 = vmatpush1.msra.mxu0 0.0
    %6110 = vmatprep.subr.mxu0 0.0
    %6111 = vmatpush1.msra.mxu0 0.0
    %6112 = vmatprep.subr.mxu0 0.0
    %6113 = vmatpush1.msra.mxu0 0.0
    %6114 = vmatprep.subr.mxu0 0.0
    %6115 = vmatpush1.msra.mxu0 0.0
    %6116 = vmatprep.subr.mxu0 0.0
    %6117 = vmatpush1.msra.mxu0 0.0
    %6118 = vmatprep.subr.mxu0 0.0
    %6119 = vmatpush1.msra.mxu0 0.0
    %6120 = vmatprep.subr.mxu0 0.0
    %6121 = vmatpush1.msra.mxu0 0.0
    %6122 = vmatprep.subr.mxu0 0.0
    %6123 = vmatpush1.msra.mxu0 0.0
    %6124 = vmatprep.mubr.f32.mxu0 0.0
    %6125 = vmatmul.mubr.f32.gmra.mrb[0].mxu0 %v3735
    %v6126 = vpop.f32.mrb[0].mxu0
    %v6127 = vadd.f32 %v3716, %v6126
    %v6128 = vpop.f32.mrb[0].mxu0
    %v6129 = vadd.f32 %v3716, %v6128
    %6130 = vmatprep.mubr.f32.mxu0 0.0
    %6131 = vmatmul.mubr.f32.gmra.mrb[0].mxu0 %v3738
    %v6132 = vpop.f32.mrb[0].mxu0
    %v6133 = vadd.f32 %v3721, %v6132
    %v6134 = vpop.f32.mrb[0].mxu0
    %v6135 = vadd.f32 %v3721, %v6134
    %6136 = vmatprep.mubr.f32.mxu0 0.0
    %6137 = vmatmul.mubr.f32.gmra.mrb[0].mxu0 %v3741
    %v6138 = vpop.f32.mrb[0].mxu0
    %v6139 = vadd.f32 %v3726, %v6138
    %v6140 = vpop.f32.mrb[0].mxu0
    %v6141 = vadd.f32 %v3726, %v6140
    %6142 = vmatprep.mubr.f32.mxu0 0.0
    %6143 = vmatmul.mubr.f32.gmra.mrb[0].mxu0 %v3744
    %v6144 = vpop.f32.mrb[0].mxu0
    %v6145 = vadd.f32 %v3731, %v6144
    %v6146 = vpop.f32.mrb[0].mxu0
    %v6147 = vadd.f32 %v3731, %v6146
    %6148 = vdwg.mxu0
    %6149 = vmatprep.subr.mxu0 %v3504
    %6150 = vmatpush1.msra.mxu0 %v3503
    %6151 = vmatprep.subr.mxu0 %v3568
    %6152 = vmatpush1.msra.mxu0 %v3567
    %6153 = vmatprep.subr.mxu0 %v3632
    %6154 = vmatpush1.msra.mxu0 %v3631
    %6155 = vmatprep.subr.mxu0 %v3696
    %6156 = vmatpush1.msra.mxu0 %v3695
    %6157 = vmatprep.subr.mxu0 0.0
    %6158 = vmatpush1.msra.mxu0 0.0
    %6159 = vmatprep.subr.mxu0 0.0
    %6160 = vmatpush1.msra.mxu0 0.0
    %6161 = vmatprep.subr.mxu0 0.0
    %6162 = vmatpush1.msra.mxu0 0.0
    %6163 = vmatprep.subr.mxu0 0.0
    %6164 = vmatpush1.msra.mxu0 0.0
    %6165 = vmatprep.subr.mxu0 0.0
    %6166 = vmatpush1.msra.mxu0 0.0
    %6167 = vmatprep.subr.mxu0 0.0
    %6168 = vmatpush1.msra.mxu0 0.0
    %6169 = vmatprep.subr.mxu0 0.0
    %6170 = vmatpush1.msra.mxu0 0.0
    %6171 = vmatprep.subr.mxu0 0.0
    %6172 = vmatpush1.msra.mxu0 0.0
    %6173 = vmatprep.subr.mxu0 0.0
    %6174 = vmatpush1.msra.mxu0 0.0
    %6175 = vmatprep.subr.mxu0 0.0
    %6176 = vmatpush1.msra.mxu0 0.0
    %6177 = vmatprep.subr.mxu0 0.0
    %6178 = vmatpush1.msra.mxu0 0.0
    %6179 = vmatprep.subr.mxu0 0.0
    %6180 = vmatpush1.msra.mxu0 0.0
    %6181 = vmatprep.subr.mxu0 0.0
    %6182 = vmatpush1.msra.mxu0 0.0
    %6183 = vmatprep.subr.mxu0 0.0
    %6184 = vmatpush1.msra.mxu0 0.0
    %6185 = vmatprep.subr.mxu0 0.0
    %6186 = vmatpush1.msra.mxu0 0.0
    %6187 = vmatprep.subr.mxu0 0.0
    %6188 = vmatpush1.msra.mxu0 0.0
    %6189 = vmatprep.subr.mxu0 0.0
    %6190 = vmatpush1.msra.mxu0 0.0
    %6191 = vmatprep.subr.mxu0 0.0
    %6192 = vmatpush1.msra.mxu0 0.0
    %6193 = vmatprep.subr.mxu0 0.0
    %6194 = vmatpush1.msra.mxu0 0.0
    %6195 = vmatprep.subr.mxu0 0.0
    %6196 = vmatpush1.msra.mxu0 0.0
    %6197 = vmatprep.subr.mxu0 0.0
    %6198 = vmatpush1.msra.mxu0 0.0
    %6199 = vmatprep.subr.mxu0 0.0
    %6200 = vmatpush1.msra.mxu0 0.0
    %6201 = vmatprep.subr.mxu0 0.0
    %6202 = vmatpush1.msra.mxu0 0.0
    %6203 = vmatprep.subr.mxu0 0.0
    %6204 = vmatpush1.msra.mxu0 0.0
    %6205 = vmatprep.subr.mxu0 0.0
    %6206 = vmatpush1.msra.mxu0 0.0
    %6207 = vmatprep.subr.mxu0 0.0
    %6208 = vmatpush1.msra.mxu0 0.0
    %6209 = vmatprep.subr.mxu0 0.0
    %6210 = vmatpush1.msra.mxu0 0.0
    %6211 = vmatprep.subr.mxu0 0.0
    %6212 = vmatpush1.msra.mxu0 0.0
    %6213 = vmatprep.mubr.f32.mxu0 0.0
    %6214 = vmatmul.mubr.f32.gmra.mrb[0].mxu0 %v3735
    %v6215 = vpop.f32.mrb[0].mxu0
    %v6216 = vadd.f32 %v3716, %v6215
    %v6217 = vpop.f32.mrb[0].mxu0
    %v6218 = vadd.f32 %v3716, %v6217
    %6219 = vmatprep.mubr.f32.mxu0 0.0
    %6220 = vmatmul.mubr.f32.gmra.mrb[0].mxu0 %v3738
    %v6221 = vpop.f32.mrb[0].mxu0
    %v6222 = vadd.f32 %v3721, %v6221
    %v6223 = vpop.f32.mrb[0].mxu0
    %v6224 = vadd.f32 %v3721, %v6223
    %6225 = vmatprep.mubr.f32.mxu0 0.0
    %6226 = vmatmul.mubr.f32.gmra.mrb[0].mxu0 %v3741
    %v6227 = vpop.f32.mrb[0].mxu0
    %v6228 = vadd.f32 %v3726, %v6227
    %v6229 = vpop.f32.mrb[0].mxu0
    %v6230 = vadd.f32 %v3726, %v6229
    %6231 = vmatprep.mubr.f32.mxu0 0.0
    %6232 = vmatmul.mubr.f32.gmra.mrb[0].mxu0 %v3744
    %v6233 = vpop.f32.mrb[0].mxu0
    %v6234 = vadd.f32 %v3731, %v6233
    %v6235 = vpop.f32.mrb[0].mxu0
    %v6236 = vadd.f32 %v3731, %v6235
    %6237 = vdwg.mxu0
    %6238 = vmatprep.subr.mxu0 %v3506
    %6239 = vmatpush1.msra.mxu0 %v3505
    %6240 = vmatprep.subr.mxu0 %v3570
    %6241 = vmatpush1.msra.mxu0 %v3569
    %6242 = vmatprep.subr.mxu0 %v3634
    %6243 = vmatpush1.msra.mxu0 %v3633
    %6244 = vmatprep.subr.mxu0 %v3698
    %6245 = vmatpush1.msra.mxu0 %v3697
    %6246 = vmatprep.subr.mxu0 0.0
    %6247 = vmatpush1.msra.mxu0 0.0
    %6248 = vmatprep.subr.mxu0 0.0
    %6249 = vmatpush1.msra.mxu0 0.0
    %6250 = vmatprep.subr.mxu0 0.0
    %6251 = vmatpush1.msra.mxu0 0.0
    %6252 = vmatprep.subr.mxu0 0.0
    %6253 = vmatpush1.msra.mxu0 0.0
    %6254 = vmatprep.subr.mxu0 0.0
    %6255 = vmatpush1.msra.mxu0 0.0
    %6256 = vmatprep.subr.mxu0 0.0
    %6257 = vmatpush1.msra.mxu0 0.0
    %6258 = vmatprep.subr.mxu0 0.0
    %6259 = vmatpush1.msra.mxu0 0.0
    %6260 = vmatprep.subr.mxu0 0.0
    %6261 = vmatpush1.msra.mxu0 0.0
    %6262 = vmatprep.subr.mxu0 0.0
    %6263 = vmatpush1.msra.mxu0 0.0
    %6264 = vmatprep.subr.mxu0 0.0
    %6265 = vmatpush1.msra.mxu0 0.0
    %6266 = vmatprep.subr.mxu0 0.0
    %6267 = vmatpush1.msra.mxu0 0.0
    %6268 = vmatprep.subr.mxu0 0.0
    %6269 = vmatpush1.msra.mxu0 0.0
    %6270 = vmatprep.subr.mxu0 0.0
    %6271 = vmatpush1.msra.mxu0 0.0
    %6272 = vmatprep.subr.mxu0 0.0
    %6273 = vmatpush1.msra.mxu0 0.0
    %6274 = vmatprep.subr.mxu0 0.0
    %6275 = vmatpush1.msra.mxu0 0.0
    %6276 = vmatprep.subr.mxu0 0.0
    %6277 = vmatpush1.msra.mxu0 0.0
    %6278 = vmatprep.subr.mxu0 0.0
    %6279 = vmatpush1.msra.mxu0 0.0
    %6280 = vmatprep.subr.mxu0 0.0
    %6281 = vmatpush1.msra.mxu0 0.0
    %6282 = vmatprep.subr.mxu0 0.0
    %6283 = vmatpush1.msra.mxu0 0.0
    %6284 = vmatprep.subr.mxu0 0.0
    %6285 = vmatpush1.msra.mxu0 0.0
    %6286 = vmatprep.subr.mxu0 0.0
    %6287 = vmatpush1.msra.mxu0 0.0
    %6288 = vmatprep.subr.mxu0 0.0
    %6289 = vmatpush1.msra.mxu0 0.0
    %6290 = vmatprep.subr.mxu0 0.0
    %6291 = vmatpush1.msra.mxu0 0.0
    %6292 = vmatprep.subr.mxu0 0.0
    %6293 = vmatpush1.msra.mxu0 0.0
    %6294 = vmatprep.subr.mxu0 0.0
    %6295 = vmatpush1.msra.mxu0 0.0
    %6296 = vmatprep.subr.mxu0 0.0
    %6297 = vmatpush1.msra.mxu0 0.0
    %6298 = vmatprep.subr.mxu0 0.0
    %6299 = vmatpush1.msra.mxu0 0.0
    %6300 = vmatprep.subr.mxu0 0.0
    %6301 = vmatpush1.msra.mxu0 0.0
    %6302 = vmatprep.mubr.f32.mxu0 0.0
    %6303 = vmatmul.mubr.f32.gmra.mrb[0].mxu0 %v3735
    %v6304 = vpop.f32.mrb[0].mxu0
    %v6305 = vadd.f32 %v3716, %v6304
    %v6306 = vpop.f32.mrb[0].mxu0
    %v6307 = vadd.f32 %v3716, %v6306
    %6308 = vmatprep.mubr.f32.mxu0 0.0
    %6309 = vmatmul.mubr.f32.gmra.mrb[0].mxu0 %v3738
    %v6310 = vpop.f32.mrb[0].mxu0
    %v6311 = vadd.f32 %v3721, %v6310
    %v6312 = vpop.f32.mrb[0].mxu0
    %v6313 = vadd.f32 %v3721, %v6312
    %6314 = vmatprep.mubr.f32.mxu0 0.0
    %6315 = vmatmul.mubr.f32.gmra.mrb[0].mxu0 %v3741
    %v6316 = vpop.f32.mrb[0].mxu0
    %v6317 = vadd.f32 %v3726, %v6316
    %v6318 = vpop.f32.mrb[0].mxu0
    %v6319 = vadd.f32 %v3726, %v6318
    %6320 = vmatprep.mubr.f32.mxu0 0.0
    %6321 = vmatmul.mubr.f32.gmra.mrb[0].mxu0 %v3744
    %v6322 = vpop.f32.mrb[0].mxu0
    %v6323 = vadd.f32 %v3731, %v6322
    %v6324 = vpop.f32.mrb[0].mxu0
    %v6325 = vadd.f32 %v3731, %v6324
    %6326 = vdwg.mxu0
    %6327 = vmatprep.subr.mxu0 %v3508
    %6328 = vmatpush1.msra.mxu0 %v3507
    %6329 = vmatprep.subr.mxu0 %v3572
    %6330 = vmatpush1.msra.mxu0 %v3571
    %6331 = vmatprep.subr.mxu0 %v3636
    %6332 = vmatpush1.msra.mxu0 %v3635
    %6333 = vmatprep.subr.mxu0 %v3700
    %6334 = vmatpush1.msra.mxu0 %v3699
    %6335 = vmatprep.subr.mxu0 0.0
    %6336 = vmatpush1.msra.mxu0 0.0
    %6337 = vmatprep.subr.mxu0 0.0
    %6338 = vmatpush1.msra.mxu0 0.0
    %6339 = vmatprep.subr.mxu0 0.0
    %6340 = vmatpush1.msra.mxu0 0.0
    %6341 = vmatprep.subr.mxu0 0.0
    %6342 = vmatpush1.msra.mxu0 0.0
    %6343 = vmatprep.subr.mxu0 0.0
    %6344 = vmatpush1.msra.mxu0 0.0
    %6345 = vmatprep.subr.mxu0 0.0
    %6346 = vmatpush1.msra.mxu0 0.0
    %6347 = vmatprep.subr.mxu0 0.0
    %6348 = vmatpush1.msra.mxu0 0.0
    %6349 = vmatprep.subr.mxu0 0.0
    %6350 = vmatpush1.msra.mxu0 0.0
    %6351 = vmatprep.subr.mxu0 0.0
    %6352 = vmatpush1.msra.mxu0 0.0
    %6353 = vmatprep.subr.mxu0 0.0
    %6354 = vmatpush1.msra.mxu0 0.0
    %6355 = vmatprep.subr.mxu0 0.0
    %6356 = vmatpush1.msra.mxu0 0.0
    %6357 = vmatprep.subr.mxu0 0.0
    %6358 = vmatpush1.msra.mxu0 0.0
    %6359 = vmatprep.subr.mxu0 0.0
    %6360 = vmatpush1.msra.mxu0 0.0
    %6361 = vmatprep.subr.mxu0 0.0
    %6362 = vmatpush1.msra.mxu0 0.0
    %6363 = vmatprep.subr.mxu0 0.0
    %6364 = vmatpush1.msra.mxu0 0.0
    %6365 = vmatprep.subr.mxu0 0.0
    %6366 = vmatpush1.msra.mxu0 0.0
    %6367 = vmatprep.subr.mxu0 0.0
    %6368 = vmatpush1.msra.mxu0 0.0
    %6369 = vmatprep.subr.mxu0 0.0
    %6370 = vmatpush1.msra.mxu0 0.0
    %6371 = vmatprep.subr.mxu0 0.0
    %6372 = vmatpush1.msra.mxu0 0.0
    %6373 = vmatprep.subr.mxu0 0.0
    %6374 = vmatpush1.msra.mxu0 0.0
    %6375 = vmatprep.subr.mxu0 0.0
    %6376 = vmatpush1.msra.mxu0 0.0
    %6377 = vmatprep.subr.mxu0 0.0
    %6378 = vmatpush1.msra.mxu0 0.0
    %6379 = vmatprep.subr.mxu0 0.0
    %6380 = vmatpush1.msra.mxu0 0.0
    %6381 = vmatprep.subr.mxu0 0.0
    %6382 = vmatpush1.msra.mxu0 0.0
    %6383 = vmatprep.subr.mxu0 0.0
    %6384 = vmatpush1.msra.mxu0 0.0
    %6385 = vmatprep.subr.mxu0 0.0
    %6386 = vmatpush1.msra.mxu0 0.0
    %6387 = vmatprep.subr.mxu0 0.0
    %6388 = vmatpush1.msra.mxu0 0.0
    %6389 = vmatprep.subr.mxu0 0.0
    %6390 = vmatpush1.msra.mxu0 0.0
    %6391 = vmatprep.mubr.f32.mxu0 0.0
    %6392 = vmatmul.mubr.f32.gmra.mrb[0].mxu0 %v3735
    %v6393 = vpop.f32.mrb[0].mxu0
    %v6394 = vadd.f32 %v3716, %v6393
    %v6395 = vpop.f32.mrb[0].mxu0
    %v6396 = vadd.f32 %v3716, %v6395
    %6397 = vmatprep.mubr.f32.mxu0 0.0
    %6398 = vmatmul.mubr.f32.gmra.mrb[0].mxu0 %v3738
    %v6399 = vpop.f32.mrb[0].mxu0
    %v6400 = vadd.f32 %v3721, %v6399
    %v6401 = vpop.f32.mrb[0].mxu0
    %v6402 = vadd.f32 %v3721, %v6401
    %6403 = vmatprep.mubr.f32.mxu0 0.0
    %6404 = vmatmul.mubr.f32.gmra.mrb[0].mxu0 %v3741
    %v6405 = vpop.f32.mrb[0].mxu0
    %v6406 = vadd.f32 %v3726, %v6405
    %v6407 = vpop.f32.mrb[0].mxu0
    %v6408 = vadd.f32 %v3726, %v6407
    %6409 = vmatprep.mubr.f32.mxu0 0.0
    %6410 = vmatmul.mubr.f32.gmra.mrb[0].mxu0 %v3744
    %v6411 = vpop.f32.mrb[0].mxu0
    %v6412 = vadd.f32 %v3731, %v6411
    %v6413 = vpop.f32.mrb[0].mxu0
    %v6414 = vadd.f32 %v3731, %v6413
    %6415 = vdwg.mxu0
    %6416 = vmatprep.subr.mxu0 %v3510
    %6417 = vmatpush1.msra.mxu0 %v3509
    %6418 = vmatprep.subr.mxu0 %v3574
    %6419 = vmatpush1.msra.mxu0 %v3573
    %6420 = vmatprep.subr.mxu0 %v3638
    %6421 = vmatpush1.msra.mxu0 %v3637
    %6422 = vmatprep.subr.mxu0 %v3702
    %6423 = vmatpush1.msra.mxu0 %v3701
    %6424 = vmatprep.subr.mxu0 0.0
    %6425 = vmatpush1.msra.mxu0 0.0
    %6426 = vmatprep.subr.mxu0 0.0
    %6427 = vmatpush1.msra.mxu0 0.0
    %6428 = vmatprep.subr.mxu0 0.0
    %6429 = vmatpush1.msra.mxu0 0.0
    %6430 = vmatprep.subr.mxu0 0.0
    %6431 = vmatpush1.msra.mxu0 0.0
    %6432 = vmatprep.subr.mxu0 0.0
    %6433 = vmatpush1.msra.mxu0 0.0
    %6434 = vmatprep.subr.mxu0 0.0
    %6435 = vmatpush1.msra.mxu0 0.0
    %6436 = vmatprep.subr.mxu0 0.0
    %6437 = vmatpush1.msra.mxu0 0.0
    %6438 = vmatprep.subr.mxu0 0.0
    %6439 = vmatpush1.msra.mxu0 0.0
    %6440 = vmatprep.subr.mxu0 0.0
    %6441 = vmatpush1.msra.mxu0 0.0
    %6442 = vmatprep.subr.mxu0 0.0
    %6443 = vmatpush1.msra.mxu0 0.0
    %6444 = vmatprep.subr.mxu0 0.0
    %6445 = vmatpush1.msra.mxu0 0.0
    %6446 = vmatprep.subr.mxu0 0.0
    %6447 = vmatpush1.msra.mxu0 0.0
    %6448 = vmatprep.subr.mxu0 0.0
    %6449 = vmatpush1.msra.mxu0 0.0
    %6450 = vmatprep.subr.mxu0 0.0
    %6451 = vmatpush1.msra.mxu0 0.0
    %6452 = vmatprep.subr.mxu0 0.0
    %6453 = vmatpush1.msra.mxu0 0.0
    %6454 = vmatprep.subr.mxu0 0.0
    %6455 = vmatpush1.msra.mxu0 0.0
    %6456 = vmatprep.subr.mxu0 0.0
    %6457 = vmatpush1.msra.mxu0 0.0
    %6458 = vmatprep.subr.mxu0 0.0
    %6459 = vmatpush1.msra.mxu0 0.0
    %6460 = vmatprep.subr.mxu0 0.0
    %6461 = vmatpush1.msra.mxu0 0.0
    %6462 = vmatprep.subr.mxu0 0.0
    %6463 = vmatpush1.msra.mxu0 0.0
    %6464 = vmatprep.subr.mxu0 0.0
    %6465 = vmatpush1.msra.mxu0 0.0
    %6466 = vmatprep.subr.mxu0 0.0
    %6467 = vmatpush1.msra.mxu0 0.0
    %6468 = vmatprep.subr.mxu0 0.0
    %6469 = vmatpush1.msra.mxu0 0.0
    %6470 = vmatprep.subr.mxu0 0.0
    %6471 = vmatpush1.msra.mxu0 0.0
    %6472 = vmatprep.subr.mxu0 0.0
    %6473 = vmatpush1.msra.mxu0 0.0
    %6474 = vmatprep.subr.mxu0 0.0
    %6475 = vmatpush1.msra.mxu0 0.0
    %6476 = vmatprep.subr.mxu0 0.0
    %6477 = vmatpush1.msra.mxu0 0.0
    %6478 = vmatprep.subr.mxu0 0.0
    %6479 = vmatpush1.msra.mxu0 0.0
    %6480 = vmatprep.mubr.f32.mxu0 0.0
    %6481 = vmatmul.mubr.f32.gmra.mrb[0].mxu0 %v3735
    %v6482 = vpop.f32.mrb[0].mxu0
    %v6483 = vadd.f32 %v3716, %v6482
    %v6484 = vpop.f32.mrb[0].mxu0
    %v6485 = vadd.f32 %v3716, %v6484
    %6486 = vmatprep.mubr.f32.mxu0 0.0
    %6487 = vmatmul.mubr.f32.gmra.mrb[0].mxu0 %v3738
    %v6488 = vpop.f32.mrb[0].mxu0
    %v6489 = vadd.f32 %v3721, %v6488
    %v6490 = vpop.f32.mrb[0].mxu0
    %v6491 = vadd.f32 %v3721, %v6490
    %6492 = vmatprep.mubr.f32.mxu0 0.0
    %6493 = vmatmul.mubr.f32.gmra.mrb[0].mxu0 %v3741
    %v6494 = vpop.f32.mrb[0].mxu0
    %v6495 = vadd.f32 %v3726, %v6494
    %v6496 = vpop.f32.mrb[0].mxu0
    %v6497 = vadd.f32 %v3726, %v6496
    %6498 = vmatprep.mubr.f32.mxu0 0.0
    %6499 = vmatmul.mubr.f32.gmra.mrb[0].mxu0 %v3744
    %v6500 = vpop.f32.mrb[0].mxu0
    %v6501 = vadd.f32 %v3731, %v6500
    %v6502 = vpop.f32.mrb[0].mxu0
    %v6503 = vadd.f32 %v3731, %v6502
    %6504 = vdwg.mxu0
    %6505 = vmatprep.subr.mxu0 %v3512
    %6506 = vmatpush1.msra.mxu0 %v3511
    %6507 = vmatprep.subr.mxu0 %v3576
    %6508 = vmatpush1.msra.mxu0 %v3575
    %6509 = vmatprep.subr.mxu0 %v3640
    %6510 = vmatpush1.msra.mxu0 %v3639
    %6511 = vmatprep.subr.mxu0 %v3704
    %6512 = vmatpush1.msra.mxu0 %v3703
    %6513 = vmatprep.subr.mxu0 0.0
    %6514 = vmatpush1.msra.mxu0 0.0
    %6515 = vmatprep.subr.mxu0 0.0
    %6516 = vmatpush1.msra.mxu0 0.0
    %6517 = vmatprep.subr.mxu0 0.0
    %6518 = vmatpush1.msra.mxu0 0.0
    %6519 = vmatprep.subr.mxu0 0.0
    %6520 = vmatpush1.msra.mxu0 0.0
    %6521 = vmatprep.subr.mxu0 0.0
    %6522 = vmatpush1.msra.mxu0 0.0
    %6523 = vmatprep.subr.mxu0 0.0
    %6524 = vmatpush1.msra.mxu0 0.0
    %6525 = vmatprep.subr.mxu0 0.0
    %6526 = vmatpush1.msra.mxu0 0.0
    %6527 = vmatprep.subr.mxu0 0.0
    %6528 = vmatpush1.msra.mxu0 0.0
    %6529 = vmatprep.subr.mxu0 0.0
    %6530 = vmatpush1.msra.mxu0 0.0
    %6531 = vmatprep.subr.mxu0 0.0
    %6532 = vmatpush1.msra.mxu0 0.0
    %6533 = vmatprep.subr.mxu0 0.0
    %6534 = vmatpush1.msra.mxu0 0.0
    %6535 = vmatprep.subr.mxu0 0.0
    %6536 = vmatpush1.msra.mxu0 0.0
    %6537 = vmatprep.subr.mxu0 0.0
    %6538 = vmatpush1.msra.mxu0 0.0
    %6539 = vmatprep.subr.mxu0 0.0
    %6540 = vmatpush1.msra.mxu0 0.0
    %6541 = vmatprep.subr.mxu0 0.0
    %6542 = vmatpush1.msra.mxu0 0.0
    %6543 = vmatprep.subr.mxu0 0.0
    %6544 = vmatpush1.msra.mxu0 0.0
    %6545 = vmatprep.subr.mxu0 0.0
    %6546 = vmatpush1.msra.mxu0 0.0
    %6547 = vmatprep.subr.mxu0 0.0
    %6548 = vmatpush1.msra.mxu0 0.0
    %6549 = vmatprep.subr.mxu0 0.0
    %6550 = vmatpush1.msra.mxu0 0.0
    %6551 = vmatprep.subr.mxu0 0.0
    %6552 = vmatpush1.msra.mxu0 0.0
    %6553 = vmatprep.subr.mxu0 0.0
    %6554 = vmatpush1.msra.mxu0 0.0
    %6555 = vmatprep.subr.mxu0 0.0
    %6556 = vmatpush1.msra.mxu0 0.0
    %6557 = vmatprep.subr.mxu0 0.0
    %6558 = vmatpush1.msra.mxu0 0.0
    %6559 = vmatprep.subr.mxu0 0.0
    %6560 = vmatpush1.msra.mxu0 0.0
    %6561 = vmatprep.subr.mxu0 0.0
    %6562 = vmatpush1.msra.mxu0 0.0
    %6563 = vmatprep.subr.mxu0 0.0
    %6564 = vmatpush1.msra.mxu0 0.0
    %6565 = vmatprep.subr.mxu0 0.0
    %6566 = vmatpush1.msra.mxu0 0.0
    %6567 = vmatprep.subr.mxu0 0.0
    %6568 = vmatpush1.msra.mxu0 0.0
    %6569 = vmatprep.mubr.f32.mxu0 0.0
    %6570 = vmatmul.mubr.f32.gmra.mrb[0].mxu0 %v3735
    %v6571 = vpop.f32.mrb[0].mxu0
    %v6572 = vadd.f32 %v3716, %v6571
    %v6573 = vpop.f32.mrb[0].mxu0
    %v6574 = vadd.f32 %v3716, %v6573
    %6575 = vmatprep.mubr.f32.mxu0 0.0
    %6576 = vmatmul.mubr.f32.gmra.mrb[0].mxu0 %v3738
    %v6577 = vpop.f32.mrb[0].mxu0
    %v6578 = vadd.f32 %v3721, %v6577
    %v6579 = vpop.f32.mrb[0].mxu0
    %v6580 = vadd.f32 %v3721, %v6579
    %6581 = vmatprep.mubr.f32.mxu0 0.0
    %6582 = vmatmul.mubr.f32.gmra.mrb[0].mxu0 %v3741
    %v6583 = vpop.f32.mrb[0].mxu0
    %v6584 = vadd.f32 %v3726, %v6583
    %v6585 = vpop.f32.mrb[0].mxu0
    %v6586 = vadd.f32 %v3726, %v6585
    %6587 = vmatprep.mubr.f32.mxu0 0.0
    %6588 = vmatmul.mubr.f32.gmra.mrb[0].mxu0 %v3744
    %v6589 = vpop.f32.mrb[0].mxu0
    %v6590 = vadd.f32 %v3731, %v6589
    %v6591 = vpop.f32.mrb[0].mxu0
    %v6592 = vadd.f32 %v3731, %v6591
    %6593 = vdwg.mxu0
    %v6594 = vmax.f32 %v3813, 0.0
    %v6595 = vmax.f32 %v3815, 0.0
    %v6596 = vmax.f32 %v3902, 0.0
    %v6597 = vmax.f32 %v3904, 0.0
    %v6598 = vmax.f32 %v3991, 0.0
    %v6599 = vmax.f32 %v3993, 0.0
    %v6600 = vmax.f32 %v4080, 0.0
    %v6601 = vmax.f32 %v4082, 0.0
    %v6602 = vmax.f32 %v4169, 0.0
    %v6603 = vmax.f32 %v4171, 0.0
    %v6604 = vmax.f32 %v4258, 0.0
    %v6605 = vmax.f32 %v4260, 0.0
    %v6606 = vmax.f32 %v4347, 0.0
    %v6607 = vmax.f32 %v4349, 0.0
    %v6608 = vmax.f32 %v4436, 0.0
    %v6609 = vmax.f32 %v4438, 0.0
    %v6610 = vmax.f32 %v4525, 0.0
    %v6611 = vmax.f32 %v4527, 0.0
    %v6612 = vmax.f32 %v4614, 0.0
    %v6613 = vmax.f32 %v4616, 0.0
    %v6614 = vmax.f32 %v4703, 0.0
    %v6615 = vmax.f32 %v4705, 0.0
    %v6616 = vmax.f32 %v4792, 0.0
    %v6617 = vmax.f32 %v4794, 0.0
    %v6618 = vmax.f32 %v4881, 0.0
    %v6619 = vmax.f32 %v4883, 0.0
    %v6620 = vmax.f32 %v4970, 0.0
    %v6621 = vmax.f32 %v4972, 0.0
    %v6622 = vmax.f32 %v5059, 0.0
    %v6623 = vmax.f32 %v5061, 0.0
    %v6624 = vmax.f32 %v5148, 0.0
    %v6625 = vmax.f32 %v5150, 0.0
    %v6626 = vmax.f32 %v5237, 0.0
    %v6627 = vmax.f32 %v5239, 0.0
    %v6628 = vmax.f32 %v5326, 0.0
    %v6629 = vmax.f32 %v5328, 0.0
    %v6630 = vmax.f32 %v5415, 0.0
    %v6631 = vmax.f32 %v5417, 0.0
    %v6632 = vmax.f32 %v5504, 0.0
    %v6633 = vmax.f32 %v5506, 0.0
    %v6634 = vmax.f32 %v5593, 0.0
    %v6635 = vmax.f32 %v5595, 0.0
    %v6636 = vmax.f32 %v5682, 0.0
    %v6637 = vmax.f32 %v5684, 0.0
    %v6638 = vmax.f32 %v5771, 0.0
    %v6639 = vmax.f32 %v5773, 0.0
    %v6640 = vmax.f32 %v5860, 0.0
    %v6641 = vmax.f32 %v5862, 0.0
    %v6642 = vmax.f32 %v5949, 0.0
    %v6643 = vmax.f32 %v5951, 0.0
    %v6644 = vmax.f32 %v6038, 0.0
    %v6645 = vmax.f32 %v6040, 0.0
    %v6646 = vmax.f32 %v6127, 0.0
    %v6647 = vmax.f32 %v6129, 0.0
    %v6648 = vmax.f32 %v6216, 0.0
    %v6649 = vmax.f32 %v6218, 0.0
    %v6650 = vmax.f32 %v6305, 0.0
    %v6651 = vmax.f32 %v6307, 0.0
    %v6652 = vmax.f32 %v6394, 0.0
    %v6653 = vmax.f32 %v6396, 0.0
    %v6654 = vmax.f32 %v6483, 0.0
    %v6655 = vmax.f32 %v6485, 0.0
    %v6656 = vmax.f32 %v6572, 0.0
    %v6657 = vmax.f32 %v6574, 0.0
    %v6658 = vmax.f32 %v3819, 0.0
    %v6659 = vmax.f32 %v3821, 0.0
    %v6660 = vmax.f32 %v3908, 0.0
    %v6661 = vmax.f32 %v3910, 0.0
    %v6662 = vmax.f32 %v3997, 0.0
    %v6663 = vmax.f32 %v3999, 0.0
    %v6664 = vmax.f32 %v4086, 0.0
    %v6665 = vmax.f32 %v4088, 0.0
    %v6666 = vmax.f32 %v4175, 0.0
    %v6667 = vmax.f32 %v4177, 0.0
    %v6668 = vmax.f32 %v4264, 0.0
    %v6669 = vmax.f32 %v4266, 0.0
    %v6670 = vmax.f32 %v4353, 0.0
    %v6671 = vmax.f32 %v4355, 0.0
    %v6672 = vmax.f32 %v4442, 0.0
    %v6673 = vmax.f32 %v4444, 0.0
    %v6674 = vmax.f32 %v4531, 0.0
    %v6675 = vmax.f32 %v4533, 0.0
    %v6676 = vmax.f32 %v4620, 0.0
    %v6677 = vmax.f32 %v4622, 0.0
    %v6678 = vmax.f32 %v4709, 0.0
    %v6679 = vmax.f32 %v4711, 0.0
    %v6680 = vmax.f32 %v4798, 0.0
    %v6681 = vmax.f32 %v4800, 0.0
    %v6682 = vmax.f32 %v4887, 0.0
    %v6683 = vmax.f32 %v4889, 0.0
    %v6684 = vmax.f32 %v4976, 0.0
    %v6685 = vmax.f32 %v4978, 0.0
    %v6686 = vmax.f32 %v5065, 0.0
    %v6687 = vmax.f32 %v5067, 0.0
    %v6688 = vmax.f32 %v5154, 0.0
    %v6689 = vmax.f32 %v5156, 0.0
    %v6690 = vmax.f32 %v5243, 0.0
    %v6691 = vmax.f32 %v5245, 0.0
    %v6692 = vmax.f32 %v5332, 0.0
    %v6693 = vmax.f32 %v5334, 0.0
    %v6694 = vmax.f32 %v5421, 0.0
    %v6695 = vmax.f32 %v5423, 0.0
    %v6696 = vmax.f32 %v5510, 0.0
    %v6697 = vmax.f32 %v5512, 0.0
    %v6698 = vmax.f32 %v5599, 0.0
    %v6699 = vmax.f32 %v5601, 0.0
    %v6700 = vmax.f32 %v5688, 0.0
    %v6701 = vmax.f32 %v5690, 0.0
    %v6702 = vmax.f32 %v5777, 0.0
    %v6703 = vmax.f32 %v5779, 0.0
    %v6704 = vmax.f32 %v5866, 0.0
    %v6705 = vmax.f32 %v5868, 0.0
    %v6706 = vmax.f32 %v5955, 0.0
    %v6707 = vmax.f32 %v5957, 0.0
    %v6708 = vmax.f32 %v6044, 0.0
    %v6709 = vmax.f32 %v6046, 0.0
    %v6710 = vmax.f32 %v6133, 0.0
    %v6711 = vmax.f32 %v6135, 0.0
    %v6712 = vmax.f32 %v6222, 0.0
    %v6713 = vmax.f32 %v6224, 0.0
    %v6714 = vmax.f32 %v6311, 0.0
    %v6715 = vmax.f32 %v6313, 0.0
    %v6716 = vmax.f32 %v6400, 0.0
    %v6717 = vmax.f32 %v6402, 0.0
    %v6718 = vmax.f32 %v6489, 0.0
    %v6719 = vmax.f32 %v6491, 0.0
    %v6720 = vmax.f32 %v6578, 0.0
    %v6721 = vmax.f32 %v6580, 0.0
    %v6722 = vmax.f32 %v3825, 0.0
    %v6723 = vmax.f32 %v3827, 0.0
    %v6724 = vmax.f32 %v3914, 0.0
    %v6725 = vmax.f32 %v3916, 0.0
    %v6726 = vmax.f32 %v4003, 0.0
    %v6727 = vmax.f32 %v4005, 0.0
    %v6728 = vmax.f32 %v4092, 0.0
    %v6729 = vmax.f32 %v4094, 0.0
    %v6730 = vmax.f32 %v4181, 0.0
    %v6731 = vmax.f32 %v4183, 0.0
    %v6732 = vmax.f32 %v4270, 0.0
    %v6733 = vmax.f32 %v4272, 0.0
    %v6734 = vmax.f32 %v4359, 0.0
    %v6735 = vmax.f32 %v4361, 0.0
    %v6736 = vmax.f32 %v4448, 0.0
    %v6737 = vmax.f32 %v4450, 0.0
    %v6738 = vmax.f32 %v4537, 0.0
    %v6739 = vmax.f32 %v4539, 0.0
    %v6740 = vmax.f32 %v4626, 0.0
    %v6741 = vmax.f32 %v4628, 0.0
    %v6742 = vmax.f32 %v4715, 0.0
    %v6743 = vmax.f32 %v4717, 0.0
    %v6744 = vmax.f32 %v4804, 0.0
    %v6745 = vmax.f32 %v4806, 0.0
    %v6746 = vmax.f32 %v4893, 0.0
    %v6747 = vmax.f32 %v4895, 0.0
    %v6748 = vmax.f32 %v4982, 0.0
    %v6749 = vmax.f32 %v4984, 0.0
    %v6750 = vmax.f32 %v5071, 0.0
    %v6751 = vmax.f32 %v5073, 0.0
    %v6752 = vmax.f32 %v5160, 0.0
    %v6753 = vmax.f32 %v5162, 0.0
    %v6754 = vmax.f32 %v5249, 0.0
    %v6755 = vmax.f32 %v5251, 0.0
    %v6756 = vmax.f32 %v5338, 0.0
    %v6757 = vmax.f32 %v5340, 0.0
    %v6758 = vmax.f32 %v5427, 0.0
    %v6759 = vmax.f32 %v5429, 0.0
    %v6760 = vmax.f32 %v5516, 0.0
    %v6761 = vmax.f32 %v5518, 0.0
    %v6762 = vmax.f32 %v5605, 0.0
    %v6763 = vmax.f32 %v5607, 0.0
    %v6764 = vmax.f32 %v5694, 0.0
    %v6765 = vmax.f32 %v5696, 0.0
    %v6766 = vmax.f32 %v5783, 0.0
    %v6767 = vmax.f32 %v5785, 0.0
    %v6768 = vmax.f32 %v5872, 0.0
    %v6769 = vmax.f32 %v5874, 0.0
    %v6770 = vmax.f32 %v5961, 0.0
    %v6771 = vmax.f32 %v5963, 0.0
    %v6772 = vmax.f32 %v6050, 0.0
    %v6773 = vmax.f32 %v6052, 0.0
    %v6774 = vmax.f32 %v6139, 0.0
    %v6775 = vmax.f32 %v6141, 0.0
    %v6776 = vmax.f32 %v6228, 0.0
    %v6777 = vmax.f32 %v6230, 0.0
    %v6778 = vmax.f32 %v6317, 0.0
    %v6779 = vmax.f32 %v6319, 0.0
    %v6780 = vmax.f32 %v6406, 0.0
    %v6781 = vmax.f32 %v6408, 0.0
    %v6782 = vmax.f32 %v6495, 0.0
    %v6783 = vmax.f32 %v6497, 0.0
    %v6784 = vmax.f32 %v6584, 0.0
    %v6785 = vmax.f32 %v6586, 0.0
    %v6786 = vmax.f32 %v3831, 0.0
    %v6787 = vmax.f32 %v3833, 0.0
    %v6788 = vmax.f32 %v3920, 0.0
    %v6789 = vmax.f32 %v3922, 0.0
    %v6790 = vmax.f32 %v4009, 0.0
    %v6791 = vmax.f32 %v4011, 0.0
    %v6792 = vmax.f32 %v4098, 0.0
    %v6793 = vmax.f32 %v4100, 0.0
    %v6794 = vmax.f32 %v4187, 0.0
    %v6795 = vmax.f32 %v4189, 0.0
    %v6796 = vmax.f32 %v4276, 0.0
    %v6797 = vmax.f32 %v4278, 0.0
    %v6798 = vmax.f32 %v4365, 0.0
    %v6799 = vmax.f32 %v4367, 0.0
    %v6800 = vmax.f32 %v4454, 0.0
    %v6801 = vmax.f32 %v4456, 0.0
    %v6802 = vmax.f32 %v4543, 0.0
    %v6803 = vmax.f32 %v4545, 0.0
    %v6804 = vmax.f32 %v4632, 0.0
    %v6805 = vmax.f32 %v4634, 0.0
    %v6806 = vmax.f32 %v4721, 0.0
    %v6807 = vmax.f32 %v4723, 0.0
    %v6808 = vmax.f32 %v4810, 0.0
    %v6809 = vmax.f32 %v4812, 0.0
    %v6810 = vmax.f32 %v4899, 0.0
    %v6811 = vmax.f32 %v4901, 0.0
    %v6812 = vmax.f32 %v4988, 0.0
    %v6813 = vmax.f32 %v4990, 0.0
    %v6814 = vmax.f32 %v5077, 0.0
    %v6815 = vmax.f32 %v5079, 0.0
    %v6816 = vmax.f32 %v5166, 0.0
    %v6817 = vmax.f32 %v5168, 0.0
    %v6818 = vmax.f32 %v5255, 0.0
    %v6819 = vmax.f32 %v5257, 0.0
    %v6820 = vmax.f32 %v5344, 0.0
    %v6821 = vmax.f32 %v5346, 0.0
    %v6822 = vmax.f32 %v5433, 0.0
    %v6823 = vmax.f32 %v5435, 0.0
    %v6824 = vmax.f32 %v5522, 0.0
    %v6825 = vmax.f32 %v5524, 0.0
    %v6826 = vmax.f32 %v5611, 0.0
    %v6827 = vmax.f32 %v5613, 0.0
    %v6828 = vmax.f32 %v5700, 0.0
    %v6829 = vmax.f32 %v5702, 0.0
    %v6830 = vmax.f32 %v5789, 0.0
    %v6831 = vmax.f32 %v5791, 0.0
    %v6832 = vmax.f32 %v5878, 0.0
    %v6833 = vmax.f32 %v5880, 0.0
    %v6834 = vmax.f32 %v5967, 0.0
    %v6835 = vmax.f32 %v5969, 0.0
    %v6836 = vmax.f32 %v6056, 0.0
    %v6837 = vmax.f32 %v6058, 0.0
    %v6838 = vmax.f32 %v6145, 0.0
    %v6839 = vmax.f32 %v6147, 0.0
    %v6840 = vmax.f32 %v6234, 0.0
    %v6841 = vmax.f32 %v6236, 0.0
    %v6842 = vmax.f32 %v6323, 0.0
    %v6843 = vmax.f32 %v6325, 0.0
    %v6844 = vmax.f32 %v6412, 0.0
    %v6845 = vmax.f32 %v6414, 0.0
    %v6846 = vmax.f32 %v6501, 0.0
    %v6847 = vmax.f32 %v6503, 0.0
    %v6848 = vmax.f32 %v6590, 0.0
    %v6849 = vmax.f32 %v6592, 0.0
    %v6850 = vld [vmem:[%s5] sm:$0xff]
    %v6851 = vld [vmem:[%s5 + $0x8] sm:$0xff]
    %v6852 = vld [vmem:[%s5 + $0x10] sm:$0xff]
    %v6853 = vld [vmem:[%s5 + $0x18] sm:$0xff]
    %6855 = vset.pattern.permute.xlu0 0
    %6856 = vperm.xlu0 %6855, %v6850
    %v6857 = vpop.permute.xlu0 %6856
    %6860 = vset.pattern.permute.xlu0 0
    %6861 = vperm.xlu0 %6860, %v6851
    %v6862 = vpop.permute.xlu0 %6861
    %6865 = vset.pattern.permute.xlu0 0
    %6866 = vperm.xlu0 %6865, %v6852
    %v6867 = vpop.permute.xlu0 %6866
    %6870 = vset.pattern.permute.xlu0 0
    %6871 = vperm.xlu0 %6870, %v6853
    %v6872 = vpop.permute.xlu0 %6871
    %v6874 = vmul.f32 %v6594, %v6857
    %v6875 = vmul.f32 %v6595, %v6857
    %v6876 = vmul.f32 %v6596, %v6857
    %v6877 = vmul.f32 %v6597, %v6857
    %v6878 = vmul.f32 %v6598, %v6857
    %v6879 = vmul.f32 %v6599, %v6857
    %v6880 = vmul.f32 %v6600, %v6857
    %v6881 = vmul.f32 %v6601, %v6857
    %v6882 = vmul.f32 %v6602, %v6857
    %v6883 = vmul.f32 %v6603, %v6857
    %v6884 = vmul.f32 %v6604, %v6857
    %v6885 = vmul.f32 %v6605, %v6857
    %v6886 = vmul.f32 %v6606, %v6857
    %v6887 = vmul.f32 %v6607, %v6857
    %v6888 = vmul.f32 %v6608, %v6857
    %v6889 = vmul.f32 %v6609, %v6857
    %v6890 = vmul.f32 %v6610, %v6857
    %v6891 = vmul.f32 %v6611, %v6857
    %v6892 = vmul.f32 %v6612, %v6857
    %v6893 = vmul.f32 %v6613, %v6857
    %v6894 = vmul.f32 %v6614, %v6857
    %v6895 = vmul.f32 %v6615, %v6857
    %v6896 = vmul.f32 %v6616, %v6857
    %v6897 = vmul.f32 %v6617, %v6857
    %v6898 = vmul.f32 %v6618, %v6857
    %v6899 = vmul.f32 %v6619, %v6857
    %v6900 = vmul.f32 %v6620, %v6857
    %v6901 = vmul.f32 %v6621, %v6857
    %v6902 = vmul.f32 %v6622, %v6857
    %v6903 = vmul.f32 %v6623, %v6857
    %v6904 = vmul.f32 %v6624, %v6857
    %v6905 = vmul.f32 %v6625, %v6857
    %v6906 = vmul.f32 %v6626, %v6857
    %v6907 = vmul.f32 %v6627, %v6857
    %v6908 = vmul.f32 %v6628, %v6857
    %v6909 = vmul.f32 %v6629, %v6857
    %v6910 = vmul.f32 %v6630, %v6857
    %v6911 = vmul.f32 %v6631, %v6857
    %v6912 = vmul.f32 %v6632, %v6857
    %v6913 = vmul.f32 %v6633, %v6857
    %v6914 = vmul.f32 %v6634, %v6857
    %v6915 = vmul.f32 %v6635, %v6857
    %v6916 = vmul.f32 %v6636, %v6857
    %v6917 = vmul.f32 %v6637, %v6857
    %v6918 = vmul.f32 %v6638, %v6857
    %v6919 = vmul.f32 %v6639, %v6857
    %v6920 = vmul.f32 %v6640, %v6857
    %v6921 = vmul.f32 %v6641, %v6857
    %v6922 = vmul.f32 %v6642, %v6857
    %v6923 = vmul.f32 %v6643, %v6857
    %v6924 = vmul.f32 %v6644, %v6857
    %v6925 = vmul.f32 %v6645, %v6857
    %v6926 = vmul.f32 %v6646, %v6857
    %v6927 = vmul.f32 %v6647, %v6857
    %v6928 = vmul.f32 %v6648, %v6857
    %v6929 = vmul.f32 %v6649, %v6857
    %v6930 = vmul.f32 %v6650, %v6857
    %v6931 = vmul.f32 %v6651, %v6857
    %v6932 = vmul.f32 %v6652, %v6857
    %v6933 = vmul.f32 %v6653, %v6857
    %v6934 = vmul.f32 %v6654, %v6857
    %v6935 = vmul.f32 %v6655, %v6857
    %v6936 = vmul.f32 %v6656, %v6857
    %v6937 = vmul.f32 %v6657, %v6857
    %v6938 = vmul.f32 %v6658, %v6862
    %v6939 = vmul.f32 %v6659, %v6862
    %v6940 = vmul.f32 %v6660, %v6862
    %v6941 = vmul.f32 %v6661, %v6862
    %v6942 = vmul.f32 %v6662, %v6862
    %v6943 = vmul.f32 %v6663, %v6862
    %v6944 = vmul.f32 %v6664, %v6862
    %v6945 = vmul.f32 %v6665, %v6862
    %v6946 = vmul.f32 %v6666, %v6862
    %v6947 = vmul.f32 %v6667, %v6862
    %v6948 = vmul.f32 %v6668, %v6862
    %v6949 = vmul.f32 %v6669, %v6862
    %v6950 = vmul.f32 %v6670, %v6862
    %v6951 = vmul.f32 %v6671, %v6862
    %v6952 = vmul.f32 %v6672, %v6862
    %v6953 = vmul.f32 %v6673, %v6862
    %v6954 = vmul.f32 %v6674, %v6862
    %v6955 = vmul.f32 %v6675, %v6862
    %v6956 = vmul.f32 %v6676, %v6862
    %v6957 = vmul.f32 %v6677, %v6862
    %v6958 = vmul.f32 %v6678, %v6862
    %v6959 = vmul.f32 %v6679, %v6862
    %v6960 = vmul.f32 %v6680, %v6862
    %v6961 = vmul.f32 %v6681, %v6862
    %v6962 = vmul.f32 %v6682, %v6862
    %v6963 = vmul.f32 %v6683, %v6862
    %v6964 = vmul.f32 %v6684, %v6862
    %v6965 = vmul.f32 %v6685, %v6862
    %v6966 = vmul.f32 %v6686, %v6862
    %v6967 = vmul.f32 %v6687, %v6862
    %v6968 = vmul.f32 %v6688, %v6862
    %v6969 = vmul.f32 %v6689, %v6862
    %v6970 = vmul.f32 %v6690, %v6862
    %v6971 = vmul.f32 %v6691, %v6862
    %v6972 = vmul.f32 %v6692, %v6862
    %v6973 = vmul.f32 %v6693, %v6862
    %v6974 = vmul.f32 %v6694, %v6862
    %v6975 = vmul.f32 %v6695, %v6862
    %v6976 = vmul.f32 %v6696, %v6862
    %v6977 = vmul.f32 %v6697, %v6862
    %v6978 = vmul.f32 %v6698, %v6862
    %v6979 = vmul.f32 %v6699, %v6862
    %v6980 = vmul.f32 %v6700, %v6862
    %v6981 = vmul.f32 %v6701, %v6862
    %v6982 = vmul.f32 %v6702, %v6862
    %v6983 = vmul.f32 %v6703, %v6862
    %v6984 = vmul.f32 %v6704, %v6862
    %v6985 = vmul.f32 %v6705, %v6862
    %v6986 = vmul.f32 %v6706, %v6862
    %v6987 = vmul.f32 %v6707, %v6862
    %v6988 = vmul.f32 %v6708, %v6862
    %v6989 = vmul.f32 %v6709, %v6862
    %v6990 = vmul.f32 %v6710, %v6862
    %v6991 = vmul.f32 %v6711, %v6862
    %v6992 = vmul.f32 %v6712, %v6862
    %v6993 = vmul.f32 %v6713, %v6862
    %v6994 = vmul.f32 %v6714, %v6862
    %v6995 = vmul.f32 %v6715, %v6862
    %v6996 = vmul.f32 %v6716, %v6862
    %v6997 = vmul.f32 %v6717, %v6862
    %v6998 = vmul.f32 %v6718, %v6862
    %v6999 = vmul.f32 %v6719, %v6862
    %v7000 = vmul.f32 %v6720, %v6862
    %v7001 = vmul.f32 %v6721, %v6862
    %v7002 = vmul.f32 %v6722, %v6867
    %v7003 = vmul.f32 %v6723, %v6867
    %v7004 = vmul.f32 %v6724, %v6867
    %v7005 = vmul.f32 %v6725, %v6867
    %v7006 = vmul.f32 %v6726, %v6867
    %v7007 = vmul.f32 %v6727, %v6867
    %v7008 = vmul.f32 %v6728, %v6867
    %v7009 = vmul.f32 %v6729, %v6867
    %v7010 = vmul.f32 %v6730, %v6867
    %v7011 = vmul.f32 %v6731, %v6867
    %v7012 = vmul.f32 %v6732, %v6867
    %v7013 = vmul.f32 %v6733, %v6867
    %v7014 = vmul.f32 %v6734, %v6867
    %v7015 = vmul.f32 %v6735, %v6867
    %v7016 = vmul.f32 %v6736, %v6867
    %v7017 = vmul.f32 %v6737, %v6867
    %v7018 = vmul.f32 %v6738, %v6867
    %v7019 = vmul.f32 %v6739, %v6867
    %v7020 = vmul.f32 %v6740, %v6867
    %v7021 = vmul.f32 %v6741, %v6867
    %v7022 = vmul.f32 %v6742, %v6867
    %v7023 = vmul.f32 %v6743, %v6867
    %v7024 = vmul.f32 %v6744, %v6867
    %v7025 = vmul.f32 %v6745, %v6867
    %v7026 = vmul.f32 %v6746, %v6867
    %v7027 = vmul.f32 %v6747, %v6867
    %v7028 = vmul.f32 %v6748, %v6867
    %v7029 = vmul.f32 %v6749, %v6867
    %v7030 = vmul.f32 %v6750, %v6867
    %v7031 = vmul.f32 %v6751, %v6867
    %v7032 = vmul.f32 %v6752, %v6867
    %v7033 = vmul.f32 %v6753, %v6867
    %v7034 = vmul.f32 %v6754, %v6867
    %v7035 = vmul.f32 %v6755, %v6867
    %v7036 = vmul.f32 %v6756, %v6867
    %v7037 = vmul.f32 %v6757, %v6867
    %v7038 = vmul.f32 %v6758, %v6867
    %v7039 = vmul.f32 %v6759, %v6867
    %v7040 = vmul.f32 %v6760, %v6867
    %v7041 = vmul.f32 %v6761, %v6867
    %v7042 = vmul.f32 %v6762, %v6867
    %v7043 = vmul.f32 %v6763, %v6867
    %v7044 = vmul.f32 %v6764, %v6867
    %v7045 = vmul.f32 %v6765, %v6867
    %v7046 = vmul.f32 %v6766, %v6867
    %v7047 = vmul.f32 %v6767, %v6867
    %v7048 = vmul.f32 %v6768, %v6867
    %v7049 = vmul.f32 %v6769, %v6867
    %v7050 = vmul.f32 %v6770, %v6867
    %v7051 = vmul.f32 %v6771, %v6867
    %v7052 = vmul.f32 %v6772, %v6867
    %v7053 = vmul.f32 %v6773, %v6867
    %v7054 = vmul.f32 %v6774, %v6867
    %v7055 = vmul.f32 %v6775, %v6867
    %v7056 = vmul.f32 %v6776, %v6867
    %v7057 = vmul.f32 %v6777, %v6867
    %v7058 = vmul.f32 %v6778, %v6867
    %v7059 = vmul.f32 %v6779, %v6867
    %v7060 = vmul.f32 %v6780, %v6867
    %v7061 = vmul.f32 %v6781, %v6867
    %v7062 = vmul.f32 %v6782, %v6867
    %v7063 = vmul.f32 %v6783, %v6867
    %v7064 = vmul.f32 %v6784, %v6867
    %v7065 = vmul.f32 %v6785, %v6867
    %v7066 = vmul.f32 %v6786, %v6872
    %v7067 = vmul.f32 %v6787, %v6872
    %v7068 = vmul.f32 %v6788, %v6872
    %v7069 = vmul.f32 %v6789, %v6872
    %v7070 = vmul.f32 %v6790, %v6872
    %v7071 = vmul.f32 %v6791, %v6872
    %v7072 = vmul.f32 %v6792, %v6872
    %v7073 = vmul.f32 %v6793, %v6872
    %v7074 = vmul.f32 %v6794, %v6872
    %v7075 = vmul.f32 %v6795, %v6872
    %v7076 = vmul.f32 %v6796, %v6872
    %v7077 = vmul.f32 %v6797, %v6872
    %v7078 = vmul.f32 %v6798, %v6872
    %v7079 = vmul.f32 %v6799, %v6872
    %v7080 = vmul.f32 %v6800, %v6872
    %v7081 = vmul.f32 %v6801, %v6872
    %v7082 = vmul.f32 %v6802, %v6872
    %v7083 = vmul.f32 %v6803, %v6872
    %v7084 = vmul.f32 %v6804, %v6872
    %v7085 = vmul.f32 %v6805, %v6872
    %v7086 = vmul.f32 %v6806, %v6872
    %v7087 = vmul.f32 %v6807, %v6872
    %v7088 = vmul.f32 %v6808, %v6872
    %v7089 = vmul.f32 %v6809, %v6872
    %v7090 = vmul.f32 %v6810, %v6872
    %v7091 = vmul.f32 %v6811, %v6872
    %v7092 = vmul.f32 %v6812, %v6872
    %v7093 = vmul.f32 %v6813, %v6872
    %v7094 = vmul.f32 %v6814, %v6872
    %v7095 = vmul.f32 %v6815, %v6872
    %v7096 = vmul.f32 %v6816, %v6872
    %v7097 = vmul.f32 %v6817, %v6872
    %v7098 = vmul.f32 %v6818, %v6872
    %v7099 = vmul.f32 %v6819, %v6872
    %v7100 = vmul.f32 %v6820, %v6872
    %v7101 = vmul.f32 %v6821, %v6872
    %v7102 = vmul.f32 %v6822, %v6872
    %v7103 = vmul.f32 %v6823, %v6872
    %v7104 = vmul.f32 %v6824, %v6872
    %v7105 = vmul.f32 %v6825, %v6872
    %v7106 = vmul.f32 %v6826, %v6872
    %v7107 = vmul.f32 %v6827, %v6872
    %v7108 = vmul.f32 %v6828, %v6872
    %v7109 = vmul.f32 %v6829, %v6872
    %v7110 = vmul.f32 %v6830, %v6872
    %v7111 = vmul.f32 %v6831, %v6872
    %v7112 = vmul.f32 %v6832, %v6872
    %v7113 = vmul.f32 %v6833, %v6872
    %v7114 = vmul.f32 %v6834, %v6872
    %v7115 = vmul.f32 %v6835, %v6872
    %v7116 = vmul.f32 %v6836, %v6872
    %v7117 = vmul.f32 %v6837, %v6872
    %v7118 = vmul.f32 %v6838, %v6872
    %v7119 = vmul.f32 %v6839, %v6872
    %v7120 = vmul.f32 %v6840, %v6872
    %v7121 = vmul.f32 %v6841, %v6872
    %v7122 = vmul.f32 %v6842, %v6872
    %v7123 = vmul.f32 %v6843, %v6872
    %v7124 = vmul.f32 %v6844, %v6872
    %v7125 = vmul.f32 %v6845, %v6872
    %v7126 = vmul.f32 %v6846, %v6872
    %v7127 = vmul.f32 %v6847, %v6872
    %v7128 = vmul.f32 %v6848, %v6872
    %v7129 = vmul.f32 %v6849, %v6872
    %v7130 = vadd.f32 %v6874, %v6938
    %v7131 = vadd.f32 %v7130, %v7002
    %v7132 = vadd.f32 %v7131, %v7066
    %v7133 = vrot.slane %v7132, 4
    %v7134 = vadd.f32 %v7132, %v7133
    %v7135 = vrot.slane %v7134, 2
    %v7136 = vadd.f32 %v7134, %v7135
    %v7137 = vrot.slane %v7136, 1
    %v7138 = vadd.f32 %v7136, %v7137
    %v7139 = vadd.f32 %v6875, %v6939
    %v7140 = vadd.f32 %v7139, %v7003
    %v7141 = vadd.f32 %v7140, %v7067
    %v7142 = vrot.slane %v7141, 4
    %v7143 = vadd.f32 %v7141, %v7142
    %v7144 = vrot.slane %v7143, 2
    %v7145 = vadd.f32 %v7143, %v7144
    %v7146 = vrot.slane %v7145, 1
    %v7147 = vadd.f32 %v7145, %v7146
    %v7148 = vadd.f32 %v6876, %v6940
    %v7149 = vadd.f32 %v7148, %v7004
    %v7150 = vadd.f32 %v7149, %v7068
    %v7151 = vrot.slane %v7150, 4
    %v7152 = vadd.f32 %v7150, %v7151
    %v7153 = vrot.slane %v7152, 2
    %v7154 = vadd.f32 %v7152, %v7153
    %v7155 = vrot.slane %v7154, 1
    %v7156 = vadd.f32 %v7154, %v7155
    %v7157 = vadd.f32 %v6877, %v6941
    %v7158 = vadd.f32 %v7157, %v7005
    %v7159 = vadd.f32 %v7158, %v7069
    %v7160 = vrot.slane %v7159, 4
    %v7161 = vadd.f32 %v7159, %v7160
    %v7162 = vrot.slane %v7161, 2
    %v7163 = vadd.f32 %v7161, %v7162
    %v7164 = vrot.slane %v7163, 1
    %v7165 = vadd.f32 %v7163, %v7164
    %v7166 = vadd.f32 %v6878, %v6942
    %v7167 = vadd.f32 %v7166, %v7006
    %v7168 = vadd.f32 %v7167, %v7070
    %v7169 = vrot.slane %v7168, 4
    %v7170 = vadd.f32 %v7168, %v7169
    %v7171 = vrot.slane %v7170, 2
    %v7172 = vadd.f32 %v7170, %v7171
    %v7173 = vrot.slane %v7172, 1
    %v7174 = vadd.f32 %v7172, %v7173
    %v7175 = vadd.f32 %v6879, %v6943
    %v7176 = vadd.f32 %v7175, %v7007
    %v7177 = vadd.f32 %v7176, %v7071
    %v7178 = vrot.slane %v7177, 4
    %v7179 = vadd.f32 %v7177, %v7178
    %v7180 = vrot.slane %v7179, 2
    %v7181 = vadd.f32 %v7179, %v7180
    %v7182 = vrot.slane %v7181, 1
    %v7183 = vadd.f32 %v7181, %v7182
    %v7184 = vadd.f32 %v6880, %v6944
    %v7185 = vadd.f32 %v7184, %v7008
    %v7186 = vadd.f32 %v7185, %v7072
    %v7187 = vrot.slane %v7186, 4
    %v7188 = vadd.f32 %v7186, %v7187
    %v7189 = vrot.slane %v7188, 2
    %v7190 = vadd.f32 %v7188, %v7189
    %v7191 = vrot.slane %v7190, 1
    %v7192 = vadd.f32 %v7190, %v7191
    %v7193 = vadd.f32 %v6881, %v6945
    %v7194 = vadd.f32 %v7193, %v7009
    %v7195 = vadd.f32 %v7194, %v7073
    %v7196 = vrot.slane %v7195, 4
    %v7197 = vadd.f32 %v7195, %v7196
    %v7198 = vrot.slane %v7197, 2
    %v7199 = vadd.f32 %v7197, %v7198
    %v7200 = vrot.slane %v7199, 1
    %v7201 = vadd.f32 %v7199, %v7200
    %v7202 = vadd.f32 %v6882, %v6946
    %v7203 = vadd.f32 %v7202, %v7010
    %v7204 = vadd.f32 %v7203, %v7074
    %v7205 = vrot.slane %v7204, 4
    %v7206 = vadd.f32 %v7204, %v7205
    %v7207 = vrot.slane %v7206, 2
    %v7208 = vadd.f32 %v7206, %v7207
    %v7209 = vrot.slane %v7208, 1
    %v7210 = vadd.f32 %v7208, %v7209
    %v7211 = vadd.f32 %v6883, %v6947
    %v7212 = vadd.f32 %v7211, %v7011
    %v7213 = vadd.f32 %v7212, %v7075
    %v7214 = vrot.slane %v7213, 4
    %v7215 = vadd.f32 %v7213, %v7214
    %v7216 = vrot.slane %v7215, 2
    %v7217 = vadd.f32 %v7215, %v7216
    %v7218 = vrot.slane %v7217, 1
    %v7219 = vadd.f32 %v7217, %v7218
    %v7220 = vadd.f32 %v6884, %v6948
    %v7221 = vadd.f32 %v7220, %v7012
    %v7222 = vadd.f32 %v7221, %v7076
    %v7223 = vrot.slane %v7222, 4
    %v7224 = vadd.f32 %v7222, %v7223
    %v7225 = vrot.slane %v7224, 2
    %v7226 = vadd.f32 %v7224, %v7225
    %v7227 = vrot.slane %v7226, 1
    %v7228 = vadd.f32 %v7226, %v7227
    %v7229 = vadd.f32 %v6885, %v6949
    %v7230 = vadd.f32 %v7229, %v7013
    %v7231 = vadd.f32 %v7230, %v7077
    %v7232 = vrot.slane %v7231, 4
    %v7233 = vadd.f32 %v7231, %v7232
    %v7234 = vrot.slane %v7233, 2
    %v7235 = vadd.f32 %v7233, %v7234
    %v7236 = vrot.slane %v7235, 1
    %v7237 = vadd.f32 %v7235, %v7236
    %v7238 = vadd.f32 %v6886, %v6950
    %v7239 = vadd.f32 %v7238, %v7014
    %v7240 = vadd.f32 %v7239, %v7078
    %v7241 = vrot.slane %v7240, 4
    %v7242 = vadd.f32 %v7240, %v7241
    %v7243 = vrot.slane %v7242, 2
    %v7244 = vadd.f32 %v7242, %v7243
    %v7245 = vrot.slane %v7244, 1
    %v7246 = vadd.f32 %v7244, %v7245
    %v7247 = vadd.f32 %v6887, %v6951
    %v7248 = vadd.f32 %v7247, %v7015
    %v7249 = vadd.f32 %v7248, %v7079
    %v7250 = vrot.slane %v7249, 4
    %v7251 = vadd.f32 %v7249, %v7250
    %v7252 = vrot.slane %v7251, 2
    %v7253 = vadd.f32 %v7251, %v7252
    %v7254 = vrot.slane %v7253, 1
    %v7255 = vadd.f32 %v7253, %v7254
    %v7256 = vadd.f32 %v6888, %v6952
    %v7257 = vadd.f32 %v7256, %v7016
    %v7258 = vadd.f32 %v7257, %v7080
    %v7259 = vrot.slane %v7258, 4
    %v7260 = vadd.f32 %v7258, %v7259
    %v7261 = vrot.slane %v7260, 2
    %v7262 = vadd.f32 %v7260, %v7261
    %v7263 = vrot.slane %v7262, 1
    %v7264 = vadd.f32 %v7262, %v7263
    %v7265 = vadd.f32 %v6889, %v6953
    %v7266 = vadd.f32 %v7265, %v7017
    %v7267 = vadd.f32 %v7266, %v7081
    %v7268 = vrot.slane %v7267, 4
    %v7269 = vadd.f32 %v7267, %v7268
    %v7270 = vrot.slane %v7269, 2
    %v7271 = vadd.f32 %v7269, %v7270
    %v7272 = vrot.slane %v7271, 1
    %v7273 = vadd.f32 %v7271, %v7272
    %v7274 = vadd.f32 %v6890, %v6954
    %v7275 = vadd.f32 %v7274, %v7018
    %v7276 = vadd.f32 %v7275, %v7082
    %v7277 = vrot.slane %v7276, 4
    %v7278 = vadd.f32 %v7276, %v7277
    %v7279 = vrot.slane %v7278, 2
    %v7280 = vadd.f32 %v7278, %v7279
    %v7281 = vrot.slane %v7280, 1
    %v7282 = vadd.f32 %v7280, %v7281
    %v7283 = vadd.f32 %v6891, %v6955
    %v7284 = vadd.f32 %v7283, %v7019
    %v7285 = vadd.f32 %v7284, %v7083
    %v7286 = vrot.slane %v7285, 4
    %v7287 = vadd.f32 %v7285, %v7286
    %v7288 = vrot.slane %v7287, 2
    %v7289 = vadd.f32 %v7287, %v7288
    %v7290 = vrot.slane %v7289, 1
    %v7291 = vadd.f32 %v7289, %v7290
    %v7292 = vadd.f32 %v6892, %v6956
    %v7293 = vadd.f32 %v7292, %v7020
    %v7294 = vadd.f32 %v7293, %v7084
    %v7295 = vrot.slane %v7294, 4
    %v7296 = vadd.f32 %v7294, %v7295
    %v7297 = vrot.slane %v7296, 2
    %v7298 = vadd.f32 %v7296, %v7297
    %v7299 = vrot.slane %v7298, 1
    %v7300 = vadd.f32 %v7298, %v7299
    %v7301 = vadd.f32 %v6893, %v6957
    %v7302 = vadd.f32 %v7301, %v7021
    %v7303 = vadd.f32 %v7302, %v7085
    %v7304 = vrot.slane %v7303, 4
    %v7305 = vadd.f32 %v7303, %v7304
    %v7306 = vrot.slane %v7305, 2
    %v7307 = vadd.f32 %v7305, %v7306
    %v7308 = vrot.slane %v7307, 1
    %v7309 = vadd.f32 %v7307, %v7308
    %v7310 = vadd.f32 %v6894, %v6958
    %v7311 = vadd.f32 %v7310, %v7022
    %v7312 = vadd.f32 %v7311, %v7086
    %v7313 = vrot.slane %v7312, 4
    %v7314 = vadd.f32 %v7312, %v7313
    %v7315 = vrot.slane %v7314, 2
    %v7316 = vadd.f32 %v7314, %v7315
    %v7317 = vrot.slane %v7316, 1
    %v7318 = vadd.f32 %v7316, %v7317
    %v7319 = vadd.f32 %v6895, %v6959
    %v7320 = vadd.f32 %v7319, %v7023
    %v7321 = vadd.f32 %v7320, %v7087
    %v7322 = vrot.slane %v7321, 4
    %v7323 = vadd.f32 %v7321, %v7322
    %v7324 = vrot.slane %v7323, 2
    %v7325 = vadd.f32 %v7323, %v7324
    %v7326 = vrot.slane %v7325, 1
    %v7327 = vadd.f32 %v7325, %v7326
    %v7328 = vadd.f32 %v6896, %v6960
    %v7329 = vadd.f32 %v7328, %v7024
    %v7330 = vadd.f32 %v7329, %v7088
    %v7331 = vrot.slane %v7330, 4
    %v7332 = vadd.f32 %v7330, %v7331
    %v7333 = vrot.slane %v7332, 2
    %v7334 = vadd.f32 %v7332, %v7333
    %v7335 = vrot.slane %v7334, 1
    %v7336 = vadd.f32 %v7334, %v7335
    %v7337 = vadd.f32 %v6897, %v6961
    %v7338 = vadd.f32 %v7337, %v7025
    %v7339 = vadd.f32 %v7338, %v7089
    %v7340 = vrot.slane %v7339, 4
    %v7341 = vadd.f32 %v7339, %v7340
    %v7342 = vrot.slane %v7341, 2
    %v7343 = vadd.f32 %v7341, %v7342
    %v7344 = vrot.slane %v7343, 1
    %v7345 = vadd.f32 %v7343, %v7344
    %v7346 = vadd.f32 %v6898, %v6962
    %v7347 = vadd.f32 %v7346, %v7026
    %v7348 = vadd.f32 %v7347, %v7090
    %v7349 = vrot.slane %v7348, 4
    %v7350 = vadd.f32 %v7348, %v7349
    %v7351 = vrot.slane %v7350, 2
    %v7352 = vadd.f32 %v7350, %v7351
    %v7353 = vrot.slane %v7352, 1
    %v7354 = vadd.f32 %v7352, %v7353
    %v7355 = vadd.f32 %v6899, %v6963
    %v7356 = vadd.f32 %v7355, %v7027
    %v7357 = vadd.f32 %v7356, %v7091
    %v7358 = vrot.slane %v7357, 4
    %v7359 = vadd.f32 %v7357, %v7358
    %v7360 = vrot.slane %v7359, 2
    %v7361 = vadd.f32 %v7359, %v7360
    %v7362 = vrot.slane %v7361, 1
    %v7363 = vadd.f32 %v7361, %v7362
    %v7364 = vadd.f32 %v6900, %v6964
    %v7365 = vadd.f32 %v7364, %v7028
    %v7366 = vadd.f32 %v7365, %v7092
    %v7367 = vrot.slane %v7366, 4
    %v7368 = vadd.f32 %v7366, %v7367
    %v7369 = vrot.slane %v7368, 2
    %v7370 = vadd.f32 %v7368, %v7369
    %v7371 = vrot.slane %v7370, 1
    %v7372 = vadd.f32 %v7370, %v7371
    %v7373 = vadd.f32 %v6901, %v6965
    %v7374 = vadd.f32 %v7373, %v7029
    %v7375 = vadd.f32 %v7374, %v7093
    %v7376 = vrot.slane %v7375, 4
    %v7377 = vadd.f32 %v7375, %v7376
    %v7378 = vrot.slane %v7377, 2
    %v7379 = vadd.f32 %v7377, %v7378
    %v7380 = vrot.slane %v7379, 1
    %v7381 = vadd.f32 %v7379, %v7380
    %v7382 = vadd.f32 %v6902, %v6966
    %v7383 = vadd.f32 %v7382, %v7030
    %v7384 = vadd.f32 %v7383, %v7094
    %v7385 = vrot.slane %v7384, 4
    %v7386 = vadd.f32 %v7384, %v7385
    %v7387 = vrot.slane %v7386, 2
    %v7388 = vadd.f32 %v7386, %v7387
    %v7389 = vrot.slane %v7388, 1
    %v7390 = vadd.f32 %v7388, %v7389
    %v7391 = vadd.f32 %v6903, %v6967
    %v7392 = vadd.f32 %v7391, %v7031
    %v7393 = vadd.f32 %v7392, %v7095
    %v7394 = vrot.slane %v7393, 4
    %v7395 = vadd.f32 %v7393, %v7394
    %v7396 = vrot.slane %v7395, 2
    %v7397 = vadd.f32 %v7395, %v7396
    %v7398 = vrot.slane %v7397, 1
    %v7399 = vadd.f32 %v7397, %v7398
    %v7400 = vadd.f32 %v6904, %v6968
    %v7401 = vadd.f32 %v7400, %v7032
    %v7402 = vadd.f32 %v7401, %v7096
    %v7403 = vrot.slane %v7402, 4
    %v7404 = vadd.f32 %v7402, %v7403
    %v7405 = vrot.slane %v7404, 2
    %v7406 = vadd.f32 %v7404, %v7405
    %v7407 = vrot.slane %v7406, 1
    %v7408 = vadd.f32 %v7406, %v7407
    %v7409 = vadd.f32 %v6905, %v6969
    %v7410 = vadd.f32 %v7409, %v7033
    %v7411 = vadd.f32 %v7410, %v7097
    %v7412 = vrot.slane %v7411, 4
    %v7413 = vadd.f32 %v7411, %v7412
    %v7414 = vrot.slane %v7413, 2
    %v7415 = vadd.f32 %v7413, %v7414
    %v7416 = vrot.slane %v7415, 1
    %v7417 = vadd.f32 %v7415, %v7416
    %v7418 = vadd.f32 %v6906, %v6970
    %v7419 = vadd.f32 %v7418, %v7034
    %v7420 = vadd.f32 %v7419, %v7098
    %v7421 = vrot.slane %v7420, 4
    %v7422 = vadd.f32 %v7420, %v7421
    %v7423 = vrot.slane %v7422, 2
    %v7424 = vadd.f32 %v7422, %v7423
    %v7425 = vrot.slane %v7424, 1
    %v7426 = vadd.f32 %v7424, %v7425
    %v7427 = vadd.f32 %v6907, %v6971
    %v7428 = vadd.f32 %v7427, %v7035
    %v7429 = vadd.f32 %v7428, %v7099
    %v7430 = vrot.slane %v7429, 4
    %v7431 = vadd.f32 %v7429, %v7430
    %v7432 = vrot.slane %v7431, 2
    %v7433 = vadd.f32 %v7431, %v7432
    %v7434 = vrot.slane %v7433, 1
    %v7435 = vadd.f32 %v7433, %v7434
    %v7436 = vadd.f32 %v6908, %v6972
    %v7437 = vadd.f32 %v7436, %v7036
    %v7438 = vadd.f32 %v7437, %v7100
    %v7439 = vrot.slane %v7438, 4
    %v7440 = vadd.f32 %v7438, %v7439
    %v7441 = vrot.slane %v7440, 2
    %v7442 = vadd.f32 %v7440, %v7441
    %v7443 = vrot.slane %v7442, 1
    %v7444 = vadd.f32 %v7442, %v7443
    %v7445 = vadd.f32 %v6909, %v6973
    %v7446 = vadd.f32 %v7445, %v7037
    %v7447 = vadd.f32 %v7446, %v7101
    %v7448 = vrot.slane %v7447, 4
    %v7449 = vadd.f32 %v7447, %v7448
    %v7450 = vrot.slane %v7449, 2
    %v7451 = vadd.f32 %v7449, %v7450
    %v7452 = vrot.slane %v7451, 1
    %v7453 = vadd.f32 %v7451, %v7452
    %v7454 = vadd.f32 %v6910, %v6974
    %v7455 = vadd.f32 %v7454, %v7038
    %v7456 = vadd.f32 %v7455, %v7102
    %v7457 = vrot.slane %v7456, 4
    %v7458 = vadd.f32 %v7456, %v7457
    %v7459 = vrot.slane %v7458, 2
    %v7460 = vadd.f32 %v7458, %v7459
    %v7461 = vrot.slane %v7460, 1
    %v7462 = vadd.f32 %v7460, %v7461
    %v7463 = vadd.f32 %v6911, %v6975
    %v7464 = vadd.f32 %v7463, %v7039
    %v7465 = vadd.f32 %v7464, %v7103
    %v7466 = vrot.slane %v7465, 4
    %v7467 = vadd.f32 %v7465, %v7466
    %v7468 = vrot.slane %v7467, 2
    %v7469 = vadd.f32 %v7467, %v7468
    %v7470 = vrot.slane %v7469, 1
    %v7471 = vadd.f32 %v7469, %v7470
    %v7472 = vadd.f32 %v6912, %v6976
    %v7473 = vadd.f32 %v7472, %v7040
    %v7474 = vadd.f32 %v7473, %v7104
    %v7475 = vrot.slane %v7474, 4
    %v7476 = vadd.f32 %v7474, %v7475
    %v7477 = vrot.slane %v7476, 2
    %v7478 = vadd.f32 %v7476, %v7477
    %v7479 = vrot.slane %v7478, 1
    %v7480 = vadd.f32 %v7478, %v7479
    %v7481 = vadd.f32 %v6913, %v6977
    %v7482 = vadd.f32 %v7481, %v7041
    %v7483 = vadd.f32 %v7482, %v7105
    %v7484 = vrot.slane %v7483, 4
    %v7485 = vadd.f32 %v7483, %v7484
    %v7486 = vrot.slane %v7485, 2
    %v7487 = vadd.f32 %v7485, %v7486
    %v7488 = vrot.slane %v7487, 1
    %v7489 = vadd.f32 %v7487, %v7488
    %v7490 = vadd.f32 %v6914, %v6978
    %v7491 = vadd.f32 %v7490, %v7042
    %v7492 = vadd.f32 %v7491, %v7106
    %v7493 = vrot.slane %v7492, 4
    %v7494 = vadd.f32 %v7492, %v7493
    %v7495 = vrot.slane %v7494, 2
    %v7496 = vadd.f32 %v7494, %v7495
    %v7497 = vrot.slane %v7496, 1
    %v7498 = vadd.f32 %v7496, %v7497
    %v7499 = vadd.f32 %v6915, %v6979
    %v7500 = vadd.f32 %v7499, %v7043
    %v7501 = vadd.f32 %v7500, %v7107
    %v7502 = vrot.slane %v7501, 4
    %v7503 = vadd.f32 %v7501, %v7502
    %v7504 = vrot.slane %v7503, 2
    %v7505 = vadd.f32 %v7503, %v7504
    %v7506 = vrot.slane %v7505, 1
    %v7507 = vadd.f32 %v7505, %v7506
    %v7508 = vadd.f32 %v6916, %v6980
    %v7509 = vadd.f32 %v7508, %v7044
    %v7510 = vadd.f32 %v7509, %v7108
    %v7511 = vrot.slane %v7510, 4
    %v7512 = vadd.f32 %v7510, %v7511
    %v7513 = vrot.slane %v7512, 2
    %v7514 = vadd.f32 %v7512, %v7513
    %v7515 = vrot.slane %v7514, 1
    %v7516 = vadd.f32 %v7514, %v7515
    %v7517 = vadd.f32 %v6917, %v6981
    %v7518 = vadd.f32 %v7517, %v7045
    %v7519 = vadd.f32 %v7518, %v7109
    %v7520 = vrot.slane %v7519, 4
    %v7521 = vadd.f32 %v7519, %v7520
    %v7522 = vrot.slane %v7521, 2
    %v7523 = vadd.f32 %v7521, %v7522
    %v7524 = vrot.slane %v7523, 1
    %v7525 = vadd.f32 %v7523, %v7524
    %v7526 = vadd.f32 %v6918, %v6982
    %v7527 = vadd.f32 %v7526, %v7046
    %v7528 = vadd.f32 %v7527, %v7110
    %v7529 = vrot.slane %v7528, 4
    %v7530 = vadd.f32 %v7528, %v7529
    %v7531 = vrot.slane %v7530, 2
    %v7532 = vadd.f32 %v7530, %v7531
    %v7533 = vrot.slane %v7532, 1
    %v7534 = vadd.f32 %v7532, %v7533
    %v7535 = vadd.f32 %v6919, %v6983
    %v7536 = vadd.f32 %v7535, %v7047
    %v7537 = vadd.f32 %v7536, %v7111
    %v7538 = vrot.slane %v7537, 4
    %v7539 = vadd.f32 %v7537, %v7538
    %v7540 = vrot.slane %v7539, 2
    %v7541 = vadd.f32 %v7539, %v7540
    %v7542 = vrot.slane %v7541, 1
    %v7543 = vadd.f32 %v7541, %v7542
    %v7544 = vadd.f32 %v6920, %v6984
    %v7545 = vadd.f32 %v7544, %v7048
    %v7546 = vadd.f32 %v7545, %v7112
    %v7547 = vrot.slane %v7546, 4
    %v7548 = vadd.f32 %v7546, %v7547
    %v7549 = vrot.slane %v7548, 2
    %v7550 = vadd.f32 %v7548, %v7549
    %v7551 = vrot.slane %v7550, 1
    %v7552 = vadd.f32 %v7550, %v7551
    %v7553 = vadd.f32 %v6921, %v6985
    %v7554 = vadd.f32 %v7553, %v7049
    %v7555 = vadd.f32 %v7554, %v7113
    %v7556 = vrot.slane %v7555, 4
    %v7557 = vadd.f32 %v7555, %v7556
    %v7558 = vrot.slane %v7557, 2
    %v7559 = vadd.f32 %v7557, %v7558
    %v7560 = vrot.slane %v7559, 1
    %v7561 = vadd.f32 %v7559, %v7560
    %v7562 = vadd.f32 %v6922, %v6986
    %v7563 = vadd.f32 %v7562, %v7050
    %v7564 = vadd.f32 %v7563, %v7114
    %v7565 = vrot.slane %v7564, 4
    %v7566 = vadd.f32 %v7564, %v7565
    %v7567 = vrot.slane %v7566, 2
    %v7568 = vadd.f32 %v7566, %v7567
    %v7569 = vrot.slane %v7568, 1
    %v7570 = vadd.f32 %v7568, %v7569
    %v7571 = vadd.f32 %v6923, %v6987
    %v7572 = vadd.f32 %v7571, %v7051
    %v7573 = vadd.f32 %v7572, %v7115
    %v7574 = vrot.slane %v7573, 4
    %v7575 = vadd.f32 %v7573, %v7574
    %v7576 = vrot.slane %v7575, 2
    %v7577 = vadd.f32 %v7575, %v7576
    %v7578 = vrot.slane %v7577, 1
    %v7579 = vadd.f32 %v7577, %v7578
    %v7580 = vadd.f32 %v6924, %v6988
    %v7581 = vadd.f32 %v7580, %v7052
    %v7582 = vadd.f32 %v7581, %v7116
    %v7583 = vrot.slane %v7582, 4
    %v7584 = vadd.f32 %v7582, %v7583
    %v7585 = vrot.slane %v7584, 2
    %v7586 = vadd.f32 %v7584, %v7585
    %v7587 = vrot.slane %v7586, 1
    %v7588 = vadd.f32 %v7586, %v7587
    %v7589 = vadd.f32 %v6925, %v6989
    %v7590 = vadd.f32 %v7589, %v7053
    %v7591 = vadd.f32 %v7590, %v7117
    %v7592 = vrot.slane %v7591, 4
    %v7593 = vadd.f32 %v7591, %v7592
    %v7594 = vrot.slane %v7593, 2
    %v7595 = vadd.f32 %v7593, %v7594
    %v7596 = vrot.slane %v7595, 1
    %v7597 = vadd.f32 %v7595, %v7596
    %v7598 = vadd.f32 %v6926, %v6990
    %v7599 = vadd.f32 %v7598, %v7054
    %v7600 = vadd.f32 %v7599, %v7118
    %v7601 = vrot.slane %v7600, 4
    %v7602 = vadd.f32 %v7600, %v7601
    %v7603 = vrot.slane %v7602, 2
    %v7604 = vadd.f32 %v7602, %v7603
    %v7605 = vrot.slane %v7604, 1
    %v7606 = vadd.f32 %v7604, %v7605
    %v7607 = vadd.f32 %v6927, %v6991
    %v7608 = vadd.f32 %v7607, %v7055
    %v7609 = vadd.f32 %v7608, %v7119
    %v7610 = vrot.slane %v7609, 4
    %v7611 = vadd.f32 %v7609, %v7610
    %v7612 = vrot.slane %v7611, 2
    %v7613 = vadd.f32 %v7611, %v7612
    %v7614 = vrot.slane %v7613, 1
    %v7615 = vadd.f32 %v7613, %v7614
    %v7616 = vadd.f32 %v6928, %v6992
    %v7617 = vadd.f32 %v7616, %v7056
    %v7618 = vadd.f32 %v7617, %v7120
    %v7619 = vrot.slane %v7618, 4
    %v7620 = vadd.f32 %v7618, %v7619
    %v7621 = vrot.slane %v7620, 2
    %v7622 = vadd.f32 %v7620, %v7621
    %v7623 = vrot.slane %v7622, 1
    %v7624 = vadd.f32 %v7622, %v7623
    %v7625 = vadd.f32 %v6929, %v6993
    %v7626 = vadd.f32 %v7625, %v7057
    %v7627 = vadd.f32 %v7626, %v7121
    %v7628 = vrot.slane %v7627, 4
    %v7629 = vadd.f32 %v7627, %v7628
    %v7630 = vrot.slane %v7629, 2
    %v7631 = vadd.f32 %v7629, %v7630
    %v7632 = vrot.slane %v7631, 1
    %v7633 = vadd.f32 %v7631, %v7632
    %v7634 = vadd.f32 %v6930, %v6994
    %v7635 = vadd.f32 %v7634, %v7058
    %v7636 = vadd.f32 %v7635, %v7122
    %v7637 = vrot.slane %v7636, 4
    %v7638 = vadd.f32 %v7636, %v7637
    %v7639 = vrot.slane %v7638, 2
    %v7640 = vadd.f32 %v7638, %v7639
    %v7641 = vrot.slane %v7640, 1
    %v7642 = vadd.f32 %v7640, %v7641
    %v7643 = vadd.f32 %v6931, %v6995
    %v7644 = vadd.f32 %v7643, %v7059
    %v7645 = vadd.f32 %v7644, %v7123
    %v7646 = vrot.slane %v7645, 4
    %v7647 = vadd.f32 %v7645, %v7646
    %v7648 = vrot.slane %v7647, 2
    %v7649 = vadd.f32 %v7647, %v7648
    %v7650 = vrot.slane %v7649, 1
    %v7651 = vadd.f32 %v7649, %v7650
    %v7652 = vadd.f32 %v6932, %v6996
    %v7653 = vadd.f32 %v7652, %v7060
    %v7654 = vadd.f32 %v7653, %v7124
    %v7655 = vrot.slane %v7654, 4
    %v7656 = vadd.f32 %v7654, %v7655
    %v7657 = vrot.slane %v7656, 2
    %v7658 = vadd.f32 %v7656, %v7657
    %v7659 = vrot.slane %v7658, 1
    %v7660 = vadd.f32 %v7658, %v7659
    %v7661 = vadd.f32 %v6933, %v6997
    %v7662 = vadd.f32 %v7661, %v7061
    %v7663 = vadd.f32 %v7662, %v7125
    %v7664 = vrot.slane %v7663, 4
    %v7665 = vadd.f32 %v7663, %v7664
    %v7666 = vrot.slane %v7665, 2
    %v7667 = vadd.f32 %v7665, %v7666
    %v7668 = vrot.slane %v7667, 1
    %v7669 = vadd.f32 %v7667, %v7668
    %v7670 = vadd.f32 %v6934, %v6998
    %v7671 = vadd.f32 %v7670, %v7062
    %v7672 = vadd.f32 %v7671, %v7126
    %v7673 = vrot.slane %v7672, 4
    %v7674 = vadd.f32 %v7672, %v7673
    %v7675 = vrot.slane %v7674, 2
    %v7676 = vadd.f32 %v7674, %v7675
    %v7677 = vrot.slane %v7676, 1
    %v7678 = vadd.f32 %v7676, %v7677
    %v7679 = vadd.f32 %v6935, %v6999
    %v7680 = vadd.f32 %v7679, %v7063
    %v7681 = vadd.f32 %v7680, %v7127
    %v7682 = vrot.slane %v7681, 4
    %v7683 = vadd.f32 %v7681, %v7682
    %v7684 = vrot.slane %v7683, 2
    %v7685 = vadd.f32 %v7683, %v7684
    %v7686 = vrot.slane %v7685, 1
    %v7687 = vadd.f32 %v7685, %v7686
    %v7688 = vadd.f32 %v6936, %v7000
    %v7689 = vadd.f32 %v7688, %v7064
    %v7690 = vadd.f32 %v7689, %v7128
    %v7691 = vrot.slane %v7690, 4
    %v7692 = vadd.f32 %v7690, %v7691
    %v7693 = vrot.slane %v7692, 2
    %v7694 = vadd.f32 %v7692, %v7693
    %v7695 = vrot.slane %v7694, 1
    %v7696 = vadd.f32 %v7694, %v7695
    %v7697 = vadd.f32 %v6937, %v7001
    %v7698 = vadd.f32 %v7697, %v7065
    %v7699 = vadd.f32 %v7698, %v7129
    %v7700 = vrot.slane %v7699, 4
    %v7701 = vadd.f32 %v7699, %v7700
    %v7702 = vrot.slane %v7701, 2
    %v7703 = vadd.f32 %v7701, %v7702
    %v7704 = vrot.slane %v7703, 1
    %v7705 = vadd.f32 %v7703, %v7704
    %v7706 = vld [vmem:[#allocation2] sm:$0x1]
    %7708 = vset.pattern.permute.xlu0 0
    %7709 = vperm.xlu0 %7708, %v7706
    %v7710 = vpop.permute.xlu0 %7709
    %v7712 = vlaneseq
    %v7713 = vshrl.u32 %v7712, 7
    %v7714 = vsub.s32 0, %v7713
    %v7715 = vrot.slane %v7710, %v7714
    %v7716 = vadd.f32 %v7138, %v7715
    %v7717 = vadd.f32 %v7147, %v7715
    %v7718 = vadd.f32 %v7156, %v7715
    %v7719 = vadd.f32 %v7165, %v7715
    %v7720 = vadd.f32 %v7174, %v7715
    %v7721 = vadd.f32 %v7183, %v7715
    %v7722 = vadd.f32 %v7192, %v7715
    %v7723 = vadd.f32 %v7201, %v7715
    %v7724 = vadd.f32 %v7210, %v7715
    %v7725 = vadd.f32 %v7219, %v7715
    %v7726 = vadd.f32 %v7228, %v7715
    %v7727 = vadd.f32 %v7237, %v7715
    %v7728 = vadd.f32 %v7246, %v7715
    %v7729 = vadd.f32 %v7255, %v7715
    %v7730 = vadd.f32 %v7264, %v7715
    %v7731 = vadd.f32 %v7273, %v7715
    %v7732 = vadd.f32 %v7282, %v7715
    %v7733 = vadd.f32 %v7291, %v7715
    %v7734 = vadd.f32 %v7300, %v7715
    %v7735 = vadd.f32 %v7309, %v7715
    %v7736 = vadd.f32 %v7318, %v7715
    %v7737 = vadd.f32 %v7327, %v7715
    %v7738 = vadd.f32 %v7336, %v7715
    %v7739 = vadd.f32 %v7345, %v7715
    %v7740 = vadd.f32 %v7354, %v7715
    %v7741 = vadd.f32 %v7363, %v7715
    %v7742 = vadd.f32 %v7372, %v7715
    %v7743 = vadd.f32 %v7381, %v7715
    %v7744 = vadd.f32 %v7390, %v7715
    %v7745 = vadd.f32 %v7399, %v7715
    %v7746 = vadd.f32 %v7408, %v7715
    %v7747 = vadd.f32 %v7417, %v7715
    %v7748 = vadd.f32 %v7426, %v7715
    %v7749 = vadd.f32 %v7435, %v7715
    %v7750 = vadd.f32 %v7444, %v7715
    %v7751 = vadd.f32 %v7453, %v7715
    %v7752 = vadd.f32 %v7462, %v7715
    %v7753 = vadd.f32 %v7471, %v7715
    %v7754 = vadd.f32 %v7480, %v7715
    %v7755 = vadd.f32 %v7489, %v7715
    %v7756 = vadd.f32 %v7498, %v7715
    %v7757 = vadd.f32 %v7507, %v7715
    %v7758 = vadd.f32 %v7516, %v7715
    %v7759 = vadd.f32 %v7525, %v7715
    %v7760 = vadd.f32 %v7534, %v7715
    %v7761 = vadd.f32 %v7543, %v7715
    %v7762 = vadd.f32 %v7552, %v7715
    %v7763 = vadd.f32 %v7561, %v7715
    %v7764 = vadd.f32 %v7570, %v7715
    %v7765 = vadd.f32 %v7579, %v7715
    %v7766 = vadd.f32 %v7588, %v7715
    %v7767 = vadd.f32 %v7597, %v7715
    %v7768 = vadd.f32 %v7606, %v7715
    %v7769 = vadd.f32 %v7615, %v7715
    %v7770 = vadd.f32 %v7624, %v7715
    %v7771 = vadd.f32 %v7633, %v7715
    %v7772 = vadd.f32 %v7642, %v7715
    %v7773 = vadd.f32 %v7651, %v7715
    %v7774 = vadd.f32 %v7660, %v7715
    %v7775 = vadd.f32 %v7669, %v7715
    %v7776 = vadd.f32 %v7678, %v7715
    %v7777 = vadd.f32 %v7687, %v7715
    %v7778 = vadd.f32 %v7696, %v7715
    %v7779 = vadd.f32 %v7705, %v7715
    %v7844 = vcombine.low %v7716, %v7717
    %v7845 = vcombine.low %v7718, %v7719
    %v7846 = vcombine.low %v7720, %v7721
    %v7847 = vcombine.low %v7722, %v7723
    %v7849 = vunpack.c.l.s4 1966171168
    %v7850 = vunpack.c.0.s8 %v7849
    %v7851 = vlaneseq
    %v7852 = vshrl.u32 %v7851, 7
    %v7853 = vsub.s32 %v7850, %v7852
    %v7854 = vrot.slane %v7844, %v7853
    %v7856 = vunpack.c.l.s4 1966171168
    %v7857 = vunpack.c.0.s8 %v7856
    %v7858 = vlaneseq
    %v7859 = vshrl.u32 %v7858, 7
    %v7860 = vsub.s32 %v7857, %v7859
    %v7861 = vrot.slane %v7845, %v7860
    %v7863 = vunpack.c.l.s4 1966171168
    %v7864 = vunpack.c.0.s8 %v7863
    %v7865 = vlaneseq
    %v7866 = vshrl.u32 %v7865, 7
    %v7867 = vsub.s32 %v7864, %v7866
    %v7868 = vrot.slane %v7846, %v7867
    %v7870 = vunpack.c.l.s4 1966171168
    %v7871 = vunpack.c.0.s8 %v7870
    %v7872 = vlaneseq
    %v7873 = vshrl.u32 %v7872, 7
    %v7874 = vsub.s32 %v7871, %v7873
    %v7875 = vrot.slane %v7847, %v7874
    %v7876 = vcombine.low %v7854, %v7861
    %v7877 = vcombine.low %v7868, %v7875
    %v7879 = vunpack.c.l.s4 1966171168
    %v7880 = vunpack.c.0.s8 %v7879
    %v7881 = vlaneseq
    %v7882 = vshrl.u32 %v7881, 7
    %v7883 = vsub.s32 %v7880, %v7882
    %v7884 = vrot.slane %v7876, %v7883
    %v7886 = vunpack.c.l.s4 1966171168
    %v7887 = vunpack.c.0.s8 %v7886
    %v7888 = vlaneseq
    %v7889 = vshrl.u32 %v7888, 7
    %v7890 = vsub.s32 %v7887, %v7889
    %v7891 = vrot.slane %v7877, %v7890
    %v7892 = vcombine.low %v7884, %v7891
    %v7893 = vcombine.low %v7724, %v7725
    %v7894 = vcombine.low %v7726, %v7727
    %v7895 = vcombine.low %v7728, %v7729
    %v7896 = vcombine.low %v7730, %v7731
    %v7898 = vunpack.c.l.s4 1966171168
    %v7899 = vunpack.c.0.s8 %v7898
    %v7900 = vlaneseq
    %v7901 = vshrl.u32 %v7900, 7
    %v7902 = vsub.s32 %v7899, %v7901
    %v7903 = vrot.slane %v7893, %v7902
    %v7905 = vunpack.c.l.s4 1966171168
    %v7906 = vunpack.c.0.s8 %v7905
    %v7907 = vlaneseq
    %v7908 = vshrl.u32 %v7907, 7
    %v7909 = vsub.s32 %v7906, %v7908
    %v7910 = vrot.slane %v7894, %v7909
    %v7912 = vunpack.c.l.s4 1966171168
    %v7913 = vunpack.c.0.s8 %v7912
    %v7914 = vlaneseq
    %v7915 = vshrl.u32 %v7914, 7
    %v7916 = vsub.s32 %v7913, %v7915
    %v7917 = vrot.slane %v7895, %v7916
    %v7919 = vunpack.c.l.s4 1966171168
    %v7920 = vunpack.c.0.s8 %v7919
    %v7921 = vlaneseq
    %v7922 = vshrl.u32 %v7921, 7
    %v7923 = vsub.s32 %v7920, %v7922
    %v7924 = vrot.slane %v7896, %v7923
    %v7925 = vcombine.low %v7903, %v7910
    %v7926 = vcombine.low %v7917, %v7924
    %v7928 = vunpack.c.l.s4 1966171168
    %v7929 = vunpack.c.0.s8 %v7928
    %v7930 = vlaneseq
    %v7931 = vshrl.u32 %v7930, 7
    %v7932 = vsub.s32 %v7929, %v7931
    %v7933 = vrot.slane %v7925, %v7932
    %v7935 = vunpack.c.l.s4 1966171168
    %v7936 = vunpack.c.0.s8 %v7935
    %v7937 = vlaneseq
    %v7938 = vshrl.u32 %v7937, 7
    %v7939 = vsub.s32 %v7936, %v7938
    %v7940 = vrot.slane %v7926, %v7939
    %v7941 = vcombine.low %v7933, %v7940
    %v7942 = vcombine.low %v7732, %v7733
    %v7943 = vcombine.low %v7734, %v7735
    %v7944 = vcombine.low %v7736, %v7737
    %v7945 = vcombine.low %v7738, %v7739
    %v7947 = vunpack.c.l.s4 1966171168
    %v7948 = vunpack.c.0.s8 %v7947
    %v7949 = vlaneseq
    %v7950 = vshrl.u32 %v7949, 7
    %v7951 = vsub.s32 %v7948, %v7950
    %v7952 = vrot.slane %v7942, %v7951
    %v7954 = vunpack.c.l.s4 1966171168
    %v7955 = vunpack.c.0.s8 %v7954
    %v7956 = vlaneseq
    %v7957 = vshrl.u32 %v7956, 7
    %v7958 = vsub.s32 %v7955, %v7957
    %v7959 = vrot.slane %v7943, %v7958
    %v7961 = vunpack.c.l.s4 1966171168
    %v7962 = vunpack.c.0.s8 %v7961
    %v7963 = vlaneseq
    %v7964 = vshrl.u32 %v7963, 7
    %v7965 = vsub.s32 %v7962, %v7964
    %v7966 = vrot.slane %v7944, %v7965
    %v7968 = vunpack.c.l.s4 1966171168
    %v7969 = vunpack.c.0.s8 %v7968
    %v7970 = vlaneseq
    %v7971 = vshrl.u32 %v7970, 7
    %v7972 = vsub.s32 %v7969, %v7971
    %v7973 = vrot.slane %v7945, %v7972
    %v7974 = vcombine.low %v7952, %v7959
    %v7975 = vcombine.low %v7966, %v7973
    %v7977 = vunpack.c.l.s4 1966171168
    %v7978 = vunpack.c.0.s8 %v7977
    %v7979 = vlaneseq
    %v7980 = vshrl.u32 %v7979, 7
    %v7981 = vsub.s32 %v7978, %v7980
    %v7982 = vrot.slane %v7974, %v7981
    %v7984 = vunpack.c.l.s4 1966171168
    %v7985 = vunpack.c.0.s8 %v7984
    %v7986 = vlaneseq
    %v7987 = vshrl.u32 %v7986, 7
    %v7988 = vsub.s32 %v7985, %v7987
    %v7989 = vrot.slane %v7975, %v7988
    %v7990 = vcombine.low %v7982, %v7989
    %v7991 = vcombine.low %v7740, %v7741
    %v7992 = vcombine.low %v7742, %v7743
    %v7993 = vcombine.low %v7744, %v7745
    %v7994 = vcombine.low %v7746, %v7747
    %v7996 = vunpack.c.l.s4 1966171168
    %v7997 = vunpack.c.0.s8 %v7996
    %v7998 = vlaneseq
    %v7999 = vshrl.u32 %v7998, 7
    %v8000 = vsub.s32 %v7997, %v7999
    %v8001 = vrot.slane %v7991, %v8000
    %v8003 = vunpack.c.l.s4 1966171168
    %v8004 = vunpack.c.0.s8 %v8003
    %v8005 = vlaneseq
    %v8006 = vshrl.u32 %v8005, 7
    %v8007 = vsub.s32 %v8004, %v8006
    %v8008 = vrot.slane %v7992, %v8007
    %v8010 = vunpack.c.l.s4 1966171168
    %v8011 = vunpack.c.0.s8 %v8010
    %v8012 = vlaneseq
    %v8013 = vshrl.u32 %v8012, 7
    %v8014 = vsub.s32 %v8011, %v8013
    %v8015 = vrot.slane %v7993, %v8014
    %v8017 = vunpack.c.l.s4 1966171168
    %v8018 = vunpack.c.0.s8 %v8017
    %v8019 = vlaneseq
    %v8020 = vshrl.u32 %v8019, 7
    %v8021 = vsub.s32 %v8018, %v8020
    %v8022 = vrot.slane %v7994, %v8021
    %v8023 = vcombine.low %v8001, %v8008
    %v8024 = vcombine.low %v8015, %v8022
    %v8026 = vunpack.c.l.s4 1966171168
    %v8027 = vunpack.c.0.s8 %v8026
    %v8028 = vlaneseq
    %v8029 = vshrl.u32 %v8028, 7
    %v8030 = vsub.s32 %v8027, %v8029
    %v8031 = vrot.slane %v8023, %v8030
    %v8033 = vunpack.c.l.s4 1966171168
    %v8034 = vunpack.c.0.s8 %v8033
    %v8035 = vlaneseq
    %v8036 = vshrl.u32 %v8035, 7
    %v8037 = vsub.s32 %v8034, %v8036
    %v8038 = vrot.slane %v8024, %v8037
    %v8039 = vcombine.low %v8031, %v8038
    %v8040 = vcombine.low %v7748, %v7749
    %v8041 = vcombine.low %v7750, %v7751
    %v8042 = vcombine.low %v7752, %v7753
    %v8043 = vcombine.low %v7754, %v7755
    %v8045 = vunpack.c.l.s4 1966171168
    %v8046 = vunpack.c.0.s8 %v8045
    %v8047 = vlaneseq
    %v8048 = vshrl.u32 %v8047, 7
    %v8049 = vsub.s32 %v8046, %v8048
    %v8050 = vrot.slane %v8040, %v8049
    %v8052 = vunpack.c.l.s4 1966171168
    %v8053 = vunpack.c.0.s8 %v8052
    %v8054 = vlaneseq
    %v8055 = vshrl.u32 %v8054, 7
    %v8056 = vsub.s32 %v8053, %v8055
    %v8057 = vrot.slane %v8041, %v8056
    %v8059 = vunpack.c.l.s4 1966171168
    %v8060 = vunpack.c.0.s8 %v8059
    %v8061 = vlaneseq
    %v8062 = vshrl.u32 %v8061, 7
    %v8063 = vsub.s32 %v8060, %v8062
    %v8064 = vrot.slane %v8042, %v8063
    %v8066 = vunpack.c.l.s4 1966171168
    %v8067 = vunpack.c.0.s8 %v8066
    %v8068 = vlaneseq
    %v8069 = vshrl.u32 %v8068, 7
    %v8070 = vsub.s32 %v8067, %v8069
    %v8071 = vrot.slane %v8043, %v8070
    %v8072 = vcombine.low %v8050, %v8057
    %v8073 = vcombine.low %v8064, %v8071
    %v8075 = vunpack.c.l.s4 1966171168
    %v8076 = vunpack.c.0.s8 %v8075
    %v8077 = vlaneseq
    %v8078 = vshrl.u32 %v8077, 7
    %v8079 = vsub.s32 %v8076, %v8078
    %v8080 = vrot.slane %v8072, %v8079
    %v8082 = vunpack.c.l.s4 1966171168
    %v8083 = vunpack.c.0.s8 %v8082
    %v8084 = vlaneseq
    %v8085 = vshrl.u32 %v8084, 7
    %v8086 = vsub.s32 %v8083, %v8085
    %v8087 = vrot.slane %v8073, %v8086
    %v8088 = vcombine.low %v8080, %v8087
    %v8089 = vcombine.low %v7756, %v7757
    %v8090 = vcombine.low %v7758, %v7759
    %v8091 = vcombine.low %v7760, %v7761
    %v8092 = vcombine.low %v7762, %v7763
    %v8094 = vunpack.c.l.s4 1966171168
    %v8095 = vunpack.c.0.s8 %v8094
    %v8096 = vlaneseq
    %v8097 = vshrl.u32 %v8096, 7
    %v8098 = vsub.s32 %v8095, %v8097
    %v8099 = vrot.slane %v8089, %v8098
    %v8101 = vunpack.c.l.s4 1966171168
    %v8102 = vunpack.c.0.s8 %v8101
    %v8103 = vlaneseq
    %v8104 = vshrl.u32 %v8103, 7
    %v8105 = vsub.s32 %v8102, %v8104
    %v8106 = vrot.slane %v8090, %v8105
    %v8108 = vunpack.c.l.s4 1966171168
    %v8109 = vunpack.c.0.s8 %v8108
    %v8110 = vlaneseq
    %v8111 = vshrl.u32 %v8110, 7
    %v8112 = vsub.s32 %v8109, %v8111
    %v8113 = vrot.slane %v8091, %v8112
    %v8115 = vunpack.c.l.s4 1966171168
    %v8116 = vunpack.c.0.s8 %v8115
    %v8117 = vlaneseq
    %v8118 = vshrl.u32 %v8117, 7
    %v8119 = vsub.s32 %v8116, %v8118
    %v8120 = vrot.slane %v8092, %v8119
    %v8121 = vcombine.low %v8099, %v8106
    %v8122 = vcombine.low %v8113, %v8120
    %v8124 = vunpack.c.l.s4 1966171168
    %v8125 = vunpack.c.0.s8 %v8124
    %v8126 = vlaneseq
    %v8127 = vshrl.u32 %v8126, 7
    %v8128 = vsub.s32 %v8125, %v8127
    %v8129 = vrot.slane %v8121, %v8128
    %v8131 = vunpack.c.l.s4 1966171168
    %v8132 = vunpack.c.0.s8 %v8131
    %v8133 = vlaneseq
    %v8134 = vshrl.u32 %v8133, 7
    %v8135 = vsub.s32 %v8132, %v8134
    %v8136 = vrot.slane %v8122, %v8135
    %v8137 = vcombine.low %v8129, %v8136
    %v8138 = vcombine.low %v7764, %v7765
    %v8139 = vcombine.low %v7766, %v7767
    %v8140 = vcombine.low %v7768, %v7769
    %v8141 = vcombine.low %v7770, %v7771
    %v8143 = vunpack.c.l.s4 1966171168
    %v8144 = vunpack.c.0.s8 %v8143
    %v8145 = vlaneseq
    %v8146 = vshrl.u32 %v8145, 7
    %v8147 = vsub.s32 %v8144, %v8146
    %v8148 = vrot.slane %v8138, %v8147
    %v8150 = vunpack.c.l.s4 1966171168
    %v8151 = vunpack.c.0.s8 %v8150
    %v8152 = vlaneseq
    %v8153 = vshrl.u32 %v8152, 7
    %v8154 = vsub.s32 %v8151, %v8153
    %v8155 = vrot.slane %v8139, %v8154
    %v8157 = vunpack.c.l.s4 1966171168
    %v8158 = vunpack.c.0.s8 %v8157
    %v8159 = vlaneseq
    %v8160 = vshrl.u32 %v8159, 7
    %v8161 = vsub.s32 %v8158, %v8160
    %v8162 = vrot.slane %v8140, %v8161
    %v8164 = vunpack.c.l.s4 1966171168
    %v8165 = vunpack.c.0.s8 %v8164
    %v8166 = vlaneseq
    %v8167 = vshrl.u32 %v8166, 7
    %v8168 = vsub.s32 %v8165, %v8167
    %v8169 = vrot.slane %v8141, %v8168
    %v8170 = vcombine.low %v8148, %v8155
    %v8171 = vcombine.low %v8162, %v8169
    %v8173 = vunpack.c.l.s4 1966171168
    %v8174 = vunpack.c.0.s8 %v8173
    %v8175 = vlaneseq
    %v8176 = vshrl.u32 %v8175, 7
    %v8177 = vsub.s32 %v8174, %v8176
    %v8178 = vrot.slane %v8170, %v8177
    %v8180 = vunpack.c.l.s4 1966171168
    %v8181 = vunpack.c.0.s8 %v8180
    %v8182 = vlaneseq
    %v8183 = vshrl.u32 %v8182, 7
    %v8184 = vsub.s32 %v8181, %v8183
    %v8185 = vrot.slane %v8171, %v8184
    %v8186 = vcombine.low %v8178, %v8185
    %v8187 = vcombine.low %v7772, %v7773
    %v8188 = vcombine.low %v7774, %v7775
    %v8189 = vcombine.low %v7776, %v7777
    %v8190 = vcombine.low %v7778, %v7779
    %v8192 = vunpack.c.l.s4 1966171168
    %v8193 = vunpack.c.0.s8 %v8192
    %v8194 = vlaneseq
    %v8195 = vshrl.u32 %v8194, 7
    %v8196 = vsub.s32 %v8193, %v8195
    %v8197 = vrot.slane %v8187, %v8196
    %v8199 = vunpack.c.l.s4 1966171168
    %v8200 = vunpack.c.0.s8 %v8199
    %v8201 = vlaneseq
    %v8202 = vshrl.u32 %v8201, 7
    %v8203 = vsub.s32 %v8200, %v8202
    %v8204 = vrot.slane %v8188, %v8203
    %v8206 = vunpack.c.l.s4 1966171168
    %v8207 = vunpack.c.0.s8 %v8206
    %v8208 = vlaneseq
    %v8209 = vshrl.u32 %v8208, 7
    %v8210 = vsub.s32 %v8207, %v8209
    %v8211 = vrot.slane %v8189, %v8210
    %v8213 = vunpack.c.l.s4 1966171168
    %v8214 = vunpack.c.0.s8 %v8213
    %v8215 = vlaneseq
    %v8216 = vshrl.u32 %v8215, 7
    %v8217 = vsub.s32 %v8214, %v8216
    %v8218 = vrot.slane %v8190, %v8217
    %v8219 = vcombine.low %v8197, %v8204
    %v8220 = vcombine.low %v8211, %v8218
    %v8222 = vunpack.c.l.s4 1966171168
    %v8223 = vunpack.c.0.s8 %v8222
    %v8224 = vlaneseq
    %v8225 = vshrl.u32 %v8224, 7
    %v8226 = vsub.s32 %v8223, %v8225
    %v8227 = vrot.slane %v8219, %v8226
    %v8229 = vunpack.c.l.s4 1966171168
    %v8230 = vunpack.c.0.s8 %v8229
    %v8231 = vlaneseq
    %v8232 = vshrl.u32 %v8231, 7
    %v8233 = vsub.s32 %v8230, %v8232
    %v8234 = vrot.slane %v8220, %v8233
    %v8235 = vcombine.low %v8227, %v8234
    %8244 = vst [vmem:[#allocation6] sm:$0xff] %v7892
    %8245 = vst [vmem:[#allocation6 + $0x8] sm:$0xff] %v7941
    %8246 = vst [vmem:[#allocation6 + $0x10] sm:$0xff] %v7990
    %8247 = vst [vmem:[#allocation6 + $0x18] sm:$0xff] %v8039
    %8248 = vst [vmem:[#allocation6 + $0x20] sm:$0xff] %v8088
    %8249 = vst [vmem:[#allocation6 + $0x28] sm:$0xff] %v8137
    %8250 = vst [vmem:[#allocation6 + $0x30] sm:$0xff] %v8186
    %8251 = vst [vmem:[#allocation6 + $0x38] sm:$0xff] %v8235
    // Predicated region
    $region34: #{tpu_custom_call.1} parent=1 // pred_check
      _
    $region35: #{tpu_custom_call.1} parent=1 // pred_check_branch
      %8253 = sbr.rel (0) target = $region37
    $region36: #{tpu_custom_call.1} parent=1 // pred_region
      %s8255 = ssub.s32 1024, 1024
      %8256 = vsyncadd [#allocation5], %s8255
      %s8258 = sshll.u32 [#allocation6], 4
      %s8259 = int_to_ptr.vmem [resolvable:$true] %s8258
      %8261 = dma.vmem_to_hbm [thread:$0]  %s8259, 1024, %s7, [#allocation5]
    $region37: #{tpu_custom_call.1} parent=1 // pred_fallthru
      _
    // Predicated region
    $region38: #{tpu_custom_call.1} parent=1 // pred_check
      _
    $region39: #{tpu_custom_call.1} parent=1 // pred_check_branch
      %8263 = sbr.rel (0) target = $region41
    $region40: #{tpu_custom_call.1} parent=1 // pred_region
      %8264 = dma.done [#allocation5], 1024
    $region41: #{tpu_custom_call.1} parent=1 // pred_fallthru
      _
    %8265 = vsyncpa [#allocation4], 1
    %8266 = vsyncpa [#allocation5], 1

</llo_original>
